<compile_context>
chip_gen: v6e
topology: v6e:2x2x1
jax: 0.10.0
libtpu: 0.0.40
codegen_flags: <defaults>
</compile_context>

<pallas_src>
import numpy as np
import jax
import jax.numpy as jnp
from jax.experimental import pallas as pl
from jax.experimental.pallas import tpu as pltpu

PAD = 0

# ---- small sizes consistent with the module's forward ----
B = 8           # batch
E = 32          # config.emb_size
H = 32          # config.decoder_hidden_size
V = 64          # tgt_vocab_size
NL = 2          # config.num_layers
T = 8           # decoded timesteps (tgt has T+1 rows)
R = T * B       # flattened (time, batch) rows
S0, S1, S2 = 16, 12, 8          # time dims of contexts[0], contexts[1], contexts[2]
S1P = 16                        # ctx1 time dim padded so B*S1P == 128
LEN0, LEN1, LEN2 = 14, 10, 6    # valid lengths used for attention masking


# ----------------------------------------------------------------------------
# Pallas kernel: the full decode in one invocation (phase 1 recurrence,
# phase 2 time-batched attention / MLP / score).
# ----------------------------------------------------------------------------
def decoder_kernel(
    embs_ref, h0_ref, c0_ref, slot_ref,                       # activations
    ctx0_ref, ctx0T_ref, ctx1_ref, ctx1T_ref, ctx2_ref, ctx2T_ref,   # contexts (flat + transposed)
    mask0_ref, mask1_ref, mask2_ref,                           # additive block-diag masks [R, B*S]
    wih0_ref, whh0_ref, b0_ref,                                # LSTM layer 0 (fused [in,4H])
    wih1_ref, whh1_ref, b1_ref,                                # LSTM layer 1
    attwin_ref, attbin_ref, attwout_ref, attbout_ref,          # global_attention linears
    wlo_ref, blo_ref,                                          # linear_out [4H,H]
    wls_ref, bls_ref, wl3_ref, bl3_ref, wl4_ref, bl4_ref,      # linear_slot / 3 / 4
    wsc_ref, bsc_ref,                                          # pre-folded slot_linear@emb^T
    out_ref, score_ref,                                        # outputs [R,H] / [R,V]
):
    f32 = jnp.float32

    # ---------------- Phase 1: serial LSTM recurrence over T ----------------
    # Layer-0 input projection hoisted off the critical path: one big dot.
    xg0 = (jnp.dot(embs_ref[...], wih0_ref[...], preferred_element_type=f32)
           + jnp.broadcast_to(b0_ref[...], (R, 4 * H)))                 # [R, 4H]
    b1_b = jnp.broadcast_to(b1_ref[...], (B, 4 * H))                    # hoisted (loop-invariant)

    def gates(g):
        # static 32-lane slices of the fused [B, 4H=128] gate tile (i, f, g, o)
        i = jax.nn.sigmoid(g[:, 0:H])
        f = jax.nn.sigmoid(g[:, H:2 * H])
        gg = jnp.tanh(g[:, 2 * H:3 * H])
        o = jax.nn.sigmoid(g[:, 3 * H:4 * H])
        return i, f, gg, o

    h0s, c0s = h0_ref[0], c0_ref[0]
    h1s, c1s = h0_ref[1], c0_ref[1]
    h1_steps = []
    for t in range(T):                      # T is small & static -> full unroll
        # layer 0: only h @ Whh remains on the serial chain
        g0 = xg0[t * B:(t + 1) * B, :] + jnp.dot(h0s, whh0_ref[...],
                                                 preferred_element_type=f32)
        i, f, gg, o = gates(g0)
        c0s = f * c0s + i * gg
        h0s = o * jnp.tanh(c0s)

        # layer 1 (inter-layer dropout is identity in eval mode)
        g1 = (jnp.dot(h0s, wih1_ref[...], preferred_element_type=f32)
              + jnp.dot(h1s, whh1_ref[...], preferred_element_type=f32) + b1_b)
        i, f, gg, o = gates(g1)
        c1s = f * c1s + i * gg
        h1s = o * jnp.tanh(c1s)
        h1_steps.append(h1s)

    h1_all = jnp.concatenate(h1_steps, axis=0)            # [R, H], row = t*B + b

    # ---------------- Phase 2: time-batched attention / MLP / score ---------
    attbin_b = jnp.broadcast_to(attbin_ref[...], (R, H))
    attbout_b = jnp.broadcast_to(attbout_ref[...], (R, H))

    def attention(xq, ctx_ref, ctxT_ref, mask_ref):
        # global_attention over all T*B rows at once.  The context is flattened
        # to [B*S, H]; the additive mask (0 valid / -1e30 elsewhere) is
        # block-diagonal in batch, so score + mix are plain 2-D MXU matmuls and
        # the softmax over the full B*S axis equals the per-batch softmax.
        gamma = jnp.dot(xq, attwin_ref[...], preferred_element_type=f32) + attbin_b
        w = jnp.dot(gamma, ctxT_ref[...], preferred_element_type=f32) + mask_ref[...]
        w = w - jnp.max(w, axis=1, keepdims=True)
        ew = jnp.exp(w)
        denom = jnp.sum(ew, axis=1, keepdims=True)
        rcp = pl.reciprocal(denom, approx=True)            # EUP slot
        rcp = rcp * (2.0 - denom * rcp)                    # one Newton step -> exact-division accuracy
        w = ew * rcp
        c_t = jnp.dot(w, ctx_ref[...], preferred_element_type=f32)       # [R, H]
        cat = jnp.concatenate([c_t, xq], axis=1)                          # [R, 2H]
        return jnp.tanh(jnp.dot(cat, attwout_ref[...], preferred_element_type=f32)
                        + attbout_b)

    x0 = h1_all + slot_ref[...]                            # ifslot == True path
    x1 = x0 + attention(x0, ctx2_ref, ctx2T_ref, mask2_ref)
    x2 = x1 + attention(x1, ctx1_ref, ctx1T_ref, mask1_ref)
    x3 = x2 + attention(x2, ctx0_ref, ctx0T_ref, mask0_ref)

    # linear_out on the 4-way concat as a single [R,128]x[128,H] dot
    cat4 = jnp.concatenate([x0, x1, x2, x3], axis=1)
    out = jnp.maximum(jnp.dot(cat4, wlo_ref[...], preferred_element_type=f32)
                      + blo_ref[...], 0.0)
    out = jnp.maximum(jnp.dot(out, wls_ref[...], preferred_element_type=f32)
                      + bls_ref[...], 0.0)
    out = jnp.maximum(jnp.dot(out, wl3_ref[...], preferred_element_type=f32)
                      + bl3_ref[...], 0.0)
    out = jnp.maximum(jnp.dot(out, wl4_ref[...], preferred_element_type=f32)
                      + bl4_ref[...], 0.0)
    # TODO(synk): nn.Dropout(0.5) and the LSTM inter-layer dropout are identity
    # in eval mode; training-mode dropout masks are not implemented.
    out_ref[...] = out

    # compute_score with slot_linear pre-folded into the vocab projection
    sv = jnp.dot(out, wsc_ref[...], preferred_element_type=f32) + bsc_ref[...]   # [R, V]
    m = jnp.max(sv, axis=1, keepdims=True)
    lse = m + jnp.log(jnp.sum(jnp.exp(sv - m), axis=1, keepdims=True))
    score_ref[...] = sv - lse


# ----------------------------------------------------------------------------
# Wrapper (glue): embedding lookup, mask/weight prep, pallas_call, loss.
# ----------------------------------------------------------------------------
def rnn_decoder_forward(params, tgt, h0, c0, slot, ctx0, ctx1, ctx2, lengths):
    inputs = tgt[:-1]                  # [T, B]
    targets = tgt[1:]                  # [T, B]
    embs = jnp.take(params['emb'], inputs, axis=0).reshape(R, E)   # [R, E], row = t*B+b

    # pad ctx1's time dim so B*S1P is lane-aligned (masking keeps padded rows inert)
    ctx1p = jnp.pad(ctx1, ((0, 0), (0, S1P - ctx1.shape[1]), (0, 0)))

    def blk(ctx):                      # flatten batch into the context axis
        flat = ctx.reshape(-1, H)      # [B*S, H]
        return flat, flat.T            # and pre-transposed [H, B*S] for the score dot

    ctx0_blk, ctx0_blkT = blk(ctx0)
    ctx1_blk, ctx1_blkT = blk(ctx1p)
    ctx2_blk, ctx2_blkT = blk(ctx2)

    # additive block-diagonal length masks: row r=(t*B+b) may only attend to
    # columns c=(b*S+s) with s < length; everything else gets -1e30.
    def blk_mask(s_dim, length):
        row_b = jnp.arange(R, dtype=jnp.int32) % B
        col_b = jnp.arange(B * s_dim, dtype=jnp.int32) // s_dim
        col_s = jnp.arange(B * s_dim, dtype=jnp.int32) % s_dim
        valid = (col_b[None, :] == row_b[:, None]) & (col_s[None, :] < length)
        return jnp.where(valid, 0.0, -1e30).astype(jnp.float32)

    mask0 = blk_mask(S0, lengths[0])
    mask1 = blk_mask(S1P, lengths[1])
    mask2 = blk_mask(S2, lengths[2])

    slot_rep = jnp.tile(slot, (T, 1))                       # [R, H], row t*B+b -> slot[b]

    # pre-fold slot_linear into the vocab projection (reassociation only)
    w_score = params['slot_w'] @ params['embT']             # [H, V]
    b_score = params['slot_b'] @ params['embT']             # [1, V]

    tensor_inputs = [
        embs, h0, c0, slot_rep,
        ctx0_blk, ctx0_blkT, ctx1_blk, ctx1_blkT, ctx2_blk, ctx2_blkT,
        mask0, mask1, mask2,
        params['wih0'], params['whh0'], params['b0'],
        params['wih1'], params['whh1'], params['b1'],
        params['att_w_in'], params['att_b_in'], params['att_w_out'], params['att_b_out'],
        params['w_lo'], params['b_lo'],
        params['w_ls'], params['b_ls'], params['w_l3'], params['b_l3'],
        params['w_l4'], params['b_l4'],
        w_score, b_score,
    ]
    vmem = pl.BlockSpec(memory_space=pltpu.MemorySpace.VMEM)

    out_flat, score_flat = pl.pallas_call(
        decoder_kernel,
        out_shape=(jax.ShapeDtypeStruct((R, H), jnp.float32),
                   jax.ShapeDtypeStruct((R, V), jnp.float32)),
        in_specs=[vmem] * len(tensor_inputs),
        out_specs=(vmem, vmem),
    )(*tensor_inputs)

    outputs = out_flat.reshape(T, B, H)
    scores = score_flat.reshape(T, B, V)

    # criterion (passed externally in the torch code): NLLLoss on log-softmax
    # scores with PAD ignored, sum reduction.
    tflat = targets.reshape(-1)                              # (t, b) order == row order
    nll = -jnp.take_along_axis(score_flat, tflat[:, None], axis=1)[:, 0]
    mask = tflat != PAD
    loss = jnp.sum(jnp.where(mask, nll, 0.0))
    num_total = jnp.sum(mask.astype(jnp.int32))
    return outputs, scores, loss, num_total


# ----------------------------------------------------------------------------
# Pure-JAX reference (same math, original weight layout) for validation.
# ----------------------------------------------------------------------------
def reference_forward(params, tgt, h0, c0, slot, ctx0, ctx1, ctx2, lengths):
    inputs = tgt[:-1]
    embs = jnp.take(params['emb'], inputs, axis=0)
    h = [h0[i] for i in range(NL)]
    c = [c0[i] for i in range(NL)]

    def lstm_cell(xin, hh, cc, wih, whh, b):
        g = xin @ wih + hh @ whh + b
        i = jax.nn.sigmoid(g[:, :H]); f = jax.nn.sigmoid(g[:, H:2 * H])
        gg = jnp.tanh(g[:, 2 * H:3 * H]); o = jax.nn.sigmoid(g[:, 3 * H:])
        cn = f * cc + i * gg
        return o * jnp.tanh(cn), cn

    def att(xq, ctx, length):
        gamma = xq @ params['att_w_in'] + params['att_b_in']
        w = jnp.einsum('bsh,bh->bs', ctx, gamma)
        pos = jnp.arange(ctx.shape[1])[None, :]
        w = jnp.where(pos < length, w, -1e30)
        w = w - jnp.max(w, axis=1, keepdims=True)
        e = jnp.exp(w)
        w = e / jnp.sum(e, axis=1, keepdims=True)
        ct = jnp.einsum('bs,bsh->bh', w, ctx)
        return jnp.tanh(jnp.concatenate([ct, xq], 1) @ params['att_w_out'] + params['att_b_out'])

    outs, scs = [], []
    for t in range(T):
        x = embs[t]
        h[0], c[0] = lstm_cell(x, h[0], c[0], params['wih0'], params['whh0'], params['b0'])
        h[1], c[1] = lstm_cell(h[0], h[1], c[1], params['wih1'], params['whh1'], params['b1'])
        ot = h[1] + slot
        ot1 = ot + att(ot, ctx2, lengths[2])
        ot2 = ot1 + att(ot1, ctx1, lengths[1])
        ot3 = ot2 + att(ot2, ctx0, lengths[0])
        o = jnp.maximum(jnp.concatenate([ot, ot1, ot2, ot3], 1) @ params['w_lo'] + params['b_lo'], 0.)
        o = jnp.maximum(o @ params['w_ls'] + params['b_ls'], 0.)
        o = jnp.maximum(o @ params['w_l3'] + params['b_l3'], 0.)
        o = jnp.maximum(o @ params['w_l4'] + params['b_l4'], 0.)
        word = o @ params['slot_w'] + params['slot_b']
        sv = word @ params['embT']
        m = jnp.max(sv, axis=1, keepdims=True)
        lse = m + jnp.log(jnp.sum(jnp.exp(sv - m), axis=1, keepdims=True))
        outs.append(o)
        scs.append(sv - lse)
    return jnp.stack(outs), jnp.stack(scs)


# ----------------------------------------------------------------------------
# Deterministic parameter construction (mirrors the module's __init__ inits).
# ----------------------------------------------------------------------------
def orthogonal(key, shape):
    a = jax.random.normal(key, shape, jnp.float32)
    transpose = shape[0] < shape[1]
    if transpose:
        a = a.T
    q, r = jnp.linalg.qr(a)
    q = q * jnp.where(jnp.diagonal(r) < 0, -1.0, 1.0)[None, :]
    if transpose:
        q = q.T
    return q[:shape[0], :shape[1]]


def kaiming(key, shape):          # torch layout [out, in]; fan_in = shape[1]
    std = float(np.sqrt(2.0 / shape[1]))
    return std * jax.random.normal(key, shape, jnp.float32)


def init_params(key):
    ks = jax.random.split(key, 16)
    p = {}
    p['emb'] = jax.random.normal(ks[0], (V, E), jnp.float32)    # nn.Embedding default
    p['embT'] = p['emb'].T
    # StackedLSTM: 2D params orthogonal, biases zero (per the init loop)
    p['wih0'] = orthogonal(ks[1], (4 * H, E)).T                 # -> [E, 4H]
    p['whh0'] = orthogonal(ks[2], (4 * H, H)).T
    p['b0'] = jnp.zeros((1, 4 * H), jnp.float32)                # b_ih + b_hh (both 0)
    p['wih1'] = orthogonal(ks[3], (4 * H, H)).T
    p['whh1'] = orthogonal(ks[4], (4 * H, H)).T
    p['b1'] = jnp.zeros((1, 4 * H), jnp.float32)
    # global_attention linears: default torch init
    bi = 1.0 / np.sqrt(H)
    p['att_w_in'] = jax.random.uniform(ks[5], (H, H), jnp.float32, -bi, bi)
    p['att_b_in'] = jax.random.uniform(ks[6], (1, H), jnp.float32, -bi, bi)
    bo = 1.0 / np.sqrt(2 * H)
    p['att_w_out'] = jax.random.uniform(ks[7], (2 * H, H), jnp.float32, -bo, bo)
    p['att_b_out'] = jax.random.uniform(ks[8], (1, H), jnp.float32, -bo, bo)
    # decoder linears: kaiming_normal weights, zero biases
    p['w_lo'] = kaiming(ks[9], (H, 4 * H)).T                    # [4H, H]
    p['b_lo'] = jnp.zeros((1, H), jnp.float32)
    p['w_ls'] = kaiming(ks[10], (H, H)).T
    p['b_ls'] = jnp.zeros((1, H), jnp.float32)
    p['w_l3'] = kaiming(ks[11], (H, H)).T
    p['b_l3'] = jnp.zeros((1, H), jnp.float32)
    p['w_l4'] = kaiming(ks[12], (H, H)).T
    p['b_l4'] = jnp.zeros((1, H), jnp.float32)
    p['slot_w'] = kaiming(ks[13], (E, H)).T                     # slot_linear: H -> E
    p['slot_b'] = jnp.zeros((1, E), jnp.float32)
    return p


if __name__ == "__main__":
    key = jax.random.PRNGKey(0)
    kp, kt, kh, kc, ksl, k0, k1, k2 = jax.random.split(key, 8)
    params = init_params(kp)

    tgt = jax.random.randint(kt, (T + 1, B), 1, V).astype(jnp.int32)
    tgt = tgt.at[-1, :2].set(PAD)                 # a few PAD targets
    h0 = 0.1 * jax.random.normal(kh, (NL, B, H), jnp.float32)
    c0 = 0.1 * jax.random.normal(kc, (NL, B, H), jnp.float32)
    slot = 0.1 * jax.random.normal(ksl, (B, H), jnp.float32)
    ctx0 = jax.random.normal(k0, (B, S0, H), jnp.float32)
    ctx1 = jax.random.normal(k1, (B, S1, H), jnp.float32)
    ctx2 = jax.random.normal(k2, (B, S2, H), jnp.float32)
    lengths = jnp.array([LEN0, LEN1, LEN2], jnp.int32)

    outputs, scores, loss, num_total = jax.jit(rnn_decoder_forward)(
        params, tgt, h0, c0, slot, ctx0, ctx1, ctx2, lengths)
    jax.block_until_ready((outputs, scores, loss, num_total))

    ref_out, ref_sc = reference_forward(params, tgt, h0, c0, slot, ctx0, ctx1, ctx2, lengths)
    np.testing.assert_allclose(np.asarray(outputs), np.asarray(ref_out), rtol=2e-3, atol=2e-3)
    np.testing.assert_allclose(np.asarray(scores), np.asarray(ref_sc), rtol=2e-3, atol=2e-3)
    assert np.isfinite(float(loss)) and int(num_total) == T * B - 2

    print("KERNEL_OK")
</pallas_src>

<mosaic_0001>
module attributes {stable_mosaic.version = 11 : i64} {
  func.func @decoder_kernel(%arg0: memref<64x32xf32, #tpu.memory_space<vmem>>, %arg1: memref<2x8x32xf32, #tpu.memory_space<vmem>>, %arg2: memref<2x8x32xf32, #tpu.memory_space<vmem>>, %arg3: memref<64x32xf32, #tpu.memory_space<vmem>>, %arg4: memref<128x32xf32, #tpu.memory_space<vmem>>, %arg5: memref<32x128xf32, #tpu.memory_space<vmem>>, %arg6: memref<128x32xf32, #tpu.memory_space<vmem>>, %arg7: memref<32x128xf32, #tpu.memory_space<vmem>>, %arg8: memref<64x32xf32, #tpu.memory_space<vmem>>, %arg9: memref<32x64xf32, #tpu.memory_space<vmem>>, %arg10: memref<64x128xf32, #tpu.memory_space<vmem>>, %arg11: memref<64x128xf32, #tpu.memory_space<vmem>>, %arg12: memref<64x64xf32, #tpu.memory_space<vmem>>, %arg13: memref<32x128xf32, #tpu.memory_space<vmem>>, %arg14: memref<32x128xf32, #tpu.memory_space<vmem>>, %arg15: memref<1x128xf32, #tpu.memory_space<vmem>>, %arg16: memref<32x128xf32, #tpu.memory_space<vmem>>, %arg17: memref<32x128xf32, #tpu.memory_space<vmem>>, %arg18: memref<1x128xf32, #tpu.memory_space<vmem>>, %arg19: memref<32x32xf32, #tpu.memory_space<vmem>>, %arg20: memref<1x32xf32, #tpu.memory_space<vmem>>, %arg21: memref<64x32xf32, #tpu.memory_space<vmem>>, %arg22: memref<1x32xf32, #tpu.memory_space<vmem>>, %arg23: memref<128x32xf32, #tpu.memory_space<vmem>>, %arg24: memref<1x32xf32, #tpu.memory_space<vmem>>, %arg25: memref<32x32xf32, #tpu.memory_space<vmem>>, %arg26: memref<1x32xf32, #tpu.memory_space<vmem>>, %arg27: memref<32x32xf32, #tpu.memory_space<vmem>>, %arg28: memref<1x32xf32, #tpu.memory_space<vmem>>, %arg29: memref<32x32xf32, #tpu.memory_space<vmem>>, %arg30: memref<1x32xf32, #tpu.memory_space<vmem>>, %arg31: memref<32x64xf32, #tpu.memory_space<vmem>>, %arg32: memref<1x64xf32, #tpu.memory_space<vmem>>, %arg33: memref<64x32xf32, #tpu.memory_space<vmem>>, %arg34: memref<64x64xf32, #tpu.memory_space<vmem>>) attributes {dimension_semantics = [], scalar_prefetch = 0 : i64, scratch_operands = 0 : i64, tpu.core_type = #tpu.core_type<tc>} {
    %c0 = arith.constant 0 : index
    %c0_0 = arith.constant 0 : index
    %0 = vector.load %arg0[%c0, %c0_0] : memref<64x32xf32, #tpu.memory_space<vmem>>, vector<64x32xf32>
    %c0_1 = arith.constant 0 : index
    %c0_2 = arith.constant 0 : index
    %1 = vector.load %arg13[%c0_1, %c0_2] : memref<32x128xf32, #tpu.memory_space<vmem>>, vector<32x128xf32>
    %cst = arith.constant dense<0.000000e+00> : vector<64x128xf32>
    %2 = tpu.matmul %0, %1, %cst {dimension_numbers = #tpu.dot_dimension_numbers<[1], [0], [0], [1], [0, 0, 1, 1], [], []>} : vector<64x32xf32>, vector<32x128xf32>, vector<64x128xf32> -> vector<64x128xf32>
    %c0_3 = arith.constant 0 : index
    %c0_4 = arith.constant 0 : index
    %3 = vector.load %arg15[%c0_3, %c0_4] : memref<1x128xf32, #tpu.memory_space<vmem>>, vector<1x128xf32>
    %4 = vector.shape_cast %3 : vector<1x128xf32> to vector<1x128xf32>
    %5 = vector.broadcast %4 : vector<1x128xf32> to vector<64x128xf32>
    %6 = arith.addf %2, %5 : vector<64x128xf32>
    %c0_5 = arith.constant 0 : index
    %c0_6 = arith.constant 0 : index
    %7 = vector.load %arg18[%c0_5, %c0_6] : memref<1x128xf32, #tpu.memory_space<vmem>>, vector<1x128xf32>
    %8 = vector.shape_cast %7 : vector<1x128xf32> to vector<1x128xf32>
    %9 = vector.broadcast %8 : vector<1x128xf32> to vector<8x128xf32>
    %c0_7 = arith.constant 0 : index
    %c0_8 = arith.constant 0 : index
    %c0_9 = arith.constant 0 : index
    %10 = vector.load %arg1[%c0_7, %c0_8, %c0_9] : memref<2x8x32xf32, #tpu.memory_space<vmem>>, vector<1x8x32xf32>
    %11 = vector.shape_cast %10 : vector<1x8x32xf32> to vector<8x32xf32>
    %c0_10 = arith.constant 0 : index
    %c0_11 = arith.constant 0 : index
    %c0_12 = arith.constant 0 : index
    %12 = vector.load %arg2[%c0_10, %c0_11, %c0_12] : memref<2x8x32xf32, #tpu.memory_space<vmem>>, vector<1x8x32xf32>
    %13 = vector.shape_cast %12 : vector<1x8x32xf32> to vector<8x32xf32>
    %c1 = arith.constant 1 : index
    %c0_13 = arith.constant 0 : index
    %c0_14 = arith.constant 0 : index
    %14 = vector.load %arg1[%c1, %c0_13, %c0_14] : memref<2x8x32xf32, #tpu.memory_space<vmem>>, vector<1x8x32xf32>
    %15 = vector.shape_cast %14 : vector<1x8x32xf32> to vector<8x32xf32>
    %c1_15 = arith.constant 1 : index
    %c0_16 = arith.constant 0 : index
    %c0_17 = arith.constant 0 : index
    %16 = vector.load %arg2[%c1_15, %c0_16, %c0_17] : memref<2x8x32xf32, #tpu.memory_space<vmem>>, vector<1x8x32xf32>
    %17 = vector.shape_cast %16 : vector<1x8x32xf32> to vector<8x32xf32>
    %18 = vector.extract_strided_slice %6 {offsets = [0, 0], sizes = [8, 128], strides = [1, 1]} : vector<64x128xf32> to vector<8x128xf32>
    %c0_18 = arith.constant 0 : index
    %c0_19 = arith.constant 0 : index
    %19 = vector.load %arg14[%c0_18, %c0_19] : memref<32x128xf32, #tpu.memory_space<vmem>>, vector<32x128xf32>
    %cst_20 = arith.constant dense<0.000000e+00> : vector<8x128xf32>
    %20 = tpu.matmul %11, %19, %cst_20 {dimension_numbers = #tpu.dot_dimension_numbers<[1], [0], [0], [1], [0, 0, 1, 1], [], []>} : vector<8x32xf32>, vector<32x128xf32>, vector<8x128xf32> -> vector<8x128xf32>
    %21 = arith.addf %18, %20 : vector<8x128xf32>
    %22 = vector.extract_strided_slice %21 {offsets = [0, 0], sizes = [8, 32], strides = [1, 1]} : vector<8x128xf32> to vector<8x32xf32>
    %23 = arith.negf %22 : vector<8x32xf32>
    %24 = math.exp %23 : vector<8x32xf32>
    %cst_21 = arith.constant 1.000000e+00 : f32
    %25 = vector.broadcast %cst_21 : f32 to vector<8x32xf32>
    %26 = arith.addf %25, %24 : vector<8x32xf32>
    %27 = arith.divf %25, %26 : vector<8x32xf32>
    %28 = vector.extract_strided_slice %21 {offsets = [0, 32], sizes = [8, 32], strides = [1, 1]} : vector<8x128xf32> to vector<8x32xf32>
    %29 = arith.negf %28 : vector<8x32xf32>
    %30 = math.exp %29 : vector<8x32xf32>
    %cst_22 = arith.constant 1.000000e+00 : f32
    %31 = vector.broadcast %cst_22 : f32 to vector<8x32xf32>
    %32 = arith.addf %31, %30 : vector<8x32xf32>
    %33 = arith.divf %31, %32 : vector<8x32xf32>
    %34 = vector.extract_strided_slice %21 {offsets = [0, 64], sizes = [8, 32], strides = [1, 1]} : vector<8x128xf32> to vector<8x32xf32>
    %35 = math.tanh %34 : vector<8x32xf32>
    %36 = vector.extract_strided_slice %21 {offsets = [0, 96], sizes = [8, 32], strides = [1, 1]} : vector<8x128xf32> to vector<8x32xf32>
    %37 = arith.negf %36 : vector<8x32xf32>
    %38 = math.exp %37 : vector<8x32xf32>
    %cst_23 = arith.constant 1.000000e+00 : f32
    %39 = vector.broadcast %cst_23 : f32 to vector<8x32xf32>
    %40 = arith.addf %39, %38 : vector<8x32xf32>
    %41 = arith.divf %39, %40 : vector<8x32xf32>
    %42 = arith.mulf %33, %13 : vector<8x32xf32>
    %43 = arith.mulf %27, %35 : vector<8x32xf32>
    %44 = arith.addf %42, %43 : vector<8x32xf32>
    %45 = math.tanh %44 : vector<8x32xf32>
    %46 = arith.mulf %41, %45 : vector<8x32xf32>
    %c0_24 = arith.constant 0 : index
    %c0_25 = arith.constant 0 : index
    %47 = vector.load %arg16[%c0_24, %c0_25] : memref<32x128xf32, #tpu.memory_space<vmem>>, vector<32x128xf32>
    %cst_26 = arith.constant dense<0.000000e+00> : vector<8x128xf32>
    %48 = tpu.matmul %46, %47, %cst_26 {dimension_numbers = #tpu.dot_dimension_numbers<[1], [0], [0], [1], [0, 0, 1, 1], [], []>} : vector<8x32xf32>, vector<32x128xf32>, vector<8x128xf32> -> vector<8x128xf32>
    %c0_27 = arith.constant 0 : index
    %c0_28 = arith.constant 0 : index
    %49 = vector.load %arg17[%c0_27, %c0_28] : memref<32x128xf32, #tpu.memory_space<vmem>>, vector<32x128xf32>
    %cst_29 = arith.constant dense<0.000000e+00> : vector<8x128xf32>
    %50 = tpu.matmul %15, %49, %cst_29 {dimension_numbers = #tpu.dot_dimension_numbers<[1], [0], [0], [1], [0, 0, 1, 1], [], []>} : vector<8x32xf32>, vector<32x128xf32>, vector<8x128xf32> -> vector<8x128xf32>
    %51 = arith.addf %48, %50 : vector<8x128xf32>
    %52 = arith.addf %51, %9 : vector<8x128xf32>
    %53 = vector.extract_strided_slice %52 {offsets = [0, 0], sizes = [8, 32], strides = [1, 1]} : vector<8x128xf32> to vector<8x32xf32>
    %54 = arith.negf %53 : vector<8x32xf32>
    %55 = math.exp %54 : vector<8x32xf32>
    %cst_30 = arith.constant 1.000000e+00 : f32
    %56 = vector.broadcast %cst_30 : f32 to vector<8x32xf32>
    %57 = arith.addf %56, %55 : vector<8x32xf32>
    %58 = arith.divf %56, %57 : vector<8x32xf32>
    %59 = vector.extract_strided_slice %52 {offsets = [0, 32], sizes = [8, 32], strides = [1, 1]} : vector<8x128xf32> to vector<8x32xf32>
    %60 = arith.negf %59 : vector<8x32xf32>
    %61 = math.exp %60 : vector<8x32xf32>
    %cst_31 = arith.constant 1.000000e+00 : f32
    %62 = vector.broadcast %cst_31 : f32 to vector<8x32xf32>
    %63 = arith.addf %62, %61 : vector<8x32xf32>
    %64 = arith.divf %62, %63 : vector<8x32xf32>
    %65 = vector.extract_strided_slice %52 {offsets = [0, 64], sizes = [8, 32], strides = [1, 1]} : vector<8x128xf32> to vector<8x32xf32>
    %66 = math.tanh %65 : vector<8x32xf32>
    %67 = vector.extract_strided_slice %52 {offsets = [0, 96], sizes = [8, 32], strides = [1, 1]} : vector<8x128xf32> to vector<8x32xf32>
    %68 = arith.negf %67 : vector<8x32xf32>
    %69 = math.exp %68 : vector<8x32xf32>
    %cst_32 = arith.constant 1.000000e+00 : f32
    %70 = vector.broadcast %cst_32 : f32 to vector<8x32xf32>
    %71 = arith.addf %70, %69 : vector<8x32xf32>
    %72 = arith.divf %70, %71 : vector<8x32xf32>
    %73 = arith.mulf %64, %17 : vector<8x32xf32>
    %74 = arith.mulf %58, %66 : vector<8x32xf32>
    %75 = arith.addf %73, %74 : vector<8x32xf32>
    %76 = math.tanh %75 : vector<8x32xf32>
    %77 = arith.mulf %72, %76 : vector<8x32xf32>
    %78 = vector.extract_strided_slice %6 {offsets = [8, 0], sizes = [8, 128], strides = [1, 1]} : vector<64x128xf32> to vector<8x128xf32>
    %c0_33 = arith.constant 0 : index
    %c0_34 = arith.constant 0 : index
    %79 = vector.load %arg14[%c0_33, %c0_34] : memref<32x128xf32, #tpu.memory_space<vmem>>, vector<32x128xf32>
    %cst_35 = arith.constant dense<0.000000e+00> : vector<8x128xf32>
    %80 = tpu.matmul %46, %79, %cst_35 {dimension_numbers = #tpu.dot_dimension_numbers<[1], [0], [0], [1], [0, 0, 1, 1], [], []>} : vector<8x32xf32>, vector<32x128xf32>, vector<8x128xf32> -> vector<8x128xf32>
    %81 = arith.addf %78, %80 : vector<8x128xf32>
    %82 = vector.extract_strided_slice %81 {offsets = [0, 0], sizes = [8, 32], strides = [1, 1]} : vector<8x128xf32> to vector<8x32xf32>
    %83 = arith.negf %82 : vector<8x32xf32>
    %84 = math.exp %83 : vector<8x32xf32>
    %cst_36 = arith.constant 1.000000e+00 : f32
    %85 = vector.broadcast %cst_36 : f32 to vector<8x32xf32>
    %86 = arith.addf %85, %84 : vector<8x32xf32>
    %87 = arith.divf %85, %86 : vector<8x32xf32>
    %88 = vector.extract_strided_slice %81 {offsets = [0, 32], sizes = [8, 32], strides = [1, 1]} : vector<8x128xf32> to vector<8x32xf32>
    %89 = arith.negf %88 : vector<8x32xf32>
    %90 = math.exp %89 : vector<8x32xf32>
    %cst_37 = arith.constant 1.000000e+00 : f32
    %91 = vector.broadcast %cst_37 : f32 to vector<8x32xf32>
    %92 = arith.addf %91, %90 : vector<8x32xf32>
    %93 = arith.divf %91, %92 : vector<8x32xf32>
    %94 = vector.extract_strided_slice %81 {offsets = [0, 64], sizes = [8, 32], strides = [1, 1]} : vector<8x128xf32> to vector<8x32xf32>
    %95 = math.tanh %94 : vector<8x32xf32>
    %96 = vector.extract_strided_slice %81 {offsets = [0, 96], sizes = [8, 32], strides = [1, 1]} : vector<8x128xf32> to vector<8x32xf32>
    %97 = arith.negf %96 : vector<8x32xf32>
    %98 = math.exp %97 : vector<8x32xf32>
    %cst_38 = arith.constant 1.000000e+00 : f32
    %99 = vector.broadcast %cst_38 : f32 to vector<8x32xf32>
    %100 = arith.addf %99, %98 : vector<8x32xf32>
    %101 = arith.divf %99, %100 : vector<8x32xf32>
    %102 = arith.mulf %93, %44 : vector<8x32xf32>
    %103 = arith.mulf %87, %95 : vector<8x32xf32>
    %104 = arith.addf %102, %103 : vector<8x32xf32>
    %105 = math.tanh %104 : vector<8x32xf32>
    %106 = arith.mulf %101, %105 : vector<8x32xf32>
    %c0_39 = arith.constant 0 : index
    %c0_40 = arith.constant 0 : index
    %107 = vector.load %arg16[%c0_39, %c0_40] : memref<32x128xf32, #tpu.memory_space<vmem>>, vector<32x128xf32>
    %cst_41 = arith.constant dense<0.000000e+00> : vector<8x128xf32>
    %108 = tpu.matmul %106, %107, %cst_41 {dimension_numbers = #tpu.dot_dimension_numbers<[1], [0], [0], [1], [0, 0, 1, 1], [], []>} : vector<8x32xf32>, vector<32x128xf32>, vector<8x128xf32> -> vector<8x128xf32>
    %c0_42 = arith.constant 0 : index
    %c0_43 = arith.constant 0 : index
    %109 = vector.load %arg17[%c0_42, %c0_43] : memref<32x128xf32, #tpu.memory_space<vmem>>, vector<32x128xf32>
    %cst_44 = arith.constant dense<0.000000e+00> : vector<8x128xf32>
    %110 = tpu.matmul %77, %109, %cst_44 {dimension_numbers = #tpu.dot_dimension_numbers<[1], [0], [0], [1], [0, 0, 1, 1], [], []>} : vector<8x32xf32>, vector<32x128xf32>, vector<8x128xf32> -> vector<8x128xf32>
    %111 = arith.addf %108, %110 : vector<8x128xf32>
    %112 = arith.addf %111, %9 : vector<8x128xf32>
    %113 = vector.extract_strided_slice %112 {offsets = [0, 0], sizes = [8, 32], strides = [1, 1]} : vector<8x128xf32> to vector<8x32xf32>
    %114 = arith.negf %113 : vector<8x32xf32>
    %115 = math.exp %114 : vector<8x32xf32>
    %cst_45 = arith.constant 1.000000e+00 : f32
    %116 = vector.broadcast %cst_45 : f32 to vector<8x32xf32>
    %117 = arith.addf %116, %115 : vector<8x32xf32>
    %118 = arith.divf %116, %117 : vector<8x32xf32>
    %119 = vector.extract_strided_slice %112 {offsets = [0, 32], sizes = [8, 32], strides = [1, 1]} : vector<8x128xf32> to vector<8x32xf32>
    %120 = arith.negf %119 : vector<8x32xf32>
    %121 = math.exp %120 : vector<8x32xf32>
    %cst_46 = arith.constant 1.000000e+00 : f32
    %122 = vector.broadcast %cst_46 : f32 to vector<8x32xf32>
    %123 = arith.addf %122, %121 : vector<8x32xf32>
    %124 = arith.divf %122, %123 : vector<8x32xf32>
    %125 = vector.extract_strided_slice %112 {offsets = [0, 64], sizes = [8, 32], strides = [1, 1]} : vector<8x128xf32> to vector<8x32xf32>
    %126 = math.tanh %125 : vector<8x32xf32>
    %127 = vector.extract_strided_slice %112 {offsets = [0, 96], sizes = [8, 32], strides = [1, 1]} : vector<8x128xf32> to vector<8x32xf32>
    %128 = arith.negf %127 : vector<8x32xf32>
    %129 = math.exp %128 : vector<8x32xf32>
    %cst_47 = arith.constant 1.000000e+00 : f32
    %130 = vector.broadcast %cst_47 : f32 to vector<8x32xf32>
    %131 = arith.addf %130, %129 : vector<8x32xf32>
    %132 = arith.divf %130, %131 : vector<8x32xf32>
    %133 = arith.mulf %124, %75 : vector<8x32xf32>
    %134 = arith.mulf %118, %126 : vector<8x32xf32>
    %135 = arith.addf %133, %134 : vector<8x32xf32>
    %136 = math.tanh %135 : vector<8x32xf32>
    %137 = arith.mulf %132, %136 : vector<8x32xf32>
    %138 = vector.extract_strided_slice %6 {offsets = [16, 0], sizes = [8, 128], strides = [1, 1]} : vector<64x128xf32> to vector<8x128xf32>
    %c0_48 = arith.constant 0 : index
    %c0_49 = arith.constant 0 : index
    %139 = vector.load %arg14[%c0_48, %c0_49] : memref<32x128xf32, #tpu.memory_space<vmem>>, vector<32x128xf32>
    %cst_50 = arith.constant dense<0.000000e+00> : vector<8x128xf32>
    %140 = tpu.matmul %106, %139, %cst_50 {dimension_numbers = #tpu.dot_dimension_numbers<[1], [0], [0], [1], [0, 0, 1, 1], [], []>} : vector<8x32xf32>, vector<32x128xf32>, vector<8x128xf32> -> vector<8x128xf32>
    %141 = arith.addf %138, %140 : vector<8x128xf32>
    %142 = vector.extract_strided_slice %141 {offsets = [0, 0], sizes = [8, 32], strides = [1, 1]} : vector<8x128xf32> to vector<8x32xf32>
    %143 = arith.negf %142 : vector<8x32xf32>
    %144 = math.exp %143 : vector<8x32xf32>
    %cst_51 = arith.constant 1.000000e+00 : f32
    %145 = vector.broadcast %cst_51 : f32 to vector<8x32xf32>
    %146 = arith.addf %145, %144 : vector<8x32xf32>
    %147 = arith.divf %145, %146 : vector<8x32xf32>
    %148 = vector.extract_strided_slice %141 {offsets = [0, 32], sizes = [8, 32], strides = [1, 1]} : vector<8x128xf32> to vector<8x32xf32>
    %149 = arith.negf %148 : vector<8x32xf32>
    %150 = math.exp %149 : vector<8x32xf32>
    %cst_52 = arith.constant 1.000000e+00 : f32
    %151 = vector.broadcast %cst_52 : f32 to vector<8x32xf32>
    %152 = arith.addf %151, %150 : vector<8x32xf32>
    %153 = arith.divf %151, %152 : vector<8x32xf32>
    %154 = vector.extract_strided_slice %141 {offsets = [0, 64], sizes = [8, 32], strides = [1, 1]} : vector<8x128xf32> to vector<8x32xf32>
    %155 = math.tanh %154 : vector<8x32xf32>
    %156 = vector.extract_strided_slice %141 {offsets = [0, 96], sizes = [8, 32], strides = [1, 1]} : vector<8x128xf32> to vector<8x32xf32>
    %157 = arith.negf %156 : vector<8x32xf32>
    %158 = math.exp %157 : vector<8x32xf32>
    %cst_53 = arith.constant 1.000000e+00 : f32
    %159 = vector.broadcast %cst_53 : f32 to vector<8x32xf32>
    %160 = arith.addf %159, %158 : vector<8x32xf32>
    %161 = arith.divf %159, %160 : vector<8x32xf32>
    %162 = arith.mulf %153, %104 : vector<8x32xf32>
    %163 = arith.mulf %147, %155 : vector<8x32xf32>
    %164 = arith.addf %162, %163 : vector<8x32xf32>
    %165 = math.tanh %164 : vector<8x32xf32>
    %166 = arith.mulf %161, %165 : vector<8x32xf32>
    %c0_54 = arith.constant 0 : index
    %c0_55 = arith.constant 0 : index
    %167 = vector.load %arg16[%c0_54, %c0_55] : memref<32x128xf32, #tpu.memory_space<vmem>>, vector<32x128xf32>
    %cst_56 = arith.constant dense<0.000000e+00> : vector<8x128xf32>
    %168 = tpu.matmul %166, %167, %cst_56 {dimension_numbers = #tpu.dot_dimension_numbers<[1], [0], [0], [1], [0, 0, 1, 1], [], []>} : vector<8x32xf32>, vector<32x128xf32>, vector<8x128xf32> -> vector<8x128xf32>
    %c0_57 = arith.constant 0 : index
    %c0_58 = arith.constant 0 : index
    %169 = vector.load %arg17[%c0_57, %c0_58] : memref<32x128xf32, #tpu.memory_space<vmem>>, vector<32x128xf32>
    %cst_59 = arith.constant dense<0.000000e+00> : vector<8x128xf32>
    %170 = tpu.matmul %137, %169, %cst_59 {dimension_numbers = #tpu.dot_dimension_numbers<[1], [0], [0], [1], [0, 0, 1, 1], [], []>} : vector<8x32xf32>, vector<32x128xf32>, vector<8x128xf32> -> vector<8x128xf32>
    %171 = arith.addf %168, %170 : vector<8x128xf32>
    %172 = arith.addf %171, %9 : vector<8x128xf32>
    %173 = vector.extract_strided_slice %172 {offsets = [0, 0], sizes = [8, 32], strides = [1, 1]} : vector<8x128xf32> to vector<8x32xf32>
    %174 = arith.negf %173 : vector<8x32xf32>
    %175 = math.exp %174 : vector<8x32xf32>
    %cst_60 = arith.constant 1.000000e+00 : f32
    %176 = vector.broadcast %cst_60 : f32 to vector<8x32xf32>
    %177 = arith.addf %176, %175 : vector<8x32xf32>
    %178 = arith.divf %176, %177 : vector<8x32xf32>
    %179 = vector.extract_strided_slice %172 {offsets = [0, 32], sizes = [8, 32], strides = [1, 1]} : vector<8x128xf32> to vector<8x32xf32>
    %180 = arith.negf %179 : vector<8x32xf32>
    %181 = math.exp %180 : vector<8x32xf32>
    %cst_61 = arith.constant 1.000000e+00 : f32
    %182 = vector.broadcast %cst_61 : f32 to vector<8x32xf32>
    %183 = arith.addf %182, %181 : vector<8x32xf32>
    %184 = arith.divf %182, %183 : vector<8x32xf32>
    %185 = vector.extract_strided_slice %172 {offsets = [0, 64], sizes = [8, 32], strides = [1, 1]} : vector<8x128xf32> to vector<8x32xf32>
    %186 = math.tanh %185 : vector<8x32xf32>
    %187 = vector.extract_strided_slice %172 {offsets = [0, 96], sizes = [8, 32], strides = [1, 1]} : vector<8x128xf32> to vector<8x32xf32>
    %188 = arith.negf %187 : vector<8x32xf32>
    %189 = math.exp %188 : vector<8x32xf32>
    %cst_62 = arith.constant 1.000000e+00 : f32
    %190 = vector.broadcast %cst_62 : f32 to vector<8x32xf32>
    %191 = arith.addf %190, %189 : vector<8x32xf32>
    %192 = arith.divf %190, %191 : vector<8x32xf32>
    %193 = arith.mulf %184, %135 : vector<8x32xf32>
    %194 = arith.mulf %178, %186 : vector<8x32xf32>
    %195 = arith.addf %193, %194 : vector<8x32xf32>
    %196 = math.tanh %195 : vector<8x32xf32>
    %197 = arith.mulf %192, %196 : vector<8x32xf32>
    %198 = vector.extract_strided_slice %6 {offsets = [24, 0], sizes = [8, 128], strides = [1, 1]} : vector<64x128xf32> to vector<8x128xf32>
    %c0_63 = arith.constant 0 : index
    %c0_64 = arith.constant 0 : index
    %199 = vector.load %arg14[%c0_63, %c0_64] : memref<32x128xf32, #tpu.memory_space<vmem>>, vector<32x128xf32>
    %cst_65 = arith.constant dense<0.000000e+00> : vector<8x128xf32>
    %200 = tpu.matmul %166, %199, %cst_65 {dimension_numbers = #tpu.dot_dimension_numbers<[1], [0], [0], [1], [0, 0, 1, 1], [], []>} : vector<8x32xf32>, vector<32x128xf32>, vector<8x128xf32> -> vector<8x128xf32>
    %201 = arith.addf %198, %200 : vector<8x128xf32>
    %202 = vector.extract_strided_slice %201 {offsets = [0, 0], sizes = [8, 32], strides = [1, 1]} : vector<8x128xf32> to vector<8x32xf32>
    %203 = arith.negf %202 : vector<8x32xf32>
    %204 = math.exp %203 : vector<8x32xf32>
    %cst_66 = arith.constant 1.000000e+00 : f32
    %205 = vector.broadcast %cst_66 : f32 to vector<8x32xf32>
    %206 = arith.addf %205, %204 : vector<8x32xf32>
    %207 = arith.divf %205, %206 : vector<8x32xf32>
    %208 = vector.extract_strided_slice %201 {offsets = [0, 32], sizes = [8, 32], strides = [1, 1]} : vector<8x128xf32> to vector<8x32xf32>
    %209 = arith.negf %208 : vector<8x32xf32>
    %210 = math.exp %209 : vector<8x32xf32>
    %cst_67 = arith.constant 1.000000e+00 : f32
    %211 = vector.broadcast %cst_67 : f32 to vector<8x32xf32>
    %212 = arith.addf %211, %210 : vector<8x32xf32>
    %213 = arith.divf %211, %212 : vector<8x32xf32>
    %214 = vector.extract_strided_slice %201 {offsets = [0, 64], sizes = [8, 32], strides = [1, 1]} : vector<8x128xf32> to vector<8x32xf32>
    %215 = math.tanh %214 : vector<8x32xf32>
    %216 = vector.extract_strided_slice %201 {offsets = [0, 96], sizes = [8, 32], strides = [1, 1]} : vector<8x128xf32> to vector<8x32xf32>
    %217 = arith.negf %216 : vector<8x32xf32>
    %218 = math.exp %217 : vector<8x32xf32>
    %cst_68 = arith.constant 1.000000e+00 : f32
    %219 = vector.broadcast %cst_68 : f32 to vector<8x32xf32>
    %220 = arith.addf %219, %218 : vector<8x32xf32>
    %221 = arith.divf %219, %220 : vector<8x32xf32>
    %222 = arith.mulf %213, %164 : vector<8x32xf32>
    %223 = arith.mulf %207, %215 : vector<8x32xf32>
    %224 = arith.addf %222, %223 : vector<8x32xf32>
    %225 = math.tanh %224 : vector<8x32xf32>
    %226 = arith.mulf %221, %225 : vector<8x32xf32>
    %c0_69 = arith.constant 0 : index
    %c0_70 = arith.constant 0 : index
    %227 = vector.load %arg16[%c0_69, %c0_70] : memref<32x128xf32, #tpu.memory_space<vmem>>, vector<32x128xf32>
    %cst_71 = arith.constant dense<0.000000e+00> : vector<8x128xf32>
    %228 = tpu.matmul %226, %227, %cst_71 {dimension_numbers = #tpu.dot_dimension_numbers<[1], [0], [0], [1], [0, 0, 1, 1], [], []>} : vector<8x32xf32>, vector<32x128xf32>, vector<8x128xf32> -> vector<8x128xf32>
    %c0_72 = arith.constant 0 : index
    %c0_73 = arith.constant 0 : index
    %229 = vector.load %arg17[%c0_72, %c0_73] : memref<32x128xf32, #tpu.memory_space<vmem>>, vector<32x128xf32>
    %cst_74 = arith.constant dense<0.000000e+00> : vector<8x128xf32>
    %230 = tpu.matmul %197, %229, %cst_74 {dimension_numbers = #tpu.dot_dimension_numbers<[1], [0], [0], [1], [0, 0, 1, 1], [], []>} : vector<8x32xf32>, vector<32x128xf32>, vector<8x128xf32> -> vector<8x128xf32>
    %231 = arith.addf %228, %230 : vector<8x128xf32>
    %232 = arith.addf %231, %9 : vector<8x128xf32>
    %233 = vector.extract_strided_slice %232 {offsets = [0, 0], sizes = [8, 32], strides = [1, 1]} : vector<8x128xf32> to vector<8x32xf32>
    %234 = arith.negf %233 : vector<8x32xf32>
    %235 = math.exp %234 : vector<8x32xf32>
    %cst_75 = arith.constant 1.000000e+00 : f32
    %236 = vector.broadcast %cst_75 : f32 to vector<8x32xf32>
    %237 = arith.addf %236, %235 : vector<8x32xf32>
    %238 = arith.divf %236, %237 : vector<8x32xf32>
    %239 = vector.extract_strided_slice %232 {offsets = [0, 32], sizes = [8, 32], strides = [1, 1]} : vector<8x128xf32> to vector<8x32xf32>
    %240 = arith.negf %239 : vector<8x32xf32>
    %241 = math.exp %240 : vector<8x32xf32>
    %cst_76 = arith.constant 1.000000e+00 : f32
    %242 = vector.broadcast %cst_76 : f32 to vector<8x32xf32>
    %243 = arith.addf %242, %241 : vector<8x32xf32>
    %244 = arith.divf %242, %243 : vector<8x32xf32>
    %245 = vector.extract_strided_slice %232 {offsets = [0, 64], sizes = [8, 32], strides = [1, 1]} : vector<8x128xf32> to vector<8x32xf32>
    %246 = math.tanh %245 : vector<8x32xf32>
    %247 = vector.extract_strided_slice %232 {offsets = [0, 96], sizes = [8, 32], strides = [1, 1]} : vector<8x128xf32> to vector<8x32xf32>
    %248 = arith.negf %247 : vector<8x32xf32>
    %249 = math.exp %248 : vector<8x32xf32>
    %cst_77 = arith.constant 1.000000e+00 : f32
    %250 = vector.broadcast %cst_77 : f32 to vector<8x32xf32>
    %251 = arith.addf %250, %249 : vector<8x32xf32>
    %252 = arith.divf %250, %251 : vector<8x32xf32>
    %253 = arith.mulf %244, %195 : vector<8x32xf32>
    %254 = arith.mulf %238, %246 : vector<8x32xf32>
    %255 = arith.addf %253, %254 : vector<8x32xf32>
    %256 = math.tanh %255 : vector<8x32xf32>
    %257 = arith.mulf %252, %256 : vector<8x32xf32>
    %258 = vector.extract_strided_slice %6 {offsets = [32, 0], sizes = [8, 128], strides = [1, 1]} : vector<64x128xf32> to vector<8x128xf32>
    %c0_78 = arith.constant 0 : index
    %c0_79 = arith.constant 0 : index
    %259 = vector.load %arg14[%c0_78, %c0_79] : memref<32x128xf32, #tpu.memory_space<vmem>>, vector<32x128xf32>
    %cst_80 = arith.constant dense<0.000000e+00> : vector<8x128xf32>
    %260 = tpu.matmul %226, %259, %cst_80 {dimension_numbers = #tpu.dot_dimension_numbers<[1], [0], [0], [1], [0, 0, 1, 1], [], []>} : vector<8x32xf32>, vector<32x128xf32>, vector<8x128xf32> -> vector<8x128xf32>
    %261 = arith.addf %258, %260 : vector<8x128xf32>
    %262 = vector.extract_strided_slice %261 {offsets = [0, 0], sizes = [8, 32], strides = [1, 1]} : vector<8x128xf32> to vector<8x32xf32>
    %263 = arith.negf %262 : vector<8x32xf32>
    %264 = math.exp %263 : vector<8x32xf32>
    %cst_81 = arith.constant 1.000000e+00 : f32
    %265 = vector.broadcast %cst_81 : f32 to vector<8x32xf32>
    %266 = arith.addf %265, %264 : vector<8x32xf32>
    %267 = arith.divf %265, %266 : vector<8x32xf32>
    %268 = vector.extract_strided_slice %261 {offsets = [0, 32], sizes = [8, 32], strides = [1, 1]} : vector<8x128xf32> to vector<8x32xf32>
    %269 = arith.negf %268 : vector<8x32xf32>
    %270 = math.exp %269 : vector<8x32xf32>
    %cst_82 = arith.constant 1.000000e+00 : f32
    %271 = vector.broadcast %cst_82 : f32 to vector<8x32xf32>
    %272 = arith.addf %271, %270 : vector<8x32xf32>
    %273 = arith.divf %271, %272 : vector<8x32xf32>
    %274 = vector.extract_strided_slice %261 {offsets = [0, 64], sizes = [8, 32], strides = [1, 1]} : vector<8x128xf32> to vector<8x32xf32>
    %275 = math.tanh %274 : vector<8x32xf32>
    %276 = vector.extract_strided_slice %261 {offsets = [0, 96], sizes = [8, 32], strides = [1, 1]} : vector<8x128xf32> to vector<8x32xf32>
    %277 = arith.negf %276 : vector<8x32xf32>
    %278 = math.exp %277 : vector<8x32xf32>
    %cst_83 = arith.constant 1.000000e+00 : f32
    %279 = vector.broadcast %cst_83 : f32 to vector<8x32xf32>
    %280 = arith.addf %279, %278 : vector<8x32xf32>
    %281 = arith.divf %279, %280 : vector<8x32xf32>
    %282 = arith.mulf %273, %224 : vector<8x32xf32>
    %283 = arith.mulf %267, %275 : vector<8x32xf32>
    %284 = arith.addf %282, %283 : vector<8x32xf32>
    %285 = math.tanh %284 : vector<8x32xf32>
    %286 = arith.mulf %281, %285 : vector<8x32xf32>
    %c0_84 = arith.constant 0 : index
    %c0_85 = arith.constant 0 : index
    %287 = vector.load %arg16[%c0_84, %c0_85] : memref<32x128xf32, #tpu.memory_space<vmem>>, vector<32x128xf32>
    %cst_86 = arith.constant dense<0.000000e+00> : vector<8x128xf32>
    %288 = tpu.matmul %286, %287, %cst_86 {dimension_numbers = #tpu.dot_dimension_numbers<[1], [0], [0], [1], [0, 0, 1, 1], [], []>} : vector<8x32xf32>, vector<32x128xf32>, vector<8x128xf32> -> vector<8x128xf32>
    %c0_87 = arith.constant 0 : index
    %c0_88 = arith.constant 0 : index
    %289 = vector.load %arg17[%c0_87, %c0_88] : memref<32x128xf32, #tpu.memory_space<vmem>>, vector<32x128xf32>
    %cst_89 = arith.constant dense<0.000000e+00> : vector<8x128xf32>
    %290 = tpu.matmul %257, %289, %cst_89 {dimension_numbers = #tpu.dot_dimension_numbers<[1], [0], [0], [1], [0, 0, 1, 1], [], []>} : vector<8x32xf32>, vector<32x128xf32>, vector<8x128xf32> -> vector<8x128xf32>
    %291 = arith.addf %288, %290 : vector<8x128xf32>
    %292 = arith.addf %291, %9 : vector<8x128xf32>
    %293 = vector.extract_strided_slice %292 {offsets = [0, 0], sizes = [8, 32], strides = [1, 1]} : vector<8x128xf32> to vector<8x32xf32>
    %294 = arith.negf %293 : vector<8x32xf32>
    %295 = math.exp %294 : vector<8x32xf32>
    %cst_90 = arith.constant 1.000000e+00 : f32
    %296 = vector.broadcast %cst_90 : f32 to vector<8x32xf32>
    %297 = arith.addf %296, %295 : vector<8x32xf32>
    %298 = arith.divf %296, %297 : vector<8x32xf32>
    %299 = vector.extract_strided_slice %292 {offsets = [0, 32], sizes = [8, 32], strides = [1, 1]} : vector<8x128xf32> to vector<8x32xf32>
    %300 = arith.negf %299 : vector<8x32xf32>
    %301 = math.exp %300 : vector<8x32xf32>
    %cst_91 = arith.constant 1.000000e+00 : f32
    %302 = vector.broadcast %cst_91 : f32 to vector<8x32xf32>
    %303 = arith.addf %302, %301 : vector<8x32xf32>
    %304 = arith.divf %302, %303 : vector<8x32xf32>
    %305 = vector.extract_strided_slice %292 {offsets = [0, 64], sizes = [8, 32], strides = [1, 1]} : vector<8x128xf32> to vector<8x32xf32>
    %306 = math.tanh %305 : vector<8x32xf32>
    %307 = vector.extract_strided_slice %292 {offsets = [0, 96], sizes = [8, 32], strides = [1, 1]} : vector<8x128xf32> to vector<8x32xf32>
    %308 = arith.negf %307 : vector<8x32xf32>
    %309 = math.exp %308 : vector<8x32xf32>
    %cst_92 = arith.constant 1.000000e+00 : f32
    %310 = vector.broadcast %cst_92 : f32 to vector<8x32xf32>
    %311 = arith.addf %310, %309 : vector<8x32xf32>
    %312 = arith.divf %310, %311 : vector<8x32xf32>
    %313 = arith.mulf %304, %255 : vector<8x32xf32>
    %314 = arith.mulf %298, %306 : vector<8x32xf32>
    %315 = arith.addf %313, %314 : vector<8x32xf32>
    %316 = math.tanh %315 : vector<8x32xf32>
    %317 = arith.mulf %312, %316 : vector<8x32xf32>
    %318 = vector.extract_strided_slice %6 {offsets = [40, 0], sizes = [8, 128], strides = [1, 1]} : vector<64x128xf32> to vector<8x128xf32>
    %c0_93 = arith.constant 0 : index
    %c0_94 = arith.constant 0 : index
    %319 = vector.load %arg14[%c0_93, %c0_94] : memref<32x128xf32, #tpu.memory_space<vmem>>, vector<32x128xf32>
    %cst_95 = arith.constant dense<0.000000e+00> : vector<8x128xf32>
    %320 = tpu.matmul %286, %319, %cst_95 {dimension_numbers = #tpu.dot_dimension_numbers<[1], [0], [0], [1], [0, 0, 1, 1], [], []>} : vector<8x32xf32>, vector<32x128xf32>, vector<8x128xf32> -> vector<8x128xf32>
    %321 = arith.addf %318, %320 : vector<8x128xf32>
    %322 = vector.extract_strided_slice %321 {offsets = [0, 0], sizes = [8, 32], strides = [1, 1]} : vector<8x128xf32> to vector<8x32xf32>
    %323 = arith.negf %322 : vector<8x32xf32>
    %324 = math.exp %323 : vector<8x32xf32>
    %cst_96 = arith.constant 1.000000e+00 : f32
    %325 = vector.broadcast %cst_96 : f32 to vector<8x32xf32>
    %326 = arith.addf %325, %324 : vector<8x32xf32>
    %327 = arith.divf %325, %326 : vector<8x32xf32>
    %328 = vector.extract_strided_slice %321 {offsets = [0, 32], sizes = [8, 32], strides = [1, 1]} : vector<8x128xf32> to vector<8x32xf32>
    %329 = arith.negf %328 : vector<8x32xf32>
    %330 = math.exp %329 : vector<8x32xf32>
    %cst_97 = arith.constant 1.000000e+00 : f32
    %331 = vector.broadcast %cst_97 : f32 to vector<8x32xf32>
    %332 = arith.addf %331, %330 : vector<8x32xf32>
    %333 = arith.divf %331, %332 : vector<8x32xf32>
    %334 = vector.extract_strided_slice %321 {offsets = [0, 64], sizes = [8, 32], strides = [1, 1]} : vector<8x128xf32> to vector<8x32xf32>
    %335 = math.tanh %334 : vector<8x32xf32>
    %336 = vector.extract_strided_slice %321 {offsets = [0, 96], sizes = [8, 32], strides = [1, 1]} : vector<8x128xf32> to vector<8x32xf32>
    %337 = arith.negf %336 : vector<8x32xf32>
    %338 = math.exp %337 : vector<8x32xf32>
    %cst_98 = arith.constant 1.000000e+00 : f32
    %339 = vector.broadcast %cst_98 : f32 to vector<8x32xf32>
    %340 = arith.addf %339, %338 : vector<8x32xf32>
    %341 = arith.divf %339, %340 : vector<8x32xf32>
    %342 = arith.mulf %333, %284 : vector<8x32xf32>
    %343 = arith.mulf %327, %335 : vector<8x32xf32>
    %344 = arith.addf %342, %343 : vector<8x32xf32>
    %345 = math.tanh %344 : vector<8x32xf32>
    %346 = arith.mulf %341, %345 : vector<8x32xf32>
    %c0_99 = arith.constant 0 : index
    %c0_100 = arith.constant 0 : index
    %347 = vector.load %arg16[%c0_99, %c0_100] : memref<32x128xf32, #tpu.memory_space<vmem>>, vector<32x128xf32>
    %cst_101 = arith.constant dense<0.000000e+00> : vector<8x128xf32>
    %348 = tpu.matmul %346, %347, %cst_101 {dimension_numbers = #tpu.dot_dimension_numbers<[1], [0], [0], [1], [0, 0, 1, 1], [], []>} : vector<8x32xf32>, vector<32x128xf32>, vector<8x128xf32> -> vector<8x128xf32>
    %c0_102 = arith.constant 0 : index
    %c0_103 = arith.constant 0 : index
    %349 = vector.load %arg17[%c0_102, %c0_103] : memref<32x128xf32, #tpu.memory_space<vmem>>, vector<32x128xf32>
    %cst_104 = arith.constant dense<0.000000e+00> : vector<8x128xf32>
    %350 = tpu.matmul %317, %349, %cst_104 {dimension_numbers = #tpu.dot_dimension_numbers<[1], [0], [0], [1], [0, 0, 1, 1], [], []>} : vector<8x32xf32>, vector<32x128xf32>, vector<8x128xf32> -> vector<8x128xf32>
    %351 = arith.addf %348, %350 : vector<8x128xf32>
    %352 = arith.addf %351, %9 : vector<8x128xf32>
    %353 = vector.extract_strided_slice %352 {offsets = [0, 0], sizes = [8, 32], strides = [1, 1]} : vector<8x128xf32> to vector<8x32xf32>
    %354 = arith.negf %353 : vector<8x32xf32>
    %355 = math.exp %354 : vector<8x32xf32>
    %cst_105 = arith.constant 1.000000e+00 : f32
    %356 = vector.broadcast %cst_105 : f32 to vector<8x32xf32>
    %357 = arith.addf %356, %355 : vector<8x32xf32>
    %358 = arith.divf %356, %357 : vector<8x32xf32>
    %359 = vector.extract_strided_slice %352 {offsets = [0, 32], sizes = [8, 32], strides = [1, 1]} : vector<8x128xf32> to vector<8x32xf32>
    %360 = arith.negf %359 : vector<8x32xf32>
    %361 = math.exp %360 : vector<8x32xf32>
    %cst_106 = arith.constant 1.000000e+00 : f32
    %362 = vector.broadcast %cst_106 : f32 to vector<8x32xf32>
    %363 = arith.addf %362, %361 : vector<8x32xf32>
    %364 = arith.divf %362, %363 : vector<8x32xf32>
    %365 = vector.extract_strided_slice %352 {offsets = [0, 64], sizes = [8, 32], strides = [1, 1]} : vector<8x128xf32> to vector<8x32xf32>
    %366 = math.tanh %365 : vector<8x32xf32>
    %367 = vector.extract_strided_slice %352 {offsets = [0, 96], sizes = [8, 32], strides = [1, 1]} : vector<8x128xf32> to vector<8x32xf32>
    %368 = arith.negf %367 : vector<8x32xf32>
    %369 = math.exp %368 : vector<8x32xf32>
    %cst_107 = arith.constant 1.000000e+00 : f32
    %370 = vector.broadcast %cst_107 : f32 to vector<8x32xf32>
    %371 = arith.addf %370, %369 : vector<8x32xf32>
    %372 = arith.divf %370, %371 : vector<8x32xf32>
    %373 = arith.mulf %364, %315 : vector<8x32xf32>
    %374 = arith.mulf %358, %366 : vector<8x32xf32>
    %375 = arith.addf %373, %374 : vector<8x32xf32>
    %376 = math.tanh %375 : vector<8x32xf32>
    %377 = arith.mulf %372, %376 : vector<8x32xf32>
    %378 = vector.extract_strided_slice %6 {offsets = [48, 0], sizes = [8, 128], strides = [1, 1]} : vector<64x128xf32> to vector<8x128xf32>
    %c0_108 = arith.constant 0 : index
    %c0_109 = arith.constant 0 : index
    %379 = vector.load %arg14[%c0_108, %c0_109] : memref<32x128xf32, #tpu.memory_space<vmem>>, vector<32x128xf32>
    %cst_110 = arith.constant dense<0.000000e+00> : vector<8x128xf32>
    %380 = tpu.matmul %346, %379, %cst_110 {dimension_numbers = #tpu.dot_dimension_numbers<[1], [0], [0], [1], [0, 0, 1, 1], [], []>} : vector<8x32xf32>, vector<32x128xf32>, vector<8x128xf32> -> vector<8x128xf32>
    %381 = arith.addf %378, %380 : vector<8x128xf32>
    %382 = vector.extract_strided_slice %381 {offsets = [0, 0], sizes = [8, 32], strides = [1, 1]} : vector<8x128xf32> to vector<8x32xf32>
    %383 = arith.negf %382 : vector<8x32xf32>
    %384 = math.exp %383 : vector<8x32xf32>
    %cst_111 = arith.constant 1.000000e+00 : f32
    %385 = vector.broadcast %cst_111 : f32 to vector<8x32xf32>
    %386 = arith.addf %385, %384 : vector<8x32xf32>
    %387 = arith.divf %385, %386 : vector<8x32xf32>
    %388 = vector.extract_strided_slice %381 {offsets = [0, 32], sizes = [8, 32], strides = [1, 1]} : vector<8x128xf32> to vector<8x32xf32>
    %389 = arith.negf %388 : vector<8x32xf32>
    %390 = math.exp %389 : vector<8x32xf32>
    %cst_112 = arith.constant 1.000000e+00 : f32
    %391 = vector.broadcast %cst_112 : f32 to vector<8x32xf32>
    %392 = arith.addf %391, %390 : vector<8x32xf32>
    %393 = arith.divf %391, %392 : vector<8x32xf32>
    %394 = vector.extract_strided_slice %381 {offsets = [0, 64], sizes = [8, 32], strides = [1, 1]} : vector<8x128xf32> to vector<8x32xf32>
    %395 = math.tanh %394 : vector<8x32xf32>
    %396 = vector.extract_strided_slice %381 {offsets = [0, 96], sizes = [8, 32], strides = [1, 1]} : vector<8x128xf32> to vector<8x32xf32>
    %397 = arith.negf %396 : vector<8x32xf32>
    %398 = math.exp %397 : vector<8x32xf32>
    %cst_113 = arith.constant 1.000000e+00 : f32
    %399 = vector.broadcast %cst_113 : f32 to vector<8x32xf32>
    %400 = arith.addf %399, %398 : vector<8x32xf32>
    %401 = arith.divf %399, %400 : vector<8x32xf32>
    %402 = arith.mulf %393, %344 : vector<8x32xf32>
    %403 = arith.mulf %387, %395 : vector<8x32xf32>
    %404 = arith.addf %402, %403 : vector<8x32xf32>
    %405 = math.tanh %404 : vector<8x32xf32>
    %406 = arith.mulf %401, %405 : vector<8x32xf32>
    %c0_114 = arith.constant 0 : index
    %c0_115 = arith.constant 0 : index
    %407 = vector.load %arg16[%c0_114, %c0_115] : memref<32x128xf32, #tpu.memory_space<vmem>>, vector<32x128xf32>
    %cst_116 = arith.constant dense<0.000000e+00> : vector<8x128xf32>
    %408 = tpu.matmul %406, %407, %cst_116 {dimension_numbers = #tpu.dot_dimension_numbers<[1], [0], [0], [1], [0, 0, 1, 1], [], []>} : vector<8x32xf32>, vector<32x128xf32>, vector<8x128xf32> -> vector<8x128xf32>
    %c0_117 = arith.constant 0 : index
    %c0_118 = arith.constant 0 : index
    %409 = vector.load %arg17[%c0_117, %c0_118] : memref<32x128xf32, #tpu.memory_space<vmem>>, vector<32x128xf32>
    %cst_119 = arith.constant dense<0.000000e+00> : vector<8x128xf32>
    %410 = tpu.matmul %377, %409, %cst_119 {dimension_numbers = #tpu.dot_dimension_numbers<[1], [0], [0], [1], [0, 0, 1, 1], [], []>} : vector<8x32xf32>, vector<32x128xf32>, vector<8x128xf32> -> vector<8x128xf32>
    %411 = arith.addf %408, %410 : vector<8x128xf32>
    %412 = arith.addf %411, %9 : vector<8x128xf32>
    %413 = vector.extract_strided_slice %412 {offsets = [0, 0], sizes = [8, 32], strides = [1, 1]} : vector<8x128xf32> to vector<8x32xf32>
    %414 = arith.negf %413 : vector<8x32xf32>
    %415 = math.exp %414 : vector<8x32xf32>
    %cst_120 = arith.constant 1.000000e+00 : f32
    %416 = vector.broadcast %cst_120 : f32 to vector<8x32xf32>
    %417 = arith.addf %416, %415 : vector<8x32xf32>
    %418 = arith.divf %416, %417 : vector<8x32xf32>
    %419 = vector.extract_strided_slice %412 {offsets = [0, 32], sizes = [8, 32], strides = [1, 1]} : vector<8x128xf32> to vector<8x32xf32>
    %420 = arith.negf %419 : vector<8x32xf32>
    %421 = math.exp %420 : vector<8x32xf32>
    %cst_121 = arith.constant 1.000000e+00 : f32
    %422 = vector.broadcast %cst_121 : f32 to vector<8x32xf32>
    %423 = arith.addf %422, %421 : vector<8x32xf32>
    %424 = arith.divf %422, %423 : vector<8x32xf32>
    %425 = vector.extract_strided_slice %412 {offsets = [0, 64], sizes = [8, 32], strides = [1, 1]} : vector<8x128xf32> to vector<8x32xf32>
    %426 = math.tanh %425 : vector<8x32xf32>
    %427 = vector.extract_strided_slice %412 {offsets = [0, 96], sizes = [8, 32], strides = [1, 1]} : vector<8x128xf32> to vector<8x32xf32>
    %428 = arith.negf %427 : vector<8x32xf32>
    %429 = math.exp %428 : vector<8x32xf32>
    %cst_122 = arith.constant 1.000000e+00 : f32
    %430 = vector.broadcast %cst_122 : f32 to vector<8x32xf32>
    %431 = arith.addf %430, %429 : vector<8x32xf32>
    %432 = arith.divf %430, %431 : vector<8x32xf32>
    %433 = arith.mulf %424, %375 : vector<8x32xf32>
    %434 = arith.mulf %418, %426 : vector<8x32xf32>
    %435 = arith.addf %433, %434 : vector<8x32xf32>
    %436 = math.tanh %435 : vector<8x32xf32>
    %437 = arith.mulf %432, %436 : vector<8x32xf32>
    %438 = vector.extract_strided_slice %6 {offsets = [56, 0], sizes = [8, 128], strides = [1, 1]} : vector<64x128xf32> to vector<8x128xf32>
    %c0_123 = arith.constant 0 : index
    %c0_124 = arith.constant 0 : index
    %439 = vector.load %arg14[%c0_123, %c0_124] : memref<32x128xf32, #tpu.memory_space<vmem>>, vector<32x128xf32>
    %cst_125 = arith.constant dense<0.000000e+00> : vector<8x128xf32>
    %440 = tpu.matmul %406, %439, %cst_125 {dimension_numbers = #tpu.dot_dimension_numbers<[1], [0], [0], [1], [0, 0, 1, 1], [], []>} : vector<8x32xf32>, vector<32x128xf32>, vector<8x128xf32> -> vector<8x128xf32>
    %441 = arith.addf %438, %440 : vector<8x128xf32>
    %442 = vector.extract_strided_slice %441 {offsets = [0, 0], sizes = [8, 32], strides = [1, 1]} : vector<8x128xf32> to vector<8x32xf32>
    %443 = arith.negf %442 : vector<8x32xf32>
    %444 = math.exp %443 : vector<8x32xf32>
    %cst_126 = arith.constant 1.000000e+00 : f32
    %445 = vector.broadcast %cst_126 : f32 to vector<8x32xf32>
    %446 = arith.addf %445, %444 : vector<8x32xf32>
    %447 = arith.divf %445, %446 : vector<8x32xf32>
    %448 = vector.extract_strided_slice %441 {offsets = [0, 32], sizes = [8, 32], strides = [1, 1]} : vector<8x128xf32> to vector<8x32xf32>
    %449 = arith.negf %448 : vector<8x32xf32>
    %450 = math.exp %449 : vector<8x32xf32>
    %cst_127 = arith.constant 1.000000e+00 : f32
    %451 = vector.broadcast %cst_127 : f32 to vector<8x32xf32>
    %452 = arith.addf %451, %450 : vector<8x32xf32>
    %453 = arith.divf %451, %452 : vector<8x32xf32>
    %454 = vector.extract_strided_slice %441 {offsets = [0, 64], sizes = [8, 32], strides = [1, 1]} : vector<8x128xf32> to vector<8x32xf32>
    %455 = math.tanh %454 : vector<8x32xf32>
    %456 = vector.extract_strided_slice %441 {offsets = [0, 96], sizes = [8, 32], strides = [1, 1]} : vector<8x128xf32> to vector<8x32xf32>
    %457 = arith.negf %456 : vector<8x32xf32>
    %458 = math.exp %457 : vector<8x32xf32>
    %cst_128 = arith.constant 1.000000e+00 : f32
    %459 = vector.broadcast %cst_128 : f32 to vector<8x32xf32>
    %460 = arith.addf %459, %458 : vector<8x32xf32>
    %461 = arith.divf %459, %460 : vector<8x32xf32>
    %462 = arith.mulf %453, %404 : vector<8x32xf32>
    %463 = arith.mulf %447, %455 : vector<8x32xf32>
    %464 = arith.addf %462, %463 : vector<8x32xf32>
    %465 = math.tanh %464 : vector<8x32xf32>
    %466 = arith.mulf %461, %465 : vector<8x32xf32>
    %c0_129 = arith.constant 0 : index
    %c0_130 = arith.constant 0 : index
    %467 = vector.load %arg16[%c0_129, %c0_130] : memref<32x128xf32, #tpu.memory_space<vmem>>, vector<32x128xf32>
    %cst_131 = arith.constant dense<0.000000e+00> : vector<8x128xf32>
    %468 = tpu.matmul %466, %467, %cst_131 {dimension_numbers = #tpu.dot_dimension_numbers<[1], [0], [0], [1], [0, 0, 1, 1], [], []>} : vector<8x32xf32>, vector<32x128xf32>, vector<8x128xf32> -> vector<8x128xf32>
    %c0_132 = arith.constant 0 : index
    %c0_133 = arith.constant 0 : index
    %469 = vector.load %arg17[%c0_132, %c0_133] : memref<32x128xf32, #tpu.memory_space<vmem>>, vector<32x128xf32>
    %cst_134 = arith.constant dense<0.000000e+00> : vector<8x128xf32>
    %470 = tpu.matmul %437, %469, %cst_134 {dimension_numbers = #tpu.dot_dimension_numbers<[1], [0], [0], [1], [0, 0, 1, 1], [], []>} : vector<8x32xf32>, vector<32x128xf32>, vector<8x128xf32> -> vector<8x128xf32>
    %471 = arith.addf %468, %470 : vector<8x128xf32>
    %472 = arith.addf %471, %9 : vector<8x128xf32>
    %473 = vector.extract_strided_slice %472 {offsets = [0, 0], sizes = [8, 32], strides = [1, 1]} : vector<8x128xf32> to vector<8x32xf32>
    %474 = arith.negf %473 : vector<8x32xf32>
    %475 = math.exp %474 : vector<8x32xf32>
    %cst_135 = arith.constant 1.000000e+00 : f32
    %476 = vector.broadcast %cst_135 : f32 to vector<8x32xf32>
    %477 = arith.addf %476, %475 : vector<8x32xf32>
    %478 = arith.divf %476, %477 : vector<8x32xf32>
    %479 = vector.extract_strided_slice %472 {offsets = [0, 32], sizes = [8, 32], strides = [1, 1]} : vector<8x128xf32> to vector<8x32xf32>
    %480 = arith.negf %479 : vector<8x32xf32>
    %481 = math.exp %480 : vector<8x32xf32>
    %cst_136 = arith.constant 1.000000e+00 : f32
    %482 = vector.broadcast %cst_136 : f32 to vector<8x32xf32>
    %483 = arith.addf %482, %481 : vector<8x32xf32>
    %484 = arith.divf %482, %483 : vector<8x32xf32>
    %485 = vector.extract_strided_slice %472 {offsets = [0, 64], sizes = [8, 32], strides = [1, 1]} : vector<8x128xf32> to vector<8x32xf32>
    %486 = math.tanh %485 : vector<8x32xf32>
    %487 = vector.extract_strided_slice %472 {offsets = [0, 96], sizes = [8, 32], strides = [1, 1]} : vector<8x128xf32> to vector<8x32xf32>
    %488 = arith.negf %487 : vector<8x32xf32>
    %489 = math.exp %488 : vector<8x32xf32>
    %cst_137 = arith.constant 1.000000e+00 : f32
    %490 = vector.broadcast %cst_137 : f32 to vector<8x32xf32>
    %491 = arith.addf %490, %489 : vector<8x32xf32>
    %492 = arith.divf %490, %491 : vector<8x32xf32>
    %493 = arith.mulf %484, %435 : vector<8x32xf32>
    %494 = arith.mulf %478, %486 : vector<8x32xf32>
    %495 = arith.addf %493, %494 : vector<8x32xf32>
    %496 = math.tanh %495 : vector<8x32xf32>
    %497 = arith.mulf %492, %496 : vector<8x32xf32>
    %498 = tpu.concatenate %77, %137, %197, %257, %317, %377, %437, %497 in 0 : vector<8x32xf32>, vector<8x32xf32>, vector<8x32xf32>, vector<8x32xf32>, vector<8x32xf32>, vector<8x32xf32>, vector<8x32xf32>, vector<8x32xf32> -> vector<64x32xf32>
    %c0_138 = arith.constant 0 : index
    %c0_139 = arith.constant 0 : index
    %499 = vector.load %arg20[%c0_138, %c0_139] : memref<1x32xf32, #tpu.memory_space<vmem>>, vector<1x32xf32>
    %500 = vector.shape_cast %499 : vector<1x32xf32> to vector<1x32xf32>
    %501 = vector.broadcast %500 : vector<1x32xf32> to vector<64x32xf32>
    %c0_140 = arith.constant 0 : index
    %c0_141 = arith.constant 0 : index
    %502 = vector.load %arg22[%c0_140, %c0_141] : memref<1x32xf32, #tpu.memory_space<vmem>>, vector<1x32xf32>
    %503 = vector.shape_cast %502 : vector<1x32xf32> to vector<1x32xf32>
    %504 = vector.broadcast %503 : vector<1x32xf32> to vector<64x32xf32>
    %c0_142 = arith.constant 0 : index
    %c0_143 = arith.constant 0 : index
    %505 = vector.load %arg3[%c0_142, %c0_143] : memref<64x32xf32, #tpu.memory_space<vmem>>, vector<64x32xf32>
    %506 = arith.addf %498, %505 : vector<64x32xf32>
    %c0_144 = arith.constant 0 : index
    %c0_145 = arith.constant 0 : index
    %507 = vector.load %arg19[%c0_144, %c0_145] : memref<32x32xf32, #tpu.memory_space<vmem>>, vector<32x32xf32>
    %cst_146 = arith.constant dense<0.000000e+00> : vector<64x32xf32>
    %508 = tpu.matmul %506, %507, %cst_146 {dimension_numbers = #tpu.dot_dimension_numbers<[1], [0], [0], [1], [0, 0, 1, 1], [], []>} : vector<64x32xf32>, vector<32x32xf32>, vector<64x32xf32> -> vector<64x32xf32>
    %509 = arith.addf %508, %501 : vector<64x32xf32>
    %c0_147 = arith.constant 0 : index
    %c0_148 = arith.constant 0 : index
    %510 = vector.load %arg9[%c0_147, %c0_148] : memref<32x64xf32, #tpu.memory_space<vmem>>, vector<32x64xf32>
    %cst_149 = arith.constant dense<0.000000e+00> : vector<64x64xf32>
    %511 = tpu.matmul %509, %510, %cst_149 {dimension_numbers = #tpu.dot_dimension_numbers<[1], [0], [0], [1], [0, 0, 1, 1], [], []>} : vector<64x32xf32>, vector<32x64xf32>, vector<64x64xf32> -> vector<64x64xf32>
    %c0_150 = arith.constant 0 : index
    %c0_151 = arith.constant 0 : index
    %512 = vector.load %arg12[%c0_150, %c0_151] : memref<64x64xf32, #tpu.memory_space<vmem>>, vector<64x64xf32>
    %513 = arith.addf %511, %512 : vector<64x64xf32>
    %cst_152 = arith.constant dense<0xFF800000> : vector<64xf32>
    %514 = vector.multi_reduction <maximumf>, %513, %cst_152 [1] : vector<64x64xf32> to vector<64xf32>
    %515 = vector.shape_cast %514 : vector<64xf32> to vector<64x1xf32>
    %516 = vector.broadcast %515 : vector<64x1xf32> to vector<64x64xf32>
    %517 = arith.subf %513, %516 : vector<64x64xf32>
    %518 = math.exp %517 : vector<64x64xf32>
    %cst_153 = arith.constant dense<0.000000e+00> : vector<64xf32>
    %519 = vector.multi_reduction <add>, %518, %cst_153 [1] : vector<64x64xf32> to vector<64xf32>
    %520 = vector.shape_cast %519 : vector<64xf32> to vector<64x1xf32>
    %521 = tpu.reciprocal %520 {approx = true} : vector<64x1xf32> -> vector<64x1xf32>
    %522 = arith.mulf %520, %521 : vector<64x1xf32>
    %cst_154 = arith.constant 2.000000e+00 : f32
    %523 = vector.broadcast %cst_154 : f32 to vector<64x1xf32>
    %524 = arith.subf %523, %522 : vector<64x1xf32>
    %525 = arith.mulf %521, %524 : vector<64x1xf32>
    %526 = vector.broadcast %525 : vector<64x1xf32> to vector<64x64xf32>
    %527 = arith.mulf %518, %526 : vector<64x64xf32>
    %c0_155 = arith.constant 0 : index
    %c0_156 = arith.constant 0 : index
    %528 = vector.load %arg8[%c0_155, %c0_156] : memref<64x32xf32, #tpu.memory_space<vmem>>, vector<64x32xf32>
    %cst_157 = arith.constant dense<0.000000e+00> : vector<64x32xf32>
    %529 = tpu.matmul %527, %528, %cst_157 {dimension_numbers = #tpu.dot_dimension_numbers<[1], [0], [0], [1], [0, 0, 1, 1], [], []>} : vector<64x64xf32>, vector<64x32xf32>, vector<64x32xf32> -> vector<64x32xf32>
    %530 = tpu.concatenate %529, %506 in 1 : vector<64x32xf32>, vector<64x32xf32> -> vector<64x64xf32>
    %c0_158 = arith.constant 0 : index
    %c0_159 = arith.constant 0 : index
    %531 = vector.load %arg21[%c0_158, %c0_159] : memref<64x32xf32, #tpu.memory_space<vmem>>, vector<64x32xf32>
    %cst_160 = arith.constant dense<0.000000e+00> : vector<64x32xf32>
    %532 = tpu.matmul %530, %531, %cst_160 {dimension_numbers = #tpu.dot_dimension_numbers<[1], [0], [0], [1], [0, 0, 1, 1], [], []>} : vector<64x64xf32>, vector<64x32xf32>, vector<64x32xf32> -> vector<64x32xf32>
    %533 = arith.addf %532, %504 : vector<64x32xf32>
    %534 = math.tanh %533 : vector<64x32xf32>
    %535 = arith.addf %506, %534 : vector<64x32xf32>
    %c0_161 = arith.constant 0 : index
    %c0_162 = arith.constant 0 : index
    %536 = vector.load %arg19[%c0_161, %c0_162] : memref<32x32xf32, #tpu.memory_space<vmem>>, vector<32x32xf32>
    %cst_163 = arith.constant dense<0.000000e+00> : vector<64x32xf32>
    %537 = tpu.matmul %535, %536, %cst_163 {dimension_numbers = #tpu.dot_dimension_numbers<[1], [0], [0], [1], [0, 0, 1, 1], [], []>} : vector<64x32xf32>, vector<32x32xf32>, vector<64x32xf32> -> vector<64x32xf32>
    %538 = arith.addf %537, %501 : vector<64x32xf32>
    %c0_164 = arith.constant 0 : index
    %c0_165 = arith.constant 0 : index
    %539 = vector.load %arg7[%c0_164, %c0_165] : memref<32x128xf32, #tpu.memory_space<vmem>>, vector<32x128xf32>
    %cst_166 = arith.constant dense<0.000000e+00> : vector<64x128xf32>
    %540 = tpu.matmul %538, %539, %cst_166 {dimension_numbers = #tpu.dot_dimension_numbers<[1], [0], [0], [1], [0, 0, 1, 1], [], []>} : vector<64x32xf32>, vector<32x128xf32>, vector<64x128xf32> -> vector<64x128xf32>
    %c0_167 = arith.constant 0 : index
    %c0_168 = arith.constant 0 : index
    %541 = vector.load %arg11[%c0_167, %c0_168] : memref<64x128xf32, #tpu.memory_space<vmem>>, vector<64x128xf32>
    %542 = arith.addf %540, %541 : vector<64x128xf32>
    %cst_169 = arith.constant dense<0xFF800000> : vector<64xf32>
    %543 = vector.multi_reduction <maximumf>, %542, %cst_169 [1] : vector<64x128xf32> to vector<64xf32>
    %544 = vector.shape_cast %543 : vector<64xf32> to vector<64x1xf32>
    %545 = vector.broadcast %544 : vector<64x1xf32> to vector<64x128xf32>
    %546 = arith.subf %542, %545 : vector<64x128xf32>
    %547 = math.exp %546 : vector<64x128xf32>
    %cst_170 = arith.constant dense<0.000000e+00> : vector<64xf32>
    %548 = vector.multi_reduction <add>, %547, %cst_170 [1] : vector<64x128xf32> to vector<64xf32>
    %549 = vector.shape_cast %548 : vector<64xf32> to vector<64x1xf32>
    %550 = tpu.reciprocal %549 {approx = true} : vector<64x1xf32> -> vector<64x1xf32>
    %551 = arith.mulf %549, %550 : vector<64x1xf32>
    %cst_171 = arith.constant 2.000000e+00 : f32
    %552 = vector.broadcast %cst_171 : f32 to vector<64x1xf32>
    %553 = arith.subf %552, %551 : vector<64x1xf32>
    %554 = arith.mulf %550, %553 : vector<64x1xf32>
    %555 = vector.broadcast %554 : vector<64x1xf32> to vector<64x128xf32>
    %556 = arith.mulf %547, %555 : vector<64x128xf32>
    %c0_172 = arith.constant 0 : index
    %c0_173 = arith.constant 0 : index
    %557 = vector.load %arg6[%c0_172, %c0_173] : memref<128x32xf32, #tpu.memory_space<vmem>>, vector<128x32xf32>
    %cst_174 = arith.constant dense<0.000000e+00> : vector<64x32xf32>
    %558 = tpu.matmul %556, %557, %cst_174 {dimension_numbers = #tpu.dot_dimension_numbers<[1], [0], [0], [1], [0, 0, 1, 1], [], []>} : vector<64x128xf32>, vector<128x32xf32>, vector<64x32xf32> -> vector<64x32xf32>
    %559 = tpu.concatenate %558, %535 in 1 : vector<64x32xf32>, vector<64x32xf32> -> vector<64x64xf32>
    %c0_175 = arith.constant 0 : index
    %c0_176 = arith.constant 0 : index
    %560 = vector.load %arg21[%c0_175, %c0_176] : memref<64x32xf32, #tpu.memory_space<vmem>>, vector<64x32xf32>
    %cst_177 = arith.constant dense<0.000000e+00> : vector<64x32xf32>
    %561 = tpu.matmul %559, %560, %cst_177 {dimension_numbers = #tpu.dot_dimension_numbers<[1], [0], [0], [1], [0, 0, 1, 1], [], []>} : vector<64x64xf32>, vector<64x32xf32>, vector<64x32xf32> -> vector<64x32xf32>
    %562 = arith.addf %561, %504 : vector<64x32xf32>
    %563 = math.tanh %562 : vector<64x32xf32>
    %564 = arith.addf %535, %563 : vector<64x32xf32>
    %c0_178 = arith.constant 0 : index
    %c0_179 = arith.constant 0 : index
    %565 = vector.load %arg19[%c0_178, %c0_179] : memref<32x32xf32, #tpu.memory_space<vmem>>, vector<32x32xf32>
    %cst_180 = arith.constant dense<0.000000e+00> : vector<64x32xf32>
    %566 = tpu.matmul %564, %565, %cst_180 {dimension_numbers = #tpu.dot_dimension_numbers<[1], [0], [0], [1], [0, 0, 1, 1], [], []>} : vector<64x32xf32>, vector<32x32xf32>, vector<64x32xf32> -> vector<64x32xf32>
    %567 = arith.addf %566, %501 : vector<64x32xf32>
    %c0_181 = arith.constant 0 : index
    %c0_182 = arith.constant 0 : index
    %568 = vector.load %arg5[%c0_181, %c0_182] : memref<32x128xf32, #tpu.memory_space<vmem>>, vector<32x128xf32>
    %cst_183 = arith.constant dense<0.000000e+00> : vector<64x128xf32>
    %569 = tpu.matmul %567, %568, %cst_183 {dimension_numbers = #tpu.dot_dimension_numbers<[1], [0], [0], [1], [0, 0, 1, 1], [], []>} : vector<64x32xf32>, vector<32x128xf32>, vector<64x128xf32> -> vector<64x128xf32>
    %c0_184 = arith.constant 0 : index
    %c0_185 = arith.constant 0 : index
    %570 = vector.load %arg10[%c0_184, %c0_185] : memref<64x128xf32, #tpu.memory_space<vmem>>, vector<64x128xf32>
    %571 = arith.addf %569, %570 : vector<64x128xf32>
    %cst_186 = arith.constant dense<0xFF800000> : vector<64xf32>
    %572 = vector.multi_reduction <maximumf>, %571, %cst_186 [1] : vector<64x128xf32> to vector<64xf32>
    %573 = vector.shape_cast %572 : vector<64xf32> to vector<64x1xf32>
    %574 = vector.broadcast %573 : vector<64x1xf32> to vector<64x128xf32>
    %575 = arith.subf %571, %574 : vector<64x128xf32>
    %576 = math.exp %575 : vector<64x128xf32>
    %cst_187 = arith.constant dense<0.000000e+00> : vector<64xf32>
    %577 = vector.multi_reduction <add>, %576, %cst_187 [1] : vector<64x128xf32> to vector<64xf32>
    %578 = vector.shape_cast %577 : vector<64xf32> to vector<64x1xf32>
    %579 = tpu.reciprocal %578 {approx = true} : vector<64x1xf32> -> vector<64x1xf32>
    %580 = arith.mulf %578, %579 : vector<64x1xf32>
    %cst_188 = arith.constant 2.000000e+00 : f32
    %581 = vector.broadcast %cst_188 : f32 to vector<64x1xf32>
    %582 = arith.subf %581, %580 : vector<64x1xf32>
    %583 = arith.mulf %579, %582 : vector<64x1xf32>
    %584 = vector.broadcast %583 : vector<64x1xf32> to vector<64x128xf32>
    %585 = arith.mulf %576, %584 : vector<64x128xf32>
    %c0_189 = arith.constant 0 : index
    %c0_190 = arith.constant 0 : index
    %586 = vector.load %arg4[%c0_189, %c0_190] : memref<128x32xf32, #tpu.memory_space<vmem>>, vector<128x32xf32>
    %cst_191 = arith.constant dense<0.000000e+00> : vector<64x32xf32>
    %587 = tpu.matmul %585, %586, %cst_191 {dimension_numbers = #tpu.dot_dimension_numbers<[1], [0], [0], [1], [0, 0, 1, 1], [], []>} : vector<64x128xf32>, vector<128x32xf32>, vector<64x32xf32> -> vector<64x32xf32>
    %588 = tpu.concatenate %587, %564 in 1 : vector<64x32xf32>, vector<64x32xf32> -> vector<64x64xf32>
    %c0_192 = arith.constant 0 : index
    %c0_193 = arith.constant 0 : index
    %589 = vector.load %arg21[%c0_192, %c0_193] : memref<64x32xf32, #tpu.memory_space<vmem>>, vector<64x32xf32>
    %cst_194 = arith.constant dense<0.000000e+00> : vector<64x32xf32>
    %590 = tpu.matmul %588, %589, %cst_194 {dimension_numbers = #tpu.dot_dimension_numbers<[1], [0], [0], [1], [0, 0, 1, 1], [], []>} : vector<64x64xf32>, vector<64x32xf32>, vector<64x32xf32> -> vector<64x32xf32>
    %591 = arith.addf %590, %504 : vector<64x32xf32>
    %592 = math.tanh %591 : vector<64x32xf32>
    %593 = arith.addf %564, %592 : vector<64x32xf32>
    %594 = tpu.concatenate %506, %535, %564, %593 in 1 : vector<64x32xf32>, vector<64x32xf32>, vector<64x32xf32>, vector<64x32xf32> -> vector<64x128xf32>
    %c0_195 = arith.constant 0 : index
    %c0_196 = arith.constant 0 : index
    %595 = vector.load %arg23[%c0_195, %c0_196] : memref<128x32xf32, #tpu.memory_space<vmem>>, vector<128x32xf32>
    %cst_197 = arith.constant dense<0.000000e+00> : vector<64x32xf32>
    %596 = tpu.matmul %594, %595, %cst_197 {dimension_numbers = #tpu.dot_dimension_numbers<[1], [0], [0], [1], [0, 0, 1, 1], [], []>} : vector<64x128xf32>, vector<128x32xf32>, vector<64x32xf32> -> vector<64x32xf32>
    %c0_198 = arith.constant 0 : index
    %c0_199 = arith.constant 0 : index
    %597 = vector.load %arg24[%c0_198, %c0_199] : memref<1x32xf32, #tpu.memory_space<vmem>>, vector<1x32xf32>
    %598 = vector.broadcast %597 : vector<1x32xf32> to vector<64x32xf32>
    %599 = arith.addf %596, %598 : vector<64x32xf32>
    %cst_200 = arith.constant 0.000000e+00 : f32
    %600 = vector.broadcast %cst_200 : f32 to vector<64x32xf32>
    %601 = arith.maximumf %599, %600 : vector<64x32xf32>
    %c0_201 = arith.constant 0 : index
    %c0_202 = arith.constant 0 : index
    %602 = vector.load %arg25[%c0_201, %c0_202] : memref<32x32xf32, #tpu.memory_space<vmem>>, vector<32x32xf32>
    %cst_203 = arith.constant dense<0.000000e+00> : vector<64x32xf32>
    %603 = tpu.matmul %601, %602, %cst_203 {dimension_numbers = #tpu.dot_dimension_numbers<[1], [0], [0], [1], [0, 0, 1, 1], [], []>} : vector<64x32xf32>, vector<32x32xf32>, vector<64x32xf32> -> vector<64x32xf32>
    %c0_204 = arith.constant 0 : index
    %c0_205 = arith.constant 0 : index
    %604 = vector.load %arg26[%c0_204, %c0_205] : memref<1x32xf32, #tpu.memory_space<vmem>>, vector<1x32xf32>
    %605 = vector.broadcast %604 : vector<1x32xf32> to vector<64x32xf32>
    %606 = arith.addf %603, %605 : vector<64x32xf32>
    %cst_206 = arith.constant 0.000000e+00 : f32
    %607 = vector.broadcast %cst_206 : f32 to vector<64x32xf32>
    %608 = arith.maximumf %606, %607 : vector<64x32xf32>
    %c0_207 = arith.constant 0 : index
    %c0_208 = arith.constant 0 : index
    %609 = vector.load %arg27[%c0_207, %c0_208] : memref<32x32xf32, #tpu.memory_space<vmem>>, vector<32x32xf32>
    %cst_209 = arith.constant dense<0.000000e+00> : vector<64x32xf32>
    %610 = tpu.matmul %608, %609, %cst_209 {dimension_numbers = #tpu.dot_dimension_numbers<[1], [0], [0], [1], [0, 0, 1, 1], [], []>} : vector<64x32xf32>, vector<32x32xf32>, vector<64x32xf32> -> vector<64x32xf32>
    %c0_210 = arith.constant 0 : index
    %c0_211 = arith.constant 0 : index
    %611 = vector.load %arg28[%c0_210, %c0_211] : memref<1x32xf32, #tpu.memory_space<vmem>>, vector<1x32xf32>
    %612 = vector.broadcast %611 : vector<1x32xf32> to vector<64x32xf32>
    %613 = arith.addf %610, %612 : vector<64x32xf32>
    %cst_212 = arith.constant 0.000000e+00 : f32
    %614 = vector.broadcast %cst_212 : f32 to vector<64x32xf32>
    %615 = arith.maximumf %613, %614 : vector<64x32xf32>
    %c0_213 = arith.constant 0 : index
    %c0_214 = arith.constant 0 : index
    %616 = vector.load %arg29[%c0_213, %c0_214] : memref<32x32xf32, #tpu.memory_space<vmem>>, vector<32x32xf32>
    %cst_215 = arith.constant dense<0.000000e+00> : vector<64x32xf32>
    %617 = tpu.matmul %615, %616, %cst_215 {dimension_numbers = #tpu.dot_dimension_numbers<[1], [0], [0], [1], [0, 0, 1, 1], [], []>} : vector<64x32xf32>, vector<32x32xf32>, vector<64x32xf32> -> vector<64x32xf32>
    %c0_216 = arith.constant 0 : index
    %c0_217 = arith.constant 0 : index
    %618 = vector.load %arg30[%c0_216, %c0_217] : memref<1x32xf32, #tpu.memory_space<vmem>>, vector<1x32xf32>
    %619 = vector.broadcast %618 : vector<1x32xf32> to vector<64x32xf32>
    %620 = arith.addf %617, %619 : vector<64x32xf32>
    %cst_218 = arith.constant 0.000000e+00 : f32
    %621 = vector.broadcast %cst_218 : f32 to vector<64x32xf32>
    %622 = arith.maximumf %620, %621 : vector<64x32xf32>
    %c0_219 = arith.constant 0 : index
    %c0_220 = arith.constant 0 : index
    %623 = vector.load %arg33[%c0_219, %c0_220] : memref<64x32xf32, #tpu.memory_space<vmem>>, vector<64x32xf32>
    tpu.vector_store %arg33[%c0_219, %c0_220], %622 {strides = array<i32>} : memref<64x32xf32, #tpu.memory_space<vmem>>, vector<64x32xf32>,
    %c0_221 = arith.constant 0 : index
    %c0_222 = arith.constant 0 : index
    %624 = vector.load %arg31[%c0_221, %c0_222] : memref<32x64xf32, #tpu.memory_space<vmem>>, vector<32x64xf32>
    %cst_223 = arith.constant dense<0.000000e+00> : vector<64x64xf32>
    %625 = tpu.matmul %622, %624, %cst_223 {dimension_numbers = #tpu.dot_dimension_numbers<[1], [0], [0], [1], [0, 0, 1, 1], [], []>} : vector<64x32xf32>, vector<32x64xf32>, vector<64x64xf32> -> vector<64x64xf32>
    %c0_224 = arith.constant 0 : index
    %c0_225 = arith.constant 0 : index
    %626 = vector.load %arg32[%c0_224, %c0_225] : memref<1x64xf32, #tpu.memory_space<vmem>>, vector<1x64xf32>
    %627 = vector.broadcast %626 : vector<1x64xf32> to vector<64x64xf32>
    %628 = arith.addf %625, %627 : vector<64x64xf32>
    %cst_226 = arith.constant dense<0xFF800000> : vector<64xf32>
    %629 = vector.multi_reduction <maximumf>, %628, %cst_226 [1] : vector<64x64xf32> to vector<64xf32>
    %630 = vector.shape_cast %629 : vector<64xf32> to vector<64x1xf32>
    %631 = vector.broadcast %630 : vector<64x1xf32> to vector<64x64xf32>
    %632 = arith.subf %628, %631 : vector<64x64xf32>
    %633 = math.exp %632 : vector<64x64xf32>
    %cst_227 = arith.constant dense<0.000000e+00> : vector<64xf32>
    %634 = vector.multi_reduction <add>, %633, %cst_227 [1] : vector<64x64xf32> to vector<64xf32>
    %635 = vector.shape_cast %634 : vector<64xf32> to vector<64x1xf32>
    %636 = math.log %635 : vector<64x1xf32>
    %637 = arith.addf %630, %636 : vector<64x1xf32>
    %638 = vector.broadcast %637 : vector<64x1xf32> to vector<64x64xf32>
    %639 = arith.subf %628, %638 : vector<64x64xf32>
    %c0_228 = arith.constant 0 : index
    %c0_229 = arith.constant 0 : index
    %640 = vector.load %arg34[%c0_228, %c0_229] : memref<64x64xf32, #tpu.memory_space<vmem>>, vector<64x64xf32>
    tpu.vector_store %arg34[%c0_228, %c0_229], %639 {strides = array<i32>} : memref<64x64xf32, #tpu.memory_space<vmem>>, vector<64x64xf32>,
    return
  }
}

</mosaic_0001>

<llo_original>
// kernel: rnn_decoder_forward.1
$region0: #{rnn_decoder_forward.1}
  #allocation0 [shape = 'u32[]', space=smem, size = 0x4, offset = 0x4, fixed_abs, tag = 'smem constant byte address 0x4 - core index']
  #allocation1 [shape = 'u32[144,128]{1,0:T(1,128)}', space=vmem, size = 0x12000, scoped, tag = 'internal scratch']
  %s0 = inlined_call_operand.smem [shape: u32[35], index: -1, kind: input, shape index: {}]
  %s1 = sld [smem:[%s0]]
  %s2 = scalar_lea.smem %s0, 1
  %s3 = sld [smem:[%s2]]
  %s4 = scalar_lea.smem %s0, 2
  %s5 = sld [smem:[%s4]]
  %s6 = scalar_lea.smem %s0, 3
  %s7 = sld [smem:[%s6]]
  %s8 = scalar_lea.smem %s0, 4
  %s9 = sld [smem:[%s8]]
  %s10 = scalar_lea.smem %s0, 5
  %s11 = sld [smem:[%s10]]
  %s12 = scalar_lea.smem %s0, 6
  %s13 = sld [smem:[%s12]]
  %s14 = scalar_lea.smem %s0, 7
  %s15 = sld [smem:[%s14]]
  %s16 = scalar_lea.smem %s0, 8
  %s17 = sld [smem:[%s16]]
  %s18 = scalar_lea.smem %s0, 9
  %s19 = sld [smem:[%s18]]
  %s20 = scalar_lea.smem %s0, 10
  %s21 = sld [smem:[%s20]]
  %s22 = scalar_lea.smem %s0, 11
  %s23 = sld [smem:[%s22]]
  %s24 = scalar_lea.smem %s0, 12
  %s25 = sld [smem:[%s24]]
  %s26 = scalar_lea.smem %s0, 13
  %s27 = sld [smem:[%s26]]
  %s28 = scalar_lea.smem %s0, 14
  %s29 = sld [smem:[%s28]]
  %s30 = scalar_lea.smem %s0, 15
  %s31 = sld [smem:[%s30]]
  %s32 = scalar_lea.smem %s0, 16
  %s33 = sld [smem:[%s32]]
  %s34 = scalar_lea.smem %s0, 17
  %s35 = sld [smem:[%s34]]
  %s36 = scalar_lea.smem %s0, 18
  %s37 = sld [smem:[%s36]]
  %s38 = scalar_lea.smem %s0, 19
  %s39 = sld [smem:[%s38]]
  %s40 = scalar_lea.smem %s0, 20
  %s41 = sld [smem:[%s40]]
  %s42 = scalar_lea.smem %s0, 21
  %s43 = sld [smem:[%s42]]
  %s44 = scalar_lea.smem %s0, 22
  %s45 = sld [smem:[%s44]]
  %s46 = scalar_lea.smem %s0, 23
  %s47 = sld [smem:[%s46]]
  %s48 = scalar_lea.smem %s0, 24
  %s49 = sld [smem:[%s48]]
  %s50 = scalar_lea.smem %s0, 25
  %s51 = sld [smem:[%s50]]
  %s52 = scalar_lea.smem %s0, 26
  %s53 = sld [smem:[%s52]]
  %s54 = scalar_lea.smem %s0, 27
  %s55 = sld [smem:[%s54]]
  %s56 = scalar_lea.smem %s0, 28
  %s57 = sld [smem:[%s56]]
  %s58 = scalar_lea.smem %s0, 29
  %s59 = sld [smem:[%s58]]
  %s60 = scalar_lea.smem %s0, 30
  %s61 = sld [smem:[%s60]]
  %s62 = scalar_lea.smem %s0, 31
  %s63 = sld [smem:[%s62]]
  %s64 = scalar_lea.smem %s0, 32
  %s65 = sld [smem:[%s64]]
  %s66 = scalar_lea.smem %s0, 33
  %s67 = sld [smem:[%s66]]
  %s68 = scalar_lea.smem %s0, 34
  %s69 = sld [smem:[%s68]]
  %70 = xla_tuple %s67, %s69
  %s71 = sld [smem:[#allocation0]]
  $region150: #{rnn_decoder_forward.1} parent=0
    _
  %s73 = ssub.s32 1, %s71
  %s74 = scalar_select 0, %s73, %s71
  $region1: #{rnn_decoder_forward.1} parent=0
    #allocation2 [shape = 'u8[32768]{0}', space=vmem, size = 0x8000, scoped, tag = 'output window, operand 0, single buffered']
    #allocation3 [shape = 's32[1]{0}', space=sflag, size = 0x4, scoped, tag = 'scoped memory for rnn_decoder_forward.1']
    %75 = vsyncpa [#allocation3], 0
    // Predicated region
    $region2: #{rnn_decoder_forward.1} parent=1 // pred_check
      _
    $region3: #{rnn_decoder_forward.1} parent=1 // pred_check_branch
      %77 = sbr.rel (0) target = $region5
    $region4: #{rnn_decoder_forward.1} parent=1 // pred_region
      _
    $region5: #{rnn_decoder_forward.1} parent=1 // pred_fallthru
      _
    // Predicated region
    $region6: #{rnn_decoder_forward.1} parent=1 // pred_check
      _
    $region7: #{rnn_decoder_forward.1} parent=1 // pred_check_branch
      %79 = sbr.rel (0) target = $region9
    $region8: #{rnn_decoder_forward.1} parent=1 // pred_region
      _
    $region9: #{rnn_decoder_forward.1} parent=1 // pred_fallthru
      _
    // Predicated region
    $region10: #{rnn_decoder_forward.1} parent=1 // pred_check
      _
    $region11: #{rnn_decoder_forward.1} parent=1 // pred_check_branch
      %81 = sbr.rel (0) target = $region13
    $region12: #{rnn_decoder_forward.1} parent=1 // pred_region
      _
    $region13: #{rnn_decoder_forward.1} parent=1 // pred_fallthru
      _
    // Predicated region
    $region14: #{rnn_decoder_forward.1} parent=1 // pred_check
      _
    $region15: #{rnn_decoder_forward.1} parent=1 // pred_check_branch
      %83 = sbr.rel (0) target = $region17
    $region16: #{rnn_decoder_forward.1} parent=1 // pred_region
      _
    $region17: #{rnn_decoder_forward.1} parent=1 // pred_fallthru
      _
    // Predicated region
    $region18: #{rnn_decoder_forward.1} parent=1 // pred_check
      _
    $region19: #{rnn_decoder_forward.1} parent=1 // pred_check_branch
      %85 = sbr.rel (0) target = $region21
    $region20: #{rnn_decoder_forward.1} parent=1 // pred_region
      _
    $region21: #{rnn_decoder_forward.1} parent=1 // pred_fallthru
      _
    // Predicated region
    $region22: #{rnn_decoder_forward.1} parent=1 // pred_check
      _
    $region23: #{rnn_decoder_forward.1} parent=1 // pred_check_branch
      %87 = sbr.rel (0) target = $region25
    $region24: #{rnn_decoder_forward.1} parent=1 // pred_region
      _
    $region25: #{rnn_decoder_forward.1} parent=1 // pred_fallthru
      _
    // Predicated region
    $region26: #{rnn_decoder_forward.1} parent=1 // pred_check
      _
    $region27: #{rnn_decoder_forward.1} parent=1 // pred_check_branch
      %89 = sbr.rel (0) target = $region29
    $region28: #{rnn_decoder_forward.1} parent=1 // pred_region
      _
    $region29: #{rnn_decoder_forward.1} parent=1 // pred_fallthru
      _
    // Predicated region
    $region30: #{rnn_decoder_forward.1} parent=1 // pred_check
      _
    $region31: #{rnn_decoder_forward.1} parent=1 // pred_check_branch
      %91 = sbr.rel (0) target = $region33
    $region32: #{rnn_decoder_forward.1} parent=1 // pred_region
      _
    $region33: #{rnn_decoder_forward.1} parent=1 // pred_fallthru
      _
    // Predicated region
    $region34: #{rnn_decoder_forward.1} parent=1 // pred_check
      _
    $region35: #{rnn_decoder_forward.1} parent=1 // pred_check_branch
      %93 = sbr.rel (0) target = $region37
    $region36: #{rnn_decoder_forward.1} parent=1 // pred_region
      _
    $region37: #{rnn_decoder_forward.1} parent=1 // pred_fallthru
      _
    // Predicated region
    $region38: #{rnn_decoder_forward.1} parent=1 // pred_check
      _
    $region39: #{rnn_decoder_forward.1} parent=1 // pred_check_branch
      %95 = sbr.rel (0) target = $region41
    $region40: #{rnn_decoder_forward.1} parent=1 // pred_region
      _
    $region41: #{rnn_decoder_forward.1} parent=1 // pred_fallthru
      _
    // Predicated region
    $region42: #{rnn_decoder_forward.1} parent=1 // pred_check
      _
    $region43: #{rnn_decoder_forward.1} parent=1 // pred_check_branch
      %97 = sbr.rel (0) target = $region45
    $region44: #{rnn_decoder_forward.1} parent=1 // pred_region
      _
    $region45: #{rnn_decoder_forward.1} parent=1 // pred_fallthru
      _
    // Predicated region
    $region46: #{rnn_decoder_forward.1} parent=1 // pred_check
      _
    $region47: #{rnn_decoder_forward.1} parent=1 // pred_check_branch
      %99 = sbr.rel (0) target = $region49
    $region48: #{rnn_decoder_forward.1} parent=1 // pred_region
      _
    $region49: #{rnn_decoder_forward.1} parent=1 // pred_fallthru
      _
    // Predicated region
    $region50: #{rnn_decoder_forward.1} parent=1 // pred_check
      _
    $region51: #{rnn_decoder_forward.1} parent=1 // pred_check_branch
      %101 = sbr.rel (0) target = $region53
    $region52: #{rnn_decoder_forward.1} parent=1 // pred_region
      _
    $region53: #{rnn_decoder_forward.1} parent=1 // pred_fallthru
      _
    // Predicated region
    $region54: #{rnn_decoder_forward.1} parent=1 // pred_check
      _
    $region55: #{rnn_decoder_forward.1} parent=1 // pred_check_branch
      %103 = sbr.rel (0) target = $region57
    $region56: #{rnn_decoder_forward.1} parent=1 // pred_region
      _
    $region57: #{rnn_decoder_forward.1} parent=1 // pred_fallthru
      _
    // Predicated region
    $region58: #{rnn_decoder_forward.1} parent=1 // pred_check
      _
    $region59: #{rnn_decoder_forward.1} parent=1 // pred_check_branch
      %105 = sbr.rel (0) target = $region61
    $region60: #{rnn_decoder_forward.1} parent=1 // pred_region
      _
    $region61: #{rnn_decoder_forward.1} parent=1 // pred_fallthru
      _
    // Predicated region
    $region62: #{rnn_decoder_forward.1} parent=1 // pred_check
      _
    $region63: #{rnn_decoder_forward.1} parent=1 // pred_check_branch
      %107 = sbr.rel (0) target = $region65
    $region64: #{rnn_decoder_forward.1} parent=1 // pred_region
      _
    $region65: #{rnn_decoder_forward.1} parent=1 // pred_fallthru
      _
    // Predicated region
    $region66: #{rnn_decoder_forward.1} parent=1 // pred_check
      _
    $region67: #{rnn_decoder_forward.1} parent=1 // pred_check_branch
      %109 = sbr.rel (0) target = $region69
    $region68: #{rnn_decoder_forward.1} parent=1 // pred_region
      _
    $region69: #{rnn_decoder_forward.1} parent=1 // pred_fallthru
      _
    // Predicated region
    $region70: #{rnn_decoder_forward.1} parent=1 // pred_check
      _
    $region71: #{rnn_decoder_forward.1} parent=1 // pred_check_branch
      %111 = sbr.rel (0) target = $region73
    $region72: #{rnn_decoder_forward.1} parent=1 // pred_region
      _
    $region73: #{rnn_decoder_forward.1} parent=1 // pred_fallthru
      _
    // Predicated region
    $region74: #{rnn_decoder_forward.1} parent=1 // pred_check
      _
    $region75: #{rnn_decoder_forward.1} parent=1 // pred_check_branch
      %113 = sbr.rel (0) target = $region77
    $region76: #{rnn_decoder_forward.1} parent=1 // pred_region
      _
    $region77: #{rnn_decoder_forward.1} parent=1 // pred_fallthru
      _
    // Predicated region
    $region78: #{rnn_decoder_forward.1} parent=1 // pred_check
      _
    $region79: #{rnn_decoder_forward.1} parent=1 // pred_check_branch
      %115 = sbr.rel (0) target = $region81
    $region80: #{rnn_decoder_forward.1} parent=1 // pred_region
      _
    $region81: #{rnn_decoder_forward.1} parent=1 // pred_fallthru
      _
    // Predicated region
    $region82: #{rnn_decoder_forward.1} parent=1 // pred_check
      _
    $region83: #{rnn_decoder_forward.1} parent=1 // pred_check_branch
      %117 = sbr.rel (0) target = $region85
    $region84: #{rnn_decoder_forward.1} parent=1 // pred_region
      _
    $region85: #{rnn_decoder_forward.1} parent=1 // pred_fallthru
      _
    // Predicated region
    $region86: #{rnn_decoder_forward.1} parent=1 // pred_check
      _
    $region87: #{rnn_decoder_forward.1} parent=1 // pred_check_branch
      %119 = sbr.rel (0) target = $region89
    $region88: #{rnn_decoder_forward.1} parent=1 // pred_region
      _
    $region89: #{rnn_decoder_forward.1} parent=1 // pred_fallthru
      _
    // Predicated region
    $region90: #{rnn_decoder_forward.1} parent=1 // pred_check
      _
    $region91: #{rnn_decoder_forward.1} parent=1 // pred_check_branch
      %121 = sbr.rel (0) target = $region93
    $region92: #{rnn_decoder_forward.1} parent=1 // pred_region
      _
    $region93: #{rnn_decoder_forward.1} parent=1 // pred_fallthru
      _
    // Predicated region
    $region94: #{rnn_decoder_forward.1} parent=1 // pred_check
      _
    $region95: #{rnn_decoder_forward.1} parent=1 // pred_check_branch
      %123 = sbr.rel (0) target = $region97
    $region96: #{rnn_decoder_forward.1} parent=1 // pred_region
      _
    $region97: #{rnn_decoder_forward.1} parent=1 // pred_fallthru
      _
    // Predicated region
    $region98: #{rnn_decoder_forward.1} parent=1 // pred_check
      _
    $region99: #{rnn_decoder_forward.1} parent=1 // pred_check_branch
      %125 = sbr.rel (0) target = $region101
    $region100: #{rnn_decoder_forward.1} parent=1 // pred_region
      _
    $region101: #{rnn_decoder_forward.1} parent=1 // pred_fallthru
      _
    // Predicated region
    $region102: #{rnn_decoder_forward.1} parent=1 // pred_check
      _
    $region103: #{rnn_decoder_forward.1} parent=1 // pred_check_branch
      %127 = sbr.rel (0) target = $region105
    $region104: #{rnn_decoder_forward.1} parent=1 // pred_region
      _
    $region105: #{rnn_decoder_forward.1} parent=1 // pred_fallthru
      _
    // Predicated region
    $region106: #{rnn_decoder_forward.1} parent=1 // pred_check
      _
    $region107: #{rnn_decoder_forward.1} parent=1 // pred_check_branch
      %129 = sbr.rel (0) target = $region109
    $region108: #{rnn_decoder_forward.1} parent=1 // pred_region
      _
    $region109: #{rnn_decoder_forward.1} parent=1 // pred_fallthru
      _
    // Predicated region
    $region110: #{rnn_decoder_forward.1} parent=1 // pred_check
      _
    $region111: #{rnn_decoder_forward.1} parent=1 // pred_check_branch
      %131 = sbr.rel (0) target = $region113
    $region112: #{rnn_decoder_forward.1} parent=1 // pred_region
      _
    $region113: #{rnn_decoder_forward.1} parent=1 // pred_fallthru
      _
    // Predicated region
    $region114: #{rnn_decoder_forward.1} parent=1 // pred_check
      _
    $region115: #{rnn_decoder_forward.1} parent=1 // pred_check_branch
      %133 = sbr.rel (0) target = $region117
    $region116: #{rnn_decoder_forward.1} parent=1 // pred_region
      _
    $region117: #{rnn_decoder_forward.1} parent=1 // pred_fallthru
      _
    // Predicated region
    $region118: #{rnn_decoder_forward.1} parent=1 // pred_check
      _
    $region119: #{rnn_decoder_forward.1} parent=1 // pred_check_branch
      %135 = sbr.rel (0) target = $region121
    $region120: #{rnn_decoder_forward.1} parent=1 // pred_region
      _
    $region121: #{rnn_decoder_forward.1} parent=1 // pred_fallthru
      _
    // Predicated region
    $region122: #{rnn_decoder_forward.1} parent=1 // pred_check
      _
    $region123: #{rnn_decoder_forward.1} parent=1 // pred_check_branch
      %137 = sbr.rel (0) target = $region125
    $region124: #{rnn_decoder_forward.1} parent=1 // pred_region
      _
    $region125: #{rnn_decoder_forward.1} parent=1 // pred_fallthru
      _
    // Predicated region
    $region126: #{rnn_decoder_forward.1} parent=1 // pred_check
      _
    $region127: #{rnn_decoder_forward.1} parent=1 // pred_check_branch
      %139 = sbr.rel (0) target = $region129
    $region128: #{rnn_decoder_forward.1} parent=1 // pred_region
      _
    $region129: #{rnn_decoder_forward.1} parent=1 // pred_fallthru
      _
    // Predicated region
    $region130: #{rnn_decoder_forward.1} parent=1 // pred_check
      _
    $region131: #{rnn_decoder_forward.1} parent=1 // pred_check_branch
      %141 = sbr.rel (0) target = $region133
    $region132: #{rnn_decoder_forward.1} parent=1 // pred_region
      _
    $region133: #{rnn_decoder_forward.1} parent=1 // pred_fallthru
      _
    %v142 = vld [vmem:[%s1] sm:$0xff]
    %v143 = vld [vmem:[%s1 + $0x8] sm:$0xff]
    %v144 = vld [vmem:[%s1 + $0x10] sm:$0xff]
    %v145 = vld [vmem:[%s1 + $0x18] sm:$0xff]
    %v146 = vld [vmem:[%s1 + $0x20] sm:$0xff]
    %v147 = vld [vmem:[%s1 + $0x28] sm:$0xff]
    %v148 = vld [vmem:[%s1 + $0x30] sm:$0xff]
    %v149 = vld [vmem:[%s1 + $0x38] sm:$0xff]
    %v150 = vld [vmem:[%s27] sm:$0xff]
    %v151 = vld [vmem:[%s27 + $0x8] sm:$0xff]
    %v152 = vld [vmem:[%s27 + $0x10] sm:$0xff]
    %v153 = vld [vmem:[%s27 + $0x18] sm:$0xff]
    %v154 = vld [vmem:[%s31] sm:$0x1]
    %v156 = vlaneseq
    %v157 = vshrl.u32 %v156, 7
    %v158 = vsub.s32 0, %v157
    %v159 = vrot.slane %v154, %v158
    %vm161 = vcmask 261120
    %v163 = vsel %vm161, %v142, 0
    %v166 = vsel %vm161, %v143, 0
    %v169 = vsel %vm161, %v144, 0
    %v172 = vsel %vm161, %v145, 0
    %v175 = vsel %vm161, %v146, 0
    %v178 = vsel %vm161, %v147, 0
    %v181 = vsel %vm161, %v148, 0
    %v184 = vsel %vm161, %v149, 0
    %186 = vmatprep.subr.mxu0 0.0
    %187 = vmatpush1.msra.mxu0 0.0
    %188 = vmatprep.subr.mxu0 0.0
    %189 = vmatpush1.msra.mxu0 0.0
    %190 = vmatprep.subr.mxu0 0.0
    %191 = vmatpush1.msra.mxu0 0.0
    %192 = vmatprep.subr.mxu0 0.0
    %193 = vmatpush1.msra.mxu0 0.0
    %194 = vmatprep.subr.mxu0 0.0
    %195 = vmatpush1.msra.mxu0 0.0
    %196 = vmatprep.subr.mxu0 0.0
    %197 = vmatpush1.msra.mxu0 0.0
    %198 = vmatprep.subr.mxu0 0.0
    %199 = vmatpush1.msra.mxu0 0.0
    %200 = vmatprep.subr.mxu0 0.0
    %201 = vmatpush1.msra.mxu0 0.0
    %202 = vmatprep.subr.mxu0 0.0
    %203 = vmatpush1.msra.mxu0 0.0
    %204 = vmatprep.subr.mxu0 0.0
    %205 = vmatpush1.msra.mxu0 0.0
    %206 = vmatprep.subr.mxu0 0.0
    %207 = vmatpush1.msra.mxu0 0.0
    %208 = vmatprep.subr.mxu0 0.0
    %209 = vmatpush1.msra.mxu0 0.0
    %210 = vmatprep.subr.mxu0 0.0
    %211 = vmatpush1.msra.mxu0 %v153
    %212 = vmatprep.subr.mxu0 0.0
    %213 = vmatpush1.msra.mxu0 %v152
    %214 = vmatprep.subr.mxu0 0.0
    %215 = vmatpush1.msra.mxu0 %v151
    %216 = vmatprep.subr.mxu0 0.0
    %217 = vmatpush1.msra.mxu0 %v150
    %218 = vmatprep.subr.mxu0 0.0
    %219 = vmatpush2.msra.mxu0 0.0
    %220 = vmatprep.subr.mxu0 0.0
    %221 = vmatpush2.msra.mxu0 0.0
    %222 = vmatprep.subr.mxu0 0.0
    %223 = vmatpush2.msra.mxu0 0.0
    %224 = vmatprep.subr.mxu0 0.0
    %225 = vmatpush2.msra.mxu0 0.0
    %226 = vmatprep.subr.mxu0 0.0
    %227 = vmatpush2.msra.mxu0 0.0
    %228 = vmatprep.subr.mxu0 0.0
    %229 = vmatpush2.msra.mxu0 0.0
    %230 = vmatprep.subr.mxu0 0.0
    %231 = vmatpush2.msra.mxu0 0.0
    %232 = vmatprep.subr.mxu0 0.0
    %233 = vmatpush2.msra.mxu0 0.0
    %234 = vmatprep.subr.mxu0 0.0
    %235 = vmatpush2.msra.mxu0 0.0
    %236 = vmatprep.subr.mxu0 0.0
    %237 = vmatpush2.msra.mxu0 0.0
    %238 = vmatprep.subr.mxu0 0.0
    %239 = vmatpush2.msra.mxu0 0.0
    %240 = vmatprep.subr.mxu0 0.0
    %241 = vmatpush2.msra.mxu0 0.0
    %242 = vmatprep.subr.mxu0 0.0
    %243 = vmatpush2.msra.mxu0 0.0
    %244 = vmatprep.subr.mxu0 0.0
    %245 = vmatpush2.msra.mxu0 0.0
    %246 = vmatprep.subr.mxu0 0.0
    %247 = vmatpush2.msra.mxu0 0.0
    %248 = vmatprep.subr.mxu0 0.0
    %249 = vmatpush2.msra.mxu0 0.0
    %250 = vmatprep.mubr.f32.mxu0 0.0
    %251 = vmatmul.mubr.f32.gmra.mxu0 %v163
    %v252 = vpop.f32.mrf.mxu0
    %v253 = vadd.f32 %v159, %v252
    %v254 = vpop.f32.mrf.mxu0
    %255 = vmatprep.mubr.f32.mxu0 0.0
    %256 = vmatmul.mubr.f32.gmra.mxu0 %v166
    %v257 = vpop.f32.mrf.mxu0
    %v258 = vadd.f32 %v159, %v257
    %v259 = vpop.f32.mrf.mxu0
    %260 = vmatprep.mubr.f32.mxu0 0.0
    %261 = vmatmul.mubr.f32.gmra.mxu0 %v169
    %v262 = vpop.f32.mrf.mxu0
    %v263 = vadd.f32 %v159, %v262
    %v264 = vpop.f32.mrf.mxu0
    %265 = vmatprep.mubr.f32.mxu0 0.0
    %266 = vmatmul.mubr.f32.gmra.mxu0 %v172
    %v267 = vpop.f32.mrf.mxu0
    %v268 = vadd.f32 %v159, %v267
    %v269 = vpop.f32.mrf.mxu0
    %270 = vmatprep.mubr.f32.mxu0 0.0
    %271 = vmatmul.mubr.f32.gmra.mxu0 %v175
    %v272 = vpop.f32.mrf.mxu0
    %v273 = vadd.f32 %v159, %v272
    %v274 = vpop.f32.mrf.mxu0
    %275 = vmatprep.mubr.f32.mxu0 0.0
    %276 = vmatmul.mubr.f32.gmra.mxu0 %v178
    %v277 = vpop.f32.mrf.mxu0
    %v278 = vadd.f32 %v159, %v277
    %v279 = vpop.f32.mrf.mxu0
    %280 = vmatprep.mubr.f32.mxu0 0.0
    %281 = vmatmul.mubr.f32.gmra.mxu0 %v181
    %v282 = vpop.f32.mrf.mxu0
    %v283 = vadd.f32 %v159, %v282
    %v284 = vpop.f32.mrf.mxu0
    %285 = vmatprep.mubr.f32.mxu0 0.0
    %286 = vmatmul.mubr.f32.gmra.mxu0 %v184
    %v287 = vpop.f32.mrf.mxu0
    %v288 = vadd.f32 %v159, %v287
    %v289 = vpop.f32.mrf.mxu0
    %290 = vdwg.mxu0
    %v291 = vld [vmem:[%s37] sm:$0x1]
    %v293 = vlaneseq
    %v294 = vshrl.u32 %v293, 7
    %v295 = vsub.s32 0, %v294
    %v296 = vrot.slane %v291, %v295
    %v298 = vld [vmem:[%s3] sm:$0xff]
    %v299 = vld [vmem:[%s5] sm:$0xff]
    %s300 = scalar_lea.vmem %s3, 8
    %v301 = vld [vmem:[%s300] sm:$0xff]
    %s302 = scalar_lea.vmem %s5, 8
    %v303 = vld [vmem:[%s302] sm:$0xff]
    %v304 = vld [vmem:[%s29] sm:$0xff]
    %v305 = vld [vmem:[%s29 + $0x8] sm:$0xff]
    %v306 = vld [vmem:[%s29 + $0x10] sm:$0xff]
    %v307 = vld [vmem:[%s29 + $0x18] sm:$0xff]
    %v309 = vsel %vm161, %v298, 0
    %311 = vmatprep.subr.mxu0 0.0
    %312 = vmatpush1.msra.mxu0 0.0
    %313 = vmatprep.subr.mxu0 0.0
    %314 = vmatpush1.msra.mxu0 0.0
    %315 = vmatprep.subr.mxu0 0.0
    %316 = vmatpush1.msra.mxu0 0.0
    %317 = vmatprep.subr.mxu0 0.0
    %318 = vmatpush1.msra.mxu0 0.0
    %319 = vmatprep.subr.mxu0 0.0
    %320 = vmatpush1.msra.mxu0 0.0
    %321 = vmatprep.subr.mxu0 0.0
    %322 = vmatpush1.msra.mxu0 0.0
    %323 = vmatprep.subr.mxu0 0.0
    %324 = vmatpush1.msra.mxu0 0.0
    %325 = vmatprep.subr.mxu0 0.0
    %326 = vmatpush1.msra.mxu0 0.0
    %327 = vmatprep.subr.mxu0 0.0
    %328 = vmatpush1.msra.mxu0 0.0
    %329 = vmatprep.subr.mxu0 0.0
    %330 = vmatpush1.msra.mxu0 0.0
    %331 = vmatprep.subr.mxu0 0.0
    %332 = vmatpush1.msra.mxu0 0.0
    %333 = vmatprep.subr.mxu0 0.0
    %334 = vmatpush1.msra.mxu0 0.0
    %335 = vmatprep.subr.mxu0 0.0
    %336 = vmatpush1.msra.mxu0 %v307
    %337 = vmatprep.subr.mxu0 0.0
    %338 = vmatpush1.msra.mxu0 %v306
    %339 = vmatprep.subr.mxu0 0.0
    %340 = vmatpush1.msra.mxu0 %v305
    %341 = vmatprep.subr.mxu0 0.0
    %342 = vmatpush1.msra.mxu0 %v304
    %343 = vmatprep.subr.mxu0 0.0
    %344 = vmatpush2.msra.mxu0 0.0
    %345 = vmatprep.subr.mxu0 0.0
    %346 = vmatpush2.msra.mxu0 0.0
    %347 = vmatprep.subr.mxu0 0.0
    %348 = vmatpush2.msra.mxu0 0.0
    %349 = vmatprep.subr.mxu0 0.0
    %350 = vmatpush2.msra.mxu0 0.0
    %351 = vmatprep.subr.mxu0 0.0
    %352 = vmatpush2.msra.mxu0 0.0
    %353 = vmatprep.subr.mxu0 0.0
    %354 = vmatpush2.msra.mxu0 0.0
    %355 = vmatprep.subr.mxu0 0.0
    %356 = vmatpush2.msra.mxu0 0.0
    %357 = vmatprep.subr.mxu0 0.0
    %358 = vmatpush2.msra.mxu0 0.0
    %359 = vmatprep.subr.mxu0 0.0
    %360 = vmatpush2.msra.mxu0 0.0
    %361 = vmatprep.subr.mxu0 0.0
    %362 = vmatpush2.msra.mxu0 0.0
    %363 = vmatprep.subr.mxu0 0.0
    %364 = vmatpush2.msra.mxu0 0.0
    %365 = vmatprep.subr.mxu0 0.0
    %366 = vmatpush2.msra.mxu0 0.0
    %367 = vmatprep.subr.mxu0 0.0
    %368 = vmatpush2.msra.mxu0 0.0
    %369 = vmatprep.subr.mxu0 0.0
    %370 = vmatpush2.msra.mxu0 0.0
    %371 = vmatprep.subr.mxu0 0.0
    %372 = vmatpush2.msra.mxu0 0.0
    %373 = vmatprep.subr.mxu0 0.0
    %374 = vmatpush2.msra.mxu0 0.0
    %375 = vmatprep.mubr.f32.mxu0 0.0
    %376 = vmatmul.mubr.f32.gmra.mxu0 %v309
    %v377 = vpop.f32.mrf.mxu0
    %v378 = vadd.f32 0.0, %v377
    %v379 = vpop.f32.mrf.mxu0
    %380 = vdwg.mxu0
    %v381 = vadd.f32 %v253, %v378
    %v382 = vxor.u32 %v381, 2147483648
    %v383 = vmul.f32 %v382, 1.442695
    %v384 = vpow.pop %v383
    %v385 = vadd.f32 %v384, 1.0
    %v386 = vrcp.pop %v385
    %v387 = vmul.f32 1.0, %v386
    %v388 = vtanh.pop %v381
    %390 = vrot.lane.b32.xlu0 %v299, 32
    %v391 = vpop.permute.xlu0 %390
    %v393 = vmul.f32 %v387, %v391
    %395 = vrot.lane.b32.xlu0 %v388, 64
    %v396 = vpop.permute.xlu0 %395
    %v398 = vmul.f32 %v387, %v396
    %400 = vrot.lane.b32.xlu0 %v398, 32
    %v401 = vpop.permute.xlu0 %400
    %v403 = vadd.f32 %v393, %v401
    %v404 = vtanh.pop %v403
    %406 = vrot.lane.b32.xlu0 %v404, 64
    %v407 = vpop.permute.xlu0 %406
    %v409 = vmul.f32 %v387, %v407
    %v410 = vld [vmem:[%s33] sm:$0xff]
    %v411 = vld [vmem:[%s33 + $0x8] sm:$0xff]
    %v412 = vld [vmem:[%s33 + $0x10] sm:$0xff]
    %v413 = vld [vmem:[%s33 + $0x18] sm:$0xff]
    %v414 = vld [vmem:[%s35] sm:$0xff]
    %v415 = vld [vmem:[%s35 + $0x8] sm:$0xff]
    %v416 = vld [vmem:[%s35 + $0x10] sm:$0xff]
    %v417 = vld [vmem:[%s35 + $0x18] sm:$0xff]
    %v419 = vsel %vm161, %v301, 0
    %421 = vmatprep.subr.mxu0 0.0
    %422 = vmatpush1.msra.mxu0 0.0
    %423 = vmatprep.subr.mxu0 0.0
    %424 = vmatpush1.msra.mxu0 0.0
    %425 = vmatprep.subr.mxu0 0.0
    %426 = vmatpush1.msra.mxu0 0.0
    %427 = vmatprep.subr.mxu0 0.0
    %428 = vmatpush1.msra.mxu0 0.0
    %429 = vmatprep.subr.mxu0 0.0
    %430 = vmatpush1.msra.mxu0 0.0
    %431 = vmatprep.subr.mxu0 0.0
    %432 = vmatpush1.msra.mxu0 0.0
    %433 = vmatprep.subr.mxu0 0.0
    %434 = vmatpush1.msra.mxu0 0.0
    %435 = vmatprep.subr.mxu0 0.0
    %436 = vmatpush1.msra.mxu0 0.0
    %437 = vmatprep.subr.mxu0 0.0
    %438 = vmatpush1.msra.mxu0 0.0
    %439 = vmatprep.subr.mxu0 0.0
    %440 = vmatpush1.msra.mxu0 0.0
    %441 = vmatprep.subr.mxu0 0.0
    %442 = vmatpush1.msra.mxu0 0.0
    %443 = vmatprep.subr.mxu0 0.0
    %444 = vmatpush1.msra.mxu0 0.0
    %445 = vmatprep.subr.mxu0 0.0
    %446 = vmatpush1.msra.mxu0 %v417
    %447 = vmatprep.subr.mxu0 0.0
    %448 = vmatpush1.msra.mxu0 %v416
    %449 = vmatprep.subr.mxu0 0.0
    %450 = vmatpush1.msra.mxu0 %v415
    %451 = vmatprep.subr.mxu0 0.0
    %452 = vmatpush1.msra.mxu0 %v414
    %453 = vmatprep.subr.mxu0 0.0
    %454 = vmatpush2.msra.mxu0 0.0
    %455 = vmatprep.subr.mxu0 0.0
    %456 = vmatpush2.msra.mxu0 0.0
    %457 = vmatprep.subr.mxu0 0.0
    %458 = vmatpush2.msra.mxu0 0.0
    %459 = vmatprep.subr.mxu0 0.0
    %460 = vmatpush2.msra.mxu0 0.0
    %461 = vmatprep.subr.mxu0 0.0
    %462 = vmatpush2.msra.mxu0 0.0
    %463 = vmatprep.subr.mxu0 0.0
    %464 = vmatpush2.msra.mxu0 0.0
    %465 = vmatprep.subr.mxu0 0.0
    %466 = vmatpush2.msra.mxu0 0.0
    %467 = vmatprep.subr.mxu0 0.0
    %468 = vmatpush2.msra.mxu0 0.0
    %469 = vmatprep.subr.mxu0 0.0
    %470 = vmatpush2.msra.mxu0 0.0
    %471 = vmatprep.subr.mxu0 0.0
    %472 = vmatpush2.msra.mxu0 0.0
    %473 = vmatprep.subr.mxu0 0.0
    %474 = vmatpush2.msra.mxu0 0.0
    %475 = vmatprep.subr.mxu0 0.0
    %476 = vmatpush2.msra.mxu0 0.0
    %477 = vmatprep.subr.mxu0 0.0
    %478 = vmatpush2.msra.mxu0 0.0
    %479 = vmatprep.subr.mxu0 0.0
    %480 = vmatpush2.msra.mxu0 0.0
    %481 = vmatprep.subr.mxu0 0.0
    %482 = vmatpush2.msra.mxu0 0.0
    %483 = vmatprep.subr.mxu0 0.0
    %484 = vmatpush2.msra.mxu0 0.0
    %485 = vmatprep.mubr.f32.mxu0 0.0
    %486 = vmatmul.mubr.f32.gmra.mxu0 %v419
    %v487 = vpop.f32.mrf.mxu0
    %v488 = vadd.f32 0.0, %v487
    %v489 = vpop.f32.mrf.mxu0
    %490 = vdwg.mxu0
    %492 = vrot.lane.b32.xlu0 %v409, 32
    %v493 = vpop.permute.xlu0 %492
    %v494 = vsel %vm161, %v493, 0
    %496 = vmatprep.subr.mxu0 0.0
    %497 = vmatpush1.msra.mxu0 0.0
    %498 = vmatprep.subr.mxu0 0.0
    %499 = vmatpush1.msra.mxu0 0.0
    %500 = vmatprep.subr.mxu0 0.0
    %501 = vmatpush1.msra.mxu0 0.0
    %502 = vmatprep.subr.mxu0 0.0
    %503 = vmatpush1.msra.mxu0 0.0
    %504 = vmatprep.subr.mxu0 0.0
    %505 = vmatpush1.msra.mxu0 0.0
    %506 = vmatprep.subr.mxu0 0.0
    %507 = vmatpush1.msra.mxu0 0.0
    %508 = vmatprep.subr.mxu0 0.0
    %509 = vmatpush1.msra.mxu0 0.0
    %510 = vmatprep.subr.mxu0 0.0
    %511 = vmatpush1.msra.mxu0 0.0
    %512 = vmatprep.subr.mxu0 0.0
    %513 = vmatpush1.msra.mxu0 0.0
    %514 = vmatprep.subr.mxu0 0.0
    %515 = vmatpush1.msra.mxu0 0.0
    %516 = vmatprep.subr.mxu0 0.0
    %517 = vmatpush1.msra.mxu0 0.0
    %518 = vmatprep.subr.mxu0 0.0
    %519 = vmatpush1.msra.mxu0 0.0
    %520 = vmatprep.subr.mxu0 0.0
    %521 = vmatpush1.msra.mxu0 %v413
    %522 = vmatprep.subr.mxu0 0.0
    %523 = vmatpush1.msra.mxu0 %v412
    %524 = vmatprep.subr.mxu0 0.0
    %525 = vmatpush1.msra.mxu0 %v411
    %526 = vmatprep.subr.mxu0 0.0
    %527 = vmatpush1.msra.mxu0 %v410
    %528 = vmatprep.subr.mxu0 0.0
    %529 = vmatpush2.msra.mxu0 0.0
    %530 = vmatprep.subr.mxu0 0.0
    %531 = vmatpush2.msra.mxu0 0.0
    %532 = vmatprep.subr.mxu0 0.0
    %533 = vmatpush2.msra.mxu0 0.0
    %534 = vmatprep.subr.mxu0 0.0
    %535 = vmatpush2.msra.mxu0 0.0
    %536 = vmatprep.subr.mxu0 0.0
    %537 = vmatpush2.msra.mxu0 0.0
    %538 = vmatprep.subr.mxu0 0.0
    %539 = vmatpush2.msra.mxu0 0.0
    %540 = vmatprep.subr.mxu0 0.0
    %541 = vmatpush2.msra.mxu0 0.0
    %542 = vmatprep.subr.mxu0 0.0
    %543 = vmatpush2.msra.mxu0 0.0
    %544 = vmatprep.subr.mxu0 0.0
    %545 = vmatpush2.msra.mxu0 0.0
    %546 = vmatprep.subr.mxu0 0.0
    %547 = vmatpush2.msra.mxu0 0.0
    %548 = vmatprep.subr.mxu0 0.0
    %549 = vmatpush2.msra.mxu0 0.0
    %550 = vmatprep.subr.mxu0 0.0
    %551 = vmatpush2.msra.mxu0 0.0
    %552 = vmatprep.subr.mxu0 0.0
    %553 = vmatpush2.msra.mxu0 0.0
    %554 = vmatprep.subr.mxu0 0.0
    %555 = vmatpush2.msra.mxu0 0.0
    %556 = vmatprep.subr.mxu0 0.0
    %557 = vmatpush2.msra.mxu0 0.0
    %558 = vmatprep.subr.mxu0 0.0
    %559 = vmatpush2.msra.mxu0 0.0
    %560 = vmatprep.mubr.f32.mxu0 0.0
    %561 = vmatmul.mubr.f32.gmra.mxu0 %v494
    %v562 = vpop.f32.mrf.mxu0
    %v563 = vadd.f32 %v488, %v562
    %v564 = vpop.f32.mrf.mxu0
    %565 = vdwg.mxu0
    %v566 = vadd.f32 %v563, %v296
    %v567 = vxor.u32 %v566, 2147483648
    %v568 = vmul.f32 %v567, 1.442695
    %v569 = vpow.pop %v568
    %v570 = vadd.f32 %v569, 1.0
    %v571 = vrcp.pop %v570
    %v572 = vmul.f32 1.0, %v571
    %v573 = vtanh.pop %v566
    %575 = vrot.lane.b32.xlu0 %v303, 32
    %v576 = vpop.permute.xlu0 %575
    %v578 = vmul.f32 %v572, %v576
    %580 = vrot.lane.b32.xlu0 %v573, 64
    %v581 = vpop.permute.xlu0 %580
    %v583 = vmul.f32 %v572, %v581
    %585 = vrot.lane.b32.xlu0 %v583, 32
    %v586 = vpop.permute.xlu0 %585
    %v588 = vadd.f32 %v578, %v586
    %v589 = vtanh.pop %v588
    %591 = vrot.lane.b32.xlu0 %v589, 64
    %v592 = vpop.permute.xlu0 %591
    %v594 = vmul.f32 %v572, %v592
    %595 = vmatprep.subr.mxu0 0.0
    %596 = vmatpush1.msra.mxu0 0.0
    %597 = vmatprep.subr.mxu0 0.0
    %598 = vmatpush1.msra.mxu0 0.0
    %599 = vmatprep.subr.mxu0 0.0
    %600 = vmatpush1.msra.mxu0 0.0
    %601 = vmatprep.subr.mxu0 0.0
    %602 = vmatpush1.msra.mxu0 0.0
    %603 = vmatprep.subr.mxu0 0.0
    %604 = vmatpush1.msra.mxu0 0.0
    %605 = vmatprep.subr.mxu0 0.0
    %606 = vmatpush1.msra.mxu0 0.0
    %607 = vmatprep.subr.mxu0 0.0
    %608 = vmatpush1.msra.mxu0 0.0
    %609 = vmatprep.subr.mxu0 0.0
    %610 = vmatpush1.msra.mxu0 0.0
    %611 = vmatprep.subr.mxu0 0.0
    %612 = vmatpush1.msra.mxu0 0.0
    %613 = vmatprep.subr.mxu0 0.0
    %614 = vmatpush1.msra.mxu0 0.0
    %615 = vmatprep.subr.mxu0 0.0
    %616 = vmatpush1.msra.mxu0 0.0
    %617 = vmatprep.subr.mxu0 0.0
    %618 = vmatpush1.msra.mxu0 0.0
    %619 = vmatprep.subr.mxu0 0.0
    %620 = vmatpush1.msra.mxu0 %v307
    %621 = vmatprep.subr.mxu0 0.0
    %622 = vmatpush1.msra.mxu0 %v306
    %623 = vmatprep.subr.mxu0 0.0
    %624 = vmatpush1.msra.mxu0 %v305
    %625 = vmatprep.subr.mxu0 0.0
    %626 = vmatpush1.msra.mxu0 %v304
    %627 = vmatprep.subr.mxu0 0.0
    %628 = vmatpush2.msra.mxu0 0.0
    %629 = vmatprep.subr.mxu0 0.0
    %630 = vmatpush2.msra.mxu0 0.0
    %631 = vmatprep.subr.mxu0 0.0
    %632 = vmatpush2.msra.mxu0 0.0
    %633 = vmatprep.subr.mxu0 0.0
    %634 = vmatpush2.msra.mxu0 0.0
    %635 = vmatprep.subr.mxu0 0.0
    %636 = vmatpush2.msra.mxu0 0.0
    %637 = vmatprep.subr.mxu0 0.0
    %638 = vmatpush2.msra.mxu0 0.0
    %639 = vmatprep.subr.mxu0 0.0
    %640 = vmatpush2.msra.mxu0 0.0
    %641 = vmatprep.subr.mxu0 0.0
    %642 = vmatpush2.msra.mxu0 0.0
    %643 = vmatprep.subr.mxu0 0.0
    %644 = vmatpush2.msra.mxu0 0.0
    %645 = vmatprep.subr.mxu0 0.0
    %646 = vmatpush2.msra.mxu0 0.0
    %647 = vmatprep.subr.mxu0 0.0
    %648 = vmatpush2.msra.mxu0 0.0
    %649 = vmatprep.subr.mxu0 0.0
    %650 = vmatpush2.msra.mxu0 0.0
    %651 = vmatprep.subr.mxu0 0.0
    %652 = vmatpush2.msra.mxu0 0.0
    %653 = vmatprep.subr.mxu0 0.0
    %654 = vmatpush2.msra.mxu0 0.0
    %655 = vmatprep.subr.mxu0 0.0
    %656 = vmatpush2.msra.mxu0 0.0
    %657 = vmatprep.subr.mxu0 0.0
    %658 = vmatpush2.msra.mxu0 0.0
    %659 = vmatprep.mubr.f32.mxu0 0.0
    %660 = vmatmul.mubr.f32.gmra.mxu0 %v494
    %v661 = vpop.f32.mrf.mxu0
    %v662 = vadd.f32 0.0, %v661
    %v663 = vpop.f32.mrf.mxu0
    %664 = vdwg.mxu0
    %v665 = vadd.f32 %v258, %v662
    %v666 = vxor.u32 %v665, 2147483648
    %v667 = vmul.f32 %v666, 1.442695
    %v668 = vpow.pop %v667
    %v669 = vadd.f32 %v668, 1.0
    %v670 = vrcp.pop %v669
    %v671 = vmul.f32 1.0, %v670
    %v672 = vtanh.pop %v665
    %v673 = vmul.f32 %v671, %v403
    %675 = vrot.lane.b32.xlu0 %v672, 64
    %v676 = vpop.permute.xlu0 %675
    %v678 = vmul.f32 %v671, %v676
    %680 = vrot.lane.b32.xlu0 %v678, 32
    %v681 = vpop.permute.xlu0 %680
    %v683 = vadd.f32 %v673, %v681
    %v684 = vtanh.pop %v683
    %686 = vrot.lane.b32.xlu0 %v684, 64
    %v687 = vpop.permute.xlu0 %686
    %v689 = vmul.f32 %v671, %v687
    %691 = vrot.lane.b32.xlu0 %v594, 32
    %v692 = vpop.permute.xlu0 %691
    %v693 = vsel %vm161, %v692, 0
    %695 = vmatprep.subr.mxu0 0.0
    %696 = vmatpush1.msra.mxu0 0.0
    %697 = vmatprep.subr.mxu0 0.0
    %698 = vmatpush1.msra.mxu0 0.0
    %699 = vmatprep.subr.mxu0 0.0
    %700 = vmatpush1.msra.mxu0 0.0
    %701 = vmatprep.subr.mxu0 0.0
    %702 = vmatpush1.msra.mxu0 0.0
    %703 = vmatprep.subr.mxu0 0.0
    %704 = vmatpush1.msra.mxu0 0.0
    %705 = vmatprep.subr.mxu0 0.0
    %706 = vmatpush1.msra.mxu0 0.0
    %707 = vmatprep.subr.mxu0 0.0
    %708 = vmatpush1.msra.mxu0 0.0
    %709 = vmatprep.subr.mxu0 0.0
    %710 = vmatpush1.msra.mxu0 0.0
    %711 = vmatprep.subr.mxu0 0.0
    %712 = vmatpush1.msra.mxu0 0.0
    %713 = vmatprep.subr.mxu0 0.0
    %714 = vmatpush1.msra.mxu0 0.0
    %715 = vmatprep.subr.mxu0 0.0
    %716 = vmatpush1.msra.mxu0 0.0
    %717 = vmatprep.subr.mxu0 0.0
    %718 = vmatpush1.msra.mxu0 0.0
    %719 = vmatprep.subr.mxu0 0.0
    %720 = vmatpush1.msra.mxu0 %v417
    %721 = vmatprep.subr.mxu0 0.0
    %722 = vmatpush1.msra.mxu0 %v416
    %723 = vmatprep.subr.mxu0 0.0
    %724 = vmatpush1.msra.mxu0 %v415
    %725 = vmatprep.subr.mxu0 0.0
    %726 = vmatpush1.msra.mxu0 %v414
    %727 = vmatprep.subr.mxu0 0.0
    %728 = vmatpush2.msra.mxu0 0.0
    %729 = vmatprep.subr.mxu0 0.0
    %730 = vmatpush2.msra.mxu0 0.0
    %731 = vmatprep.subr.mxu0 0.0
    %732 = vmatpush2.msra.mxu0 0.0
    %733 = vmatprep.subr.mxu0 0.0
    %734 = vmatpush2.msra.mxu0 0.0
    %735 = vmatprep.subr.mxu0 0.0
    %736 = vmatpush2.msra.mxu0 0.0
    %737 = vmatprep.subr.mxu0 0.0
    %738 = vmatpush2.msra.mxu0 0.0
    %739 = vmatprep.subr.mxu0 0.0
    %740 = vmatpush2.msra.mxu0 0.0
    %741 = vmatprep.subr.mxu0 0.0
    %742 = vmatpush2.msra.mxu0 0.0
    %743 = vmatprep.subr.mxu0 0.0
    %744 = vmatpush2.msra.mxu0 0.0
    %745 = vmatprep.subr.mxu0 0.0
    %746 = vmatpush2.msra.mxu0 0.0
    %747 = vmatprep.subr.mxu0 0.0
    %748 = vmatpush2.msra.mxu0 0.0
    %749 = vmatprep.subr.mxu0 0.0
    %750 = vmatpush2.msra.mxu0 0.0
    %751 = vmatprep.subr.mxu0 0.0
    %752 = vmatpush2.msra.mxu0 0.0
    %753 = vmatprep.subr.mxu0 0.0
    %754 = vmatpush2.msra.mxu0 0.0
    %755 = vmatprep.subr.mxu0 0.0
    %756 = vmatpush2.msra.mxu0 0.0
    %757 = vmatprep.subr.mxu0 0.0
    %758 = vmatpush2.msra.mxu0 0.0
    %759 = vmatprep.mubr.f32.mxu0 0.0
    %760 = vmatmul.mubr.f32.gmra.mxu0 %v693
    %v761 = vpop.f32.mrf.mxu0
    %v762 = vadd.f32 0.0, %v761
    %v763 = vpop.f32.mrf.mxu0
    %764 = vdwg.mxu0
    %766 = vrot.lane.b32.xlu0 %v689, 32
    %v767 = vpop.permute.xlu0 %766
    %v768 = vsel %vm161, %v767, 0
    %770 = vmatprep.subr.mxu0 0.0
    %771 = vmatpush1.msra.mxu0 0.0
    %772 = vmatprep.subr.mxu0 0.0
    %773 = vmatpush1.msra.mxu0 0.0
    %774 = vmatprep.subr.mxu0 0.0
    %775 = vmatpush1.msra.mxu0 0.0
    %776 = vmatprep.subr.mxu0 0.0
    %777 = vmatpush1.msra.mxu0 0.0
    %778 = vmatprep.subr.mxu0 0.0
    %779 = vmatpush1.msra.mxu0 0.0
    %780 = vmatprep.subr.mxu0 0.0
    %781 = vmatpush1.msra.mxu0 0.0
    %782 = vmatprep.subr.mxu0 0.0
    %783 = vmatpush1.msra.mxu0 0.0
    %784 = vmatprep.subr.mxu0 0.0
    %785 = vmatpush1.msra.mxu0 0.0
    %786 = vmatprep.subr.mxu0 0.0
    %787 = vmatpush1.msra.mxu0 0.0
    %788 = vmatprep.subr.mxu0 0.0
    %789 = vmatpush1.msra.mxu0 0.0
    %790 = vmatprep.subr.mxu0 0.0
    %791 = vmatpush1.msra.mxu0 0.0
    %792 = vmatprep.subr.mxu0 0.0
    %793 = vmatpush1.msra.mxu0 0.0
    %794 = vmatprep.subr.mxu0 0.0
    %795 = vmatpush1.msra.mxu0 %v413
    %796 = vmatprep.subr.mxu0 0.0
    %797 = vmatpush1.msra.mxu0 %v412
    %798 = vmatprep.subr.mxu0 0.0
    %799 = vmatpush1.msra.mxu0 %v411
    %800 = vmatprep.subr.mxu0 0.0
    %801 = vmatpush1.msra.mxu0 %v410
    %802 = vmatprep.subr.mxu0 0.0
    %803 = vmatpush2.msra.mxu0 0.0
    %804 = vmatprep.subr.mxu0 0.0
    %805 = vmatpush2.msra.mxu0 0.0
    %806 = vmatprep.subr.mxu0 0.0
    %807 = vmatpush2.msra.mxu0 0.0
    %808 = vmatprep.subr.mxu0 0.0
    %809 = vmatpush2.msra.mxu0 0.0
    %810 = vmatprep.subr.mxu0 0.0
    %811 = vmatpush2.msra.mxu0 0.0
    %812 = vmatprep.subr.mxu0 0.0
    %813 = vmatpush2.msra.mxu0 0.0
    %814 = vmatprep.subr.mxu0 0.0
    %815 = vmatpush2.msra.mxu0 0.0
    %816 = vmatprep.subr.mxu0 0.0
    %817 = vmatpush2.msra.mxu0 0.0
    %818 = vmatprep.subr.mxu0 0.0
    %819 = vmatpush2.msra.mxu0 0.0
    %820 = vmatprep.subr.mxu0 0.0
    %821 = vmatpush2.msra.mxu0 0.0
    %822 = vmatprep.subr.mxu0 0.0
    %823 = vmatpush2.msra.mxu0 0.0
    %824 = vmatprep.subr.mxu0 0.0
    %825 = vmatpush2.msra.mxu0 0.0
    %826 = vmatprep.subr.mxu0 0.0
    %827 = vmatpush2.msra.mxu0 0.0
    %828 = vmatprep.subr.mxu0 0.0
    %829 = vmatpush2.msra.mxu0 0.0
    %830 = vmatprep.subr.mxu0 0.0
    %831 = vmatpush2.msra.mxu0 0.0
    %832 = vmatprep.subr.mxu0 0.0
    %833 = vmatpush2.msra.mxu0 0.0
    %834 = vmatprep.mubr.f32.mxu0 0.0
    %835 = vmatmul.mubr.f32.gmra.mxu0 %v768
    %v836 = vpop.f32.mrf.mxu0
    %v837 = vadd.f32 %v762, %v836
    %v838 = vpop.f32.mrf.mxu0
    %839 = vdwg.mxu0
    %v840 = vadd.f32 %v837, %v296
    %v841 = vxor.u32 %v840, 2147483648
    %v842 = vmul.f32 %v841, 1.442695
    %v843 = vpow.pop %v842
    %v844 = vadd.f32 %v843, 1.0
    %v845 = vrcp.pop %v844
    %v846 = vmul.f32 1.0, %v845
    %v847 = vtanh.pop %v840
    %v848 = vmul.f32 %v846, %v588
    %850 = vrot.lane.b32.xlu0 %v847, 64
    %v851 = vpop.permute.xlu0 %850
    %v853 = vmul.f32 %v846, %v851
    %855 = vrot.lane.b32.xlu0 %v853, 32
    %v856 = vpop.permute.xlu0 %855
    %v858 = vadd.f32 %v848, %v856
    %v859 = vtanh.pop %v858
    %861 = vrot.lane.b32.xlu0 %v859, 64
    %v862 = vpop.permute.xlu0 %861
    %v864 = vmul.f32 %v846, %v862
    %865 = vmatprep.subr.mxu0 0.0
    %866 = vmatpush1.msra.mxu0 0.0
    %867 = vmatprep.subr.mxu0 0.0
    %868 = vmatpush1.msra.mxu0 0.0
    %869 = vmatprep.subr.mxu0 0.0
    %870 = vmatpush1.msra.mxu0 0.0
    %871 = vmatprep.subr.mxu0 0.0
    %872 = vmatpush1.msra.mxu0 0.0
    %873 = vmatprep.subr.mxu0 0.0
    %874 = vmatpush1.msra.mxu0 0.0
    %875 = vmatprep.subr.mxu0 0.0
    %876 = vmatpush1.msra.mxu0 0.0
    %877 = vmatprep.subr.mxu0 0.0
    %878 = vmatpush1.msra.mxu0 0.0
    %879 = vmatprep.subr.mxu0 0.0
    %880 = vmatpush1.msra.mxu0 0.0
    %881 = vmatprep.subr.mxu0 0.0
    %882 = vmatpush1.msra.mxu0 0.0
    %883 = vmatprep.subr.mxu0 0.0
    %884 = vmatpush1.msra.mxu0 0.0
    %885 = vmatprep.subr.mxu0 0.0
    %886 = vmatpush1.msra.mxu0 0.0
    %887 = vmatprep.subr.mxu0 0.0
    %888 = vmatpush1.msra.mxu0 0.0
    %889 = vmatprep.subr.mxu0 0.0
    %890 = vmatpush1.msra.mxu0 %v307
    %891 = vmatprep.subr.mxu0 0.0
    %892 = vmatpush1.msra.mxu0 %v306
    %893 = vmatprep.subr.mxu0 0.0
    %894 = vmatpush1.msra.mxu0 %v305
    %895 = vmatprep.subr.mxu0 0.0
    %896 = vmatpush1.msra.mxu0 %v304
    %897 = vmatprep.subr.mxu0 0.0
    %898 = vmatpush2.msra.mxu0 0.0
    %899 = vmatprep.subr.mxu0 0.0
    %900 = vmatpush2.msra.mxu0 0.0
    %901 = vmatprep.subr.mxu0 0.0
    %902 = vmatpush2.msra.mxu0 0.0
    %903 = vmatprep.subr.mxu0 0.0
    %904 = vmatpush2.msra.mxu0 0.0
    %905 = vmatprep.subr.mxu0 0.0
    %906 = vmatpush2.msra.mxu0 0.0
    %907 = vmatprep.subr.mxu0 0.0
    %908 = vmatpush2.msra.mxu0 0.0
    %909 = vmatprep.subr.mxu0 0.0
    %910 = vmatpush2.msra.mxu0 0.0
    %911 = vmatprep.subr.mxu0 0.0
    %912 = vmatpush2.msra.mxu0 0.0
    %913 = vmatprep.subr.mxu0 0.0
    %914 = vmatpush2.msra.mxu0 0.0
    %915 = vmatprep.subr.mxu0 0.0
    %916 = vmatpush2.msra.mxu0 0.0
    %917 = vmatprep.subr.mxu0 0.0
    %918 = vmatpush2.msra.mxu0 0.0
    %919 = vmatprep.subr.mxu0 0.0
    %920 = vmatpush2.msra.mxu0 0.0
    %921 = vmatprep.subr.mxu0 0.0
    %922 = vmatpush2.msra.mxu0 0.0
    %923 = vmatprep.subr.mxu0 0.0
    %924 = vmatpush2.msra.mxu0 0.0
    %925 = vmatprep.subr.mxu0 0.0
    %926 = vmatpush2.msra.mxu0 0.0
    %927 = vmatprep.subr.mxu0 0.0
    %928 = vmatpush2.msra.mxu0 0.0
    %929 = vmatprep.mubr.f32.mxu0 0.0
    %930 = vmatmul.mubr.f32.gmra.mxu0 %v768
    %v931 = vpop.f32.mrf.mxu0
    %v932 = vadd.f32 0.0, %v931
    %v933 = vpop.f32.mrf.mxu0
    %934 = vdwg.mxu0
    %v935 = vadd.f32 %v263, %v932
    %v936 = vxor.u32 %v935, 2147483648
    %v937 = vmul.f32 %v936, 1.442695
    %v938 = vpow.pop %v937
    %v939 = vadd.f32 %v938, 1.0
    %v940 = vrcp.pop %v939
    %v941 = vmul.f32 1.0, %v940
    %v942 = vtanh.pop %v935
    %v943 = vmul.f32 %v941, %v683
    %945 = vrot.lane.b32.xlu0 %v942, 64
    %v946 = vpop.permute.xlu0 %945
    %v948 = vmul.f32 %v941, %v946
    %950 = vrot.lane.b32.xlu0 %v948, 32
    %v951 = vpop.permute.xlu0 %950
    %v953 = vadd.f32 %v943, %v951
    %v954 = vtanh.pop %v953
    %956 = vrot.lane.b32.xlu0 %v954, 64
    %v957 = vpop.permute.xlu0 %956
    %v959 = vmul.f32 %v941, %v957
    %961 = vrot.lane.b32.xlu0 %v864, 32
    %v962 = vpop.permute.xlu0 %961
    %v963 = vsel %vm161, %v962, 0
    %965 = vmatprep.subr.mxu0 0.0
    %966 = vmatpush1.msra.mxu0 0.0
    %967 = vmatprep.subr.mxu0 0.0
    %968 = vmatpush1.msra.mxu0 0.0
    %969 = vmatprep.subr.mxu0 0.0
    %970 = vmatpush1.msra.mxu0 0.0
    %971 = vmatprep.subr.mxu0 0.0
    %972 = vmatpush1.msra.mxu0 0.0
    %973 = vmatprep.subr.mxu0 0.0
    %974 = vmatpush1.msra.mxu0 0.0
    %975 = vmatprep.subr.mxu0 0.0
    %976 = vmatpush1.msra.mxu0 0.0
    %977 = vmatprep.subr.mxu0 0.0
    %978 = vmatpush1.msra.mxu0 0.0
    %979 = vmatprep.subr.mxu0 0.0
    %980 = vmatpush1.msra.mxu0 0.0
    %981 = vmatprep.subr.mxu0 0.0
    %982 = vmatpush1.msra.mxu0 0.0
    %983 = vmatprep.subr.mxu0 0.0
    %984 = vmatpush1.msra.mxu0 0.0
    %985 = vmatprep.subr.mxu0 0.0
    %986 = vmatpush1.msra.mxu0 0.0
    %987 = vmatprep.subr.mxu0 0.0
    %988 = vmatpush1.msra.mxu0 0.0
    %989 = vmatprep.subr.mxu0 0.0
    %990 = vmatpush1.msra.mxu0 %v417
    %991 = vmatprep.subr.mxu0 0.0
    %992 = vmatpush1.msra.mxu0 %v416
    %993 = vmatprep.subr.mxu0 0.0
    %994 = vmatpush1.msra.mxu0 %v415
    %995 = vmatprep.subr.mxu0 0.0
    %996 = vmatpush1.msra.mxu0 %v414
    %997 = vmatprep.subr.mxu0 0.0
    %998 = vmatpush2.msra.mxu0 0.0
    %999 = vmatprep.subr.mxu0 0.0
    %1000 = vmatpush2.msra.mxu0 0.0
    %1001 = vmatprep.subr.mxu0 0.0
    %1002 = vmatpush2.msra.mxu0 0.0
    %1003 = vmatprep.subr.mxu0 0.0
    %1004 = vmatpush2.msra.mxu0 0.0
    %1005 = vmatprep.subr.mxu0 0.0
    %1006 = vmatpush2.msra.mxu0 0.0
    %1007 = vmatprep.subr.mxu0 0.0
    %1008 = vmatpush2.msra.mxu0 0.0
    %1009 = vmatprep.subr.mxu0 0.0
    %1010 = vmatpush2.msra.mxu0 0.0
    %1011 = vmatprep.subr.mxu0 0.0
    %1012 = vmatpush2.msra.mxu0 0.0
    %1013 = vmatprep.subr.mxu0 0.0
    %1014 = vmatpush2.msra.mxu0 0.0
    %1015 = vmatprep.subr.mxu0 0.0
    %1016 = vmatpush2.msra.mxu0 0.0
    %1017 = vmatprep.subr.mxu0 0.0
    %1018 = vmatpush2.msra.mxu0 0.0
    %1019 = vmatprep.subr.mxu0 0.0
    %1020 = vmatpush2.msra.mxu0 0.0
    %1021 = vmatprep.subr.mxu0 0.0
    %1022 = vmatpush2.msra.mxu0 0.0
    %1023 = vmatprep.subr.mxu0 0.0
    %1024 = vmatpush2.msra.mxu0 0.0
    %1025 = vmatprep.subr.mxu0 0.0
    %1026 = vmatpush2.msra.mxu0 0.0
    %1027 = vmatprep.subr.mxu0 0.0
    %1028 = vmatpush2.msra.mxu0 0.0
    %1029 = vmatprep.mubr.f32.mxu0 0.0
    %1030 = vmatmul.mubr.f32.gmra.mxu0 %v963
    %v1031 = vpop.f32.mrf.mxu0
    %v1032 = vadd.f32 0.0, %v1031
    %v1033 = vpop.f32.mrf.mxu0
    %1034 = vdwg.mxu0
    %1036 = vrot.lane.b32.xlu0 %v959, 32
    %v1037 = vpop.permute.xlu0 %1036
    %v1038 = vsel %vm161, %v1037, 0
    %1040 = vmatprep.subr.mxu0 0.0
    %1041 = vmatpush1.msra.mxu0 0.0
    %1042 = vmatprep.subr.mxu0 0.0
    %1043 = vmatpush1.msra.mxu0 0.0
    %1044 = vmatprep.subr.mxu0 0.0
    %1045 = vmatpush1.msra.mxu0 0.0
    %1046 = vmatprep.subr.mxu0 0.0
    %1047 = vmatpush1.msra.mxu0 0.0
    %1048 = vmatprep.subr.mxu0 0.0
    %1049 = vmatpush1.msra.mxu0 0.0
    %1050 = vmatprep.subr.mxu0 0.0
    %1051 = vmatpush1.msra.mxu0 0.0
    %1052 = vmatprep.subr.mxu0 0.0
    %1053 = vmatpush1.msra.mxu0 0.0
    %1054 = vmatprep.subr.mxu0 0.0
    %1055 = vmatpush1.msra.mxu0 0.0
    %1056 = vmatprep.subr.mxu0 0.0
    %1057 = vmatpush1.msra.mxu0 0.0
    %1058 = vmatprep.subr.mxu0 0.0
    %1059 = vmatpush1.msra.mxu0 0.0
    %1060 = vmatprep.subr.mxu0 0.0
    %1061 = vmatpush1.msra.mxu0 0.0
    %1062 = vmatprep.subr.mxu0 0.0
    %1063 = vmatpush1.msra.mxu0 0.0
    %1064 = vmatprep.subr.mxu0 0.0
    %1065 = vmatpush1.msra.mxu0 %v413
    %1066 = vmatprep.subr.mxu0 0.0
    %1067 = vmatpush1.msra.mxu0 %v412
    %1068 = vmatprep.subr.mxu0 0.0
    %1069 = vmatpush1.msra.mxu0 %v411
    %1070 = vmatprep.subr.mxu0 0.0
    %1071 = vmatpush1.msra.mxu0 %v410
    %1072 = vmatprep.subr.mxu0 0.0
    %1073 = vmatpush2.msra.mxu0 0.0
    %1074 = vmatprep.subr.mxu0 0.0
    %1075 = vmatpush2.msra.mxu0 0.0
    %1076 = vmatprep.subr.mxu0 0.0
    %1077 = vmatpush2.msra.mxu0 0.0
    %1078 = vmatprep.subr.mxu0 0.0
    %1079 = vmatpush2.msra.mxu0 0.0
    %1080 = vmatprep.subr.mxu0 0.0
    %1081 = vmatpush2.msra.mxu0 0.0
    %1082 = vmatprep.subr.mxu0 0.0
    %1083 = vmatpush2.msra.mxu0 0.0
    %1084 = vmatprep.subr.mxu0 0.0
    %1085 = vmatpush2.msra.mxu0 0.0
    %1086 = vmatprep.subr.mxu0 0.0
    %1087 = vmatpush2.msra.mxu0 0.0
    %1088 = vmatprep.subr.mxu0 0.0
    %1089 = vmatpush2.msra.mxu0 0.0
    %1090 = vmatprep.subr.mxu0 0.0
    %1091 = vmatpush2.msra.mxu0 0.0
    %1092 = vmatprep.subr.mxu0 0.0
    %1093 = vmatpush2.msra.mxu0 0.0
    %1094 = vmatprep.subr.mxu0 0.0
    %1095 = vmatpush2.msra.mxu0 0.0
    %1096 = vmatprep.subr.mxu0 0.0
    %1097 = vmatpush2.msra.mxu0 0.0
    %1098 = vmatprep.subr.mxu0 0.0
    %1099 = vmatpush2.msra.mxu0 0.0
    %1100 = vmatprep.subr.mxu0 0.0
    %1101 = vmatpush2.msra.mxu0 0.0
    %1102 = vmatprep.subr.mxu0 0.0
    %1103 = vmatpush2.msra.mxu0 0.0
    %1104 = vmatprep.mubr.f32.mxu0 0.0
    %1105 = vmatmul.mubr.f32.gmra.mxu0 %v1038
    %v1106 = vpop.f32.mrf.mxu0
    %v1107 = vadd.f32 %v1032, %v1106
    %v1108 = vpop.f32.mrf.mxu0
    %1109 = vdwg.mxu0
    %v1110 = vadd.f32 %v1107, %v296
    %v1111 = vxor.u32 %v1110, 2147483648
    %v1112 = vmul.f32 %v1111, 1.442695
    %v1113 = vpow.pop %v1112
    %v1114 = vadd.f32 %v1113, 1.0
    %v1115 = vrcp.pop %v1114
    %v1116 = vmul.f32 1.0, %v1115
    %v1117 = vtanh.pop %v1110
    %v1118 = vmul.f32 %v1116, %v858
    %1120 = vrot.lane.b32.xlu0 %v1117, 64
    %v1121 = vpop.permute.xlu0 %1120
    %v1123 = vmul.f32 %v1116, %v1121
    %1125 = vrot.lane.b32.xlu0 %v1123, 32
    %v1126 = vpop.permute.xlu0 %1125
    %v1128 = vadd.f32 %v1118, %v1126
    %v1129 = vtanh.pop %v1128
    %1131 = vrot.lane.b32.xlu0 %v1129, 64
    %v1132 = vpop.permute.xlu0 %1131
    %v1134 = vmul.f32 %v1116, %v1132
    %1135 = vmatprep.subr.mxu0 0.0
    %1136 = vmatpush1.msra.mxu0 0.0
    %1137 = vmatprep.subr.mxu0 0.0
    %1138 = vmatpush1.msra.mxu0 0.0
    %1139 = vmatprep.subr.mxu0 0.0
    %1140 = vmatpush1.msra.mxu0 0.0
    %1141 = vmatprep.subr.mxu0 0.0
    %1142 = vmatpush1.msra.mxu0 0.0
    %1143 = vmatprep.subr.mxu0 0.0
    %1144 = vmatpush1.msra.mxu0 0.0
    %1145 = vmatprep.subr.mxu0 0.0
    %1146 = vmatpush1.msra.mxu0 0.0
    %1147 = vmatprep.subr.mxu0 0.0
    %1148 = vmatpush1.msra.mxu0 0.0
    %1149 = vmatprep.subr.mxu0 0.0
    %1150 = vmatpush1.msra.mxu0 0.0
    %1151 = vmatprep.subr.mxu0 0.0
    %1152 = vmatpush1.msra.mxu0 0.0
    %1153 = vmatprep.subr.mxu0 0.0
    %1154 = vmatpush1.msra.mxu0 0.0
    %1155 = vmatprep.subr.mxu0 0.0
    %1156 = vmatpush1.msra.mxu0 0.0
    %1157 = vmatprep.subr.mxu0 0.0
    %1158 = vmatpush1.msra.mxu0 0.0
    %1159 = vmatprep.subr.mxu0 0.0
    %1160 = vmatpush1.msra.mxu0 %v307
    %1161 = vmatprep.subr.mxu0 0.0
    %1162 = vmatpush1.msra.mxu0 %v306
    %1163 = vmatprep.subr.mxu0 0.0
    %1164 = vmatpush1.msra.mxu0 %v305
    %1165 = vmatprep.subr.mxu0 0.0
    %1166 = vmatpush1.msra.mxu0 %v304
    %1167 = vmatprep.subr.mxu0 0.0
    %1168 = vmatpush2.msra.mxu0 0.0
    %1169 = vmatprep.subr.mxu0 0.0
    %1170 = vmatpush2.msra.mxu0 0.0
    %1171 = vmatprep.subr.mxu0 0.0
    %1172 = vmatpush2.msra.mxu0 0.0
    %1173 = vmatprep.subr.mxu0 0.0
    %1174 = vmatpush2.msra.mxu0 0.0
    %1175 = vmatprep.subr.mxu0 0.0
    %1176 = vmatpush2.msra.mxu0 0.0
    %1177 = vmatprep.subr.mxu0 0.0
    %1178 = vmatpush2.msra.mxu0 0.0
    %1179 = vmatprep.subr.mxu0 0.0
    %1180 = vmatpush2.msra.mxu0 0.0
    %1181 = vmatprep.subr.mxu0 0.0
    %1182 = vmatpush2.msra.mxu0 0.0
    %1183 = vmatprep.subr.mxu0 0.0
    %1184 = vmatpush2.msra.mxu0 0.0
    %1185 = vmatprep.subr.mxu0 0.0
    %1186 = vmatpush2.msra.mxu0 0.0
    %1187 = vmatprep.subr.mxu0 0.0
    %1188 = vmatpush2.msra.mxu0 0.0
    %1189 = vmatprep.subr.mxu0 0.0
    %1190 = vmatpush2.msra.mxu0 0.0
    %1191 = vmatprep.subr.mxu0 0.0
    %1192 = vmatpush2.msra.mxu0 0.0
    %1193 = vmatprep.subr.mxu0 0.0
    %1194 = vmatpush2.msra.mxu0 0.0
    %1195 = vmatprep.subr.mxu0 0.0
    %1196 = vmatpush2.msra.mxu0 0.0
    %1197 = vmatprep.subr.mxu0 0.0
    %1198 = vmatpush2.msra.mxu0 0.0
    %1199 = vmatprep.mubr.f32.mxu0 0.0
    %1200 = vmatmul.mubr.f32.gmra.mxu0 %v1038
    %v1201 = vpop.f32.mrf.mxu0
    %v1202 = vadd.f32 0.0, %v1201
    %v1203 = vpop.f32.mrf.mxu0
    %1204 = vdwg.mxu0
    %v1205 = vadd.f32 %v268, %v1202
    %v1206 = vxor.u32 %v1205, 2147483648
    %v1207 = vmul.f32 %v1206, 1.442695
    %v1208 = vpow.pop %v1207
    %v1209 = vadd.f32 %v1208, 1.0
    %v1210 = vrcp.pop %v1209
    %v1211 = vmul.f32 1.0, %v1210
    %v1212 = vtanh.pop %v1205
    %v1213 = vmul.f32 %v1211, %v953
    %1215 = vrot.lane.b32.xlu0 %v1212, 64
    %v1216 = vpop.permute.xlu0 %1215
    %v1218 = vmul.f32 %v1211, %v1216
    %1220 = vrot.lane.b32.xlu0 %v1218, 32
    %v1221 = vpop.permute.xlu0 %1220
    %v1223 = vadd.f32 %v1213, %v1221
    %v1224 = vtanh.pop %v1223
    %1226 = vrot.lane.b32.xlu0 %v1224, 64
    %v1227 = vpop.permute.xlu0 %1226
    %v1229 = vmul.f32 %v1211, %v1227
    %1231 = vrot.lane.b32.xlu0 %v1134, 32
    %v1232 = vpop.permute.xlu0 %1231
    %v1233 = vsel %vm161, %v1232, 0
    %1235 = vmatprep.subr.mxu0 0.0
    %1236 = vmatpush1.msra.mxu0 0.0
    %1237 = vmatprep.subr.mxu0 0.0
    %1238 = vmatpush1.msra.mxu0 0.0
    %1239 = vmatprep.subr.mxu0 0.0
    %1240 = vmatpush1.msra.mxu0 0.0
    %1241 = vmatprep.subr.mxu0 0.0
    %1242 = vmatpush1.msra.mxu0 0.0
    %1243 = vmatprep.subr.mxu0 0.0
    %1244 = vmatpush1.msra.mxu0 0.0
    %1245 = vmatprep.subr.mxu0 0.0
    %1246 = vmatpush1.msra.mxu0 0.0
    %1247 = vmatprep.subr.mxu0 0.0
    %1248 = vmatpush1.msra.mxu0 0.0
    %1249 = vmatprep.subr.mxu0 0.0
    %1250 = vmatpush1.msra.mxu0 0.0
    %1251 = vmatprep.subr.mxu0 0.0
    %1252 = vmatpush1.msra.mxu0 0.0
    %1253 = vmatprep.subr.mxu0 0.0
    %1254 = vmatpush1.msra.mxu0 0.0
    %1255 = vmatprep.subr.mxu0 0.0
    %1256 = vmatpush1.msra.mxu0 0.0
    %1257 = vmatprep.subr.mxu0 0.0
    %1258 = vmatpush1.msra.mxu0 0.0
    %1259 = vmatprep.subr.mxu0 0.0
    %1260 = vmatpush1.msra.mxu0 %v417
    %1261 = vmatprep.subr.mxu0 0.0
    %1262 = vmatpush1.msra.mxu0 %v416
    %1263 = vmatprep.subr.mxu0 0.0
    %1264 = vmatpush1.msra.mxu0 %v415
    %1265 = vmatprep.subr.mxu0 0.0
    %1266 = vmatpush1.msra.mxu0 %v414
    %1267 = vmatprep.subr.mxu0 0.0
    %1268 = vmatpush2.msra.mxu0 0.0
    %1269 = vmatprep.subr.mxu0 0.0
    %1270 = vmatpush2.msra.mxu0 0.0
    %1271 = vmatprep.subr.mxu0 0.0
    %1272 = vmatpush2.msra.mxu0 0.0
    %1273 = vmatprep.subr.mxu0 0.0
    %1274 = vmatpush2.msra.mxu0 0.0
    %1275 = vmatprep.subr.mxu0 0.0
    %1276 = vmatpush2.msra.mxu0 0.0
    %1277 = vmatprep.subr.mxu0 0.0
    %1278 = vmatpush2.msra.mxu0 0.0
    %1279 = vmatprep.subr.mxu0 0.0
    %1280 = vmatpush2.msra.mxu0 0.0
    %1281 = vmatprep.subr.mxu0 0.0
    %1282 = vmatpush2.msra.mxu0 0.0
    %1283 = vmatprep.subr.mxu0 0.0
    %1284 = vmatpush2.msra.mxu0 0.0
    %1285 = vmatprep.subr.mxu0 0.0
    %1286 = vmatpush2.msra.mxu0 0.0
    %1287 = vmatprep.subr.mxu0 0.0
    %1288 = vmatpush2.msra.mxu0 0.0
    %1289 = vmatprep.subr.mxu0 0.0
    %1290 = vmatpush2.msra.mxu0 0.0
    %1291 = vmatprep.subr.mxu0 0.0
    %1292 = vmatpush2.msra.mxu0 0.0
    %1293 = vmatprep.subr.mxu0 0.0
    %1294 = vmatpush2.msra.mxu0 0.0
    %1295 = vmatprep.subr.mxu0 0.0
    %1296 = vmatpush2.msra.mxu0 0.0
    %1297 = vmatprep.subr.mxu0 0.0
    %1298 = vmatpush2.msra.mxu0 0.0
    %1299 = vmatprep.mubr.f32.mxu0 0.0
    %1300 = vmatmul.mubr.f32.gmra.mxu0 %v1233
    %v1301 = vpop.f32.mrf.mxu0
    %v1302 = vadd.f32 0.0, %v1301
    %v1303 = vpop.f32.mrf.mxu0
    %1304 = vdwg.mxu0
    %1306 = vrot.lane.b32.xlu0 %v1229, 32
    %v1307 = vpop.permute.xlu0 %1306
    %v1308 = vsel %vm161, %v1307, 0
    %1310 = vmatprep.subr.mxu0 0.0
    %1311 = vmatpush1.msra.mxu0 0.0
    %1312 = vmatprep.subr.mxu0 0.0
    %1313 = vmatpush1.msra.mxu0 0.0
    %1314 = vmatprep.subr.mxu0 0.0
    %1315 = vmatpush1.msra.mxu0 0.0
    %1316 = vmatprep.subr.mxu0 0.0
    %1317 = vmatpush1.msra.mxu0 0.0
    %1318 = vmatprep.subr.mxu0 0.0
    %1319 = vmatpush1.msra.mxu0 0.0
    %1320 = vmatprep.subr.mxu0 0.0
    %1321 = vmatpush1.msra.mxu0 0.0
    %1322 = vmatprep.subr.mxu0 0.0
    %1323 = vmatpush1.msra.mxu0 0.0
    %1324 = vmatprep.subr.mxu0 0.0
    %1325 = vmatpush1.msra.mxu0 0.0
    %1326 = vmatprep.subr.mxu0 0.0
    %1327 = vmatpush1.msra.mxu0 0.0
    %1328 = vmatprep.subr.mxu0 0.0
    %1329 = vmatpush1.msra.mxu0 0.0
    %1330 = vmatprep.subr.mxu0 0.0
    %1331 = vmatpush1.msra.mxu0 0.0
    %1332 = vmatprep.subr.mxu0 0.0
    %1333 = vmatpush1.msra.mxu0 0.0
    %1334 = vmatprep.subr.mxu0 0.0
    %1335 = vmatpush1.msra.mxu0 %v413
    %1336 = vmatprep.subr.mxu0 0.0
    %1337 = vmatpush1.msra.mxu0 %v412
    %1338 = vmatprep.subr.mxu0 0.0
    %1339 = vmatpush1.msra.mxu0 %v411
    %1340 = vmatprep.subr.mxu0 0.0
    %1341 = vmatpush1.msra.mxu0 %v410
    %1342 = vmatprep.subr.mxu0 0.0
    %1343 = vmatpush2.msra.mxu0 0.0
    %1344 = vmatprep.subr.mxu0 0.0
    %1345 = vmatpush2.msra.mxu0 0.0
    %1346 = vmatprep.subr.mxu0 0.0
    %1347 = vmatpush2.msra.mxu0 0.0
    %1348 = vmatprep.subr.mxu0 0.0
    %1349 = vmatpush2.msra.mxu0 0.0
    %1350 = vmatprep.subr.mxu0 0.0
    %1351 = vmatpush2.msra.mxu0 0.0
    %1352 = vmatprep.subr.mxu0 0.0
    %1353 = vmatpush2.msra.mxu0 0.0
    %1354 = vmatprep.subr.mxu0 0.0
    %1355 = vmatpush2.msra.mxu0 0.0
    %1356 = vmatprep.subr.mxu0 0.0
    %1357 = vmatpush2.msra.mxu0 0.0
    %1358 = vmatprep.subr.mxu0 0.0
    %1359 = vmatpush2.msra.mxu0 0.0
    %1360 = vmatprep.subr.mxu0 0.0
    %1361 = vmatpush2.msra.mxu0 0.0
    %1362 = vmatprep.subr.mxu0 0.0
    %1363 = vmatpush2.msra.mxu0 0.0
    %1364 = vmatprep.subr.mxu0 0.0
    %1365 = vmatpush2.msra.mxu0 0.0
    %1366 = vmatprep.subr.mxu0 0.0
    %1367 = vmatpush2.msra.mxu0 0.0
    %1368 = vmatprep.subr.mxu0 0.0
    %1369 = vmatpush2.msra.mxu0 0.0
    %1370 = vmatprep.subr.mxu0 0.0
    %1371 = vmatpush2.msra.mxu0 0.0
    %1372 = vmatprep.subr.mxu0 0.0
    %1373 = vmatpush2.msra.mxu0 0.0
    %1374 = vmatprep.mubr.f32.mxu0 0.0
    %1375 = vmatmul.mubr.f32.gmra.mxu0 %v1308
    %v1376 = vpop.f32.mrf.mxu0
    %v1377 = vadd.f32 %v1302, %v1376
    %v1378 = vpop.f32.mrf.mxu0
    %1379 = vdwg.mxu0
    %v1380 = vadd.f32 %v1377, %v296
    %v1381 = vxor.u32 %v1380, 2147483648
    %v1382 = vmul.f32 %v1381, 1.442695
    %v1383 = vpow.pop %v1382
    %v1384 = vadd.f32 %v1383, 1.0
    %v1385 = vrcp.pop %v1384
    %v1386 = vmul.f32 1.0, %v1385
    %v1387 = vtanh.pop %v1380
    %v1388 = vmul.f32 %v1386, %v1128
    %1390 = vrot.lane.b32.xlu0 %v1387, 64
    %v1391 = vpop.permute.xlu0 %1390
    %v1393 = vmul.f32 %v1386, %v1391
    %1395 = vrot.lane.b32.xlu0 %v1393, 32
    %v1396 = vpop.permute.xlu0 %1395
    %v1398 = vadd.f32 %v1388, %v1396
    %v1399 = vtanh.pop %v1398
    %1401 = vrot.lane.b32.xlu0 %v1399, 64
    %v1402 = vpop.permute.xlu0 %1401
    %v1404 = vmul.f32 %v1386, %v1402
    %1405 = vmatprep.subr.mxu0 0.0
    %1406 = vmatpush1.msra.mxu0 0.0
    %1407 = vmatprep.subr.mxu0 0.0
    %1408 = vmatpush1.msra.mxu0 0.0
    %1409 = vmatprep.subr.mxu0 0.0
    %1410 = vmatpush1.msra.mxu0 0.0
    %1411 = vmatprep.subr.mxu0 0.0
    %1412 = vmatpush1.msra.mxu0 0.0
    %1413 = vmatprep.subr.mxu0 0.0
    %1414 = vmatpush1.msra.mxu0 0.0
    %1415 = vmatprep.subr.mxu0 0.0
    %1416 = vmatpush1.msra.mxu0 0.0
    %1417 = vmatprep.subr.mxu0 0.0
    %1418 = vmatpush1.msra.mxu0 0.0
    %1419 = vmatprep.subr.mxu0 0.0
    %1420 = vmatpush1.msra.mxu0 0.0
    %1421 = vmatprep.subr.mxu0 0.0
    %1422 = vmatpush1.msra.mxu0 0.0
    %1423 = vmatprep.subr.mxu0 0.0
    %1424 = vmatpush1.msra.mxu0 0.0
    %1425 = vmatprep.subr.mxu0 0.0
    %1426 = vmatpush1.msra.mxu0 0.0
    %1427 = vmatprep.subr.mxu0 0.0
    %1428 = vmatpush1.msra.mxu0 0.0
    %1429 = vmatprep.subr.mxu0 0.0
    %1430 = vmatpush1.msra.mxu0 %v307
    %1431 = vmatprep.subr.mxu0 0.0
    %1432 = vmatpush1.msra.mxu0 %v306
    %1433 = vmatprep.subr.mxu0 0.0
    %1434 = vmatpush1.msra.mxu0 %v305
    %1435 = vmatprep.subr.mxu0 0.0
    %1436 = vmatpush1.msra.mxu0 %v304
    %1437 = vmatprep.subr.mxu0 0.0
    %1438 = vmatpush2.msra.mxu0 0.0
    %1439 = vmatprep.subr.mxu0 0.0
    %1440 = vmatpush2.msra.mxu0 0.0
    %1441 = vmatprep.subr.mxu0 0.0
    %1442 = vmatpush2.msra.mxu0 0.0
    %1443 = vmatprep.subr.mxu0 0.0
    %1444 = vmatpush2.msra.mxu0 0.0
    %1445 = vmatprep.subr.mxu0 0.0
    %1446 = vmatpush2.msra.mxu0 0.0
    %1447 = vmatprep.subr.mxu0 0.0
    %1448 = vmatpush2.msra.mxu0 0.0
    %1449 = vmatprep.subr.mxu0 0.0
    %1450 = vmatpush2.msra.mxu0 0.0
    %1451 = vmatprep.subr.mxu0 0.0
    %1452 = vmatpush2.msra.mxu0 0.0
    %1453 = vmatprep.subr.mxu0 0.0
    %1454 = vmatpush2.msra.mxu0 0.0
    %1455 = vmatprep.subr.mxu0 0.0
    %1456 = vmatpush2.msra.mxu0 0.0
    %1457 = vmatprep.subr.mxu0 0.0
    %1458 = vmatpush2.msra.mxu0 0.0
    %1459 = vmatprep.subr.mxu0 0.0
    %1460 = vmatpush2.msra.mxu0 0.0
    %1461 = vmatprep.subr.mxu0 0.0
    %1462 = vmatpush2.msra.mxu0 0.0
    %1463 = vmatprep.subr.mxu0 0.0
    %1464 = vmatpush2.msra.mxu0 0.0
    %1465 = vmatprep.subr.mxu0 0.0
    %1466 = vmatpush2.msra.mxu0 0.0
    %1467 = vmatprep.subr.mxu0 0.0
    %1468 = vmatpush2.msra.mxu0 0.0
    %1469 = vmatprep.mubr.f32.mxu0 0.0
    %1470 = vmatmul.mubr.f32.gmra.mxu0 %v1308
    %v1471 = vpop.f32.mrf.mxu0
    %v1472 = vadd.f32 0.0, %v1471
    %v1473 = vpop.f32.mrf.mxu0
    %1474 = vdwg.mxu0
    %v1475 = vadd.f32 %v273, %v1472
    %v1476 = vxor.u32 %v1475, 2147483648
    %v1477 = vmul.f32 %v1476, 1.442695
    %v1478 = vpow.pop %v1477
    %v1479 = vadd.f32 %v1478, 1.0
    %v1480 = vrcp.pop %v1479
    %v1481 = vmul.f32 1.0, %v1480
    %v1482 = vtanh.pop %v1475
    %v1483 = vmul.f32 %v1481, %v1223
    %1485 = vrot.lane.b32.xlu0 %v1482, 64
    %v1486 = vpop.permute.xlu0 %1485
    %v1488 = vmul.f32 %v1481, %v1486
    %1490 = vrot.lane.b32.xlu0 %v1488, 32
    %v1491 = vpop.permute.xlu0 %1490
    %v1493 = vadd.f32 %v1483, %v1491
    %v1494 = vtanh.pop %v1493
    %1496 = vrot.lane.b32.xlu0 %v1494, 64
    %v1497 = vpop.permute.xlu0 %1496
    %v1499 = vmul.f32 %v1481, %v1497
    %1501 = vrot.lane.b32.xlu0 %v1404, 32
    %v1502 = vpop.permute.xlu0 %1501
    %v1503 = vsel %vm161, %v1502, 0
    %1505 = vmatprep.subr.mxu0 0.0
    %1506 = vmatpush1.msra.mxu0 0.0
    %1507 = vmatprep.subr.mxu0 0.0
    %1508 = vmatpush1.msra.mxu0 0.0
    %1509 = vmatprep.subr.mxu0 0.0
    %1510 = vmatpush1.msra.mxu0 0.0
    %1511 = vmatprep.subr.mxu0 0.0
    %1512 = vmatpush1.msra.mxu0 0.0
    %1513 = vmatprep.subr.mxu0 0.0
    %1514 = vmatpush1.msra.mxu0 0.0
    %1515 = vmatprep.subr.mxu0 0.0
    %1516 = vmatpush1.msra.mxu0 0.0
    %1517 = vmatprep.subr.mxu0 0.0
    %1518 = vmatpush1.msra.mxu0 0.0
    %1519 = vmatprep.subr.mxu0 0.0
    %1520 = vmatpush1.msra.mxu0 0.0
    %1521 = vmatprep.subr.mxu0 0.0
    %1522 = vmatpush1.msra.mxu0 0.0
    %1523 = vmatprep.subr.mxu0 0.0
    %1524 = vmatpush1.msra.mxu0 0.0
    %1525 = vmatprep.subr.mxu0 0.0
    %1526 = vmatpush1.msra.mxu0 0.0
    %1527 = vmatprep.subr.mxu0 0.0
    %1528 = vmatpush1.msra.mxu0 0.0
    %1529 = vmatprep.subr.mxu0 0.0
    %1530 = vmatpush1.msra.mxu0 %v417
    %1531 = vmatprep.subr.mxu0 0.0
    %1532 = vmatpush1.msra.mxu0 %v416
    %1533 = vmatprep.subr.mxu0 0.0
    %1534 = vmatpush1.msra.mxu0 %v415
    %1535 = vmatprep.subr.mxu0 0.0
    %1536 = vmatpush1.msra.mxu0 %v414
    %1537 = vmatprep.subr.mxu0 0.0
    %1538 = vmatpush2.msra.mxu0 0.0
    %1539 = vmatprep.subr.mxu0 0.0
    %1540 = vmatpush2.msra.mxu0 0.0
    %1541 = vmatprep.subr.mxu0 0.0
    %1542 = vmatpush2.msra.mxu0 0.0
    %1543 = vmatprep.subr.mxu0 0.0
    %1544 = vmatpush2.msra.mxu0 0.0
    %1545 = vmatprep.subr.mxu0 0.0
    %1546 = vmatpush2.msra.mxu0 0.0
    %1547 = vmatprep.subr.mxu0 0.0
    %1548 = vmatpush2.msra.mxu0 0.0
    %1549 = vmatprep.subr.mxu0 0.0
    %1550 = vmatpush2.msra.mxu0 0.0
    %1551 = vmatprep.subr.mxu0 0.0
    %1552 = vmatpush2.msra.mxu0 0.0
    %1553 = vmatprep.subr.mxu0 0.0
    %1554 = vmatpush2.msra.mxu0 0.0
    %1555 = vmatprep.subr.mxu0 0.0
    %1556 = vmatpush2.msra.mxu0 0.0
    %1557 = vmatprep.subr.mxu0 0.0
    %1558 = vmatpush2.msra.mxu0 0.0
    %1559 = vmatprep.subr.mxu0 0.0
    %1560 = vmatpush2.msra.mxu0 0.0
    %1561 = vmatprep.subr.mxu0 0.0
    %1562 = vmatpush2.msra.mxu0 0.0
    %1563 = vmatprep.subr.mxu0 0.0
    %1564 = vmatpush2.msra.mxu0 0.0
    %1565 = vmatprep.subr.mxu0 0.0
    %1566 = vmatpush2.msra.mxu0 0.0
    %1567 = vmatprep.subr.mxu0 0.0
    %1568 = vmatpush2.msra.mxu0 0.0
    %1569 = vmatprep.mubr.f32.mxu0 0.0
    %1570 = vmatmul.mubr.f32.gmra.mxu0 %v1503
    %v1571 = vpop.f32.mrf.mxu0
    %v1572 = vadd.f32 0.0, %v1571
    %v1573 = vpop.f32.mrf.mxu0
    %1574 = vdwg.mxu0
    %1576 = vrot.lane.b32.xlu0 %v1499, 32
    %v1577 = vpop.permute.xlu0 %1576
    %v1578 = vsel %vm161, %v1577, 0
    %1580 = vmatprep.subr.mxu0 0.0
    %1581 = vmatpush1.msra.mxu0 0.0
    %1582 = vmatprep.subr.mxu0 0.0
    %1583 = vmatpush1.msra.mxu0 0.0
    %1584 = vmatprep.subr.mxu0 0.0
    %1585 = vmatpush1.msra.mxu0 0.0
    %1586 = vmatprep.subr.mxu0 0.0
    %1587 = vmatpush1.msra.mxu0 0.0
    %1588 = vmatprep.subr.mxu0 0.0
    %1589 = vmatpush1.msra.mxu0 0.0
    %1590 = vmatprep.subr.mxu0 0.0
    %1591 = vmatpush1.msra.mxu0 0.0
    %1592 = vmatprep.subr.mxu0 0.0
    %1593 = vmatpush1.msra.mxu0 0.0
    %1594 = vmatprep.subr.mxu0 0.0
    %1595 = vmatpush1.msra.mxu0 0.0
    %1596 = vmatprep.subr.mxu0 0.0
    %1597 = vmatpush1.msra.mxu0 0.0
    %1598 = vmatprep.subr.mxu0 0.0
    %1599 = vmatpush1.msra.mxu0 0.0
    %1600 = vmatprep.subr.mxu0 0.0
    %1601 = vmatpush1.msra.mxu0 0.0
    %1602 = vmatprep.subr.mxu0 0.0
    %1603 = vmatpush1.msra.mxu0 0.0
    %1604 = vmatprep.subr.mxu0 0.0
    %1605 = vmatpush1.msra.mxu0 %v413
    %1606 = vmatprep.subr.mxu0 0.0
    %1607 = vmatpush1.msra.mxu0 %v412
    %1608 = vmatprep.subr.mxu0 0.0
    %1609 = vmatpush1.msra.mxu0 %v411
    %1610 = vmatprep.subr.mxu0 0.0
    %1611 = vmatpush1.msra.mxu0 %v410
    %1612 = vmatprep.subr.mxu0 0.0
    %1613 = vmatpush2.msra.mxu0 0.0
    %1614 = vmatprep.subr.mxu0 0.0
    %1615 = vmatpush2.msra.mxu0 0.0
    %1616 = vmatprep.subr.mxu0 0.0
    %1617 = vmatpush2.msra.mxu0 0.0
    %1618 = vmatprep.subr.mxu0 0.0
    %1619 = vmatpush2.msra.mxu0 0.0
    %1620 = vmatprep.subr.mxu0 0.0
    %1621 = vmatpush2.msra.mxu0 0.0
    %1622 = vmatprep.subr.mxu0 0.0
    %1623 = vmatpush2.msra.mxu0 0.0
    %1624 = vmatprep.subr.mxu0 0.0
    %1625 = vmatpush2.msra.mxu0 0.0
    %1626 = vmatprep.subr.mxu0 0.0
    %1627 = vmatpush2.msra.mxu0 0.0
    %1628 = vmatprep.subr.mxu0 0.0
    %1629 = vmatpush2.msra.mxu0 0.0
    %1630 = vmatprep.subr.mxu0 0.0
    %1631 = vmatpush2.msra.mxu0 0.0
    %1632 = vmatprep.subr.mxu0 0.0
    %1633 = vmatpush2.msra.mxu0 0.0
    %1634 = vmatprep.subr.mxu0 0.0
    %1635 = vmatpush2.msra.mxu0 0.0
    %1636 = vmatprep.subr.mxu0 0.0
    %1637 = vmatpush2.msra.mxu0 0.0
    %1638 = vmatprep.subr.mxu0 0.0
    %1639 = vmatpush2.msra.mxu0 0.0
    %1640 = vmatprep.subr.mxu0 0.0
    %1641 = vmatpush2.msra.mxu0 0.0
    %1642 = vmatprep.subr.mxu0 0.0
    %1643 = vmatpush2.msra.mxu0 0.0
    %1644 = vmatprep.mubr.f32.mxu0 0.0
    %1645 = vmatmul.mubr.f32.gmra.mxu0 %v1578
    %v1646 = vpop.f32.mrf.mxu0
    %v1647 = vadd.f32 %v1572, %v1646
    %v1648 = vpop.f32.mrf.mxu0
    %1649 = vdwg.mxu0
    %v1650 = vadd.f32 %v1647, %v296
    %v1651 = vxor.u32 %v1650, 2147483648
    %v1652 = vmul.f32 %v1651, 1.442695
    %v1653 = vpow.pop %v1652
    %v1654 = vadd.f32 %v1653, 1.0
    %v1655 = vrcp.pop %v1654
    %v1656 = vmul.f32 1.0, %v1655
    %v1657 = vtanh.pop %v1650
    %v1658 = vmul.f32 %v1656, %v1398
    %1660 = vrot.lane.b32.xlu0 %v1657, 64
    %v1661 = vpop.permute.xlu0 %1660
    %v1663 = vmul.f32 %v1656, %v1661
    %1665 = vrot.lane.b32.xlu0 %v1663, 32
    %v1666 = vpop.permute.xlu0 %1665
    %v1668 = vadd.f32 %v1658, %v1666
    %v1669 = vtanh.pop %v1668
    %1671 = vrot.lane.b32.xlu0 %v1669, 64
    %v1672 = vpop.permute.xlu0 %1671
    %v1674 = vmul.f32 %v1656, %v1672
    %1675 = vmatprep.subr.mxu0 0.0
    %1676 = vmatpush1.msra.mxu0 0.0
    %1677 = vmatprep.subr.mxu0 0.0
    %1678 = vmatpush1.msra.mxu0 0.0
    %1679 = vmatprep.subr.mxu0 0.0
    %1680 = vmatpush1.msra.mxu0 0.0
    %1681 = vmatprep.subr.mxu0 0.0
    %1682 = vmatpush1.msra.mxu0 0.0
    %1683 = vmatprep.subr.mxu0 0.0
    %1684 = vmatpush1.msra.mxu0 0.0
    %1685 = vmatprep.subr.mxu0 0.0
    %1686 = vmatpush1.msra.mxu0 0.0
    %1687 = vmatprep.subr.mxu0 0.0
    %1688 = vmatpush1.msra.mxu0 0.0
    %1689 = vmatprep.subr.mxu0 0.0
    %1690 = vmatpush1.msra.mxu0 0.0
    %1691 = vmatprep.subr.mxu0 0.0
    %1692 = vmatpush1.msra.mxu0 0.0
    %1693 = vmatprep.subr.mxu0 0.0
    %1694 = vmatpush1.msra.mxu0 0.0
    %1695 = vmatprep.subr.mxu0 0.0
    %1696 = vmatpush1.msra.mxu0 0.0
    %1697 = vmatprep.subr.mxu0 0.0
    %1698 = vmatpush1.msra.mxu0 0.0
    %1699 = vmatprep.subr.mxu0 0.0
    %1700 = vmatpush1.msra.mxu0 %v307
    %1701 = vmatprep.subr.mxu0 0.0
    %1702 = vmatpush1.msra.mxu0 %v306
    %1703 = vmatprep.subr.mxu0 0.0
    %1704 = vmatpush1.msra.mxu0 %v305
    %1705 = vmatprep.subr.mxu0 0.0
    %1706 = vmatpush1.msra.mxu0 %v304
    %1707 = vmatprep.subr.mxu0 0.0
    %1708 = vmatpush2.msra.mxu0 0.0
    %1709 = vmatprep.subr.mxu0 0.0
    %1710 = vmatpush2.msra.mxu0 0.0
    %1711 = vmatprep.subr.mxu0 0.0
    %1712 = vmatpush2.msra.mxu0 0.0
    %1713 = vmatprep.subr.mxu0 0.0
    %1714 = vmatpush2.msra.mxu0 0.0
    %1715 = vmatprep.subr.mxu0 0.0
    %1716 = vmatpush2.msra.mxu0 0.0
    %1717 = vmatprep.subr.mxu0 0.0
    %1718 = vmatpush2.msra.mxu0 0.0
    %1719 = vmatprep.subr.mxu0 0.0
    %1720 = vmatpush2.msra.mxu0 0.0
    %1721 = vmatprep.subr.mxu0 0.0
    %1722 = vmatpush2.msra.mxu0 0.0
    %1723 = vmatprep.subr.mxu0 0.0
    %1724 = vmatpush2.msra.mxu0 0.0
    %1725 = vmatprep.subr.mxu0 0.0
    %1726 = vmatpush2.msra.mxu0 0.0
    %1727 = vmatprep.subr.mxu0 0.0
    %1728 = vmatpush2.msra.mxu0 0.0
    %1729 = vmatprep.subr.mxu0 0.0
    %1730 = vmatpush2.msra.mxu0 0.0
    %1731 = vmatprep.subr.mxu0 0.0
    %1732 = vmatpush2.msra.mxu0 0.0
    %1733 = vmatprep.subr.mxu0 0.0
    %1734 = vmatpush2.msra.mxu0 0.0
    %1735 = vmatprep.subr.mxu0 0.0
    %1736 = vmatpush2.msra.mxu0 0.0
    %1737 = vmatprep.subr.mxu0 0.0
    %1738 = vmatpush2.msra.mxu0 0.0
    %1739 = vmatprep.mubr.f32.mxu0 0.0
    %1740 = vmatmul.mubr.f32.gmra.mxu0 %v1578
    %v1741 = vpop.f32.mrf.mxu0
    %v1742 = vadd.f32 0.0, %v1741
    %v1743 = vpop.f32.mrf.mxu0
    %1744 = vdwg.mxu0
    %v1745 = vadd.f32 %v278, %v1742
    %v1746 = vxor.u32 %v1745, 2147483648
    %v1747 = vmul.f32 %v1746, 1.442695
    %v1748 = vpow.pop %v1747
    %v1749 = vadd.f32 %v1748, 1.0
    %v1750 = vrcp.pop %v1749
    %v1751 = vmul.f32 1.0, %v1750
    %v1752 = vtanh.pop %v1745
    %v1753 = vmul.f32 %v1751, %v1493
    %1755 = vrot.lane.b32.xlu0 %v1752, 64
    %v1756 = vpop.permute.xlu0 %1755
    %v1758 = vmul.f32 %v1751, %v1756
    %1760 = vrot.lane.b32.xlu0 %v1758, 32
    %v1761 = vpop.permute.xlu0 %1760
    %v1763 = vadd.f32 %v1753, %v1761
    %v1764 = vtanh.pop %v1763
    %1766 = vrot.lane.b32.xlu0 %v1764, 64
    %v1767 = vpop.permute.xlu0 %1766
    %v1769 = vmul.f32 %v1751, %v1767
    %1771 = vrot.lane.b32.xlu0 %v1674, 32
    %v1772 = vpop.permute.xlu0 %1771
    %v1773 = vsel %vm161, %v1772, 0
    %1775 = vmatprep.subr.mxu0 0.0
    %1776 = vmatpush1.msra.mxu0 0.0
    %1777 = vmatprep.subr.mxu0 0.0
    %1778 = vmatpush1.msra.mxu0 0.0
    %1779 = vmatprep.subr.mxu0 0.0
    %1780 = vmatpush1.msra.mxu0 0.0
    %1781 = vmatprep.subr.mxu0 0.0
    %1782 = vmatpush1.msra.mxu0 0.0
    %1783 = vmatprep.subr.mxu0 0.0
    %1784 = vmatpush1.msra.mxu0 0.0
    %1785 = vmatprep.subr.mxu0 0.0
    %1786 = vmatpush1.msra.mxu0 0.0
    %1787 = vmatprep.subr.mxu0 0.0
    %1788 = vmatpush1.msra.mxu0 0.0
    %1789 = vmatprep.subr.mxu0 0.0
    %1790 = vmatpush1.msra.mxu0 0.0
    %1791 = vmatprep.subr.mxu0 0.0
    %1792 = vmatpush1.msra.mxu0 0.0
    %1793 = vmatprep.subr.mxu0 0.0
    %1794 = vmatpush1.msra.mxu0 0.0
    %1795 = vmatprep.subr.mxu0 0.0
    %1796 = vmatpush1.msra.mxu0 0.0
    %1797 = vmatprep.subr.mxu0 0.0
    %1798 = vmatpush1.msra.mxu0 0.0
    %1799 = vmatprep.subr.mxu0 0.0
    %1800 = vmatpush1.msra.mxu0 %v417
    %1801 = vmatprep.subr.mxu0 0.0
    %1802 = vmatpush1.msra.mxu0 %v416
    %1803 = vmatprep.subr.mxu0 0.0
    %1804 = vmatpush1.msra.mxu0 %v415
    %1805 = vmatprep.subr.mxu0 0.0
    %1806 = vmatpush1.msra.mxu0 %v414
    %1807 = vmatprep.subr.mxu0 0.0
    %1808 = vmatpush2.msra.mxu0 0.0
    %1809 = vmatprep.subr.mxu0 0.0
    %1810 = vmatpush2.msra.mxu0 0.0
    %1811 = vmatprep.subr.mxu0 0.0
    %1812 = vmatpush2.msra.mxu0 0.0
    %1813 = vmatprep.subr.mxu0 0.0
    %1814 = vmatpush2.msra.mxu0 0.0
    %1815 = vmatprep.subr.mxu0 0.0
    %1816 = vmatpush2.msra.mxu0 0.0
    %1817 = vmatprep.subr.mxu0 0.0
    %1818 = vmatpush2.msra.mxu0 0.0
    %1819 = vmatprep.subr.mxu0 0.0
    %1820 = vmatpush2.msra.mxu0 0.0
    %1821 = vmatprep.subr.mxu0 0.0
    %1822 = vmatpush2.msra.mxu0 0.0
    %1823 = vmatprep.subr.mxu0 0.0
    %1824 = vmatpush2.msra.mxu0 0.0
    %1825 = vmatprep.subr.mxu0 0.0
    %1826 = vmatpush2.msra.mxu0 0.0
    %1827 = vmatprep.subr.mxu0 0.0
    %1828 = vmatpush2.msra.mxu0 0.0
    %1829 = vmatprep.subr.mxu0 0.0
    %1830 = vmatpush2.msra.mxu0 0.0
    %1831 = vmatprep.subr.mxu0 0.0
    %1832 = vmatpush2.msra.mxu0 0.0
    %1833 = vmatprep.subr.mxu0 0.0
    %1834 = vmatpush2.msra.mxu0 0.0
    %1835 = vmatprep.subr.mxu0 0.0
    %1836 = vmatpush2.msra.mxu0 0.0
    %1837 = vmatprep.subr.mxu0 0.0
    %1838 = vmatpush2.msra.mxu0 0.0
    %1839 = vmatprep.mubr.f32.mxu0 0.0
    %1840 = vmatmul.mubr.f32.gmra.mxu0 %v1773
    %v1841 = vpop.f32.mrf.mxu0
    %v1842 = vadd.f32 0.0, %v1841
    %v1843 = vpop.f32.mrf.mxu0
    %1844 = vdwg.mxu0
    %1846 = vrot.lane.b32.xlu0 %v1769, 32
    %v1847 = vpop.permute.xlu0 %1846
    %v1848 = vsel %vm161, %v1847, 0
    %1850 = vmatprep.subr.mxu0 0.0
    %1851 = vmatpush1.msra.mxu0 0.0
    %1852 = vmatprep.subr.mxu0 0.0
    %1853 = vmatpush1.msra.mxu0 0.0
    %1854 = vmatprep.subr.mxu0 0.0
    %1855 = vmatpush1.msra.mxu0 0.0
    %1856 = vmatprep.subr.mxu0 0.0
    %1857 = vmatpush1.msra.mxu0 0.0
    %1858 = vmatprep.subr.mxu0 0.0
    %1859 = vmatpush1.msra.mxu0 0.0
    %1860 = vmatprep.subr.mxu0 0.0
    %1861 = vmatpush1.msra.mxu0 0.0
    %1862 = vmatprep.subr.mxu0 0.0
    %1863 = vmatpush1.msra.mxu0 0.0
    %1864 = vmatprep.subr.mxu0 0.0
    %1865 = vmatpush1.msra.mxu0 0.0
    %1866 = vmatprep.subr.mxu0 0.0
    %1867 = vmatpush1.msra.mxu0 0.0
    %1868 = vmatprep.subr.mxu0 0.0
    %1869 = vmatpush1.msra.mxu0 0.0
    %1870 = vmatprep.subr.mxu0 0.0
    %1871 = vmatpush1.msra.mxu0 0.0
    %1872 = vmatprep.subr.mxu0 0.0
    %1873 = vmatpush1.msra.mxu0 0.0
    %1874 = vmatprep.subr.mxu0 0.0
    %1875 = vmatpush1.msra.mxu0 %v413
    %1876 = vmatprep.subr.mxu0 0.0
    %1877 = vmatpush1.msra.mxu0 %v412
    %1878 = vmatprep.subr.mxu0 0.0
    %1879 = vmatpush1.msra.mxu0 %v411
    %1880 = vmatprep.subr.mxu0 0.0
    %1881 = vmatpush1.msra.mxu0 %v410
    %1882 = vmatprep.subr.mxu0 0.0
    %1883 = vmatpush2.msra.mxu0 0.0
    %1884 = vmatprep.subr.mxu0 0.0
    %1885 = vmatpush2.msra.mxu0 0.0
    %1886 = vmatprep.subr.mxu0 0.0
    %1887 = vmatpush2.msra.mxu0 0.0
    %1888 = vmatprep.subr.mxu0 0.0
    %1889 = vmatpush2.msra.mxu0 0.0
    %1890 = vmatprep.subr.mxu0 0.0
    %1891 = vmatpush2.msra.mxu0 0.0
    %1892 = vmatprep.subr.mxu0 0.0
    %1893 = vmatpush2.msra.mxu0 0.0
    %1894 = vmatprep.subr.mxu0 0.0
    %1895 = vmatpush2.msra.mxu0 0.0
    %1896 = vmatprep.subr.mxu0 0.0
    %1897 = vmatpush2.msra.mxu0 0.0
    %1898 = vmatprep.subr.mxu0 0.0
    %1899 = vmatpush2.msra.mxu0 0.0
    %1900 = vmatprep.subr.mxu0 0.0
    %1901 = vmatpush2.msra.mxu0 0.0
    %1902 = vmatprep.subr.mxu0 0.0
    %1903 = vmatpush2.msra.mxu0 0.0
    %1904 = vmatprep.subr.mxu0 0.0
    %1905 = vmatpush2.msra.mxu0 0.0
    %1906 = vmatprep.subr.mxu0 0.0
    %1907 = vmatpush2.msra.mxu0 0.0
    %1908 = vmatprep.subr.mxu0 0.0
    %1909 = vmatpush2.msra.mxu0 0.0
    %1910 = vmatprep.subr.mxu0 0.0
    %1911 = vmatpush2.msra.mxu0 0.0
    %1912 = vmatprep.subr.mxu0 0.0
    %1913 = vmatpush2.msra.mxu0 0.0
    %1914 = vmatprep.mubr.f32.mxu0 0.0
    %1915 = vmatmul.mubr.f32.gmra.mxu0 %v1848
    %v1916 = vpop.f32.mrf.mxu0
    %v1917 = vadd.f32 %v1842, %v1916
    %v1918 = vpop.f32.mrf.mxu0
    %1919 = vdwg.mxu0
    %v1920 = vadd.f32 %v1917, %v296
    %v1921 = vxor.u32 %v1920, 2147483648
    %v1922 = vmul.f32 %v1921, 1.442695
    %v1923 = vpow.pop %v1922
    %v1924 = vadd.f32 %v1923, 1.0
    %v1925 = vrcp.pop %v1924
    %v1926 = vmul.f32 1.0, %v1925
    %v1927 = vtanh.pop %v1920
    %v1928 = vmul.f32 %v1926, %v1668
    %1930 = vrot.lane.b32.xlu0 %v1927, 64
    %v1931 = vpop.permute.xlu0 %1930
    %v1933 = vmul.f32 %v1926, %v1931
    %1935 = vrot.lane.b32.xlu0 %v1933, 32
    %v1936 = vpop.permute.xlu0 %1935
    %v1938 = vadd.f32 %v1928, %v1936
    %v1939 = vtanh.pop %v1938
    %1941 = vrot.lane.b32.xlu0 %v1939, 64
    %v1942 = vpop.permute.xlu0 %1941
    %v1944 = vmul.f32 %v1926, %v1942
    %1945 = vmatprep.subr.mxu0 0.0
    %1946 = vmatpush1.msra.mxu0 0.0
    %1947 = vmatprep.subr.mxu0 0.0
    %1948 = vmatpush1.msra.mxu0 0.0
    %1949 = vmatprep.subr.mxu0 0.0
    %1950 = vmatpush1.msra.mxu0 0.0
    %1951 = vmatprep.subr.mxu0 0.0
    %1952 = vmatpush1.msra.mxu0 0.0
    %1953 = vmatprep.subr.mxu0 0.0
    %1954 = vmatpush1.msra.mxu0 0.0
    %1955 = vmatprep.subr.mxu0 0.0
    %1956 = vmatpush1.msra.mxu0 0.0
    %1957 = vmatprep.subr.mxu0 0.0
    %1958 = vmatpush1.msra.mxu0 0.0
    %1959 = vmatprep.subr.mxu0 0.0
    %1960 = vmatpush1.msra.mxu0 0.0
    %1961 = vmatprep.subr.mxu0 0.0
    %1962 = vmatpush1.msra.mxu0 0.0
    %1963 = vmatprep.subr.mxu0 0.0
    %1964 = vmatpush1.msra.mxu0 0.0
    %1965 = vmatprep.subr.mxu0 0.0
    %1966 = vmatpush1.msra.mxu0 0.0
    %1967 = vmatprep.subr.mxu0 0.0
    %1968 = vmatpush1.msra.mxu0 0.0
    %1969 = vmatprep.subr.mxu0 0.0
    %1970 = vmatpush1.msra.mxu0 %v307
    %1971 = vmatprep.subr.mxu0 0.0
    %1972 = vmatpush1.msra.mxu0 %v306
    %1973 = vmatprep.subr.mxu0 0.0
    %1974 = vmatpush1.msra.mxu0 %v305
    %1975 = vmatprep.subr.mxu0 0.0
    %1976 = vmatpush1.msra.mxu0 %v304
    %1977 = vmatprep.subr.mxu0 0.0
    %1978 = vmatpush2.msra.mxu0 0.0
    %1979 = vmatprep.subr.mxu0 0.0
    %1980 = vmatpush2.msra.mxu0 0.0
    %1981 = vmatprep.subr.mxu0 0.0
    %1982 = vmatpush2.msra.mxu0 0.0
    %1983 = vmatprep.subr.mxu0 0.0
    %1984 = vmatpush2.msra.mxu0 0.0
    %1985 = vmatprep.subr.mxu0 0.0
    %1986 = vmatpush2.msra.mxu0 0.0
    %1987 = vmatprep.subr.mxu0 0.0
    %1988 = vmatpush2.msra.mxu0 0.0
    %1989 = vmatprep.subr.mxu0 0.0
    %1990 = vmatpush2.msra.mxu0 0.0
    %1991 = vmatprep.subr.mxu0 0.0
    %1992 = vmatpush2.msra.mxu0 0.0
    %1993 = vmatprep.subr.mxu0 0.0
    %1994 = vmatpush2.msra.mxu0 0.0
    %1995 = vmatprep.subr.mxu0 0.0
    %1996 = vmatpush2.msra.mxu0 0.0
    %1997 = vmatprep.subr.mxu0 0.0
    %1998 = vmatpush2.msra.mxu0 0.0
    %1999 = vmatprep.subr.mxu0 0.0
    %2000 = vmatpush2.msra.mxu0 0.0
    %2001 = vmatprep.subr.mxu0 0.0
    %2002 = vmatpush2.msra.mxu0 0.0
    %2003 = vmatprep.subr.mxu0 0.0
    %2004 = vmatpush2.msra.mxu0 0.0
    %2005 = vmatprep.subr.mxu0 0.0
    %2006 = vmatpush2.msra.mxu0 0.0
    %2007 = vmatprep.subr.mxu0 0.0
    %2008 = vmatpush2.msra.mxu0 0.0
    %2009 = vmatprep.mubr.f32.mxu0 0.0
    %2010 = vmatmul.mubr.f32.gmra.mxu0 %v1848
    %v2011 = vpop.f32.mrf.mxu0
    %v2012 = vadd.f32 0.0, %v2011
    %v2013 = vpop.f32.mrf.mxu0
    %2014 = vdwg.mxu0
    %v2015 = vadd.f32 %v283, %v2012
    %v2016 = vxor.u32 %v2015, 2147483648
    %v2017 = vmul.f32 %v2016, 1.442695
    %v2018 = vpow.pop %v2017
    %v2019 = vadd.f32 %v2018, 1.0
    %v2020 = vrcp.pop %v2019
    %v2021 = vmul.f32 1.0, %v2020
    %v2022 = vtanh.pop %v2015
    %v2023 = vmul.f32 %v2021, %v1763
    %2025 = vrot.lane.b32.xlu0 %v2022, 64
    %v2026 = vpop.permute.xlu0 %2025
    %v2028 = vmul.f32 %v2021, %v2026
    %2030 = vrot.lane.b32.xlu0 %v2028, 32
    %v2031 = vpop.permute.xlu0 %2030
    %v2033 = vadd.f32 %v2023, %v2031
    %v2034 = vtanh.pop %v2033
    %2036 = vrot.lane.b32.xlu0 %v2034, 64
    %v2037 = vpop.permute.xlu0 %2036
    %v2039 = vmul.f32 %v2021, %v2037
    %2041 = vrot.lane.b32.xlu0 %v1944, 32
    %v2042 = vpop.permute.xlu0 %2041
    %v2043 = vsel %vm161, %v2042, 0
    %2045 = vmatprep.subr.mxu0 0.0
    %2046 = vmatpush1.msra.mxu0 0.0
    %2047 = vmatprep.subr.mxu0 0.0
    %2048 = vmatpush1.msra.mxu0 0.0
    %2049 = vmatprep.subr.mxu0 0.0
    %2050 = vmatpush1.msra.mxu0 0.0
    %2051 = vmatprep.subr.mxu0 0.0
    %2052 = vmatpush1.msra.mxu0 0.0
    %2053 = vmatprep.subr.mxu0 0.0
    %2054 = vmatpush1.msra.mxu0 0.0
    %2055 = vmatprep.subr.mxu0 0.0
    %2056 = vmatpush1.msra.mxu0 0.0
    %2057 = vmatprep.subr.mxu0 0.0
    %2058 = vmatpush1.msra.mxu0 0.0
    %2059 = vmatprep.subr.mxu0 0.0
    %2060 = vmatpush1.msra.mxu0 0.0
    %2061 = vmatprep.subr.mxu0 0.0
    %2062 = vmatpush1.msra.mxu0 0.0
    %2063 = vmatprep.subr.mxu0 0.0
    %2064 = vmatpush1.msra.mxu0 0.0
    %2065 = vmatprep.subr.mxu0 0.0
    %2066 = vmatpush1.msra.mxu0 0.0
    %2067 = vmatprep.subr.mxu0 0.0
    %2068 = vmatpush1.msra.mxu0 0.0
    %2069 = vmatprep.subr.mxu0 0.0
    %2070 = vmatpush1.msra.mxu0 %v417
    %2071 = vmatprep.subr.mxu0 0.0
    %2072 = vmatpush1.msra.mxu0 %v416
    %2073 = vmatprep.subr.mxu0 0.0
    %2074 = vmatpush1.msra.mxu0 %v415
    %2075 = vmatprep.subr.mxu0 0.0
    %2076 = vmatpush1.msra.mxu0 %v414
    %2077 = vmatprep.subr.mxu0 0.0
    %2078 = vmatpush2.msra.mxu0 0.0
    %2079 = vmatprep.subr.mxu0 0.0
    %2080 = vmatpush2.msra.mxu0 0.0
    %2081 = vmatprep.subr.mxu0 0.0
    %2082 = vmatpush2.msra.mxu0 0.0
    %2083 = vmatprep.subr.mxu0 0.0
    %2084 = vmatpush2.msra.mxu0 0.0
    %2085 = vmatprep.subr.mxu0 0.0
    %2086 = vmatpush2.msra.mxu0 0.0
    %2087 = vmatprep.subr.mxu0 0.0
    %2088 = vmatpush2.msra.mxu0 0.0
    %2089 = vmatprep.subr.mxu0 0.0
    %2090 = vmatpush2.msra.mxu0 0.0
    %2091 = vmatprep.subr.mxu0 0.0
    %2092 = vmatpush2.msra.mxu0 0.0
    %2093 = vmatprep.subr.mxu0 0.0
    %2094 = vmatpush2.msra.mxu0 0.0
    %2095 = vmatprep.subr.mxu0 0.0
    %2096 = vmatpush2.msra.mxu0 0.0
    %2097 = vmatprep.subr.mxu0 0.0
    %2098 = vmatpush2.msra.mxu0 0.0
    %2099 = vmatprep.subr.mxu0 0.0
    %2100 = vmatpush2.msra.mxu0 0.0
    %2101 = vmatprep.subr.mxu0 0.0
    %2102 = vmatpush2.msra.mxu0 0.0
    %2103 = vmatprep.subr.mxu0 0.0
    %2104 = vmatpush2.msra.mxu0 0.0
    %2105 = vmatprep.subr.mxu0 0.0
    %2106 = vmatpush2.msra.mxu0 0.0
    %2107 = vmatprep.subr.mxu0 0.0
    %2108 = vmatpush2.msra.mxu0 0.0
    %2109 = vmatprep.mubr.f32.mxu0 0.0
    %2110 = vmatmul.mubr.f32.gmra.mxu0 %v2043
    %v2111 = vpop.f32.mrf.mxu0
    %v2112 = vadd.f32 0.0, %v2111
    %v2113 = vpop.f32.mrf.mxu0
    %2114 = vdwg.mxu0
    %2116 = vrot.lane.b32.xlu0 %v2039, 32
    %v2117 = vpop.permute.xlu0 %2116
    %v2118 = vsel %vm161, %v2117, 0
    %2120 = vmatprep.subr.mxu0 0.0
    %2121 = vmatpush1.msra.mxu0 0.0
    %2122 = vmatprep.subr.mxu0 0.0
    %2123 = vmatpush1.msra.mxu0 0.0
    %2124 = vmatprep.subr.mxu0 0.0
    %2125 = vmatpush1.msra.mxu0 0.0
    %2126 = vmatprep.subr.mxu0 0.0
    %2127 = vmatpush1.msra.mxu0 0.0
    %2128 = vmatprep.subr.mxu0 0.0
    %2129 = vmatpush1.msra.mxu0 0.0
    %2130 = vmatprep.subr.mxu0 0.0
    %2131 = vmatpush1.msra.mxu0 0.0
    %2132 = vmatprep.subr.mxu0 0.0
    %2133 = vmatpush1.msra.mxu0 0.0
    %2134 = vmatprep.subr.mxu0 0.0
    %2135 = vmatpush1.msra.mxu0 0.0
    %2136 = vmatprep.subr.mxu0 0.0
    %2137 = vmatpush1.msra.mxu0 0.0
    %2138 = vmatprep.subr.mxu0 0.0
    %2139 = vmatpush1.msra.mxu0 0.0
    %2140 = vmatprep.subr.mxu0 0.0
    %2141 = vmatpush1.msra.mxu0 0.0
    %2142 = vmatprep.subr.mxu0 0.0
    %2143 = vmatpush1.msra.mxu0 0.0
    %2144 = vmatprep.subr.mxu0 0.0
    %2145 = vmatpush1.msra.mxu0 %v413
    %2146 = vmatprep.subr.mxu0 0.0
    %2147 = vmatpush1.msra.mxu0 %v412
    %2148 = vmatprep.subr.mxu0 0.0
    %2149 = vmatpush1.msra.mxu0 %v411
    %2150 = vmatprep.subr.mxu0 0.0
    %2151 = vmatpush1.msra.mxu0 %v410
    %2152 = vmatprep.subr.mxu0 0.0
    %2153 = vmatpush2.msra.mxu0 0.0
    %2154 = vmatprep.subr.mxu0 0.0
    %2155 = vmatpush2.msra.mxu0 0.0
    %2156 = vmatprep.subr.mxu0 0.0
    %2157 = vmatpush2.msra.mxu0 0.0
    %2158 = vmatprep.subr.mxu0 0.0
    %2159 = vmatpush2.msra.mxu0 0.0
    %2160 = vmatprep.subr.mxu0 0.0
    %2161 = vmatpush2.msra.mxu0 0.0
    %2162 = vmatprep.subr.mxu0 0.0
    %2163 = vmatpush2.msra.mxu0 0.0
    %2164 = vmatprep.subr.mxu0 0.0
    %2165 = vmatpush2.msra.mxu0 0.0
    %2166 = vmatprep.subr.mxu0 0.0
    %2167 = vmatpush2.msra.mxu0 0.0
    %2168 = vmatprep.subr.mxu0 0.0
    %2169 = vmatpush2.msra.mxu0 0.0
    %2170 = vmatprep.subr.mxu0 0.0
    %2171 = vmatpush2.msra.mxu0 0.0
    %2172 = vmatprep.subr.mxu0 0.0
    %2173 = vmatpush2.msra.mxu0 0.0
    %2174 = vmatprep.subr.mxu0 0.0
    %2175 = vmatpush2.msra.mxu0 0.0
    %2176 = vmatprep.subr.mxu0 0.0
    %2177 = vmatpush2.msra.mxu0 0.0
    %2178 = vmatprep.subr.mxu0 0.0
    %2179 = vmatpush2.msra.mxu0 0.0
    %2180 = vmatprep.subr.mxu0 0.0
    %2181 = vmatpush2.msra.mxu0 0.0
    %2182 = vmatprep.subr.mxu0 0.0
    %2183 = vmatpush2.msra.mxu0 0.0
    %2184 = vmatprep.mubr.f32.mxu0 0.0
    %2185 = vmatmul.mubr.f32.gmra.mxu0 %v2118
    %v2186 = vpop.f32.mrf.mxu0
    %v2187 = vadd.f32 %v2112, %v2186
    %v2188 = vpop.f32.mrf.mxu0
    %2189 = vdwg.mxu0
    %v2190 = vadd.f32 %v2187, %v296
    %v2191 = vxor.u32 %v2190, 2147483648
    %v2192 = vmul.f32 %v2191, 1.442695
    %v2193 = vpow.pop %v2192
    %v2194 = vadd.f32 %v2193, 1.0
    %v2195 = vrcp.pop %v2194
    %v2196 = vmul.f32 1.0, %v2195
    %v2197 = vtanh.pop %v2190
    %v2198 = vmul.f32 %v2196, %v1938
    %2200 = vrot.lane.b32.xlu0 %v2197, 64
    %v2201 = vpop.permute.xlu0 %2200
    %v2203 = vmul.f32 %v2196, %v2201
    %2205 = vrot.lane.b32.xlu0 %v2203, 32
    %v2206 = vpop.permute.xlu0 %2205
    %v2208 = vadd.f32 %v2198, %v2206
    %v2209 = vtanh.pop %v2208
    %2211 = vrot.lane.b32.xlu0 %v2209, 64
    %v2212 = vpop.permute.xlu0 %2211
    %v2214 = vmul.f32 %v2196, %v2212
    %2215 = vmatprep.subr.mxu0 0.0
    %2216 = vmatpush1.msra.mxu0 0.0
    %2217 = vmatprep.subr.mxu0 0.0
    %2218 = vmatpush1.msra.mxu0 0.0
    %2219 = vmatprep.subr.mxu0 0.0
    %2220 = vmatpush1.msra.mxu0 0.0
    %2221 = vmatprep.subr.mxu0 0.0
    %2222 = vmatpush1.msra.mxu0 0.0
    %2223 = vmatprep.subr.mxu0 0.0
    %2224 = vmatpush1.msra.mxu0 0.0
    %2225 = vmatprep.subr.mxu0 0.0
    %2226 = vmatpush1.msra.mxu0 0.0
    %2227 = vmatprep.subr.mxu0 0.0
    %2228 = vmatpush1.msra.mxu0 0.0
    %2229 = vmatprep.subr.mxu0 0.0
    %2230 = vmatpush1.msra.mxu0 0.0
    %2231 = vmatprep.subr.mxu0 0.0
    %2232 = vmatpush1.msra.mxu0 0.0
    %2233 = vmatprep.subr.mxu0 0.0
    %2234 = vmatpush1.msra.mxu0 0.0
    %2235 = vmatprep.subr.mxu0 0.0
    %2236 = vmatpush1.msra.mxu0 0.0
    %2237 = vmatprep.subr.mxu0 0.0
    %2238 = vmatpush1.msra.mxu0 0.0
    %2239 = vmatprep.subr.mxu0 0.0
    %2240 = vmatpush1.msra.mxu0 %v307
    %2241 = vmatprep.subr.mxu0 0.0
    %2242 = vmatpush1.msra.mxu0 %v306
    %2243 = vmatprep.subr.mxu0 0.0
    %2244 = vmatpush1.msra.mxu0 %v305
    %2245 = vmatprep.subr.mxu0 0.0
    %2246 = vmatpush1.msra.mxu0 %v304
    %2247 = vmatprep.subr.mxu0 0.0
    %2248 = vmatpush2.msra.mxu0 0.0
    %2249 = vmatprep.subr.mxu0 0.0
    %2250 = vmatpush2.msra.mxu0 0.0
    %2251 = vmatprep.subr.mxu0 0.0
    %2252 = vmatpush2.msra.mxu0 0.0
    %2253 = vmatprep.subr.mxu0 0.0
    %2254 = vmatpush2.msra.mxu0 0.0
    %2255 = vmatprep.subr.mxu0 0.0
    %2256 = vmatpush2.msra.mxu0 0.0
    %2257 = vmatprep.subr.mxu0 0.0
    %2258 = vmatpush2.msra.mxu0 0.0
    %2259 = vmatprep.subr.mxu0 0.0
    %2260 = vmatpush2.msra.mxu0 0.0
    %2261 = vmatprep.subr.mxu0 0.0
    %2262 = vmatpush2.msra.mxu0 0.0
    %2263 = vmatprep.subr.mxu0 0.0
    %2264 = vmatpush2.msra.mxu0 0.0
    %2265 = vmatprep.subr.mxu0 0.0
    %2266 = vmatpush2.msra.mxu0 0.0
    %2267 = vmatprep.subr.mxu0 0.0
    %2268 = vmatpush2.msra.mxu0 0.0
    %2269 = vmatprep.subr.mxu0 0.0
    %2270 = vmatpush2.msra.mxu0 0.0
    %2271 = vmatprep.subr.mxu0 0.0
    %2272 = vmatpush2.msra.mxu0 0.0
    %2273 = vmatprep.subr.mxu0 0.0
    %2274 = vmatpush2.msra.mxu0 0.0
    %2275 = vmatprep.subr.mxu0 0.0
    %2276 = vmatpush2.msra.mxu0 0.0
    %2277 = vmatprep.subr.mxu0 0.0
    %2278 = vmatpush2.msra.mxu0 0.0
    %2279 = vmatprep.mubr.f32.mxu0 0.0
    %2280 = vmatmul.mubr.f32.gmra.mxu0 %v2118
    %v2281 = vpop.f32.mrf.mxu0
    %v2282 = vadd.f32 0.0, %v2281
    %v2283 = vpop.f32.mrf.mxu0
    %2284 = vdwg.mxu0
    %v2285 = vadd.f32 %v288, %v2282
    %v2286 = vxor.u32 %v2285, 2147483648
    %v2287 = vmul.f32 %v2286, 1.442695
    %v2288 = vpow.pop %v2287
    %v2289 = vadd.f32 %v2288, 1.0
    %v2290 = vrcp.pop %v2289
    %v2291 = vmul.f32 1.0, %v2290
    %v2292 = vtanh.pop %v2285
    %v2293 = vmul.f32 %v2291, %v2033
    %2295 = vrot.lane.b32.xlu0 %v2292, 64
    %v2296 = vpop.permute.xlu0 %2295
    %v2298 = vmul.f32 %v2291, %v2296
    %2300 = vrot.lane.b32.xlu0 %v2298, 32
    %v2301 = vpop.permute.xlu0 %2300
    %v2303 = vadd.f32 %v2293, %v2301
    %v2304 = vtanh.pop %v2303
    %2306 = vrot.lane.b32.xlu0 %v2304, 64
    %v2307 = vpop.permute.xlu0 %2306
    %v2309 = vmul.f32 %v2291, %v2307
    %2311 = vrot.lane.b32.xlu0 %v2214, 32
    %v2312 = vpop.permute.xlu0 %2311
    %v2313 = vsel %vm161, %v2312, 0
    %2315 = vmatprep.subr.mxu0 0.0
    %2316 = vmatpush1.msra.mxu0 0.0
    %2317 = vmatprep.subr.mxu0 0.0
    %2318 = vmatpush1.msra.mxu0 0.0
    %2319 = vmatprep.subr.mxu0 0.0
    %2320 = vmatpush1.msra.mxu0 0.0
    %2321 = vmatprep.subr.mxu0 0.0
    %2322 = vmatpush1.msra.mxu0 0.0
    %2323 = vmatprep.subr.mxu0 0.0
    %2324 = vmatpush1.msra.mxu0 0.0
    %2325 = vmatprep.subr.mxu0 0.0
    %2326 = vmatpush1.msra.mxu0 0.0
    %2327 = vmatprep.subr.mxu0 0.0
    %2328 = vmatpush1.msra.mxu0 0.0
    %2329 = vmatprep.subr.mxu0 0.0
    %2330 = vmatpush1.msra.mxu0 0.0
    %2331 = vmatprep.subr.mxu0 0.0
    %2332 = vmatpush1.msra.mxu0 0.0
    %2333 = vmatprep.subr.mxu0 0.0
    %2334 = vmatpush1.msra.mxu0 0.0
    %2335 = vmatprep.subr.mxu0 0.0
    %2336 = vmatpush1.msra.mxu0 0.0
    %2337 = vmatprep.subr.mxu0 0.0
    %2338 = vmatpush1.msra.mxu0 0.0
    %2339 = vmatprep.subr.mxu0 0.0
    %2340 = vmatpush1.msra.mxu0 %v417
    %2341 = vmatprep.subr.mxu0 0.0
    %2342 = vmatpush1.msra.mxu0 %v416
    %2343 = vmatprep.subr.mxu0 0.0
    %2344 = vmatpush1.msra.mxu0 %v415
    %2345 = vmatprep.subr.mxu0 0.0
    %2346 = vmatpush1.msra.mxu0 %v414
    %2347 = vmatprep.subr.mxu0 0.0
    %2348 = vmatpush2.msra.mxu0 0.0
    %2349 = vmatprep.subr.mxu0 0.0
    %2350 = vmatpush2.msra.mxu0 0.0
    %2351 = vmatprep.subr.mxu0 0.0
    %2352 = vmatpush2.msra.mxu0 0.0
    %2353 = vmatprep.subr.mxu0 0.0
    %2354 = vmatpush2.msra.mxu0 0.0
    %2355 = vmatprep.subr.mxu0 0.0
    %2356 = vmatpush2.msra.mxu0 0.0
    %2357 = vmatprep.subr.mxu0 0.0
    %2358 = vmatpush2.msra.mxu0 0.0
    %2359 = vmatprep.subr.mxu0 0.0
    %2360 = vmatpush2.msra.mxu0 0.0
    %2361 = vmatprep.subr.mxu0 0.0
    %2362 = vmatpush2.msra.mxu0 0.0
    %2363 = vmatprep.subr.mxu0 0.0
    %2364 = vmatpush2.msra.mxu0 0.0
    %2365 = vmatprep.subr.mxu0 0.0
    %2366 = vmatpush2.msra.mxu0 0.0
    %2367 = vmatprep.subr.mxu0 0.0
    %2368 = vmatpush2.msra.mxu0 0.0
    %2369 = vmatprep.subr.mxu0 0.0
    %2370 = vmatpush2.msra.mxu0 0.0
    %2371 = vmatprep.subr.mxu0 0.0
    %2372 = vmatpush2.msra.mxu0 0.0
    %2373 = vmatprep.subr.mxu0 0.0
    %2374 = vmatpush2.msra.mxu0 0.0
    %2375 = vmatprep.subr.mxu0 0.0
    %2376 = vmatpush2.msra.mxu0 0.0
    %2377 = vmatprep.subr.mxu0 0.0
    %2378 = vmatpush2.msra.mxu0 0.0
    %2379 = vmatprep.mubr.f32.mxu0 0.0
    %2380 = vmatmul.mubr.f32.gmra.mxu0 %v2313
    %v2381 = vpop.f32.mrf.mxu0
    %v2382 = vadd.f32 0.0, %v2381
    %v2383 = vpop.f32.mrf.mxu0
    %2384 = vdwg.mxu0
    %2386 = vrot.lane.b32.xlu0 %v2309, 32
    %v2387 = vpop.permute.xlu0 %2386
    %v2388 = vsel %vm161, %v2387, 0
    %2390 = vmatprep.subr.mxu0 0.0
    %2391 = vmatpush1.msra.mxu0 0.0
    %2392 = vmatprep.subr.mxu0 0.0
    %2393 = vmatpush1.msra.mxu0 0.0
    %2394 = vmatprep.subr.mxu0 0.0
    %2395 = vmatpush1.msra.mxu0 0.0
    %2396 = vmatprep.subr.mxu0 0.0
    %2397 = vmatpush1.msra.mxu0 0.0
    %2398 = vmatprep.subr.mxu0 0.0
    %2399 = vmatpush1.msra.mxu0 0.0
    %2400 = vmatprep.subr.mxu0 0.0
    %2401 = vmatpush1.msra.mxu0 0.0
    %2402 = vmatprep.subr.mxu0 0.0
    %2403 = vmatpush1.msra.mxu0 0.0
    %2404 = vmatprep.subr.mxu0 0.0
    %2405 = vmatpush1.msra.mxu0 0.0
    %2406 = vmatprep.subr.mxu0 0.0
    %2407 = vmatpush1.msra.mxu0 0.0
    %2408 = vmatprep.subr.mxu0 0.0
    %2409 = vmatpush1.msra.mxu0 0.0
    %2410 = vmatprep.subr.mxu0 0.0
    %2411 = vmatpush1.msra.mxu0 0.0
    %2412 = vmatprep.subr.mxu0 0.0
    %2413 = vmatpush1.msra.mxu0 0.0
    %2414 = vmatprep.subr.mxu0 0.0
    %2415 = vmatpush1.msra.mxu0 %v413
    %2416 = vmatprep.subr.mxu0 0.0
    %2417 = vmatpush1.msra.mxu0 %v412
    %2418 = vmatprep.subr.mxu0 0.0
    %2419 = vmatpush1.msra.mxu0 %v411
    %2420 = vmatprep.subr.mxu0 0.0
    %2421 = vmatpush1.msra.mxu0 %v410
    %2422 = vmatprep.subr.mxu0 0.0
    %2423 = vmatpush2.msra.mxu0 0.0
    %2424 = vmatprep.subr.mxu0 0.0
    %2425 = vmatpush2.msra.mxu0 0.0
    %2426 = vmatprep.subr.mxu0 0.0
    %2427 = vmatpush2.msra.mxu0 0.0
    %2428 = vmatprep.subr.mxu0 0.0
    %2429 = vmatpush2.msra.mxu0 0.0
    %2430 = vmatprep.subr.mxu0 0.0
    %2431 = vmatpush2.msra.mxu0 0.0
    %2432 = vmatprep.subr.mxu0 0.0
    %2433 = vmatpush2.msra.mxu0 0.0
    %2434 = vmatprep.subr.mxu0 0.0
    %2435 = vmatpush2.msra.mxu0 0.0
    %2436 = vmatprep.subr.mxu0 0.0
    %2437 = vmatpush2.msra.mxu0 0.0
    %2438 = vmatprep.subr.mxu0 0.0
    %2439 = vmatpush2.msra.mxu0 0.0
    %2440 = vmatprep.subr.mxu0 0.0
    %2441 = vmatpush2.msra.mxu0 0.0
    %2442 = vmatprep.subr.mxu0 0.0
    %2443 = vmatpush2.msra.mxu0 0.0
    %2444 = vmatprep.subr.mxu0 0.0
    %2445 = vmatpush2.msra.mxu0 0.0
    %2446 = vmatprep.subr.mxu0 0.0
    %2447 = vmatpush2.msra.mxu0 0.0
    %2448 = vmatprep.subr.mxu0 0.0
    %2449 = vmatpush2.msra.mxu0 0.0
    %2450 = vmatprep.subr.mxu0 0.0
    %2451 = vmatpush2.msra.mxu0 0.0
    %2452 = vmatprep.subr.mxu0 0.0
    %2453 = vmatpush2.msra.mxu0 0.0
    %2454 = vmatprep.mubr.f32.mxu0 0.0
    %2455 = vmatmul.mubr.f32.gmra.mxu0 %v2388
    %v2456 = vpop.f32.mrf.mxu0
    %v2457 = vadd.f32 %v2382, %v2456
    %v2458 = vpop.f32.mrf.mxu0
    %2459 = vdwg.mxu0
    %v2460 = vadd.f32 %v2457, %v296
    %v2461 = vxor.u32 %v2460, 2147483648
    %v2462 = vmul.f32 %v2461, 1.442695
    %v2463 = vpow.pop %v2462
    %v2464 = vadd.f32 %v2463, 1.0
    %v2465 = vrcp.pop %v2464
    %v2466 = vmul.f32 1.0, %v2465
    %v2467 = vtanh.pop %v2460
    %v2468 = vmul.f32 %v2466, %v2208
    %2470 = vrot.lane.b32.xlu0 %v2467, 64
    %v2471 = vpop.permute.xlu0 %2470
    %v2473 = vmul.f32 %v2466, %v2471
    %2475 = vrot.lane.b32.xlu0 %v2473, 32
    %v2476 = vpop.permute.xlu0 %2475
    %v2478 = vadd.f32 %v2468, %v2476
    %v2479 = vtanh.pop %v2478
    %2481 = vrot.lane.b32.xlu0 %v2479, 64
    %v2482 = vpop.permute.xlu0 %2481
    %v2484 = vmul.f32 %v2466, %v2482
    %v2485 = vld [vmem:[%s41] sm:$0x1]
    %v2487 = vlaneseq
    %v2488 = vshrl.u32 %v2487, 7
    %v2489 = vsub.s32 0, %v2488
    %v2490 = vrot.slane %v2485, %v2489
    %v2492 = vld [vmem:[%s45] sm:$0x1]
    %v2494 = vlaneseq
    %v2495 = vshrl.u32 %v2494, 7
    %v2496 = vsub.s32 0, %v2495
    %v2497 = vrot.slane %v2492, %v2496
    %v2499 = vld [vmem:[%s7] sm:$0xff]
    %v2500 = vld [vmem:[%s7 + $0x8] sm:$0xff]
    %v2501 = vld [vmem:[%s7 + $0x10] sm:$0xff]
    %v2502 = vld [vmem:[%s7 + $0x18] sm:$0xff]
    %v2503 = vld [vmem:[%s7 + $0x20] sm:$0xff]
    %v2504 = vld [vmem:[%s7 + $0x28] sm:$0xff]
    %v2505 = vld [vmem:[%s7 + $0x30] sm:$0xff]
    %v2506 = vld [vmem:[%s7 + $0x38] sm:$0xff]
    %2515 = vrot.lane.b32.xlu0 %v2499, 96
    %v2516 = vpop.permute.xlu0 %2515
    %2517 = vrot.lane.b32.xlu0 %v2500, 96
    %v2518 = vpop.permute.xlu0 %2517
    %2519 = vrot.lane.b32.xlu0 %v2501, 96
    %v2520 = vpop.permute.xlu0 %2519
    %2521 = vrot.lane.b32.xlu0 %v2502, 96
    %v2522 = vpop.permute.xlu0 %2521
    %2523 = vrot.lane.b32.xlu0 %v2503, 96
    %v2524 = vpop.permute.xlu0 %2523
    %2525 = vrot.lane.b32.xlu0 %v2504, 96
    %v2526 = vpop.permute.xlu0 %2525
    %2527 = vrot.lane.b32.xlu0 %v2505, 96
    %v2528 = vpop.permute.xlu0 %2527
    %2529 = vrot.lane.b32.xlu0 %v2506, 96
    %v2530 = vpop.permute.xlu0 %2529
    %v2539 = vadd.f32 %v594, %v2516
    %v2540 = vadd.f32 %v864, %v2518
    %v2541 = vadd.f32 %v1134, %v2520
    %v2542 = vadd.f32 %v1404, %v2522
    %v2543 = vadd.f32 %v1674, %v2524
    %v2544 = vadd.f32 %v1944, %v2526
    %v2545 = vadd.f32 %v2214, %v2528
    %v2546 = vadd.f32 %v2484, %v2530
    %v2547 = vld [vmem:[%s39] sm:$0xff]
    %v2548 = vld [vmem:[%s39 + $0x8] sm:$0xff]
    %v2549 = vld [vmem:[%s39 + $0x10] sm:$0xff]
    %v2550 = vld [vmem:[%s39 + $0x18] sm:$0xff]
    %2559 = vrot.lane.b32.xlu0 %v2539, 32
    %v2560 = vpop.permute.xlu0 %2559
    %2561 = vrot.lane.b32.xlu0 %v2540, 32
    %v2562 = vpop.permute.xlu0 %2561
    %2563 = vrot.lane.b32.xlu0 %v2541, 32
    %v2564 = vpop.permute.xlu0 %2563
    %2565 = vrot.lane.b32.xlu0 %v2542, 32
    %v2566 = vpop.permute.xlu0 %2565
    %2567 = vrot.lane.b32.xlu0 %v2543, 32
    %v2568 = vpop.permute.xlu0 %2567
    %2569 = vrot.lane.b32.xlu0 %v2544, 32
    %v2570 = vpop.permute.xlu0 %2569
    %2571 = vrot.lane.b32.xlu0 %v2545, 32
    %v2572 = vpop.permute.xlu0 %2571
    %2573 = vrot.lane.b32.xlu0 %v2546, 32
    %v2574 = vpop.permute.xlu0 %2573
    %v2575 = vsel %vm161, %v2560, 0
    %v2577 = vsel %vm161, %v2562, 0
    %v2579 = vsel %vm161, %v2564, 0
    %v2581 = vsel %vm161, %v2566, 0
    %v2583 = vsel %vm161, %v2568, 0
    %v2585 = vsel %vm161, %v2570, 0
    %v2587 = vsel %vm161, %v2572, 0
    %v2589 = vsel %vm161, %v2574, 0
    %2591 = vmatprep.subr.mxu0 0.0
    %2592 = vmatpush1.msra.mxu0 0.0
    %2593 = vmatprep.subr.mxu0 0.0
    %2594 = vmatpush1.msra.mxu0 0.0
    %2595 = vmatprep.subr.mxu0 0.0
    %2596 = vmatpush1.msra.mxu0 0.0
    %2597 = vmatprep.subr.mxu0 0.0
    %2598 = vmatpush1.msra.mxu0 0.0
    %2599 = vmatprep.subr.mxu0 0.0
    %2600 = vmatpush1.msra.mxu0 0.0
    %2601 = vmatprep.subr.mxu0 0.0
    %2602 = vmatpush1.msra.mxu0 0.0
    %2603 = vmatprep.subr.mxu0 0.0
    %2604 = vmatpush1.msra.mxu0 0.0
    %2605 = vmatprep.subr.mxu0 0.0
    %2606 = vmatpush1.msra.mxu0 0.0
    %2607 = vmatprep.subr.mxu0 0.0
    %2608 = vmatpush1.msra.mxu0 0.0
    %2609 = vmatprep.subr.mxu0 0.0
    %2610 = vmatpush1.msra.mxu0 0.0
    %2611 = vmatprep.subr.mxu0 0.0
    %2612 = vmatpush1.msra.mxu0 0.0
    %2613 = vmatprep.subr.mxu0 0.0
    %2614 = vmatpush1.msra.mxu0 0.0
    %2615 = vmatprep.subr.mxu0 0.0
    %2616 = vmatpush1.msra.mxu0 %v2550
    %2617 = vmatprep.subr.mxu0 0.0
    %2618 = vmatpush1.msra.mxu0 %v2549
    %2619 = vmatprep.subr.mxu0 0.0
    %2620 = vmatpush1.msra.mxu0 %v2548
    %2621 = vmatprep.subr.mxu0 0.0
    %2622 = vmatpush1.msra.mxu0 %v2547
    %2623 = vmatprep.subr.mxu0 0.0
    %2624 = vmatpush2.msra.mxu0 0.0
    %2625 = vmatprep.subr.mxu0 0.0
    %2626 = vmatpush2.msra.mxu0 0.0
    %2627 = vmatprep.subr.mxu0 0.0
    %2628 = vmatpush2.msra.mxu0 0.0
    %2629 = vmatprep.subr.mxu0 0.0
    %2630 = vmatpush2.msra.mxu0 0.0
    %2631 = vmatprep.subr.mxu0 0.0
    %2632 = vmatpush2.msra.mxu0 0.0
    %2633 = vmatprep.subr.mxu0 0.0
    %2634 = vmatpush2.msra.mxu0 0.0
    %2635 = vmatprep.subr.mxu0 0.0
    %2636 = vmatpush2.msra.mxu0 0.0
    %2637 = vmatprep.subr.mxu0 0.0
    %2638 = vmatpush2.msra.mxu0 0.0
    %2639 = vmatprep.subr.mxu0 0.0
    %2640 = vmatpush2.msra.mxu0 0.0
    %2641 = vmatprep.subr.mxu0 0.0
    %2642 = vmatpush2.msra.mxu0 0.0
    %2643 = vmatprep.subr.mxu0 0.0
    %2644 = vmatpush2.msra.mxu0 0.0
    %2645 = vmatprep.subr.mxu0 0.0
    %2646 = vmatpush2.msra.mxu0 0.0
    %2647 = vmatprep.subr.mxu0 0.0
    %2648 = vmatpush2.msra.mxu0 0.0
    %2649 = vmatprep.subr.mxu0 0.0
    %2650 = vmatpush2.msra.mxu0 0.0
    %2651 = vmatprep.subr.mxu0 0.0
    %2652 = vmatpush2.msra.mxu0 0.0
    %2653 = vmatprep.subr.mxu0 0.0
    %2654 = vmatpush2.msra.mxu0 0.0
    %2655 = vmatprep.mubr.f32.mxu0 0.0
    %2656 = vmatmul.mubr.f32.gmra.mxu0 %v2575
    %v2657 = vpop.f32.mrf.mxu0
    %v2658 = vadd.f32 %v2490, %v2657
    %v2659 = vpop.f32.mrf.mxu0
    %2660 = vmatprep.mubr.f32.mxu0 0.0
    %2661 = vmatmul.mubr.f32.gmra.mxu0 %v2577
    %v2662 = vpop.f32.mrf.mxu0
    %v2663 = vadd.f32 %v2490, %v2662
    %v2664 = vpop.f32.mrf.mxu0
    %2665 = vmatprep.mubr.f32.mxu0 0.0
    %2666 = vmatmul.mubr.f32.gmra.mxu0 %v2579
    %v2667 = vpop.f32.mrf.mxu0
    %v2668 = vadd.f32 %v2490, %v2667
    %v2669 = vpop.f32.mrf.mxu0
    %2670 = vmatprep.mubr.f32.mxu0 0.0
    %2671 = vmatmul.mubr.f32.gmra.mxu0 %v2581
    %v2672 = vpop.f32.mrf.mxu0
    %v2673 = vadd.f32 %v2490, %v2672
    %v2674 = vpop.f32.mrf.mxu0
    %2675 = vmatprep.mubr.f32.mxu0 0.0
    %2676 = vmatmul.mubr.f32.gmra.mxu0 %v2583
    %v2677 = vpop.f32.mrf.mxu0
    %v2678 = vadd.f32 %v2490, %v2677
    %v2679 = vpop.f32.mrf.mxu0
    %2680 = vmatprep.mubr.f32.mxu0 0.0
    %2681 = vmatmul.mubr.f32.gmra.mxu0 %v2585
    %v2682 = vpop.f32.mrf.mxu0
    %v2683 = vadd.f32 %v2490, %v2682
    %v2684 = vpop.f32.mrf.mxu0
    %2685 = vmatprep.mubr.f32.mxu0 0.0
    %2686 = vmatmul.mubr.f32.gmra.mxu0 %v2587
    %v2687 = vpop.f32.mrf.mxu0
    %v2688 = vadd.f32 %v2490, %v2687
    %v2689 = vpop.f32.mrf.mxu0
    %2690 = vmatprep.mubr.f32.mxu0 0.0
    %2691 = vmatmul.mubr.f32.gmra.mxu0 %v2589
    %v2692 = vpop.f32.mrf.mxu0
    %v2693 = vadd.f32 %v2490, %v2692
    %v2694 = vpop.f32.mrf.mxu0
    %2695 = vdwg.mxu0
    %v2696 = vld [vmem:[%s19] sm:$0xff]
    %v2697 = vld [vmem:[%s19 + $0x8] sm:$0xff]
    %v2698 = vld [vmem:[%s19 + $0x10] sm:$0xff]
    %v2699 = vld [vmem:[%s19 + $0x18] sm:$0xff]
    %v2700 = vld [vmem:[%s25] sm:$0xff]
    %v2701 = vld [vmem:[%s25 + $0x8] sm:$0xff]
    %v2702 = vld [vmem:[%s25 + $0x10] sm:$0xff]
    %v2703 = vld [vmem:[%s25 + $0x18] sm:$0xff]
    %v2704 = vld [vmem:[%s25 + $0x20] sm:$0xff]
    %v2705 = vld [vmem:[%s25 + $0x28] sm:$0xff]
    %v2706 = vld [vmem:[%s25 + $0x30] sm:$0xff]
    %v2707 = vld [vmem:[%s25 + $0x38] sm:$0xff]
    %v2709 = vsel %vm161, %v2658, 0
    %v2712 = vsel %vm161, %v2663, 0
    %v2715 = vsel %vm161, %v2668, 0
    %v2718 = vsel %vm161, %v2673, 0
    %v2721 = vsel %vm161, %v2678, 0
    %v2724 = vsel %vm161, %v2683, 0
    %v2727 = vsel %vm161, %v2688, 0
    %v2730 = vsel %vm161, %v2693, 0
    %2732 = vmatprep.subr.mxu0 0.0
    %2733 = vmatpush1.msra.mxu0 0.0
    %2734 = vmatprep.subr.mxu0 0.0
    %2735 = vmatpush1.msra.mxu0 0.0
    %2736 = vmatprep.subr.mxu0 0.0
    %2737 = vmatpush1.msra.mxu0 0.0
    %2738 = vmatprep.subr.mxu0 0.0
    %2739 = vmatpush1.msra.mxu0 0.0
    %2740 = vmatprep.subr.mxu0 0.0
    %2741 = vmatpush1.msra.mxu0 0.0
    %2742 = vmatprep.subr.mxu0 0.0
    %2743 = vmatpush1.msra.mxu0 0.0
    %2744 = vmatprep.subr.mxu0 0.0
    %2745 = vmatpush1.msra.mxu0 0.0
    %2746 = vmatprep.subr.mxu0 0.0
    %2747 = vmatpush1.msra.mxu0 0.0
    %2748 = vmatprep.subr.mxu0 0.0
    %2749 = vmatpush1.msra.mxu0 0.0
    %2750 = vmatprep.subr.mxu0 0.0
    %2751 = vmatpush1.msra.mxu0 0.0
    %2752 = vmatprep.subr.mxu0 0.0
    %2753 = vmatpush1.msra.mxu0 0.0
    %2754 = vmatprep.subr.mxu0 0.0
    %2755 = vmatpush1.msra.mxu0 0.0
    %2756 = vmatprep.subr.mxu0 0.0
    %2757 = vmatpush1.msra.mxu0 %v2699
    %2758 = vmatprep.subr.mxu0 0.0
    %2759 = vmatpush1.msra.mxu0 %v2698
    %2760 = vmatprep.subr.mxu0 0.0
    %2761 = vmatpush1.msra.mxu0 %v2697
    %2762 = vmatprep.subr.mxu0 0.0
    %2763 = vmatpush1.msra.mxu0 %v2696
    %2764 = vmatprep.subr.mxu0 0.0
    %2765 = vmatpush2.msra.mxu0 0.0
    %2766 = vmatprep.subr.mxu0 0.0
    %2767 = vmatpush2.msra.mxu0 0.0
    %2768 = vmatprep.subr.mxu0 0.0
    %2769 = vmatpush2.msra.mxu0 0.0
    %2770 = vmatprep.subr.mxu0 0.0
    %2771 = vmatpush2.msra.mxu0 0.0
    %2772 = vmatprep.subr.mxu0 0.0
    %2773 = vmatpush2.msra.mxu0 0.0
    %2774 = vmatprep.subr.mxu0 0.0
    %2775 = vmatpush2.msra.mxu0 0.0
    %2776 = vmatprep.subr.mxu0 0.0
    %2777 = vmatpush2.msra.mxu0 0.0
    %2778 = vmatprep.subr.mxu0 0.0
    %2779 = vmatpush2.msra.mxu0 0.0
    %2780 = vmatprep.subr.mxu0 0.0
    %2781 = vmatpush2.msra.mxu0 0.0
    %2782 = vmatprep.subr.mxu0 0.0
    %2783 = vmatpush2.msra.mxu0 0.0
    %2784 = vmatprep.subr.mxu0 0.0
    %2785 = vmatpush2.msra.mxu0 0.0
    %2786 = vmatprep.subr.mxu0 0.0
    %2787 = vmatpush2.msra.mxu0 0.0
    %2788 = vmatprep.subr.mxu0 0.0
    %2789 = vmatpush2.msra.mxu0 0.0
    %2790 = vmatprep.subr.mxu0 0.0
    %2791 = vmatpush2.msra.mxu0 0.0
    %2792 = vmatprep.subr.mxu0 0.0
    %2793 = vmatpush2.msra.mxu0 0.0
    %2794 = vmatprep.subr.mxu0 0.0
    %2795 = vmatpush2.msra.mxu0 0.0
    %2796 = vmatprep.mubr.f32.mxu0 0.0
    %2797 = vmatmul.mubr.f32.gmra.mxu0 %v2709
    %v2798 = vpop.f32.mrf.mxu0
    %v2799 = vadd.f32 %v2700, %v2798
    %v2800 = vpop.f32.mrf.mxu0
    %2801 = vmatprep.mubr.f32.mxu0 0.0
    %2802 = vmatmul.mubr.f32.gmra.mxu0 %v2712
    %v2803 = vpop.f32.mrf.mxu0
    %v2804 = vadd.f32 %v2701, %v2803
    %v2805 = vpop.f32.mrf.mxu0
    %2806 = vmatprep.mubr.f32.mxu0 0.0
    %2807 = vmatmul.mubr.f32.gmra.mxu0 %v2715
    %v2808 = vpop.f32.mrf.mxu0
    %v2809 = vadd.f32 %v2702, %v2808
    %v2810 = vpop.f32.mrf.mxu0
    %2811 = vmatprep.mubr.f32.mxu0 0.0
    %2812 = vmatmul.mubr.f32.gmra.mxu0 %v2718
    %v2813 = vpop.f32.mrf.mxu0
    %v2814 = vadd.f32 %v2703, %v2813
    %v2815 = vpop.f32.mrf.mxu0
    %2816 = vmatprep.mubr.f32.mxu0 0.0
    %2817 = vmatmul.mubr.f32.gmra.mxu0 %v2721
    %v2818 = vpop.f32.mrf.mxu0
    %v2819 = vadd.f32 %v2704, %v2818
    %v2820 = vpop.f32.mrf.mxu0
    %2821 = vmatprep.mubr.f32.mxu0 0.0
    %2822 = vmatmul.mubr.f32.gmra.mxu0 %v2724
    %v2823 = vpop.f32.mrf.mxu0
    %v2824 = vadd.f32 %v2705, %v2823
    %v2825 = vpop.f32.mrf.mxu0
    %2826 = vmatprep.mubr.f32.mxu0 0.0
    %2827 = vmatmul.mubr.f32.gmra.mxu0 %v2727
    %v2828 = vpop.f32.mrf.mxu0
    %v2829 = vadd.f32 %v2706, %v2828
    %v2830 = vpop.f32.mrf.mxu0
    %2831 = vmatprep.mubr.f32.mxu0 0.0
    %2832 = vmatmul.mubr.f32.gmra.mxu0 %v2730
    %v2833 = vpop.f32.mrf.mxu0
    %v2834 = vadd.f32 %v2707, %v2833
    %v2835 = vpop.f32.mrf.mxu0
    %2836 = vdwg.mxu0
    %vm2837 = vcmask 523264
    %v2838 = vsel %vm2837, %v2799, -inf
    %2839 = vmax.xlane.f32.xlu0 %v2838
    %v2840 = vpop.xlane.xlu0 %2839
    %v2841 = vsel %vm2837, %v2804, -inf
    %2842 = vmax.xlane.f32.xlu0 %v2841
    %v2843 = vpop.xlane.xlu0 %2842
    %v2844 = vsel %vm2837, %v2809, -inf
    %2845 = vmax.xlane.f32.xlu0 %v2844
    %v2846 = vpop.xlane.xlu0 %2845
    %v2847 = vsel %vm2837, %v2814, -inf
    %2848 = vmax.xlane.f32.xlu0 %v2847
    %v2849 = vpop.xlane.xlu0 %2848
    %v2850 = vsel %vm2837, %v2819, -inf
    %2851 = vmax.xlane.f32.xlu0 %v2850
    %v2852 = vpop.xlane.xlu0 %2851
    %v2853 = vsel %vm2837, %v2824, -inf
    %2854 = vmax.xlane.f32.xlu0 %v2853
    %v2855 = vpop.xlane.xlu0 %2854
    %v2856 = vsel %vm2837, %v2829, -inf
    %2857 = vmax.xlane.f32.xlu0 %v2856
    %v2858 = vpop.xlane.xlu0 %2857
    %v2859 = vsel %vm2837, %v2834, -inf
    %2860 = vmax.xlane.f32.xlu0 %v2859
    %v2861 = vpop.xlane.xlu0 %2860
    %v2862 = vsub.f32 %v2799, %v2840
    %v2863 = vsub.f32 %v2804, %v2843
    %v2864 = vsub.f32 %v2809, %v2846
    %v2865 = vsub.f32 %v2814, %v2849
    %v2866 = vsub.f32 %v2819, %v2852
    %v2867 = vsub.f32 %v2824, %v2855
    %v2868 = vsub.f32 %v2829, %v2858
    %v2869 = vsub.f32 %v2834, %v2861
    %v2870 = vmul.f32 %v2862, 1.442695
    %v2871 = vpow.pop %v2870
    %v2872 = vmul.f32 %v2863, 1.442695
    %v2873 = vpow.pop %v2872
    %v2874 = vmul.f32 %v2864, 1.442695
    %v2875 = vpow.pop %v2874
    %v2876 = vmul.f32 %v2865, 1.442695
    %v2877 = vpow.pop %v2876
    %v2878 = vmul.f32 %v2866, 1.442695
    %v2879 = vpow.pop %v2878
    %v2880 = vmul.f32 %v2867, 1.442695
    %v2881 = vpow.pop %v2880
    %v2882 = vmul.f32 %v2868, 1.442695
    %v2883 = vpow.pop %v2882
    %v2884 = vmul.f32 %v2869, 1.442695
    %v2885 = vpow.pop %v2884
    %v2886 = vsel %vm2837, %v2871, 0.0
    %2887 = vadd.xlane.f32.xlu0 %v2886
    %v2888 = vpop.xlane.xlu0 %2887
    %v2889 = vsel %vm2837, %v2873, 0.0
    %2890 = vadd.xlane.f32.xlu0 %v2889
    %v2891 = vpop.xlane.xlu0 %2890
    %v2892 = vsel %vm2837, %v2875, 0.0
    %2893 = vadd.xlane.f32.xlu0 %v2892
    %v2894 = vpop.xlane.xlu0 %2893
    %v2895 = vsel %vm2837, %v2877, 0.0
    %2896 = vadd.xlane.f32.xlu0 %v2895
    %v2897 = vpop.xlane.xlu0 %2896
    %v2898 = vsel %vm2837, %v2879, 0.0
    %2899 = vadd.xlane.f32.xlu0 %v2898
    %v2900 = vpop.xlane.xlu0 %2899
    %v2901 = vsel %vm2837, %v2881, 0.0
    %2902 = vadd.xlane.f32.xlu0 %v2901
    %v2903 = vpop.xlane.xlu0 %2902
    %v2904 = vsel %vm2837, %v2883, 0.0
    %2905 = vadd.xlane.f32.xlu0 %v2904
    %v2906 = vpop.xlane.xlu0 %2905
    %v2907 = vsel %vm2837, %v2885, 0.0
    %2908 = vadd.xlane.f32.xlu0 %v2907
    %v2909 = vpop.xlane.xlu0 %2908
    %v2910 = vrcp.pop %v2888
    %v2911 = vrcp.pop %v2891
    %v2912 = vrcp.pop %v2894
    %v2913 = vrcp.pop %v2897
    %v2914 = vrcp.pop %v2900
    %v2915 = vrcp.pop %v2903
    %v2916 = vrcp.pop %v2906
    %v2917 = vrcp.pop %v2909
    %v2918 = vmul.f32 %v2888, %v2910
    %v2919 = vmul.f32 %v2891, %v2911
    %v2920 = vmul.f32 %v2894, %v2912
    %v2921 = vmul.f32 %v2897, %v2913
    %v2922 = vmul.f32 %v2900, %v2914
    %v2923 = vmul.f32 %v2903, %v2915
    %v2924 = vmul.f32 %v2906, %v2916
    %v2925 = vmul.f32 %v2909, %v2917
    %v2926 = vsub.f32 2.0, %v2918
    %v2927 = vsub.f32 2.0, %v2919
    %v2928 = vsub.f32 2.0, %v2920
    %v2929 = vsub.f32 2.0, %v2921
    %v2930 = vsub.f32 2.0, %v2922
    %v2931 = vsub.f32 2.0, %v2923
    %v2932 = vsub.f32 2.0, %v2924
    %v2933 = vsub.f32 2.0, %v2925
    %v2934 = vmul.f32 %v2910, %v2926
    %v2935 = vmul.f32 %v2911, %v2927
    %v2936 = vmul.f32 %v2912, %v2928
    %v2937 = vmul.f32 %v2913, %v2929
    %v2938 = vmul.f32 %v2914, %v2930
    %v2939 = vmul.f32 %v2915, %v2931
    %v2940 = vmul.f32 %v2916, %v2932
    %v2941 = vmul.f32 %v2917, %v2933
    %v2942 = vmul.f32 %v2871, %v2934
    %v2943 = vmul.f32 %v2873, %v2935
    %v2944 = vmul.f32 %v2875, %v2936
    %v2945 = vmul.f32 %v2877, %v2937
    %v2946 = vmul.f32 %v2879, %v2938
    %v2947 = vmul.f32 %v2881, %v2939
    %v2948 = vmul.f32 %v2883, %v2940
    %v2949 = vmul.f32 %v2885, %v2941
    %v2950 = vld [vmem:[%s17] sm:$0xff]
    %v2951 = vld [vmem:[%s17 + $0x8] sm:$0xff]
    %v2952 = vld [vmem:[%s17 + $0x10] sm:$0xff]
    %v2953 = vld [vmem:[%s17 + $0x18] sm:$0xff]
    %v2954 = vld [vmem:[%s17 + $0x20] sm:$0xff]
    %v2955 = vld [vmem:[%s17 + $0x28] sm:$0xff]
    %v2956 = vld [vmem:[%s17 + $0x30] sm:$0xff]
    %v2957 = vld [vmem:[%s17 + $0x38] sm:$0xff]
    %v2959 = vsel %vm2837, %v2942, 0
    %v2962 = vsel %vm2837, %v2943, 0
    %v2965 = vsel %vm2837, %v2944, 0
    %v2968 = vsel %vm2837, %v2945, 0
    %v2971 = vsel %vm2837, %v2946, 0
    %v2974 = vsel %vm2837, %v2947, 0
    %v2977 = vsel %vm2837, %v2948, 0
    %v2980 = vsel %vm2837, %v2949, 0
    %2982 = vmatprep.subr.mxu0 0.0
    %2983 = vmatpush1.msra.mxu0 0.0
    %2984 = vmatprep.subr.mxu0 0.0
    %2985 = vmatpush1.msra.mxu0 0.0
    %2986 = vmatprep.subr.mxu0 0.0
    %2987 = vmatpush1.msra.mxu0 0.0
    %2988 = vmatprep.subr.mxu0 0.0
    %2989 = vmatpush1.msra.mxu0 0.0
    %2990 = vmatprep.subr.mxu0 0.0
    %2991 = vmatpush1.msra.mxu0 0.0
    %2992 = vmatprep.subr.mxu0 0.0
    %2993 = vmatpush1.msra.mxu0 0.0
    %2994 = vmatprep.subr.mxu0 0.0
    %2995 = vmatpush1.msra.mxu0 0.0
    %2996 = vmatprep.subr.mxu0 0.0
    %2997 = vmatpush1.msra.mxu0 0.0
    %2998 = vmatprep.subr.mxu0 0.0
    %2999 = vmatpush1.msra.mxu0 %v2957
    %3000 = vmatprep.subr.mxu0 0.0
    %3001 = vmatpush1.msra.mxu0 %v2956
    %3002 = vmatprep.subr.mxu0 0.0
    %3003 = vmatpush1.msra.mxu0 %v2955
    %3004 = vmatprep.subr.mxu0 0.0
    %3005 = vmatpush1.msra.mxu0 %v2954
    %3006 = vmatprep.subr.mxu0 0.0
    %3007 = vmatpush1.msra.mxu0 %v2953
    %3008 = vmatprep.subr.mxu0 0.0
    %3009 = vmatpush1.msra.mxu0 %v2952
    %3010 = vmatprep.subr.mxu0 0.0
    %3011 = vmatpush1.msra.mxu0 %v2951
    %3012 = vmatprep.subr.mxu0 0.0
    %3013 = vmatpush1.msra.mxu0 %v2950
    %3014 = vmatprep.subr.mxu0 0.0
    %3015 = vmatpush2.msra.mxu0 0.0
    %3016 = vmatprep.subr.mxu0 0.0
    %3017 = vmatpush2.msra.mxu0 0.0
    %3018 = vmatprep.subr.mxu0 0.0
    %3019 = vmatpush2.msra.mxu0 0.0
    %3020 = vmatprep.subr.mxu0 0.0
    %3021 = vmatpush2.msra.mxu0 0.0
    %3022 = vmatprep.subr.mxu0 0.0
    %3023 = vmatpush2.msra.mxu0 0.0
    %3024 = vmatprep.subr.mxu0 0.0
    %3025 = vmatpush2.msra.mxu0 0.0
    %3026 = vmatprep.subr.mxu0 0.0
    %3027 = vmatpush2.msra.mxu0 0.0
    %3028 = vmatprep.subr.mxu0 0.0
    %3029 = vmatpush2.msra.mxu0 0.0
    %3030 = vmatprep.subr.mxu0 0.0
    %3031 = vmatpush2.msra.mxu0 0.0
    %3032 = vmatprep.subr.mxu0 0.0
    %3033 = vmatpush2.msra.mxu0 0.0
    %3034 = vmatprep.subr.mxu0 0.0
    %3035 = vmatpush2.msra.mxu0 0.0
    %3036 = vmatprep.subr.mxu0 0.0
    %3037 = vmatpush2.msra.mxu0 0.0
    %3038 = vmatprep.subr.mxu0 0.0
    %3039 = vmatpush2.msra.mxu0 0.0
    %3040 = vmatprep.subr.mxu0 0.0
    %3041 = vmatpush2.msra.mxu0 0.0
    %3042 = vmatprep.subr.mxu0 0.0
    %3043 = vmatpush2.msra.mxu0 0.0
    %3044 = vmatprep.subr.mxu0 0.0
    %3045 = vmatpush2.msra.mxu0 0.0
    %3046 = vmatprep.mubr.f32.mxu0 0.0
    %3047 = vmatmul.mubr.f32.gmra.mxu0 %v2959
    %v3048 = vpop.f32.mrf.mxu0
    %v3049 = vadd.f32 0.0, %v3048
    %v3050 = vpop.f32.mrf.mxu0
    %3051 = vmatprep.mubr.f32.mxu0 0.0
    %3052 = vmatmul.mubr.f32.gmra.mxu0 %v2962
    %v3053 = vpop.f32.mrf.mxu0
    %v3054 = vadd.f32 0.0, %v3053
    %v3055 = vpop.f32.mrf.mxu0
    %3056 = vmatprep.mubr.f32.mxu0 0.0
    %3057 = vmatmul.mubr.f32.gmra.mxu0 %v2965
    %v3058 = vpop.f32.mrf.mxu0
    %v3059 = vadd.f32 0.0, %v3058
    %v3060 = vpop.f32.mrf.mxu0
    %3061 = vmatprep.mubr.f32.mxu0 0.0
    %3062 = vmatmul.mubr.f32.gmra.mxu0 %v2968
    %v3063 = vpop.f32.mrf.mxu0
    %v3064 = vadd.f32 0.0, %v3063
    %v3065 = vpop.f32.mrf.mxu0
    %3066 = vmatprep.mubr.f32.mxu0 0.0
    %3067 = vmatmul.mubr.f32.gmra.mxu0 %v2971
    %v3068 = vpop.f32.mrf.mxu0
    %v3069 = vadd.f32 0.0, %v3068
    %v3070 = vpop.f32.mrf.mxu0
    %3071 = vmatprep.mubr.f32.mxu0 0.0
    %3072 = vmatmul.mubr.f32.gmra.mxu0 %v2974
    %v3073 = vpop.f32.mrf.mxu0
    %v3074 = vadd.f32 0.0, %v3073
    %v3075 = vpop.f32.mrf.mxu0
    %3076 = vmatprep.mubr.f32.mxu0 0.0
    %3077 = vmatmul.mubr.f32.gmra.mxu0 %v2977
    %v3078 = vpop.f32.mrf.mxu0
    %v3079 = vadd.f32 0.0, %v3078
    %v3080 = vpop.f32.mrf.mxu0
    %3081 = vmatprep.mubr.f32.mxu0 0.0
    %3082 = vmatmul.mubr.f32.gmra.mxu0 %v2980
    %v3083 = vpop.f32.mrf.mxu0
    %v3084 = vadd.f32 0.0, %v3083
    %v3085 = vpop.f32.mrf.mxu0
    %3086 = vdwg.mxu0
    %3087 = vrot.lane.b32.xlu0 %v2539, 64
    %v3088 = vpop.permute.xlu0 %3087
    %3089 = vrot.lane.b32.xlu0 %v2540, 64
    %v3090 = vpop.permute.xlu0 %3089
    %3091 = vrot.lane.b32.xlu0 %v2541, 64
    %v3092 = vpop.permute.xlu0 %3091
    %3093 = vrot.lane.b32.xlu0 %v2542, 64
    %v3094 = vpop.permute.xlu0 %3093
    %3095 = vrot.lane.b32.xlu0 %v2543, 64
    %v3096 = vpop.permute.xlu0 %3095
    %3097 = vrot.lane.b32.xlu0 %v2544, 64
    %v3098 = vpop.permute.xlu0 %3097
    %3099 = vrot.lane.b32.xlu0 %v2545, 64
    %v3100 = vpop.permute.xlu0 %3099
    %3101 = vrot.lane.b32.xlu0 %v2546, 64
    %v3102 = vpop.permute.xlu0 %3101
    %v3111 = vsel %vm161, %v3049, %v3088
    %v3112 = vsel %vm161, %v3054, %v3090
    %v3113 = vsel %vm161, %v3059, %v3092
    %v3114 = vsel %vm161, %v3064, %v3094
    %v3115 = vsel %vm161, %v3069, %v3096
    %v3116 = vsel %vm161, %v3074, %v3098
    %v3117 = vsel %vm161, %v3079, %v3100
    %v3118 = vsel %vm161, %v3084, %v3102
    %v3119 = vld [vmem:[%s43] sm:$0xff]
    %v3120 = vld [vmem:[%s43 + $0x8] sm:$0xff]
    %v3121 = vld [vmem:[%s43 + $0x10] sm:$0xff]
    %v3122 = vld [vmem:[%s43 + $0x18] sm:$0xff]
    %v3123 = vld [vmem:[%s43 + $0x20] sm:$0xff]
    %v3124 = vld [vmem:[%s43 + $0x28] sm:$0xff]
    %v3125 = vld [vmem:[%s43 + $0x30] sm:$0xff]
    %v3126 = vld [vmem:[%s43 + $0x38] sm:$0xff]
    %v3128 = vsel %vm2837, %v3111, 0
    %v3131 = vsel %vm2837, %v3112, 0
    %v3134 = vsel %vm2837, %v3113, 0
    %v3137 = vsel %vm2837, %v3114, 0
    %v3140 = vsel %vm2837, %v3115, 0
    %v3143 = vsel %vm2837, %v3116, 0
    %v3146 = vsel %vm2837, %v3117, 0
    %v3149 = vsel %vm2837, %v3118, 0
    %3151 = vmatprep.subr.mxu0 0.0
    %3152 = vmatpush1.msra.mxu0 0.0
    %3153 = vmatprep.subr.mxu0 0.0
    %3154 = vmatpush1.msra.mxu0 0.0
    %3155 = vmatprep.subr.mxu0 0.0
    %3156 = vmatpush1.msra.mxu0 0.0
    %3157 = vmatprep.subr.mxu0 0.0
    %3158 = vmatpush1.msra.mxu0 0.0
    %3159 = vmatprep.subr.mxu0 0.0
    %3160 = vmatpush1.msra.mxu0 0.0
    %3161 = vmatprep.subr.mxu0 0.0
    %3162 = vmatpush1.msra.mxu0 0.0
    %3163 = vmatprep.subr.mxu0 0.0
    %3164 = vmatpush1.msra.mxu0 0.0
    %3165 = vmatprep.subr.mxu0 0.0
    %3166 = vmatpush1.msra.mxu0 0.0
    %3167 = vmatprep.subr.mxu0 0.0
    %3168 = vmatpush1.msra.mxu0 %v3126
    %3169 = vmatprep.subr.mxu0 0.0
    %3170 = vmatpush1.msra.mxu0 %v3125
    %3171 = vmatprep.subr.mxu0 0.0
    %3172 = vmatpush1.msra.mxu0 %v3124
    %3173 = vmatprep.subr.mxu0 0.0
    %3174 = vmatpush1.msra.mxu0 %v3123
    %3175 = vmatprep.subr.mxu0 0.0
    %3176 = vmatpush1.msra.mxu0 %v3122
    %3177 = vmatprep.subr.mxu0 0.0
    %3178 = vmatpush1.msra.mxu0 %v3121
    %3179 = vmatprep.subr.mxu0 0.0
    %3180 = vmatpush1.msra.mxu0 %v3120
    %3181 = vmatprep.subr.mxu0 0.0
    %3182 = vmatpush1.msra.mxu0 %v3119
    %3183 = vmatprep.subr.mxu0 0.0
    %3184 = vmatpush2.msra.mxu0 0.0
    %3185 = vmatprep.subr.mxu0 0.0
    %3186 = vmatpush2.msra.mxu0 0.0
    %3187 = vmatprep.subr.mxu0 0.0
    %3188 = vmatpush2.msra.mxu0 0.0
    %3189 = vmatprep.subr.mxu0 0.0
    %3190 = vmatpush2.msra.mxu0 0.0
    %3191 = vmatprep.subr.mxu0 0.0
    %3192 = vmatpush2.msra.mxu0 0.0
    %3193 = vmatprep.subr.mxu0 0.0
    %3194 = vmatpush2.msra.mxu0 0.0
    %3195 = vmatprep.subr.mxu0 0.0
    %3196 = vmatpush2.msra.mxu0 0.0
    %3197 = vmatprep.subr.mxu0 0.0
    %3198 = vmatpush2.msra.mxu0 0.0
    %3199 = vmatprep.subr.mxu0 0.0
    %3200 = vmatpush2.msra.mxu0 0.0
    %3201 = vmatprep.subr.mxu0 0.0
    %3202 = vmatpush2.msra.mxu0 0.0
    %3203 = vmatprep.subr.mxu0 0.0
    %3204 = vmatpush2.msra.mxu0 0.0
    %3205 = vmatprep.subr.mxu0 0.0
    %3206 = vmatpush2.msra.mxu0 0.0
    %3207 = vmatprep.subr.mxu0 0.0
    %3208 = vmatpush2.msra.mxu0 0.0
    %3209 = vmatprep.subr.mxu0 0.0
    %3210 = vmatpush2.msra.mxu0 0.0
    %3211 = vmatprep.subr.mxu0 0.0
    %3212 = vmatpush2.msra.mxu0 0.0
    %3213 = vmatprep.subr.mxu0 0.0
    %3214 = vmatpush2.msra.mxu0 0.0
    %3215 = vmatprep.mubr.f32.mxu0 0.0
    %3216 = vmatmul.mubr.f32.gmra.mxu0 %v3128
    %v3217 = vpop.f32.mrf.mxu0
    %v3218 = vadd.f32 %v2497, %v3217
    %v3219 = vpop.f32.mrf.mxu0
    %3220 = vmatprep.mubr.f32.mxu0 0.0
    %3221 = vmatmul.mubr.f32.gmra.mxu0 %v3131
    %v3222 = vpop.f32.mrf.mxu0
    %v3223 = vadd.f32 %v2497, %v3222
    %v3224 = vpop.f32.mrf.mxu0
    %3225 = vmatprep.mubr.f32.mxu0 0.0
    %3226 = vmatmul.mubr.f32.gmra.mxu0 %v3134
    %v3227 = vpop.f32.mrf.mxu0
    %v3228 = vadd.f32 %v2497, %v3227
    %v3229 = vpop.f32.mrf.mxu0
    %3230 = vmatprep.mubr.f32.mxu0 0.0
    %3231 = vmatmul.mubr.f32.gmra.mxu0 %v3137
    %v3232 = vpop.f32.mrf.mxu0
    %v3233 = vadd.f32 %v2497, %v3232
    %v3234 = vpop.f32.mrf.mxu0
    %3235 = vmatprep.mubr.f32.mxu0 0.0
    %3236 = vmatmul.mubr.f32.gmra.mxu0 %v3140
    %v3237 = vpop.f32.mrf.mxu0
    %v3238 = vadd.f32 %v2497, %v3237
    %v3239 = vpop.f32.mrf.mxu0
    %3240 = vmatprep.mubr.f32.mxu0 0.0
    %3241 = vmatmul.mubr.f32.gmra.mxu0 %v3143
    %v3242 = vpop.f32.mrf.mxu0
    %v3243 = vadd.f32 %v2497, %v3242
    %v3244 = vpop.f32.mrf.mxu0
    %3245 = vmatprep.mubr.f32.mxu0 0.0
    %3246 = vmatmul.mubr.f32.gmra.mxu0 %v3146
    %v3247 = vpop.f32.mrf.mxu0
    %v3248 = vadd.f32 %v2497, %v3247
    %v3249 = vpop.f32.mrf.mxu0
    %3250 = vmatprep.mubr.f32.mxu0 0.0
    %3251 = vmatmul.mubr.f32.gmra.mxu0 %v3149
    %v3252 = vpop.f32.mrf.mxu0
    %v3253 = vadd.f32 %v2497, %v3252
    %v3254 = vpop.f32.mrf.mxu0
    %3255 = vdwg.mxu0
    %v3256 = vtanh.pop %v3218
    %v3257 = vtanh.pop %v3223
    %v3258 = vtanh.pop %v3228
    %v3259 = vtanh.pop %v3233
    %v3260 = vtanh.pop %v3238
    %v3261 = vtanh.pop %v3243
    %v3262 = vtanh.pop %v3248
    %v3263 = vtanh.pop %v3253
    %3272 = vrot.lane.b32.xlu0 %v3256, 96
    %v3273 = vpop.permute.xlu0 %3272
    %3274 = vrot.lane.b32.xlu0 %v3257, 96
    %v3275 = vpop.permute.xlu0 %3274
    %3276 = vrot.lane.b32.xlu0 %v3258, 96
    %v3277 = vpop.permute.xlu0 %3276
    %3278 = vrot.lane.b32.xlu0 %v3259, 96
    %v3279 = vpop.permute.xlu0 %3278
    %3280 = vrot.lane.b32.xlu0 %v3260, 96
    %v3281 = vpop.permute.xlu0 %3280
    %3282 = vrot.lane.b32.xlu0 %v3261, 96
    %v3283 = vpop.permute.xlu0 %3282
    %3284 = vrot.lane.b32.xlu0 %v3262, 96
    %v3285 = vpop.permute.xlu0 %3284
    %3286 = vrot.lane.b32.xlu0 %v3263, 96
    %v3287 = vpop.permute.xlu0 %3286
    %v3296 = vadd.f32 %v2539, %v3273
    %v3297 = vadd.f32 %v2540, %v3275
    %v3298 = vadd.f32 %v2541, %v3277
    %v3299 = vadd.f32 %v2542, %v3279
    %v3300 = vadd.f32 %v2543, %v3281
    %v3301 = vadd.f32 %v2544, %v3283
    %v3302 = vadd.f32 %v2545, %v3285
    %v3303 = vadd.f32 %v2546, %v3287
    %3312 = vrot.lane.b32.xlu0 %v3296, 32
    %v3313 = vpop.permute.xlu0 %3312
    %3314 = vrot.lane.b32.xlu0 %v3297, 32
    %v3315 = vpop.permute.xlu0 %3314
    %3316 = vrot.lane.b32.xlu0 %v3298, 32
    %v3317 = vpop.permute.xlu0 %3316
    %3318 = vrot.lane.b32.xlu0 %v3299, 32
    %v3319 = vpop.permute.xlu0 %3318
    %3320 = vrot.lane.b32.xlu0 %v3300, 32
    %v3321 = vpop.permute.xlu0 %3320
    %3322 = vrot.lane.b32.xlu0 %v3301, 32
    %v3323 = vpop.permute.xlu0 %3322
    %3324 = vrot.lane.b32.xlu0 %v3302, 32
    %v3325 = vpop.permute.xlu0 %3324
    %3326 = vrot.lane.b32.xlu0 %v3303, 32
    %v3327 = vpop.permute.xlu0 %3326
    %v3328 = vsel %vm161, %v3313, 0
    %v3330 = vsel %vm161, %v3315, 0
    %v3332 = vsel %vm161, %v3317, 0
    %v3334 = vsel %vm161, %v3319, 0
    %v3336 = vsel %vm161, %v3321, 0
    %v3338 = vsel %vm161, %v3323, 0
    %v3340 = vsel %vm161, %v3325, 0
    %v3342 = vsel %vm161, %v3327, 0
    %3344 = vmatprep.subr.mxu0 0.0
    %3345 = vmatpush1.msra.mxu0 0.0
    %3346 = vmatprep.subr.mxu0 0.0
    %3347 = vmatpush1.msra.mxu0 0.0
    %3348 = vmatprep.subr.mxu0 0.0
    %3349 = vmatpush1.msra.mxu0 0.0
    %3350 = vmatprep.subr.mxu0 0.0
    %3351 = vmatpush1.msra.mxu0 0.0
    %3352 = vmatprep.subr.mxu0 0.0
    %3353 = vmatpush1.msra.mxu0 0.0
    %3354 = vmatprep.subr.mxu0 0.0
    %3355 = vmatpush1.msra.mxu0 0.0
    %3356 = vmatprep.subr.mxu0 0.0
    %3357 = vmatpush1.msra.mxu0 0.0
    %3358 = vmatprep.subr.mxu0 0.0
    %3359 = vmatpush1.msra.mxu0 0.0
    %3360 = vmatprep.subr.mxu0 0.0
    %3361 = vmatpush1.msra.mxu0 0.0
    %3362 = vmatprep.subr.mxu0 0.0
    %3363 = vmatpush1.msra.mxu0 0.0
    %3364 = vmatprep.subr.mxu0 0.0
    %3365 = vmatpush1.msra.mxu0 0.0
    %3366 = vmatprep.subr.mxu0 0.0
    %3367 = vmatpush1.msra.mxu0 0.0
    %3368 = vmatprep.subr.mxu0 0.0
    %3369 = vmatpush1.msra.mxu0 %v2550
    %3370 = vmatprep.subr.mxu0 0.0
    %3371 = vmatpush1.msra.mxu0 %v2549
    %3372 = vmatprep.subr.mxu0 0.0
    %3373 = vmatpush1.msra.mxu0 %v2548
    %3374 = vmatprep.subr.mxu0 0.0
    %3375 = vmatpush1.msra.mxu0 %v2547
    %3376 = vmatprep.subr.mxu0 0.0
    %3377 = vmatpush2.msra.mxu0 0.0
    %3378 = vmatprep.subr.mxu0 0.0
    %3379 = vmatpush2.msra.mxu0 0.0
    %3380 = vmatprep.subr.mxu0 0.0
    %3381 = vmatpush2.msra.mxu0 0.0
    %3382 = vmatprep.subr.mxu0 0.0
    %3383 = vmatpush2.msra.mxu0 0.0
    %3384 = vmatprep.subr.mxu0 0.0
    %3385 = vmatpush2.msra.mxu0 0.0
    %3386 = vmatprep.subr.mxu0 0.0
    %3387 = vmatpush2.msra.mxu0 0.0
    %3388 = vmatprep.subr.mxu0 0.0
    %3389 = vmatpush2.msra.mxu0 0.0
    %3390 = vmatprep.subr.mxu0 0.0
    %3391 = vmatpush2.msra.mxu0 0.0
    %3392 = vmatprep.subr.mxu0 0.0
    %3393 = vmatpush2.msra.mxu0 0.0
    %3394 = vmatprep.subr.mxu0 0.0
    %3395 = vmatpush2.msra.mxu0 0.0
    %3396 = vmatprep.subr.mxu0 0.0
    %3397 = vmatpush2.msra.mxu0 0.0
    %3398 = vmatprep.subr.mxu0 0.0
    %3399 = vmatpush2.msra.mxu0 0.0
    %3400 = vmatprep.subr.mxu0 0.0
    %3401 = vmatpush2.msra.mxu0 0.0
    %3402 = vmatprep.subr.mxu0 0.0
    %3403 = vmatpush2.msra.mxu0 0.0
    %3404 = vmatprep.subr.mxu0 0.0
    %3405 = vmatpush2.msra.mxu0 0.0
    %3406 = vmatprep.subr.mxu0 0.0
    %3407 = vmatpush2.msra.mxu0 0.0
    %3408 = vmatprep.mubr.f32.mxu0 0.0
    %3409 = vmatmul.mubr.f32.gmra.mxu0 %v3328
    %v3410 = vpop.f32.mrf.mxu0
    %v3411 = vadd.f32 %v2490, %v3410
    %v3412 = vpop.f32.mrf.mxu0
    %3413 = vmatprep.mubr.f32.mxu0 0.0
    %3414 = vmatmul.mubr.f32.gmra.mxu0 %v3330
    %v3415 = vpop.f32.mrf.mxu0
    %v3416 = vadd.f32 %v2490, %v3415
    %v3417 = vpop.f32.mrf.mxu0
    %3418 = vmatprep.mubr.f32.mxu0 0.0
    %3419 = vmatmul.mubr.f32.gmra.mxu0 %v3332
    %v3420 = vpop.f32.mrf.mxu0
    %v3421 = vadd.f32 %v2490, %v3420
    %v3422 = vpop.f32.mrf.mxu0
    %3423 = vmatprep.mubr.f32.mxu0 0.0
    %3424 = vmatmul.mubr.f32.gmra.mxu0 %v3334
    %v3425 = vpop.f32.mrf.mxu0
    %v3426 = vadd.f32 %v2490, %v3425
    %v3427 = vpop.f32.mrf.mxu0
    %3428 = vmatprep.mubr.f32.mxu0 0.0
    %3429 = vmatmul.mubr.f32.gmra.mxu0 %v3336
    %v3430 = vpop.f32.mrf.mxu0
    %v3431 = vadd.f32 %v2490, %v3430
    %v3432 = vpop.f32.mrf.mxu0
    %3433 = vmatprep.mubr.f32.mxu0 0.0
    %3434 = vmatmul.mubr.f32.gmra.mxu0 %v3338
    %v3435 = vpop.f32.mrf.mxu0
    %v3436 = vadd.f32 %v2490, %v3435
    %v3437 = vpop.f32.mrf.mxu0
    %3438 = vmatprep.mubr.f32.mxu0 0.0
    %3439 = vmatmul.mubr.f32.gmra.mxu0 %v3340
    %v3440 = vpop.f32.mrf.mxu0
    %v3441 = vadd.f32 %v2490, %v3440
    %v3442 = vpop.f32.mrf.mxu0
    %3443 = vmatprep.mubr.f32.mxu0 0.0
    %3444 = vmatmul.mubr.f32.gmra.mxu0 %v3342
    %v3445 = vpop.f32.mrf.mxu0
    %v3446 = vadd.f32 %v2490, %v3445
    %v3447 = vpop.f32.mrf.mxu0
    %3448 = vdwg.mxu0
    %v3449 = vld [vmem:[%s15] sm:$0xff]
    %v3450 = vld [vmem:[%s15 + $0x8] sm:$0xff]
    %v3451 = vld [vmem:[%s15 + $0x10] sm:$0xff]
    %v3452 = vld [vmem:[%s15 + $0x18] sm:$0xff]
    %v3453 = vld [vmem:[%s23] sm:$0xff]
    %v3454 = vld [vmem:[%s23 + $0x8] sm:$0xff]
    %v3455 = vld [vmem:[%s23 + $0x10] sm:$0xff]
    %v3456 = vld [vmem:[%s23 + $0x18] sm:$0xff]
    %v3457 = vld [vmem:[%s23 + $0x20] sm:$0xff]
    %v3458 = vld [vmem:[%s23 + $0x28] sm:$0xff]
    %v3459 = vld [vmem:[%s23 + $0x30] sm:$0xff]
    %v3460 = vld [vmem:[%s23 + $0x38] sm:$0xff]
    %v3462 = vsel %vm161, %v3411, 0
    %v3465 = vsel %vm161, %v3416, 0
    %v3468 = vsel %vm161, %v3421, 0
    %v3471 = vsel %vm161, %v3426, 0
    %v3474 = vsel %vm161, %v3431, 0
    %v3477 = vsel %vm161, %v3436, 0
    %v3480 = vsel %vm161, %v3441, 0
    %v3483 = vsel %vm161, %v3446, 0
    %3485 = vmatprep.subr.mxu0 0.0
    %3486 = vmatpush1.msra.mxu0 0.0
    %3487 = vmatprep.subr.mxu0 0.0
    %3488 = vmatpush1.msra.mxu0 0.0
    %3489 = vmatprep.subr.mxu0 0.0
    %3490 = vmatpush1.msra.mxu0 0.0
    %3491 = vmatprep.subr.mxu0 0.0
    %3492 = vmatpush1.msra.mxu0 0.0
    %3493 = vmatprep.subr.mxu0 0.0
    %3494 = vmatpush1.msra.mxu0 0.0
    %3495 = vmatprep.subr.mxu0 0.0
    %3496 = vmatpush1.msra.mxu0 0.0
    %3497 = vmatprep.subr.mxu0 0.0
    %3498 = vmatpush1.msra.mxu0 0.0
    %3499 = vmatprep.subr.mxu0 0.0
    %3500 = vmatpush1.msra.mxu0 0.0
    %3501 = vmatprep.subr.mxu0 0.0
    %3502 = vmatpush1.msra.mxu0 0.0
    %3503 = vmatprep.subr.mxu0 0.0
    %3504 = vmatpush1.msra.mxu0 0.0
    %3505 = vmatprep.subr.mxu0 0.0
    %3506 = vmatpush1.msra.mxu0 0.0
    %3507 = vmatprep.subr.mxu0 0.0
    %3508 = vmatpush1.msra.mxu0 0.0
    %3509 = vmatprep.subr.mxu0 0.0
    %3510 = vmatpush1.msra.mxu0 %v3452
    %3511 = vmatprep.subr.mxu0 0.0
    %3512 = vmatpush1.msra.mxu0 %v3451
    %3513 = vmatprep.subr.mxu0 0.0
    %3514 = vmatpush1.msra.mxu0 %v3450
    %3515 = vmatprep.subr.mxu0 0.0
    %3516 = vmatpush1.msra.mxu0 %v3449
    %3517 = vmatprep.subr.mxu0 0.0
    %3518 = vmatpush2.msra.mxu0 0.0
    %3519 = vmatprep.subr.mxu0 0.0
    %3520 = vmatpush2.msra.mxu0 0.0
    %3521 = vmatprep.subr.mxu0 0.0
    %3522 = vmatpush2.msra.mxu0 0.0
    %3523 = vmatprep.subr.mxu0 0.0
    %3524 = vmatpush2.msra.mxu0 0.0
    %3525 = vmatprep.subr.mxu0 0.0
    %3526 = vmatpush2.msra.mxu0 0.0
    %3527 = vmatprep.subr.mxu0 0.0
    %3528 = vmatpush2.msra.mxu0 0.0
    %3529 = vmatprep.subr.mxu0 0.0
    %3530 = vmatpush2.msra.mxu0 0.0
    %3531 = vmatprep.subr.mxu0 0.0
    %3532 = vmatpush2.msra.mxu0 0.0
    %3533 = vmatprep.subr.mxu0 0.0
    %3534 = vmatpush2.msra.mxu0 0.0
    %3535 = vmatprep.subr.mxu0 0.0
    %3536 = vmatpush2.msra.mxu0 0.0
    %3537 = vmatprep.subr.mxu0 0.0
    %3538 = vmatpush2.msra.mxu0 0.0
    %3539 = vmatprep.subr.mxu0 0.0
    %3540 = vmatpush2.msra.mxu0 0.0
    %3541 = vmatprep.subr.mxu0 0.0
    %3542 = vmatpush2.msra.mxu0 0.0
    %3543 = vmatprep.subr.mxu0 0.0
    %3544 = vmatpush2.msra.mxu0 0.0
    %3545 = vmatprep.subr.mxu0 0.0
    %3546 = vmatpush2.msra.mxu0 0.0
    %3547 = vmatprep.subr.mxu0 0.0
    %3548 = vmatpush2.msra.mxu0 0.0
    %3549 = vmatprep.mubr.f32.mxu0 0.0
    %3550 = vmatmul.mubr.f32.gmra.mxu0 %v3462
    %v3551 = vpop.f32.mrf.mxu0
    %v3552 = vadd.f32 %v3453, %v3551
    %v3553 = vpop.f32.mrf.mxu0
    %3554 = vmatprep.mubr.f32.mxu0 0.0
    %3555 = vmatmul.mubr.f32.gmra.mxu0 %v3465
    %v3556 = vpop.f32.mrf.mxu0
    %v3557 = vadd.f32 %v3454, %v3556
    %v3558 = vpop.f32.mrf.mxu0
    %3559 = vmatprep.mubr.f32.mxu0 0.0
    %3560 = vmatmul.mubr.f32.gmra.mxu0 %v3468
    %v3561 = vpop.f32.mrf.mxu0
    %v3562 = vadd.f32 %v3455, %v3561
    %v3563 = vpop.f32.mrf.mxu0
    %3564 = vmatprep.mubr.f32.mxu0 0.0
    %3565 = vmatmul.mubr.f32.gmra.mxu0 %v3471
    %v3566 = vpop.f32.mrf.mxu0
    %v3567 = vadd.f32 %v3456, %v3566
    %v3568 = vpop.f32.mrf.mxu0
    %3569 = vmatprep.mubr.f32.mxu0 0.0
    %3570 = vmatmul.mubr.f32.gmra.mxu0 %v3474
    %v3571 = vpop.f32.mrf.mxu0
    %v3572 = vadd.f32 %v3457, %v3571
    %v3573 = vpop.f32.mrf.mxu0
    %3574 = vmatprep.mubr.f32.mxu0 0.0
    %3575 = vmatmul.mubr.f32.gmra.mxu0 %v3477
    %v3576 = vpop.f32.mrf.mxu0
    %v3577 = vadd.f32 %v3458, %v3576
    %v3578 = vpop.f32.mrf.mxu0
    %3579 = vmatprep.mubr.f32.mxu0 0.0
    %3580 = vmatmul.mubr.f32.gmra.mxu0 %v3480
    %v3581 = vpop.f32.mrf.mxu0
    %v3582 = vadd.f32 %v3459, %v3581
    %v3583 = vpop.f32.mrf.mxu0
    %3584 = vmatprep.mubr.f32.mxu0 0.0
    %3585 = vmatmul.mubr.f32.gmra.mxu0 %v3483
    %v3586 = vpop.f32.mrf.mxu0
    %v3587 = vadd.f32 %v3460, %v3586
    %v3588 = vpop.f32.mrf.mxu0
    %3589 = vdwg.mxu0
    %3590 = vmax.xlane.f32.xlu0 %v3552
    %v3591 = vpop.xlane.xlu0 %3590
    %3592 = vmax.xlane.f32.xlu0 %v3557
    %v3593 = vpop.xlane.xlu0 %3592
    %3594 = vmax.xlane.f32.xlu0 %v3562
    %v3595 = vpop.xlane.xlu0 %3594
    %3596 = vmax.xlane.f32.xlu0 %v3567
    %v3597 = vpop.xlane.xlu0 %3596
    %3598 = vmax.xlane.f32.xlu0 %v3572
    %v3599 = vpop.xlane.xlu0 %3598
    %3600 = vmax.xlane.f32.xlu0 %v3577
    %v3601 = vpop.xlane.xlu0 %3600
    %3602 = vmax.xlane.f32.xlu0 %v3582
    %v3603 = vpop.xlane.xlu0 %3602
    %3604 = vmax.xlane.f32.xlu0 %v3587
    %v3605 = vpop.xlane.xlu0 %3604
    %v3606 = vsub.f32 %v3552, %v3591
    %v3607 = vsub.f32 %v3557, %v3593
    %v3608 = vsub.f32 %v3562, %v3595
    %v3609 = vsub.f32 %v3567, %v3597
    %v3610 = vsub.f32 %v3572, %v3599
    %v3611 = vsub.f32 %v3577, %v3601
    %v3612 = vsub.f32 %v3582, %v3603
    %v3613 = vsub.f32 %v3587, %v3605
    %v3614 = vmul.f32 %v3606, 1.442695
    %v3615 = vpow.pop %v3614
    %v3616 = vmul.f32 %v3607, 1.442695
    %v3617 = vpow.pop %v3616
    %v3618 = vmul.f32 %v3608, 1.442695
    %v3619 = vpow.pop %v3618
    %v3620 = vmul.f32 %v3609, 1.442695
    %v3621 = vpow.pop %v3620
    %v3622 = vmul.f32 %v3610, 1.442695
    %v3623 = vpow.pop %v3622
    %v3624 = vmul.f32 %v3611, 1.442695
    %v3625 = vpow.pop %v3624
    %v3626 = vmul.f32 %v3612, 1.442695
    %v3627 = vpow.pop %v3626
    %v3628 = vmul.f32 %v3613, 1.442695
    %v3629 = vpow.pop %v3628
    %3630 = vadd.xlane.f32.xlu0 %v3615
    %v3631 = vpop.xlane.xlu0 %3630
    %3632 = vadd.xlane.f32.xlu0 %v3617
    %v3633 = vpop.xlane.xlu0 %3632
    %3634 = vadd.xlane.f32.xlu0 %v3619
    %v3635 = vpop.xlane.xlu0 %3634
    %3636 = vadd.xlane.f32.xlu0 %v3621
    %v3637 = vpop.xlane.xlu0 %3636
    %3638 = vadd.xlane.f32.xlu0 %v3623
    %v3639 = vpop.xlane.xlu0 %3638
    %3640 = vadd.xlane.f32.xlu0 %v3625
    %v3641 = vpop.xlane.xlu0 %3640
    %3642 = vadd.xlane.f32.xlu0 %v3627
    %v3643 = vpop.xlane.xlu0 %3642
    %3644 = vadd.xlane.f32.xlu0 %v3629
    %v3645 = vpop.xlane.xlu0 %3644
    %v3646 = vrcp.pop %v3631
    %v3647 = vrcp.pop %v3633
    %v3648 = vrcp.pop %v3635
    %v3649 = vrcp.pop %v3637
    %v3650 = vrcp.pop %v3639
    %v3651 = vrcp.pop %v3641
    %v3652 = vrcp.pop %v3643
    %v3653 = vrcp.pop %v3645
    %v3654 = vmul.f32 %v3631, %v3646
    %v3655 = vmul.f32 %v3633, %v3647
    %v3656 = vmul.f32 %v3635, %v3648
    %v3657 = vmul.f32 %v3637, %v3649
    %v3658 = vmul.f32 %v3639, %v3650
    %v3659 = vmul.f32 %v3641, %v3651
    %v3660 = vmul.f32 %v3643, %v3652
    %v3661 = vmul.f32 %v3645, %v3653
    %v3662 = vsub.f32 2.0, %v3654
    %v3663 = vsub.f32 2.0, %v3655
    %v3664 = vsub.f32 2.0, %v3656
    %v3665 = vsub.f32 2.0, %v3657
    %v3666 = vsub.f32 2.0, %v3658
    %v3667 = vsub.f32 2.0, %v3659
    %v3668 = vsub.f32 2.0, %v3660
    %v3669 = vsub.f32 2.0, %v3661
    %v3670 = vmul.f32 %v3646, %v3662
    %v3671 = vmul.f32 %v3647, %v3663
    %v3672 = vmul.f32 %v3648, %v3664
    %v3673 = vmul.f32 %v3649, %v3665
    %v3674 = vmul.f32 %v3650, %v3666
    %v3675 = vmul.f32 %v3651, %v3667
    %v3676 = vmul.f32 %v3652, %v3668
    %v3677 = vmul.f32 %v3653, %v3669
    %v3678 = vmul.f32 %v3615, %v3670
    %v3679 = vmul.f32 %v3617, %v3671
    %v3680 = vmul.f32 %v3619, %v3672
    %v3681 = vmul.f32 %v3621, %v3673
    %v3682 = vmul.f32 %v3623, %v3674
    %v3683 = vmul.f32 %v3625, %v3675
    %v3684 = vmul.f32 %v3627, %v3676
    %v3685 = vmul.f32 %v3629, %v3677
    %v3686 = vld [vmem:[%s13] sm:$0xff]
    %v3687 = vld [vmem:[%s13 + $0x8] sm:$0xff]
    %v3688 = vld [vmem:[%s13 + $0x10] sm:$0xff]
    %v3689 = vld [vmem:[%s13 + $0x18] sm:$0xff]
    %v3690 = vld [vmem:[%s13 + $0x20] sm:$0xff]
    %v3691 = vld [vmem:[%s13 + $0x28] sm:$0xff]
    %v3692 = vld [vmem:[%s13 + $0x30] sm:$0xff]
    %v3693 = vld [vmem:[%s13 + $0x38] sm:$0xff]
    %v3694 = vld [vmem:[%s13 + $0x40] sm:$0xff]
    %v3695 = vld [vmem:[%s13 + $0x48] sm:$0xff]
    %v3696 = vld [vmem:[%s13 + $0x50] sm:$0xff]
    %v3697 = vld [vmem:[%s13 + $0x58] sm:$0xff]
    %v3698 = vld [vmem:[%s13 + $0x60] sm:$0xff]
    %v3699 = vld [vmem:[%s13 + $0x68] sm:$0xff]
    %v3700 = vld [vmem:[%s13 + $0x70] sm:$0xff]
    %v3701 = vld [vmem:[%s13 + $0x78] sm:$0xff]
    %3702 = vmatprep.subr.mxu0 0.0
    %3703 = vmatpush1.msra.mxu0 %v3701
    %3704 = vmatprep.subr.mxu0 0.0
    %3705 = vmatpush1.msra.mxu0 %v3700
    %3706 = vmatprep.subr.mxu0 0.0
    %3707 = vmatpush1.msra.mxu0 %v3699
    %3708 = vmatprep.subr.mxu0 0.0
    %3709 = vmatpush1.msra.mxu0 %v3698
    %3710 = vmatprep.subr.mxu0 0.0
    %3711 = vmatpush1.msra.mxu0 %v3697
    %3712 = vmatprep.subr.mxu0 0.0
    %3713 = vmatpush1.msra.mxu0 %v3696
    %3714 = vmatprep.subr.mxu0 0.0
    %3715 = vmatpush1.msra.mxu0 %v3695
    %3716 = vmatprep.subr.mxu0 0.0
    %3717 = vmatpush1.msra.mxu0 %v3694
    %3718 = vmatprep.subr.mxu0 0.0
    %3719 = vmatpush1.msra.mxu0 %v3693
    %3720 = vmatprep.subr.mxu0 0.0
    %3721 = vmatpush1.msra.mxu0 %v3692
    %3722 = vmatprep.subr.mxu0 0.0
    %3723 = vmatpush1.msra.mxu0 %v3691
    %3724 = vmatprep.subr.mxu0 0.0
    %3725 = vmatpush1.msra.mxu0 %v3690
    %3726 = vmatprep.subr.mxu0 0.0
    %3727 = vmatpush1.msra.mxu0 %v3689
    %3728 = vmatprep.subr.mxu0 0.0
    %3729 = vmatpush1.msra.mxu0 %v3688
    %3730 = vmatprep.subr.mxu0 0.0
    %3731 = vmatpush1.msra.mxu0 %v3687
    %3732 = vmatprep.subr.mxu0 0.0
    %3733 = vmatpush1.msra.mxu0 %v3686
    %3734 = vmatprep.subr.mxu0 0.0
    %3735 = vmatpush2.msra.mxu0 0.0
    %3736 = vmatprep.subr.mxu0 0.0
    %3737 = vmatpush2.msra.mxu0 0.0
    %3738 = vmatprep.subr.mxu0 0.0
    %3739 = vmatpush2.msra.mxu0 0.0
    %3740 = vmatprep.subr.mxu0 0.0
    %3741 = vmatpush2.msra.mxu0 0.0
    %3742 = vmatprep.subr.mxu0 0.0
    %3743 = vmatpush2.msra.mxu0 0.0
    %3744 = vmatprep.subr.mxu0 0.0
    %3745 = vmatpush2.msra.mxu0 0.0
    %3746 = vmatprep.subr.mxu0 0.0
    %3747 = vmatpush2.msra.mxu0 0.0
    %3748 = vmatprep.subr.mxu0 0.0
    %3749 = vmatpush2.msra.mxu0 0.0
    %3750 = vmatprep.subr.mxu0 0.0
    %3751 = vmatpush2.msra.mxu0 0.0
    %3752 = vmatprep.subr.mxu0 0.0
    %3753 = vmatpush2.msra.mxu0 0.0
    %3754 = vmatprep.subr.mxu0 0.0
    %3755 = vmatpush2.msra.mxu0 0.0
    %3756 = vmatprep.subr.mxu0 0.0
    %3757 = vmatpush2.msra.mxu0 0.0
    %3758 = vmatprep.subr.mxu0 0.0
    %3759 = vmatpush2.msra.mxu0 0.0
    %3760 = vmatprep.subr.mxu0 0.0
    %3761 = vmatpush2.msra.mxu0 0.0
    %3762 = vmatprep.subr.mxu0 0.0
    %3763 = vmatpush2.msra.mxu0 0.0
    %3764 = vmatprep.subr.mxu0 0.0
    %3765 = vmatpush2.msra.mxu0 0.0
    %3766 = vmatprep.mubr.f32.mxu0 0.0
    %3767 = vmatmul.mubr.f32.gmra.mxu0 %v3678
    %v3768 = vpop.f32.mrf.mxu0
    %v3769 = vadd.f32 0.0, %v3768
    %v3770 = vpop.f32.mrf.mxu0
    %3771 = vmatprep.mubr.f32.mxu0 0.0
    %3772 = vmatmul.mubr.f32.gmra.mxu0 %v3679
    %v3773 = vpop.f32.mrf.mxu0
    %v3774 = vadd.f32 0.0, %v3773
    %v3775 = vpop.f32.mrf.mxu0
    %3776 = vmatprep.mubr.f32.mxu0 0.0
    %3777 = vmatmul.mubr.f32.gmra.mxu0 %v3680
    %v3778 = vpop.f32.mrf.mxu0
    %v3779 = vadd.f32 0.0, %v3778
    %v3780 = vpop.f32.mrf.mxu0
    %3781 = vmatprep.mubr.f32.mxu0 0.0
    %3782 = vmatmul.mubr.f32.gmra.mxu0 %v3681
    %v3783 = vpop.f32.mrf.mxu0
    %v3784 = vadd.f32 0.0, %v3783
    %v3785 = vpop.f32.mrf.mxu0
    %3786 = vmatprep.mubr.f32.mxu0 0.0
    %3787 = vmatmul.mubr.f32.gmra.mxu0 %v3682
    %v3788 = vpop.f32.mrf.mxu0
    %v3789 = vadd.f32 0.0, %v3788
    %v3790 = vpop.f32.mrf.mxu0
    %3791 = vmatprep.mubr.f32.mxu0 0.0
    %3792 = vmatmul.mubr.f32.gmra.mxu0 %v3683
    %v3793 = vpop.f32.mrf.mxu0
    %v3794 = vadd.f32 0.0, %v3793
    %v3795 = vpop.f32.mrf.mxu0
    %3796 = vmatprep.mubr.f32.mxu0 0.0
    %3797 = vmatmul.mubr.f32.gmra.mxu0 %v3684
    %v3798 = vpop.f32.mrf.mxu0
    %v3799 = vadd.f32 0.0, %v3798
    %v3800 = vpop.f32.mrf.mxu0
    %3801 = vmatprep.mubr.f32.mxu0 0.0
    %3802 = vmatmul.mubr.f32.gmra.mxu0 %v3685
    %v3803 = vpop.f32.mrf.mxu0
    %v3804 = vadd.f32 0.0, %v3803
    %v3805 = vpop.f32.mrf.mxu0
    %3806 = vdwg.mxu0
    %3807 = vrot.lane.b32.xlu0 %v3296, 64
    %v3808 = vpop.permute.xlu0 %3807
    %3809 = vrot.lane.b32.xlu0 %v3297, 64
    %v3810 = vpop.permute.xlu0 %3809
    %3811 = vrot.lane.b32.xlu0 %v3298, 64
    %v3812 = vpop.permute.xlu0 %3811
    %3813 = vrot.lane.b32.xlu0 %v3299, 64
    %v3814 = vpop.permute.xlu0 %3813
    %3815 = vrot.lane.b32.xlu0 %v3300, 64
    %v3816 = vpop.permute.xlu0 %3815
    %3817 = vrot.lane.b32.xlu0 %v3301, 64
    %v3818 = vpop.permute.xlu0 %3817
    %3819 = vrot.lane.b32.xlu0 %v3302, 64
    %v3820 = vpop.permute.xlu0 %3819
    %3821 = vrot.lane.b32.xlu0 %v3303, 64
    %v3822 = vpop.permute.xlu0 %3821
    %v3831 = vsel %vm161, %v3769, %v3808
    %v3832 = vsel %vm161, %v3774, %v3810
    %v3833 = vsel %vm161, %v3779, %v3812
    %v3834 = vsel %vm161, %v3784, %v3814
    %v3835 = vsel %vm161, %v3789, %v3816
    %v3836 = vsel %vm161, %v3794, %v3818
    %v3837 = vsel %vm161, %v3799, %v3820
    %v3838 = vsel %vm161, %v3804, %v3822
    %v3840 = vsel %vm2837, %v3831, 0
    %v3843 = vsel %vm2837, %v3832, 0
    %v3846 = vsel %vm2837, %v3833, 0
    %v3849 = vsel %vm2837, %v3834, 0
    %v3852 = vsel %vm2837, %v3835, 0
    %v3855 = vsel %vm2837, %v3836, 0
    %v3858 = vsel %vm2837, %v3837, 0
    %v3861 = vsel %vm2837, %v3838, 0
    %3863 = vmatprep.subr.mxu0 0.0
    %3864 = vmatpush1.msra.mxu0 0.0
    %3865 = vmatprep.subr.mxu0 0.0
    %3866 = vmatpush1.msra.mxu0 0.0
    %3867 = vmatprep.subr.mxu0 0.0
    %3868 = vmatpush1.msra.mxu0 0.0
    %3869 = vmatprep.subr.mxu0 0.0
    %3870 = vmatpush1.msra.mxu0 0.0
    %3871 = vmatprep.subr.mxu0 0.0
    %3872 = vmatpush1.msra.mxu0 0.0
    %3873 = vmatprep.subr.mxu0 0.0
    %3874 = vmatpush1.msra.mxu0 0.0
    %3875 = vmatprep.subr.mxu0 0.0
    %3876 = vmatpush1.msra.mxu0 0.0
    %3877 = vmatprep.subr.mxu0 0.0
    %3878 = vmatpush1.msra.mxu0 0.0
    %3879 = vmatprep.subr.mxu0 0.0
    %3880 = vmatpush1.msra.mxu0 %v3126
    %3881 = vmatprep.subr.mxu0 0.0
    %3882 = vmatpush1.msra.mxu0 %v3125
    %3883 = vmatprep.subr.mxu0 0.0
    %3884 = vmatpush1.msra.mxu0 %v3124
    %3885 = vmatprep.subr.mxu0 0.0
    %3886 = vmatpush1.msra.mxu0 %v3123
    %3887 = vmatprep.subr.mxu0 0.0
    %3888 = vmatpush1.msra.mxu0 %v3122
    %3889 = vmatprep.subr.mxu0 0.0
    %3890 = vmatpush1.msra.mxu0 %v3121
    %3891 = vmatprep.subr.mxu0 0.0
    %3892 = vmatpush1.msra.mxu0 %v3120
    %3893 = vmatprep.subr.mxu0 0.0
    %3894 = vmatpush1.msra.mxu0 %v3119
    %3895 = vmatprep.subr.mxu0 0.0
    %3896 = vmatpush2.msra.mxu0 0.0
    %3897 = vmatprep.subr.mxu0 0.0
    %3898 = vmatpush2.msra.mxu0 0.0
    %3899 = vmatprep.subr.mxu0 0.0
    %3900 = vmatpush2.msra.mxu0 0.0
    %3901 = vmatprep.subr.mxu0 0.0
    %3902 = vmatpush2.msra.mxu0 0.0
    %3903 = vmatprep.subr.mxu0 0.0
    %3904 = vmatpush2.msra.mxu0 0.0
    %3905 = vmatprep.subr.mxu0 0.0
    %3906 = vmatpush2.msra.mxu0 0.0
    %3907 = vmatprep.subr.mxu0 0.0
    %3908 = vmatpush2.msra.mxu0 0.0
    %3909 = vmatprep.subr.mxu0 0.0
    %3910 = vmatpush2.msra.mxu0 0.0
    %3911 = vmatprep.subr.mxu0 0.0
    %3912 = vmatpush2.msra.mxu0 0.0
    %3913 = vmatprep.subr.mxu0 0.0
    %3914 = vmatpush2.msra.mxu0 0.0
    %3915 = vmatprep.subr.mxu0 0.0
    %3916 = vmatpush2.msra.mxu0 0.0
    %3917 = vmatprep.subr.mxu0 0.0
    %3918 = vmatpush2.msra.mxu0 0.0
    %3919 = vmatprep.subr.mxu0 0.0
    %3920 = vmatpush2.msra.mxu0 0.0
    %3921 = vmatprep.subr.mxu0 0.0
    %3922 = vmatpush2.msra.mxu0 0.0
    %3923 = vmatprep.subr.mxu0 0.0
    %3924 = vmatpush2.msra.mxu0 0.0
    %3925 = vmatprep.subr.mxu0 0.0
    %3926 = vmatpush2.msra.mxu0 0.0
    %3927 = vmatprep.mubr.f32.mxu0 0.0
    %3928 = vmatmul.mubr.f32.gmra.mxu0 %v3840
    %v3929 = vpop.f32.mrf.mxu0
    %v3930 = vadd.f32 %v2497, %v3929
    %v3931 = vpop.f32.mrf.mxu0
    %3932 = vmatprep.mubr.f32.mxu0 0.0
    %3933 = vmatmul.mubr.f32.gmra.mxu0 %v3843
    %v3934 = vpop.f32.mrf.mxu0
    %v3935 = vadd.f32 %v2497, %v3934
    %v3936 = vpop.f32.mrf.mxu0
    %3937 = vmatprep.mubr.f32.mxu0 0.0
    %3938 = vmatmul.mubr.f32.gmra.mxu0 %v3846
    %v3939 = vpop.f32.mrf.mxu0
    %v3940 = vadd.f32 %v2497, %v3939
    %v3941 = vpop.f32.mrf.mxu0
    %3942 = vmatprep.mubr.f32.mxu0 0.0
    %3943 = vmatmul.mubr.f32.gmra.mxu0 %v3849
    %v3944 = vpop.f32.mrf.mxu0
    %v3945 = vadd.f32 %v2497, %v3944
    %v3946 = vpop.f32.mrf.mxu0
    %3947 = vmatprep.mubr.f32.mxu0 0.0
    %3948 = vmatmul.mubr.f32.gmra.mxu0 %v3852
    %v3949 = vpop.f32.mrf.mxu0
    %v3950 = vadd.f32 %v2497, %v3949
    %v3951 = vpop.f32.mrf.mxu0
    %3952 = vmatprep.mubr.f32.mxu0 0.0
    %3953 = vmatmul.mubr.f32.gmra.mxu0 %v3855
    %v3954 = vpop.f32.mrf.mxu0
    %v3955 = vadd.f32 %v2497, %v3954
    %v3956 = vpop.f32.mrf.mxu0
    %3957 = vmatprep.mubr.f32.mxu0 0.0
    %3958 = vmatmul.mubr.f32.gmra.mxu0 %v3858
    %v3959 = vpop.f32.mrf.mxu0
    %v3960 = vadd.f32 %v2497, %v3959
    %v3961 = vpop.f32.mrf.mxu0
    %3962 = vmatprep.mubr.f32.mxu0 0.0
    %3963 = vmatmul.mubr.f32.gmra.mxu0 %v3861
    %v3964 = vpop.f32.mrf.mxu0
    %v3965 = vadd.f32 %v2497, %v3964
    %v3966 = vpop.f32.mrf.mxu0
    %3967 = vdwg.mxu0
    %v3968 = vtanh.pop %v3930
    %v3969 = vtanh.pop %v3935
    %v3970 = vtanh.pop %v3940
    %v3971 = vtanh.pop %v3945
    %v3972 = vtanh.pop %v3950
    %v3973 = vtanh.pop %v3955
    %v3974 = vtanh.pop %v3960
    %v3975 = vtanh.pop %v3965
    %3984 = vrot.lane.b32.xlu0 %v3968, 96
    %v3985 = vpop.permute.xlu0 %3984
    %3986 = vrot.lane.b32.xlu0 %v3969, 96
    %v3987 = vpop.permute.xlu0 %3986
    %3988 = vrot.lane.b32.xlu0 %v3970, 96
    %v3989 = vpop.permute.xlu0 %3988
    %3990 = vrot.lane.b32.xlu0 %v3971, 96
    %v3991 = vpop.permute.xlu0 %3990
    %3992 = vrot.lane.b32.xlu0 %v3972, 96
    %v3993 = vpop.permute.xlu0 %3992
    %3994 = vrot.lane.b32.xlu0 %v3973, 96
    %v3995 = vpop.permute.xlu0 %3994
    %3996 = vrot.lane.b32.xlu0 %v3974, 96
    %v3997 = vpop.permute.xlu0 %3996
    %3998 = vrot.lane.b32.xlu0 %v3975, 96
    %v3999 = vpop.permute.xlu0 %3998
    %v4008 = vadd.f32 %v3296, %v3985
    %v4009 = vadd.f32 %v3297, %v3987
    %v4010 = vadd.f32 %v3298, %v3989
    %v4011 = vadd.f32 %v3299, %v3991
    %v4012 = vadd.f32 %v3300, %v3993
    %v4013 = vadd.f32 %v3301, %v3995
    %v4014 = vadd.f32 %v3302, %v3997
    %v4015 = vadd.f32 %v3303, %v3999
    %4024 = vrot.lane.b32.xlu0 %v4008, 32
    %v4025 = vpop.permute.xlu0 %4024
    %4026 = vrot.lane.b32.xlu0 %v4009, 32
    %v4027 = vpop.permute.xlu0 %4026
    %4028 = vrot.lane.b32.xlu0 %v4010, 32
    %v4029 = vpop.permute.xlu0 %4028
    %4030 = vrot.lane.b32.xlu0 %v4011, 32
    %v4031 = vpop.permute.xlu0 %4030
    %4032 = vrot.lane.b32.xlu0 %v4012, 32
    %v4033 = vpop.permute.xlu0 %4032
    %4034 = vrot.lane.b32.xlu0 %v4013, 32
    %v4035 = vpop.permute.xlu0 %4034
    %4036 = vrot.lane.b32.xlu0 %v4014, 32
    %v4037 = vpop.permute.xlu0 %4036
    %4038 = vrot.lane.b32.xlu0 %v4015, 32
    %v4039 = vpop.permute.xlu0 %4038
    %v4040 = vsel %vm161, %v4025, 0
    %v4042 = vsel %vm161, %v4027, 0
    %v4044 = vsel %vm161, %v4029, 0
    %v4046 = vsel %vm161, %v4031, 0
    %v4048 = vsel %vm161, %v4033, 0
    %v4050 = vsel %vm161, %v4035, 0
    %v4052 = vsel %vm161, %v4037, 0
    %v4054 = vsel %vm161, %v4039, 0
    %4056 = vmatprep.subr.mxu0 0.0
    %4057 = vmatpush1.msra.mxu0 0.0
    %4058 = vmatprep.subr.mxu0 0.0
    %4059 = vmatpush1.msra.mxu0 0.0
    %4060 = vmatprep.subr.mxu0 0.0
    %4061 = vmatpush1.msra.mxu0 0.0
    %4062 = vmatprep.subr.mxu0 0.0
    %4063 = vmatpush1.msra.mxu0 0.0
    %4064 = vmatprep.subr.mxu0 0.0
    %4065 = vmatpush1.msra.mxu0 0.0
    %4066 = vmatprep.subr.mxu0 0.0
    %4067 = vmatpush1.msra.mxu0 0.0
    %4068 = vmatprep.subr.mxu0 0.0
    %4069 = vmatpush1.msra.mxu0 0.0
    %4070 = vmatprep.subr.mxu0 0.0
    %4071 = vmatpush1.msra.mxu0 0.0
    %4072 = vmatprep.subr.mxu0 0.0
    %4073 = vmatpush1.msra.mxu0 0.0
    %4074 = vmatprep.subr.mxu0 0.0
    %4075 = vmatpush1.msra.mxu0 0.0
    %4076 = vmatprep.subr.mxu0 0.0
    %4077 = vmatpush1.msra.mxu0 0.0
    %4078 = vmatprep.subr.mxu0 0.0
    %4079 = vmatpush1.msra.mxu0 0.0
    %4080 = vmatprep.subr.mxu0 0.0
    %4081 = vmatpush1.msra.mxu0 %v2550
    %4082 = vmatprep.subr.mxu0 0.0
    %4083 = vmatpush1.msra.mxu0 %v2549
    %4084 = vmatprep.subr.mxu0 0.0
    %4085 = vmatpush1.msra.mxu0 %v2548
    %4086 = vmatprep.subr.mxu0 0.0
    %4087 = vmatpush1.msra.mxu0 %v2547
    %4088 = vmatprep.subr.mxu0 0.0
    %4089 = vmatpush2.msra.mxu0 0.0
    %4090 = vmatprep.subr.mxu0 0.0
    %4091 = vmatpush2.msra.mxu0 0.0
    %4092 = vmatprep.subr.mxu0 0.0
    %4093 = vmatpush2.msra.mxu0 0.0
    %4094 = vmatprep.subr.mxu0 0.0
    %4095 = vmatpush2.msra.mxu0 0.0
    %4096 = vmatprep.subr.mxu0 0.0
    %4097 = vmatpush2.msra.mxu0 0.0
    %4098 = vmatprep.subr.mxu0 0.0
    %4099 = vmatpush2.msra.mxu0 0.0
    %4100 = vmatprep.subr.mxu0 0.0
    %4101 = vmatpush2.msra.mxu0 0.0
    %4102 = vmatprep.subr.mxu0 0.0
    %4103 = vmatpush2.msra.mxu0 0.0
    %4104 = vmatprep.subr.mxu0 0.0
    %4105 = vmatpush2.msra.mxu0 0.0
    %4106 = vmatprep.subr.mxu0 0.0
    %4107 = vmatpush2.msra.mxu0 0.0
    %4108 = vmatprep.subr.mxu0 0.0
    %4109 = vmatpush2.msra.mxu0 0.0
    %4110 = vmatprep.subr.mxu0 0.0
    %4111 = vmatpush2.msra.mxu0 0.0
    %4112 = vmatprep.subr.mxu0 0.0
    %4113 = vmatpush2.msra.mxu0 0.0
    %4114 = vmatprep.subr.mxu0 0.0
    %4115 = vmatpush2.msra.mxu0 0.0
    %4116 = vmatprep.subr.mxu0 0.0
    %4117 = vmatpush2.msra.mxu0 0.0
    %4118 = vmatprep.subr.mxu0 0.0
    %4119 = vmatpush2.msra.mxu0 0.0
    %4120 = vmatprep.mubr.f32.mxu0 0.0
    %4121 = vmatmul.mubr.f32.gmra.mxu0 %v4040
    %v4122 = vpop.f32.mrf.mxu0
    %v4123 = vadd.f32 %v2490, %v4122
    %v4124 = vpop.f32.mrf.mxu0
    %4125 = vmatprep.mubr.f32.mxu0 0.0
    %4126 = vmatmul.mubr.f32.gmra.mxu0 %v4042
    %v4127 = vpop.f32.mrf.mxu0
    %v4128 = vadd.f32 %v2490, %v4127
    %v4129 = vpop.f32.mrf.mxu0
    %4130 = vmatprep.mubr.f32.mxu0 0.0
    %4131 = vmatmul.mubr.f32.gmra.mxu0 %v4044
    %v4132 = vpop.f32.mrf.mxu0
    %v4133 = vadd.f32 %v2490, %v4132
    %v4134 = vpop.f32.mrf.mxu0
    %4135 = vmatprep.mubr.f32.mxu0 0.0
    %4136 = vmatmul.mubr.f32.gmra.mxu0 %v4046
    %v4137 = vpop.f32.mrf.mxu0
    %v4138 = vadd.f32 %v2490, %v4137
    %v4139 = vpop.f32.mrf.mxu0
    %4140 = vmatprep.mubr.f32.mxu0 0.0
    %4141 = vmatmul.mubr.f32.gmra.mxu0 %v4048
    %v4142 = vpop.f32.mrf.mxu0
    %v4143 = vadd.f32 %v2490, %v4142
    %v4144 = vpop.f32.mrf.mxu0
    %4145 = vmatprep.mubr.f32.mxu0 0.0
    %4146 = vmatmul.mubr.f32.gmra.mxu0 %v4050
    %v4147 = vpop.f32.mrf.mxu0
    %v4148 = vadd.f32 %v2490, %v4147
    %v4149 = vpop.f32.mrf.mxu0
    %4150 = vmatprep.mubr.f32.mxu0 0.0
    %4151 = vmatmul.mubr.f32.gmra.mxu0 %v4052
    %v4152 = vpop.f32.mrf.mxu0
    %v4153 = vadd.f32 %v2490, %v4152
    %v4154 = vpop.f32.mrf.mxu0
    %4155 = vmatprep.mubr.f32.mxu0 0.0
    %4156 = vmatmul.mubr.f32.gmra.mxu0 %v4054
    %v4157 = vpop.f32.mrf.mxu0
    %v4158 = vadd.f32 %v2490, %v4157
    %v4159 = vpop.f32.mrf.mxu0
    %4160 = vdwg.mxu0
    %v4161 = vld [vmem:[%s11] sm:$0xff]
    %v4162 = vld [vmem:[%s11 + $0x8] sm:$0xff]
    %v4163 = vld [vmem:[%s11 + $0x10] sm:$0xff]
    %v4164 = vld [vmem:[%s11 + $0x18] sm:$0xff]
    %v4165 = vld [vmem:[%s21] sm:$0xff]
    %v4166 = vld [vmem:[%s21 + $0x8] sm:$0xff]
    %v4167 = vld [vmem:[%s21 + $0x10] sm:$0xff]
    %v4168 = vld [vmem:[%s21 + $0x18] sm:$0xff]
    %v4169 = vld [vmem:[%s21 + $0x20] sm:$0xff]
    %v4170 = vld [vmem:[%s21 + $0x28] sm:$0xff]
    %v4171 = vld [vmem:[%s21 + $0x30] sm:$0xff]
    %v4172 = vld [vmem:[%s21 + $0x38] sm:$0xff]
    %v4174 = vsel %vm161, %v4123, 0
    %v4177 = vsel %vm161, %v4128, 0
    %v4180 = vsel %vm161, %v4133, 0
    %v4183 = vsel %vm161, %v4138, 0
    %v4186 = vsel %vm161, %v4143, 0
    %v4189 = vsel %vm161, %v4148, 0
    %v4192 = vsel %vm161, %v4153, 0
    %v4195 = vsel %vm161, %v4158, 0
    %4197 = vmatprep.subr.mxu0 0.0
    %4198 = vmatpush1.msra.mxu0 0.0
    %4199 = vmatprep.subr.mxu0 0.0
    %4200 = vmatpush1.msra.mxu0 0.0
    %4201 = vmatprep.subr.mxu0 0.0
    %4202 = vmatpush1.msra.mxu0 0.0
    %4203 = vmatprep.subr.mxu0 0.0
    %4204 = vmatpush1.msra.mxu0 0.0
    %4205 = vmatprep.subr.mxu0 0.0
    %4206 = vmatpush1.msra.mxu0 0.0
    %4207 = vmatprep.subr.mxu0 0.0
    %4208 = vmatpush1.msra.mxu0 0.0
    %4209 = vmatprep.subr.mxu0 0.0
    %4210 = vmatpush1.msra.mxu0 0.0
    %4211 = vmatprep.subr.mxu0 0.0
    %4212 = vmatpush1.msra.mxu0 0.0
    %4213 = vmatprep.subr.mxu0 0.0
    %4214 = vmatpush1.msra.mxu0 0.0
    %4215 = vmatprep.subr.mxu0 0.0
    %4216 = vmatpush1.msra.mxu0 0.0
    %4217 = vmatprep.subr.mxu0 0.0
    %4218 = vmatpush1.msra.mxu0 0.0
    %4219 = vmatprep.subr.mxu0 0.0
    %4220 = vmatpush1.msra.mxu0 0.0
    %4221 = vmatprep.subr.mxu0 0.0
    %4222 = vmatpush1.msra.mxu0 %v4164
    %4223 = vmatprep.subr.mxu0 0.0
    %4224 = vmatpush1.msra.mxu0 %v4163
    %4225 = vmatprep.subr.mxu0 0.0
    %4226 = vmatpush1.msra.mxu0 %v4162
    %4227 = vmatprep.subr.mxu0 0.0
    %4228 = vmatpush1.msra.mxu0 %v4161
    %4229 = vmatprep.subr.mxu0 0.0
    %4230 = vmatpush2.msra.mxu0 0.0
    %4231 = vmatprep.subr.mxu0 0.0
    %4232 = vmatpush2.msra.mxu0 0.0
    %4233 = vmatprep.subr.mxu0 0.0
    %4234 = vmatpush2.msra.mxu0 0.0
    %4235 = vmatprep.subr.mxu0 0.0
    %4236 = vmatpush2.msra.mxu0 0.0
    %4237 = vmatprep.subr.mxu0 0.0
    %4238 = vmatpush2.msra.mxu0 0.0
    %4239 = vmatprep.subr.mxu0 0.0
    %4240 = vmatpush2.msra.mxu0 0.0
    %4241 = vmatprep.subr.mxu0 0.0
    %4242 = vmatpush2.msra.mxu0 0.0
    %4243 = vmatprep.subr.mxu0 0.0
    %4244 = vmatpush2.msra.mxu0 0.0
    %4245 = vmatprep.subr.mxu0 0.0
    %4246 = vmatpush2.msra.mxu0 0.0
    %4247 = vmatprep.subr.mxu0 0.0
    %4248 = vmatpush2.msra.mxu0 0.0
    %4249 = vmatprep.subr.mxu0 0.0
    %4250 = vmatpush2.msra.mxu0 0.0
    %4251 = vmatprep.subr.mxu0 0.0
    %4252 = vmatpush2.msra.mxu0 0.0
    %4253 = vmatprep.subr.mxu0 0.0
    %4254 = vmatpush2.msra.mxu0 0.0
    %4255 = vmatprep.subr.mxu0 0.0
    %4256 = vmatpush2.msra.mxu0 0.0
    %4257 = vmatprep.subr.mxu0 0.0
    %4258 = vmatpush2.msra.mxu0 0.0
    %4259 = vmatprep.subr.mxu0 0.0
    %4260 = vmatpush2.msra.mxu0 0.0
    %4261 = vmatprep.mubr.f32.mxu0 0.0
    %4262 = vmatmul.mubr.f32.gmra.mxu0 %v4174
    %v4263 = vpop.f32.mrf.mxu0
    %v4264 = vadd.f32 %v4165, %v4263
    %v4265 = vpop.f32.mrf.mxu0
    %4266 = vmatprep.mubr.f32.mxu0 0.0
    %4267 = vmatmul.mubr.f32.gmra.mxu0 %v4177
    %v4268 = vpop.f32.mrf.mxu0
    %v4269 = vadd.f32 %v4166, %v4268
    %v4270 = vpop.f32.mrf.mxu0
    %4271 = vmatprep.mubr.f32.mxu0 0.0
    %4272 = vmatmul.mubr.f32.gmra.mxu0 %v4180
    %v4273 = vpop.f32.mrf.mxu0
    %v4274 = vadd.f32 %v4167, %v4273
    %v4275 = vpop.f32.mrf.mxu0
    %4276 = vmatprep.mubr.f32.mxu0 0.0
    %4277 = vmatmul.mubr.f32.gmra.mxu0 %v4183
    %v4278 = vpop.f32.mrf.mxu0
    %v4279 = vadd.f32 %v4168, %v4278
    %v4280 = vpop.f32.mrf.mxu0
    %4281 = vmatprep.mubr.f32.mxu0 0.0
    %4282 = vmatmul.mubr.f32.gmra.mxu0 %v4186
    %v4283 = vpop.f32.mrf.mxu0
    %v4284 = vadd.f32 %v4169, %v4283
    %v4285 = vpop.f32.mrf.mxu0
    %4286 = vmatprep.mubr.f32.mxu0 0.0
    %4287 = vmatmul.mubr.f32.gmra.mxu0 %v4189
    %v4288 = vpop.f32.mrf.mxu0
    %v4289 = vadd.f32 %v4170, %v4288
    %v4290 = vpop.f32.mrf.mxu0
    %4291 = vmatprep.mubr.f32.mxu0 0.0
    %4292 = vmatmul.mubr.f32.gmra.mxu0 %v4192
    %v4293 = vpop.f32.mrf.mxu0
    %v4294 = vadd.f32 %v4171, %v4293
    %v4295 = vpop.f32.mrf.mxu0
    %4296 = vmatprep.mubr.f32.mxu0 0.0
    %4297 = vmatmul.mubr.f32.gmra.mxu0 %v4195
    %v4298 = vpop.f32.mrf.mxu0
    %v4299 = vadd.f32 %v4172, %v4298
    %v4300 = vpop.f32.mrf.mxu0
    %4301 = vdwg.mxu0
    %4302 = vmax.xlane.f32.xlu0 %v4264
    %v4303 = vpop.xlane.xlu0 %4302
    %4304 = vmax.xlane.f32.xlu0 %v4269
    %v4305 = vpop.xlane.xlu0 %4304
    %4306 = vmax.xlane.f32.xlu0 %v4274
    %v4307 = vpop.xlane.xlu0 %4306
    %4308 = vmax.xlane.f32.xlu0 %v4279
    %v4309 = vpop.xlane.xlu0 %4308
    %4310 = vmax.xlane.f32.xlu0 %v4284
    %v4311 = vpop.xlane.xlu0 %4310
    %4312 = vmax.xlane.f32.xlu0 %v4289
    %v4313 = vpop.xlane.xlu0 %4312
    %4314 = vmax.xlane.f32.xlu0 %v4294
    %v4315 = vpop.xlane.xlu0 %4314
    %4316 = vmax.xlane.f32.xlu0 %v4299
    %v4317 = vpop.xlane.xlu0 %4316
    %v4318 = vsub.f32 %v4264, %v4303
    %v4319 = vsub.f32 %v4269, %v4305
    %v4320 = vsub.f32 %v4274, %v4307
    %v4321 = vsub.f32 %v4279, %v4309
    %v4322 = vsub.f32 %v4284, %v4311
    %v4323 = vsub.f32 %v4289, %v4313
    %v4324 = vsub.f32 %v4294, %v4315
    %v4325 = vsub.f32 %v4299, %v4317
    %v4326 = vmul.f32 %v4318, 1.442695
    %v4327 = vpow.pop %v4326
    %v4328 = vmul.f32 %v4319, 1.442695
    %v4329 = vpow.pop %v4328
    %v4330 = vmul.f32 %v4320, 1.442695
    %v4331 = vpow.pop %v4330
    %v4332 = vmul.f32 %v4321, 1.442695
    %v4333 = vpow.pop %v4332
    %v4334 = vmul.f32 %v4322, 1.442695
    %v4335 = vpow.pop %v4334
    %v4336 = vmul.f32 %v4323, 1.442695
    %v4337 = vpow.pop %v4336
    %v4338 = vmul.f32 %v4324, 1.442695
    %v4339 = vpow.pop %v4338
    %v4340 = vmul.f32 %v4325, 1.442695
    %v4341 = vpow.pop %v4340
    %4342 = vadd.xlane.f32.xlu0 %v4327
    %v4343 = vpop.xlane.xlu0 %4342
    %4344 = vadd.xlane.f32.xlu0 %v4329
    %v4345 = vpop.xlane.xlu0 %4344
    %4346 = vadd.xlane.f32.xlu0 %v4331
    %v4347 = vpop.xlane.xlu0 %4346
    %4348 = vadd.xlane.f32.xlu0 %v4333
    %v4349 = vpop.xlane.xlu0 %4348
    %4350 = vadd.xlane.f32.xlu0 %v4335
    %v4351 = vpop.xlane.xlu0 %4350
    %4352 = vadd.xlane.f32.xlu0 %v4337
    %v4353 = vpop.xlane.xlu0 %4352
    %4354 = vadd.xlane.f32.xlu0 %v4339
    %v4355 = vpop.xlane.xlu0 %4354
    %4356 = vadd.xlane.f32.xlu0 %v4341
    %v4357 = vpop.xlane.xlu0 %4356
    %v4358 = vrcp.pop %v4343
    %v4359 = vrcp.pop %v4345
    %v4360 = vrcp.pop %v4347
    %v4361 = vrcp.pop %v4349
    %v4362 = vrcp.pop %v4351
    %v4363 = vrcp.pop %v4353
    %v4364 = vrcp.pop %v4355
    %v4365 = vrcp.pop %v4357
    %v4366 = vmul.f32 %v4343, %v4358
    %v4367 = vmul.f32 %v4345, %v4359
    %v4368 = vmul.f32 %v4347, %v4360
    %v4369 = vmul.f32 %v4349, %v4361
    %v4370 = vmul.f32 %v4351, %v4362
    %v4371 = vmul.f32 %v4353, %v4363
    %v4372 = vmul.f32 %v4355, %v4364
    %v4373 = vmul.f32 %v4357, %v4365
    %v4374 = vsub.f32 2.0, %v4366
    %v4375 = vsub.f32 2.0, %v4367
    %v4376 = vsub.f32 2.0, %v4368
    %v4377 = vsub.f32 2.0, %v4369
    %v4378 = vsub.f32 2.0, %v4370
    %v4379 = vsub.f32 2.0, %v4371
    %v4380 = vsub.f32 2.0, %v4372
    %v4381 = vsub.f32 2.0, %v4373
    %v4382 = vmul.f32 %v4358, %v4374
    %v4383 = vmul.f32 %v4359, %v4375
    %v4384 = vmul.f32 %v4360, %v4376
    %v4385 = vmul.f32 %v4361, %v4377
    %v4386 = vmul.f32 %v4362, %v4378
    %v4387 = vmul.f32 %v4363, %v4379
    %v4388 = vmul.f32 %v4364, %v4380
    %v4389 = vmul.f32 %v4365, %v4381
    %v4390 = vmul.f32 %v4327, %v4382
    %v4391 = vmul.f32 %v4329, %v4383
    %v4392 = vmul.f32 %v4331, %v4384
    %v4393 = vmul.f32 %v4333, %v4385
    %v4394 = vmul.f32 %v4335, %v4386
    %v4395 = vmul.f32 %v4337, %v4387
    %v4396 = vmul.f32 %v4339, %v4388
    %v4397 = vmul.f32 %v4341, %v4389
    %v4398 = vld [vmem:[%s9] sm:$0xff]
    %v4399 = vld [vmem:[%s9 + $0x8] sm:$0xff]
    %v4400 = vld [vmem:[%s9 + $0x10] sm:$0xff]
    %v4401 = vld [vmem:[%s9 + $0x18] sm:$0xff]
    %v4402 = vld [vmem:[%s9 + $0x20] sm:$0xff]
    %v4403 = vld [vmem:[%s9 + $0x28] sm:$0xff]
    %v4404 = vld [vmem:[%s9 + $0x30] sm:$0xff]
    %v4405 = vld [vmem:[%s9 + $0x38] sm:$0xff]
    %v4406 = vld [vmem:[%s9 + $0x40] sm:$0xff]
    %v4407 = vld [vmem:[%s9 + $0x48] sm:$0xff]
    %v4408 = vld [vmem:[%s9 + $0x50] sm:$0xff]
    %v4409 = vld [vmem:[%s9 + $0x58] sm:$0xff]
    %v4410 = vld [vmem:[%s9 + $0x60] sm:$0xff]
    %v4411 = vld [vmem:[%s9 + $0x68] sm:$0xff]
    %v4412 = vld [vmem:[%s9 + $0x70] sm:$0xff]
    %v4413 = vld [vmem:[%s9 + $0x78] sm:$0xff]
    %4414 = vmatprep.subr.mxu0 0.0
    %4415 = vmatpush1.msra.mxu0 %v4413
    %4416 = vmatprep.subr.mxu0 0.0
    %4417 = vmatpush1.msra.mxu0 %v4412
    %4418 = vmatprep.subr.mxu0 0.0
    %4419 = vmatpush1.msra.mxu0 %v4411
    %4420 = vmatprep.subr.mxu0 0.0
    %4421 = vmatpush1.msra.mxu0 %v4410
    %4422 = vmatprep.subr.mxu0 0.0
    %4423 = vmatpush1.msra.mxu0 %v4409
    %4424 = vmatprep.subr.mxu0 0.0
    %4425 = vmatpush1.msra.mxu0 %v4408
    %4426 = vmatprep.subr.mxu0 0.0
    %4427 = vmatpush1.msra.mxu0 %v4407
    %4428 = vmatprep.subr.mxu0 0.0
    %4429 = vmatpush1.msra.mxu0 %v4406
    %4430 = vmatprep.subr.mxu0 0.0
    %4431 = vmatpush1.msra.mxu0 %v4405
    %4432 = vmatprep.subr.mxu0 0.0
    %4433 = vmatpush1.msra.mxu0 %v4404
    %4434 = vmatprep.subr.mxu0 0.0
    %4435 = vmatpush1.msra.mxu0 %v4403
    %4436 = vmatprep.subr.mxu0 0.0
    %4437 = vmatpush1.msra.mxu0 %v4402
    %4438 = vmatprep.subr.mxu0 0.0
    %4439 = vmatpush1.msra.mxu0 %v4401
    %4440 = vmatprep.subr.mxu0 0.0
    %4441 = vmatpush1.msra.mxu0 %v4400
    %4442 = vmatprep.subr.mxu0 0.0
    %4443 = vmatpush1.msra.mxu0 %v4399
    %4444 = vmatprep.subr.mxu0 0.0
    %4445 = vmatpush1.msra.mxu0 %v4398
    %4446 = vmatprep.subr.mxu0 0.0
    %4447 = vmatpush2.msra.mxu0 0.0
    %4448 = vmatprep.subr.mxu0 0.0
    %4449 = vmatpush2.msra.mxu0 0.0
    %4450 = vmatprep.subr.mxu0 0.0
    %4451 = vmatpush2.msra.mxu0 0.0
    %4452 = vmatprep.subr.mxu0 0.0
    %4453 = vmatpush2.msra.mxu0 0.0
    %4454 = vmatprep.subr.mxu0 0.0
    %4455 = vmatpush2.msra.mxu0 0.0
    %4456 = vmatprep.subr.mxu0 0.0
    %4457 = vmatpush2.msra.mxu0 0.0
    %4458 = vmatprep.subr.mxu0 0.0
    %4459 = vmatpush2.msra.mxu0 0.0
    %4460 = vmatprep.subr.mxu0 0.0
    %4461 = vmatpush2.msra.mxu0 0.0
    %4462 = vmatprep.subr.mxu0 0.0
    %4463 = vmatpush2.msra.mxu0 0.0
    %4464 = vmatprep.subr.mxu0 0.0
    %4465 = vmatpush2.msra.mxu0 0.0
    %4466 = vmatprep.subr.mxu0 0.0
    %4467 = vmatpush2.msra.mxu0 0.0
    %4468 = vmatprep.subr.mxu0 0.0
    %4469 = vmatpush2.msra.mxu0 0.0
    %4470 = vmatprep.subr.mxu0 0.0
    %4471 = vmatpush2.msra.mxu0 0.0
    %4472 = vmatprep.subr.mxu0 0.0
    %4473 = vmatpush2.msra.mxu0 0.0
    %4474 = vmatprep.subr.mxu0 0.0
    %4475 = vmatpush2.msra.mxu0 0.0
    %4476 = vmatprep.subr.mxu0 0.0
    %4477 = vmatpush2.msra.mxu0 0.0
    %4478 = vmatprep.mubr.f32.mxu0 0.0
    %4479 = vmatmul.mubr.f32.gmra.mxu0 %v4390
    %v4480 = vpop.f32.mrf.mxu0
    %v4481 = vadd.f32 0.0, %v4480
    %v4482 = vpop.f32.mrf.mxu0
    %4483 = vmatprep.mubr.f32.mxu0 0.0
    %4484 = vmatmul.mubr.f32.gmra.mxu0 %v4391
    %v4485 = vpop.f32.mrf.mxu0
    %v4486 = vadd.f32 0.0, %v4485
    %v4487 = vpop.f32.mrf.mxu0
    %4488 = vmatprep.mubr.f32.mxu0 0.0
    %4489 = vmatmul.mubr.f32.gmra.mxu0 %v4392
    %v4490 = vpop.f32.mrf.mxu0
    %v4491 = vadd.f32 0.0, %v4490
    %v4492 = vpop.f32.mrf.mxu0
    %4493 = vmatprep.mubr.f32.mxu0 0.0
    %4494 = vmatmul.mubr.f32.gmra.mxu0 %v4393
    %v4495 = vpop.f32.mrf.mxu0
    %v4496 = vadd.f32 0.0, %v4495
    %v4497 = vpop.f32.mrf.mxu0
    %4498 = vmatprep.mubr.f32.mxu0 0.0
    %4499 = vmatmul.mubr.f32.gmra.mxu0 %v4394
    %v4500 = vpop.f32.mrf.mxu0
    %v4501 = vadd.f32 0.0, %v4500
    %v4502 = vpop.f32.mrf.mxu0
    %4503 = vmatprep.mubr.f32.mxu0 0.0
    %4504 = vmatmul.mubr.f32.gmra.mxu0 %v4395
    %v4505 = vpop.f32.mrf.mxu0
    %v4506 = vadd.f32 0.0, %v4505
    %v4507 = vpop.f32.mrf.mxu0
    %4508 = vmatprep.mubr.f32.mxu0 0.0
    %4509 = vmatmul.mubr.f32.gmra.mxu0 %v4396
    %v4510 = vpop.f32.mrf.mxu0
    %v4511 = vadd.f32 0.0, %v4510
    %v4512 = vpop.f32.mrf.mxu0
    %4513 = vmatprep.mubr.f32.mxu0 0.0
    %4514 = vmatmul.mubr.f32.gmra.mxu0 %v4397
    %v4515 = vpop.f32.mrf.mxu0
    %v4516 = vadd.f32 0.0, %v4515
    %v4517 = vpop.f32.mrf.mxu0
    %4518 = vdwg.mxu0
    %4519 = vrot.lane.b32.xlu0 %v4008, 64
    %v4520 = vpop.permute.xlu0 %4519
    %4521 = vrot.lane.b32.xlu0 %v4009, 64
    %v4522 = vpop.permute.xlu0 %4521
    %4523 = vrot.lane.b32.xlu0 %v4010, 64
    %v4524 = vpop.permute.xlu0 %4523
    %4525 = vrot.lane.b32.xlu0 %v4011, 64
    %v4526 = vpop.permute.xlu0 %4525
    %4527 = vrot.lane.b32.xlu0 %v4012, 64
    %v4528 = vpop.permute.xlu0 %4527
    %4529 = vrot.lane.b32.xlu0 %v4013, 64
    %v4530 = vpop.permute.xlu0 %4529
    %4531 = vrot.lane.b32.xlu0 %v4014, 64
    %v4532 = vpop.permute.xlu0 %4531
    %4533 = vrot.lane.b32.xlu0 %v4015, 64
    %v4534 = vpop.permute.xlu0 %4533
    %v4543 = vsel %vm161, %v4481, %v4520
    %v4544 = vsel %vm161, %v4486, %v4522
    %v4545 = vsel %vm161, %v4491, %v4524
    %v4546 = vsel %vm161, %v4496, %v4526
    %v4547 = vsel %vm161, %v4501, %v4528
    %v4548 = vsel %vm161, %v4506, %v4530
    %v4549 = vsel %vm161, %v4511, %v4532
    %v4550 = vsel %vm161, %v4516, %v4534
    %v4552 = vsel %vm2837, %v4543, 0
    %v4555 = vsel %vm2837, %v4544, 0
    %v4558 = vsel %vm2837, %v4545, 0
    %v4561 = vsel %vm2837, %v4546, 0
    %v4564 = vsel %vm2837, %v4547, 0
    %v4567 = vsel %vm2837, %v4548, 0
    %v4570 = vsel %vm2837, %v4549, 0
    %v4573 = vsel %vm2837, %v4550, 0
    %4575 = vmatprep.subr.mxu0 0.0
    %4576 = vmatpush1.msra.mxu0 0.0
    %4577 = vmatprep.subr.mxu0 0.0
    %4578 = vmatpush1.msra.mxu0 0.0
    %4579 = vmatprep.subr.mxu0 0.0
    %4580 = vmatpush1.msra.mxu0 0.0
    %4581 = vmatprep.subr.mxu0 0.0
    %4582 = vmatpush1.msra.mxu0 0.0
    %4583 = vmatprep.subr.mxu0 0.0
    %4584 = vmatpush1.msra.mxu0 0.0
    %4585 = vmatprep.subr.mxu0 0.0
    %4586 = vmatpush1.msra.mxu0 0.0
    %4587 = vmatprep.subr.mxu0 0.0
    %4588 = vmatpush1.msra.mxu0 0.0
    %4589 = vmatprep.subr.mxu0 0.0
    %4590 = vmatpush1.msra.mxu0 0.0
    %4591 = vmatprep.subr.mxu0 0.0
    %4592 = vmatpush1.msra.mxu0 %v3126
    %4593 = vmatprep.subr.mxu0 0.0
    %4594 = vmatpush1.msra.mxu0 %v3125
    %4595 = vmatprep.subr.mxu0 0.0
    %4596 = vmatpush1.msra.mxu0 %v3124
    %4597 = vmatprep.subr.mxu0 0.0
    %4598 = vmatpush1.msra.mxu0 %v3123
    %4599 = vmatprep.subr.mxu0 0.0
    %4600 = vmatpush1.msra.mxu0 %v3122
    %4601 = vmatprep.subr.mxu0 0.0
    %4602 = vmatpush1.msra.mxu0 %v3121
    %4603 = vmatprep.subr.mxu0 0.0
    %4604 = vmatpush1.msra.mxu0 %v3120
    %4605 = vmatprep.subr.mxu0 0.0
    %4606 = vmatpush1.msra.mxu0 %v3119
    %4607 = vmatprep.subr.mxu0 0.0
    %4608 = vmatpush2.msra.mxu0 0.0
    %4609 = vmatprep.subr.mxu0 0.0
    %4610 = vmatpush2.msra.mxu0 0.0
    %4611 = vmatprep.subr.mxu0 0.0
    %4612 = vmatpush2.msra.mxu0 0.0
    %4613 = vmatprep.subr.mxu0 0.0
    %4614 = vmatpush2.msra.mxu0 0.0
    %4615 = vmatprep.subr.mxu0 0.0
    %4616 = vmatpush2.msra.mxu0 0.0
    %4617 = vmatprep.subr.mxu0 0.0
    %4618 = vmatpush2.msra.mxu0 0.0
    %4619 = vmatprep.subr.mxu0 0.0
    %4620 = vmatpush2.msra.mxu0 0.0
    %4621 = vmatprep.subr.mxu0 0.0
    %4622 = vmatpush2.msra.mxu0 0.0
    %4623 = vmatprep.subr.mxu0 0.0
    %4624 = vmatpush2.msra.mxu0 0.0
    %4625 = vmatprep.subr.mxu0 0.0
    %4626 = vmatpush2.msra.mxu0 0.0
    %4627 = vmatprep.subr.mxu0 0.0
    %4628 = vmatpush2.msra.mxu0 0.0
    %4629 = vmatprep.subr.mxu0 0.0
    %4630 = vmatpush2.msra.mxu0 0.0
    %4631 = vmatprep.subr.mxu0 0.0
    %4632 = vmatpush2.msra.mxu0 0.0
    %4633 = vmatprep.subr.mxu0 0.0
    %4634 = vmatpush2.msra.mxu0 0.0
    %4635 = vmatprep.subr.mxu0 0.0
    %4636 = vmatpush2.msra.mxu0 0.0
    %4637 = vmatprep.subr.mxu0 0.0
    %4638 = vmatpush2.msra.mxu0 0.0
    %4639 = vmatprep.mubr.f32.mxu0 0.0
    %4640 = vmatmul.mubr.f32.gmra.mxu0 %v4552
    %v4641 = vpop.f32.mrf.mxu0
    %v4642 = vadd.f32 %v2497, %v4641
    %v4643 = vpop.f32.mrf.mxu0
    %4644 = vmatprep.mubr.f32.mxu0 0.0
    %4645 = vmatmul.mubr.f32.gmra.mxu0 %v4555
    %v4646 = vpop.f32.mrf.mxu0
    %v4647 = vadd.f32 %v2497, %v4646
    %v4648 = vpop.f32.mrf.mxu0
    %4649 = vmatprep.mubr.f32.mxu0 0.0
    %4650 = vmatmul.mubr.f32.gmra.mxu0 %v4558
    %v4651 = vpop.f32.mrf.mxu0
    %v4652 = vadd.f32 %v2497, %v4651
    %v4653 = vpop.f32.mrf.mxu0
    %4654 = vmatprep.mubr.f32.mxu0 0.0
    %4655 = vmatmul.mubr.f32.gmra.mxu0 %v4561
    %v4656 = vpop.f32.mrf.mxu0
    %v4657 = vadd.f32 %v2497, %v4656
    %v4658 = vpop.f32.mrf.mxu0
    %4659 = vmatprep.mubr.f32.mxu0 0.0
    %4660 = vmatmul.mubr.f32.gmra.mxu0 %v4564
    %v4661 = vpop.f32.mrf.mxu0
    %v4662 = vadd.f32 %v2497, %v4661
    %v4663 = vpop.f32.mrf.mxu0
    %4664 = vmatprep.mubr.f32.mxu0 0.0
    %4665 = vmatmul.mubr.f32.gmra.mxu0 %v4567
    %v4666 = vpop.f32.mrf.mxu0
    %v4667 = vadd.f32 %v2497, %v4666
    %v4668 = vpop.f32.mrf.mxu0
    %4669 = vmatprep.mubr.f32.mxu0 0.0
    %4670 = vmatmul.mubr.f32.gmra.mxu0 %v4570
    %v4671 = vpop.f32.mrf.mxu0
    %v4672 = vadd.f32 %v2497, %v4671
    %v4673 = vpop.f32.mrf.mxu0
    %4674 = vmatprep.mubr.f32.mxu0 0.0
    %4675 = vmatmul.mubr.f32.gmra.mxu0 %v4573
    %v4676 = vpop.f32.mrf.mxu0
    %v4677 = vadd.f32 %v2497, %v4676
    %v4678 = vpop.f32.mrf.mxu0
    %4679 = vdwg.mxu0
    %v4680 = vtanh.pop %v4642
    %v4681 = vtanh.pop %v4647
    %v4682 = vtanh.pop %v4652
    %v4683 = vtanh.pop %v4657
    %v4684 = vtanh.pop %v4662
    %v4685 = vtanh.pop %v4667
    %v4686 = vtanh.pop %v4672
    %v4687 = vtanh.pop %v4677
    %4696 = vrot.lane.b32.xlu0 %v4680, 96
    %v4697 = vpop.permute.xlu0 %4696
    %4698 = vrot.lane.b32.xlu0 %v4681, 96
    %v4699 = vpop.permute.xlu0 %4698
    %4700 = vrot.lane.b32.xlu0 %v4682, 96
    %v4701 = vpop.permute.xlu0 %4700
    %4702 = vrot.lane.b32.xlu0 %v4683, 96
    %v4703 = vpop.permute.xlu0 %4702
    %4704 = vrot.lane.b32.xlu0 %v4684, 96
    %v4705 = vpop.permute.xlu0 %4704
    %4706 = vrot.lane.b32.xlu0 %v4685, 96
    %v4707 = vpop.permute.xlu0 %4706
    %4708 = vrot.lane.b32.xlu0 %v4686, 96
    %v4709 = vpop.permute.xlu0 %4708
    %4710 = vrot.lane.b32.xlu0 %v4687, 96
    %v4711 = vpop.permute.xlu0 %4710
    %v4720 = vadd.f32 %v4008, %v4697
    %v4721 = vadd.f32 %v4009, %v4699
    %v4722 = vadd.f32 %v4010, %v4701
    %v4723 = vadd.f32 %v4011, %v4703
    %v4724 = vadd.f32 %v4012, %v4705
    %v4725 = vadd.f32 %v4013, %v4707
    %v4726 = vadd.f32 %v4014, %v4709
    %v4727 = vadd.f32 %v4015, %v4711
    %4736 = vrot.lane.b32.xlu0 %v4008, 96
    %v4737 = vpop.permute.xlu0 %4736
    %4738 = vrot.lane.b32.xlu0 %v4009, 96
    %v4739 = vpop.permute.xlu0 %4738
    %4740 = vrot.lane.b32.xlu0 %v4010, 96
    %v4741 = vpop.permute.xlu0 %4740
    %4742 = vrot.lane.b32.xlu0 %v4011, 96
    %v4743 = vpop.permute.xlu0 %4742
    %4744 = vrot.lane.b32.xlu0 %v4012, 96
    %v4745 = vpop.permute.xlu0 %4744
    %4746 = vrot.lane.b32.xlu0 %v4013, 96
    %v4747 = vpop.permute.xlu0 %4746
    %4748 = vrot.lane.b32.xlu0 %v4014, 96
    %v4749 = vpop.permute.xlu0 %4748
    %4750 = vrot.lane.b32.xlu0 %v4015, 96
    %v4751 = vpop.permute.xlu0 %4750
    %v4760 = vsel %vm161, %v2560, %v3808
    %v4761 = vsel %vm161, %v2562, %v3810
    %v4762 = vsel %vm161, %v2564, %v3812
    %v4763 = vsel %vm161, %v2566, %v3814
    %v4764 = vsel %vm161, %v2568, %v3816
    %v4765 = vsel %vm161, %v2570, %v3818
    %v4766 = vsel %vm161, %v2572, %v3820
    %v4767 = vsel %vm161, %v2574, %v3822
    %v4768 = vsel %vm2837, %v4760, %v4737
    %v4769 = vsel %vm2837, %v4761, %v4739
    %v4770 = vsel %vm2837, %v4762, %v4741
    %v4771 = vsel %vm2837, %v4763, %v4743
    %v4772 = vsel %vm2837, %v4764, %v4745
    %v4773 = vsel %vm2837, %v4765, %v4747
    %v4774 = vsel %vm2837, %v4766, %v4749
    %v4775 = vsel %vm2837, %v4767, %v4751
    %vm4776 = vcmask 785408
    %v4777 = vsel %vm4776, %v4768, %v4720
    %v4778 = vsel %vm4776, %v4769, %v4721
    %v4779 = vsel %vm4776, %v4770, %v4722
    %v4780 = vsel %vm4776, %v4771, %v4723
    %v4781 = vsel %vm4776, %v4772, %v4724
    %v4782 = vsel %vm4776, %v4773, %v4725
    %v4783 = vsel %vm4776, %v4774, %v4726
    %v4784 = vsel %vm4776, %v4775, %v4727
    %v4785 = vld [vmem:[%s47] sm:$0xff]
    %v4786 = vld [vmem:[%s47 + $0x8] sm:$0xff]
    %v4787 = vld [vmem:[%s47 + $0x10] sm:$0xff]
    %v4788 = vld [vmem:[%s47 + $0x18] sm:$0xff]
    %v4789 = vld [vmem:[%s47 + $0x20] sm:$0xff]
    %v4790 = vld [vmem:[%s47 + $0x28] sm:$0xff]
    %v4791 = vld [vmem:[%s47 + $0x30] sm:$0xff]
    %v4792 = vld [vmem:[%s47 + $0x38] sm:$0xff]
    %v4793 = vld [vmem:[%s47 + $0x40] sm:$0xff]
    %v4794 = vld [vmem:[%s47 + $0x48] sm:$0xff]
    %v4795 = vld [vmem:[%s47 + $0x50] sm:$0xff]
    %v4796 = vld [vmem:[%s47 + $0x58] sm:$0xff]
    %v4797 = vld [vmem:[%s47 + $0x60] sm:$0xff]
    %v4798 = vld [vmem:[%s47 + $0x68] sm:$0xff]
    %v4799 = vld [vmem:[%s47 + $0x70] sm:$0xff]
    %v4800 = vld [vmem:[%s47 + $0x78] sm:$0xff]
    %v4801 = vld [vmem:[%s49] sm:$0x1]
    %v4803 = vlaneseq
    %v4804 = vshrl.u32 %v4803, 7
    %v4805 = vsub.s32 0, %v4804
    %v4806 = vrot.slane %v4801, %v4805
    %4808 = vmatprep.subr.mxu0 0.0
    %4809 = vmatpush1.msra.mxu0 %v4800
    %4810 = vmatprep.subr.mxu0 0.0
    %4811 = vmatpush1.msra.mxu0 %v4799
    %4812 = vmatprep.subr.mxu0 0.0
    %4813 = vmatpush1.msra.mxu0 %v4798
    %4814 = vmatprep.subr.mxu0 0.0
    %4815 = vmatpush1.msra.mxu0 %v4797
    %4816 = vmatprep.subr.mxu0 0.0
    %4817 = vmatpush1.msra.mxu0 %v4796
    %4818 = vmatprep.subr.mxu0 0.0
    %4819 = vmatpush1.msra.mxu0 %v4795
    %4820 = vmatprep.subr.mxu0 0.0
    %4821 = vmatpush1.msra.mxu0 %v4794
    %4822 = vmatprep.subr.mxu0 0.0
    %4823 = vmatpush1.msra.mxu0 %v4793
    %4824 = vmatprep.subr.mxu0 0.0
    %4825 = vmatpush1.msra.mxu0 %v4792
    %4826 = vmatprep.subr.mxu0 0.0
    %4827 = vmatpush1.msra.mxu0 %v4791
    %4828 = vmatprep.subr.mxu0 0.0
    %4829 = vmatpush1.msra.mxu0 %v4790
    %4830 = vmatprep.subr.mxu0 0.0
    %4831 = vmatpush1.msra.mxu0 %v4789
    %4832 = vmatprep.subr.mxu0 0.0
    %4833 = vmatpush1.msra.mxu0 %v4788
    %4834 = vmatprep.subr.mxu0 0.0
    %4835 = vmatpush1.msra.mxu0 %v4787
    %4836 = vmatprep.subr.mxu0 0.0
    %4837 = vmatpush1.msra.mxu0 %v4786
    %4838 = vmatprep.subr.mxu0 0.0
    %4839 = vmatpush1.msra.mxu0 %v4785
    %4840 = vmatprep.subr.mxu0 0.0
    %4841 = vmatpush2.msra.mxu0 0.0
    %4842 = vmatprep.subr.mxu0 0.0
    %4843 = vmatpush2.msra.mxu0 0.0
    %4844 = vmatprep.subr.mxu0 0.0
    %4845 = vmatpush2.msra.mxu0 0.0
    %4846 = vmatprep.subr.mxu0 0.0
    %4847 = vmatpush2.msra.mxu0 0.0
    %4848 = vmatprep.subr.mxu0 0.0
    %4849 = vmatpush2.msra.mxu0 0.0
    %4850 = vmatprep.subr.mxu0 0.0
    %4851 = vmatpush2.msra.mxu0 0.0
    %4852 = vmatprep.subr.mxu0 0.0
    %4853 = vmatpush2.msra.mxu0 0.0
    %4854 = vmatprep.subr.mxu0 0.0
    %4855 = vmatpush2.msra.mxu0 0.0
    %4856 = vmatprep.subr.mxu0 0.0
    %4857 = vmatpush2.msra.mxu0 0.0
    %4858 = vmatprep.subr.mxu0 0.0
    %4859 = vmatpush2.msra.mxu0 0.0
    %4860 = vmatprep.subr.mxu0 0.0
    %4861 = vmatpush2.msra.mxu0 0.0
    %4862 = vmatprep.subr.mxu0 0.0
    %4863 = vmatpush2.msra.mxu0 0.0
    %4864 = vmatprep.subr.mxu0 0.0
    %4865 = vmatpush2.msra.mxu0 0.0
    %4866 = vmatprep.subr.mxu0 0.0
    %4867 = vmatpush2.msra.mxu0 0.0
    %4868 = vmatprep.subr.mxu0 0.0
    %4869 = vmatpush2.msra.mxu0 0.0
    %4870 = vmatprep.subr.mxu0 0.0
    %4871 = vmatpush2.msra.mxu0 0.0
    %4872 = vmatprep.mubr.f32.mxu0 0.0
    %4873 = vmatmul.mubr.f32.gmra.mxu0 %v4777
    %v4874 = vpop.f32.mrf.mxu0
    %v4875 = vadd.f32 %v4806, %v4874
    %v4876 = vpop.f32.mrf.mxu0
    %4877 = vmatprep.mubr.f32.mxu0 0.0
    %4878 = vmatmul.mubr.f32.gmra.mxu0 %v4778
    %v4879 = vpop.f32.mrf.mxu0
    %v4880 = vadd.f32 %v4806, %v4879
    %v4881 = vpop.f32.mrf.mxu0
    %4882 = vmatprep.mubr.f32.mxu0 0.0
    %4883 = vmatmul.mubr.f32.gmra.mxu0 %v4779
    %v4884 = vpop.f32.mrf.mxu0
    %v4885 = vadd.f32 %v4806, %v4884
    %v4886 = vpop.f32.mrf.mxu0
    %4887 = vmatprep.mubr.f32.mxu0 0.0
    %4888 = vmatmul.mubr.f32.gmra.mxu0 %v4780
    %v4889 = vpop.f32.mrf.mxu0
    %v4890 = vadd.f32 %v4806, %v4889
    %v4891 = vpop.f32.mrf.mxu0
    %4892 = vmatprep.mubr.f32.mxu0 0.0
    %4893 = vmatmul.mubr.f32.gmra.mxu0 %v4781
    %v4894 = vpop.f32.mrf.mxu0
    %v4895 = vadd.f32 %v4806, %v4894
    %v4896 = vpop.f32.mrf.mxu0
    %4897 = vmatprep.mubr.f32.mxu0 0.0
    %4898 = vmatmul.mubr.f32.gmra.mxu0 %v4782
    %v4899 = vpop.f32.mrf.mxu0
    %v4900 = vadd.f32 %v4806, %v4899
    %v4901 = vpop.f32.mrf.mxu0
    %4902 = vmatprep.mubr.f32.mxu0 0.0
    %4903 = vmatmul.mubr.f32.gmra.mxu0 %v4783
    %v4904 = vpop.f32.mrf.mxu0
    %v4905 = vadd.f32 %v4806, %v4904
    %v4906 = vpop.f32.mrf.mxu0
    %4907 = vmatprep.mubr.f32.mxu0 0.0
    %4908 = vmatmul.mubr.f32.gmra.mxu0 %v4784
    %v4909 = vpop.f32.mrf.mxu0
    %v4910 = vadd.f32 %v4806, %v4909
    %v4911 = vpop.f32.mrf.mxu0
    %4912 = vdwg.mxu0
    %v4913 = vmax.f32 %v4875, 0.0
    %v4914 = vmax.f32 %v4880, 0.0
    %v4915 = vmax.f32 %v4885, 0.0
    %v4916 = vmax.f32 %v4890, 0.0
    %v4917 = vmax.f32 %v4895, 0.0
    %v4918 = vmax.f32 %v4900, 0.0
    %v4919 = vmax.f32 %v4905, 0.0
    %v4920 = vmax.f32 %v4910, 0.0
    %v4921 = vld [vmem:[%s51] sm:$0xff]
    %v4922 = vld [vmem:[%s51 + $0x8] sm:$0xff]
    %v4923 = vld [vmem:[%s51 + $0x10] sm:$0xff]
    %v4924 = vld [vmem:[%s51 + $0x18] sm:$0xff]
    %v4925 = vld [vmem:[%s53] sm:$0x1]
    %v4927 = vlaneseq
    %v4928 = vshrl.u32 %v4927, 7
    %v4929 = vsub.s32 0, %v4928
    %v4930 = vrot.slane %v4925, %v4929
    %v4933 = vsel %vm161, %v4913, 0
    %v4936 = vsel %vm161, %v4914, 0
    %v4939 = vsel %vm161, %v4915, 0
    %v4942 = vsel %vm161, %v4916, 0
    %v4945 = vsel %vm161, %v4917, 0
    %v4948 = vsel %vm161, %v4918, 0
    %v4951 = vsel %vm161, %v4919, 0
    %v4954 = vsel %vm161, %v4920, 0
    %4956 = vmatprep.subr.mxu0 0.0
    %4957 = vmatpush1.msra.mxu0 0.0
    %4958 = vmatprep.subr.mxu0 0.0
    %4959 = vmatpush1.msra.mxu0 0.0
    %4960 = vmatprep.subr.mxu0 0.0
    %4961 = vmatpush1.msra.mxu0 0.0
    %4962 = vmatprep.subr.mxu0 0.0
    %4963 = vmatpush1.msra.mxu0 0.0
    %4964 = vmatprep.subr.mxu0 0.0
    %4965 = vmatpush1.msra.mxu0 0.0
    %4966 = vmatprep.subr.mxu0 0.0
    %4967 = vmatpush1.msra.mxu0 0.0
    %4968 = vmatprep.subr.mxu0 0.0
    %4969 = vmatpush1.msra.mxu0 0.0
    %4970 = vmatprep.subr.mxu0 0.0
    %4971 = vmatpush1.msra.mxu0 0.0
    %4972 = vmatprep.subr.mxu0 0.0
    %4973 = vmatpush1.msra.mxu0 0.0
    %4974 = vmatprep.subr.mxu0 0.0
    %4975 = vmatpush1.msra.mxu0 0.0
    %4976 = vmatprep.subr.mxu0 0.0
    %4977 = vmatpush1.msra.mxu0 0.0
    %4978 = vmatprep.subr.mxu0 0.0
    %4979 = vmatpush1.msra.mxu0 0.0
    %4980 = vmatprep.subr.mxu0 0.0
    %4981 = vmatpush1.msra.mxu0 %v4924
    %4982 = vmatprep.subr.mxu0 0.0
    %4983 = vmatpush1.msra.mxu0 %v4923
    %4984 = vmatprep.subr.mxu0 0.0
    %4985 = vmatpush1.msra.mxu0 %v4922
    %4986 = vmatprep.subr.mxu0 0.0
    %4987 = vmatpush1.msra.mxu0 %v4921
    %4988 = vmatprep.subr.mxu0 0.0
    %4989 = vmatpush2.msra.mxu0 0.0
    %4990 = vmatprep.subr.mxu0 0.0
    %4991 = vmatpush2.msra.mxu0 0.0
    %4992 = vmatprep.subr.mxu0 0.0
    %4993 = vmatpush2.msra.mxu0 0.0
    %4994 = vmatprep.subr.mxu0 0.0
    %4995 = vmatpush2.msra.mxu0 0.0
    %4996 = vmatprep.subr.mxu0 0.0
    %4997 = vmatpush2.msra.mxu0 0.0
    %4998 = vmatprep.subr.mxu0 0.0
    %4999 = vmatpush2.msra.mxu0 0.0
    %5000 = vmatprep.subr.mxu0 0.0
    %5001 = vmatpush2.msra.mxu0 0.0
    %5002 = vmatprep.subr.mxu0 0.0
    %5003 = vmatpush2.msra.mxu0 0.0
    %5004 = vmatprep.subr.mxu0 0.0
    %5005 = vmatpush2.msra.mxu0 0.0
    %5006 = vmatprep.subr.mxu0 0.0
    %5007 = vmatpush2.msra.mxu0 0.0
    %5008 = vmatprep.subr.mxu0 0.0
    %5009 = vmatpush2.msra.mxu0 0.0
    %5010 = vmatprep.subr.mxu0 0.0
    %5011 = vmatpush2.msra.mxu0 0.0
    %5012 = vmatprep.subr.mxu0 0.0
    %5013 = vmatpush2.msra.mxu0 0.0
    %5014 = vmatprep.subr.mxu0 0.0
    %5015 = vmatpush2.msra.mxu0 0.0
    %5016 = vmatprep.subr.mxu0 0.0
    %5017 = vmatpush2.msra.mxu0 0.0
    %5018 = vmatprep.subr.mxu0 0.0
    %5019 = vmatpush2.msra.mxu0 0.0
    %5020 = vmatprep.mubr.f32.mxu0 0.0
    %5021 = vmatmul.mubr.f32.gmra.mxu0 %v4933
    %v5022 = vpop.f32.mrf.mxu0
    %v5023 = vadd.f32 %v4930, %v5022
    %v5024 = vpop.f32.mrf.mxu0
    %5025 = vmatprep.mubr.f32.mxu0 0.0
    %5026 = vmatmul.mubr.f32.gmra.mxu0 %v4936
    %v5027 = vpop.f32.mrf.mxu0
    %v5028 = vadd.f32 %v4930, %v5027
    %v5029 = vpop.f32.mrf.mxu0
    %5030 = vmatprep.mubr.f32.mxu0 0.0
    %5031 = vmatmul.mubr.f32.gmra.mxu0 %v4939
    %v5032 = vpop.f32.mrf.mxu0
    %v5033 = vadd.f32 %v4930, %v5032
    %v5034 = vpop.f32.mrf.mxu0
    %5035 = vmatprep.mubr.f32.mxu0 0.0
    %5036 = vmatmul.mubr.f32.gmra.mxu0 %v4942
    %v5037 = vpop.f32.mrf.mxu0
    %v5038 = vadd.f32 %v4930, %v5037
    %v5039 = vpop.f32.mrf.mxu0
    %5040 = vmatprep.mubr.f32.mxu0 0.0
    %5041 = vmatmul.mubr.f32.gmra.mxu0 %v4945
    %v5042 = vpop.f32.mrf.mxu0
    %v5043 = vadd.f32 %v4930, %v5042
    %v5044 = vpop.f32.mrf.mxu0
    %5045 = vmatprep.mubr.f32.mxu0 0.0
    %5046 = vmatmul.mubr.f32.gmra.mxu0 %v4948
    %v5047 = vpop.f32.mrf.mxu0
    %v5048 = vadd.f32 %v4930, %v5047
    %v5049 = vpop.f32.mrf.mxu0
    %5050 = vmatprep.mubr.f32.mxu0 0.0
    %5051 = vmatmul.mubr.f32.gmra.mxu0 %v4951
    %v5052 = vpop.f32.mrf.mxu0
    %v5053 = vadd.f32 %v4930, %v5052
    %v5054 = vpop.f32.mrf.mxu0
    %5055 = vmatprep.mubr.f32.mxu0 0.0
    %5056 = vmatmul.mubr.f32.gmra.mxu0 %v4954
    %v5057 = vpop.f32.mrf.mxu0
    %v5058 = vadd.f32 %v4930, %v5057
    %v5059 = vpop.f32.mrf.mxu0
    %5060 = vdwg.mxu0
    %v5061 = vmax.f32 %v5023, 0.0
    %v5062 = vmax.f32 %v5028, 0.0
    %v5063 = vmax.f32 %v5033, 0.0
    %v5064 = vmax.f32 %v5038, 0.0
    %v5065 = vmax.f32 %v5043, 0.0
    %v5066 = vmax.f32 %v5048, 0.0
    %v5067 = vmax.f32 %v5053, 0.0
    %v5068 = vmax.f32 %v5058, 0.0
    %v5069 = vld [vmem:[%s55] sm:$0xff]
    %v5070 = vld [vmem:[%s55 + $0x8] sm:$0xff]
    %v5071 = vld [vmem:[%s55 + $0x10] sm:$0xff]
    %v5072 = vld [vmem:[%s55 + $0x18] sm:$0xff]
    %v5073 = vld [vmem:[%s57] sm:$0x1]
    %v5075 = vlaneseq
    %v5076 = vshrl.u32 %v5075, 7
    %v5077 = vsub.s32 0, %v5076
    %v5078 = vrot.slane %v5073, %v5077
    %v5081 = vsel %vm161, %v5061, 0
    %v5084 = vsel %vm161, %v5062, 0
    %v5087 = vsel %vm161, %v5063, 0
    %v5090 = vsel %vm161, %v5064, 0
    %v5093 = vsel %vm161, %v5065, 0
    %v5096 = vsel %vm161, %v5066, 0
    %v5099 = vsel %vm161, %v5067, 0
    %v5102 = vsel %vm161, %v5068, 0
    %5104 = vmatprep.subr.mxu0 0.0
    %5105 = vmatpush1.msra.mxu0 0.0
    %5106 = vmatprep.subr.mxu0 0.0
    %5107 = vmatpush1.msra.mxu0 0.0
    %5108 = vmatprep.subr.mxu0 0.0
    %5109 = vmatpush1.msra.mxu0 0.0
    %5110 = vmatprep.subr.mxu0 0.0
    %5111 = vmatpush1.msra.mxu0 0.0
    %5112 = vmatprep.subr.mxu0 0.0
    %5113 = vmatpush1.msra.mxu0 0.0
    %5114 = vmatprep.subr.mxu0 0.0
    %5115 = vmatpush1.msra.mxu0 0.0
    %5116 = vmatprep.subr.mxu0 0.0
    %5117 = vmatpush1.msra.mxu0 0.0
    %5118 = vmatprep.subr.mxu0 0.0
    %5119 = vmatpush1.msra.mxu0 0.0
    %5120 = vmatprep.subr.mxu0 0.0
    %5121 = vmatpush1.msra.mxu0 0.0
    %5122 = vmatprep.subr.mxu0 0.0
    %5123 = vmatpush1.msra.mxu0 0.0
    %5124 = vmatprep.subr.mxu0 0.0
    %5125 = vmatpush1.msra.mxu0 0.0
    %5126 = vmatprep.subr.mxu0 0.0
    %5127 = vmatpush1.msra.mxu0 0.0
    %5128 = vmatprep.subr.mxu0 0.0
    %5129 = vmatpush1.msra.mxu0 %v5072
    %5130 = vmatprep.subr.mxu0 0.0
    %5131 = vmatpush1.msra.mxu0 %v5071
    %5132 = vmatprep.subr.mxu0 0.0
    %5133 = vmatpush1.msra.mxu0 %v5070
    %5134 = vmatprep.subr.mxu0 0.0
    %5135 = vmatpush1.msra.mxu0 %v5069
    %5136 = vmatprep.subr.mxu0 0.0
    %5137 = vmatpush2.msra.mxu0 0.0
    %5138 = vmatprep.subr.mxu0 0.0
    %5139 = vmatpush2.msra.mxu0 0.0
    %5140 = vmatprep.subr.mxu0 0.0
    %5141 = vmatpush2.msra.mxu0 0.0
    %5142 = vmatprep.subr.mxu0 0.0
    %5143 = vmatpush2.msra.mxu0 0.0
    %5144 = vmatprep.subr.mxu0 0.0
    %5145 = vmatpush2.msra.mxu0 0.0
    %5146 = vmatprep.subr.mxu0 0.0
    %5147 = vmatpush2.msra.mxu0 0.0
    %5148 = vmatprep.subr.mxu0 0.0
    %5149 = vmatpush2.msra.mxu0 0.0
    %5150 = vmatprep.subr.mxu0 0.0
    %5151 = vmatpush2.msra.mxu0 0.0
    %5152 = vmatprep.subr.mxu0 0.0
    %5153 = vmatpush2.msra.mxu0 0.0
    %5154 = vmatprep.subr.mxu0 0.0
    %5155 = vmatpush2.msra.mxu0 0.0
    %5156 = vmatprep.subr.mxu0 0.0
    %5157 = vmatpush2.msra.mxu0 0.0
    %5158 = vmatprep.subr.mxu0 0.0
    %5159 = vmatpush2.msra.mxu0 0.0
    %5160 = vmatprep.subr.mxu0 0.0
    %5161 = vmatpush2.msra.mxu0 0.0
    %5162 = vmatprep.subr.mxu0 0.0
    %5163 = vmatpush2.msra.mxu0 0.0
    %5164 = vmatprep.subr.mxu0 0.0
    %5165 = vmatpush2.msra.mxu0 0.0
    %5166 = vmatprep.subr.mxu0 0.0
    %5167 = vmatpush2.msra.mxu0 0.0
    %5168 = vmatprep.mubr.f32.mxu0 0.0
    %5169 = vmatmul.mubr.f32.gmra.mxu0 %v5081
    %v5170 = vpop.f32.mrf.mxu0
    %v5171 = vadd.f32 %v5078, %v5170
    %v5172 = vpop.f32.mrf.mxu0
    %5173 = vmatprep.mubr.f32.mxu0 0.0
    %5174 = vmatmul.mubr.f32.gmra.mxu0 %v5084
    %v5175 = vpop.f32.mrf.mxu0
    %v5176 = vadd.f32 %v5078, %v5175
    %v5177 = vpop.f32.mrf.mxu0
    %5178 = vmatprep.mubr.f32.mxu0 0.0
    %5179 = vmatmul.mubr.f32.gmra.mxu0 %v5087
    %v5180 = vpop.f32.mrf.mxu0
    %v5181 = vadd.f32 %v5078, %v5180
    %v5182 = vpop.f32.mrf.mxu0
    %5183 = vmatprep.mubr.f32.mxu0 0.0
    %5184 = vmatmul.mubr.f32.gmra.mxu0 %v5090
    %v5185 = vpop.f32.mrf.mxu0
    %v5186 = vadd.f32 %v5078, %v5185
    %v5187 = vpop.f32.mrf.mxu0
    %5188 = vmatprep.mubr.f32.mxu0 0.0
    %5189 = vmatmul.mubr.f32.gmra.mxu0 %v5093
    %v5190 = vpop.f32.mrf.mxu0
    %v5191 = vadd.f32 %v5078, %v5190
    %v5192 = vpop.f32.mrf.mxu0
    %5193 = vmatprep.mubr.f32.mxu0 0.0
    %5194 = vmatmul.mubr.f32.gmra.mxu0 %v5096
    %v5195 = vpop.f32.mrf.mxu0
    %v5196 = vadd.f32 %v5078, %v5195
    %v5197 = vpop.f32.mrf.mxu0
    %5198 = vmatprep.mubr.f32.mxu0 0.0
    %5199 = vmatmul.mubr.f32.gmra.mxu0 %v5099
    %v5200 = vpop.f32.mrf.mxu0
    %v5201 = vadd.f32 %v5078, %v5200
    %v5202 = vpop.f32.mrf.mxu0
    %5203 = vmatprep.mubr.f32.mxu0 0.0
    %5204 = vmatmul.mubr.f32.gmra.mxu0 %v5102
    %v5205 = vpop.f32.mrf.mxu0
    %v5206 = vadd.f32 %v5078, %v5205
    %v5207 = vpop.f32.mrf.mxu0
    %5208 = vdwg.mxu0
    %v5209 = vmax.f32 %v5171, 0.0
    %v5210 = vmax.f32 %v5176, 0.0
    %v5211 = vmax.f32 %v5181, 0.0
    %v5212 = vmax.f32 %v5186, 0.0
    %v5213 = vmax.f32 %v5191, 0.0
    %v5214 = vmax.f32 %v5196, 0.0
    %v5215 = vmax.f32 %v5201, 0.0
    %v5216 = vmax.f32 %v5206, 0.0
    %v5217 = vld [vmem:[%s59] sm:$0xff]
    %v5218 = vld [vmem:[%s59 + $0x8] sm:$0xff]
    %v5219 = vld [vmem:[%s59 + $0x10] sm:$0xff]
    %v5220 = vld [vmem:[%s59 + $0x18] sm:$0xff]
    %v5221 = vld [vmem:[%s61] sm:$0x1]
    %v5223 = vlaneseq
    %v5224 = vshrl.u32 %v5223, 7
    %v5225 = vsub.s32 0, %v5224
    %v5226 = vrot.slane %v5221, %v5225
    %v5229 = vsel %vm161, %v5209, 0
    %v5232 = vsel %vm161, %v5210, 0
    %v5235 = vsel %vm161, %v5211, 0
    %v5238 = vsel %vm161, %v5212, 0
    %v5241 = vsel %vm161, %v5213, 0
    %v5244 = vsel %vm161, %v5214, 0
    %v5247 = vsel %vm161, %v5215, 0
    %v5250 = vsel %vm161, %v5216, 0
    %5252 = vmatprep.subr.mxu0 0.0
    %5253 = vmatpush1.msra.mxu0 0.0
    %5254 = vmatprep.subr.mxu0 0.0
    %5255 = vmatpush1.msra.mxu0 0.0
    %5256 = vmatprep.subr.mxu0 0.0
    %5257 = vmatpush1.msra.mxu0 0.0
    %5258 = vmatprep.subr.mxu0 0.0
    %5259 = vmatpush1.msra.mxu0 0.0
    %5260 = vmatprep.subr.mxu0 0.0
    %5261 = vmatpush1.msra.mxu0 0.0
    %5262 = vmatprep.subr.mxu0 0.0
    %5263 = vmatpush1.msra.mxu0 0.0
    %5264 = vmatprep.subr.mxu0 0.0
    %5265 = vmatpush1.msra.mxu0 0.0
    %5266 = vmatprep.subr.mxu0 0.0
    %5267 = vmatpush1.msra.mxu0 0.0
    %5268 = vmatprep.subr.mxu0 0.0
    %5269 = vmatpush1.msra.mxu0 0.0
    %5270 = vmatprep.subr.mxu0 0.0
    %5271 = vmatpush1.msra.mxu0 0.0
    %5272 = vmatprep.subr.mxu0 0.0
    %5273 = vmatpush1.msra.mxu0 0.0
    %5274 = vmatprep.subr.mxu0 0.0
    %5275 = vmatpush1.msra.mxu0 0.0
    %5276 = vmatprep.subr.mxu0 0.0
    %5277 = vmatpush1.msra.mxu0 %v5220
    %5278 = vmatprep.subr.mxu0 0.0
    %5279 = vmatpush1.msra.mxu0 %v5219
    %5280 = vmatprep.subr.mxu0 0.0
    %5281 = vmatpush1.msra.mxu0 %v5218
    %5282 = vmatprep.subr.mxu0 0.0
    %5283 = vmatpush1.msra.mxu0 %v5217
    %5284 = vmatprep.subr.mxu0 0.0
    %5285 = vmatpush2.msra.mxu0 0.0
    %5286 = vmatprep.subr.mxu0 0.0
    %5287 = vmatpush2.msra.mxu0 0.0
    %5288 = vmatprep.subr.mxu0 0.0
    %5289 = vmatpush2.msra.mxu0 0.0
    %5290 = vmatprep.subr.mxu0 0.0
    %5291 = vmatpush2.msra.mxu0 0.0
    %5292 = vmatprep.subr.mxu0 0.0
    %5293 = vmatpush2.msra.mxu0 0.0
    %5294 = vmatprep.subr.mxu0 0.0
    %5295 = vmatpush2.msra.mxu0 0.0
    %5296 = vmatprep.subr.mxu0 0.0
    %5297 = vmatpush2.msra.mxu0 0.0
    %5298 = vmatprep.subr.mxu0 0.0
    %5299 = vmatpush2.msra.mxu0 0.0
    %5300 = vmatprep.subr.mxu0 0.0
    %5301 = vmatpush2.msra.mxu0 0.0
    %5302 = vmatprep.subr.mxu0 0.0
    %5303 = vmatpush2.msra.mxu0 0.0
    %5304 = vmatprep.subr.mxu0 0.0
    %5305 = vmatpush2.msra.mxu0 0.0
    %5306 = vmatprep.subr.mxu0 0.0
    %5307 = vmatpush2.msra.mxu0 0.0
    %5308 = vmatprep.subr.mxu0 0.0
    %5309 = vmatpush2.msra.mxu0 0.0
    %5310 = vmatprep.subr.mxu0 0.0
    %5311 = vmatpush2.msra.mxu0 0.0
    %5312 = vmatprep.subr.mxu0 0.0
    %5313 = vmatpush2.msra.mxu0 0.0
    %5314 = vmatprep.subr.mxu0 0.0
    %5315 = vmatpush2.msra.mxu0 0.0
    %5316 = vmatprep.mubr.f32.mxu0 0.0
    %5317 = vmatmul.mubr.f32.gmra.mxu0 %v5229
    %v5318 = vpop.f32.mrf.mxu0
    %v5319 = vadd.f32 %v5226, %v5318
    %v5320 = vpop.f32.mrf.mxu0
    %5321 = vmatprep.mubr.f32.mxu0 0.0
    %5322 = vmatmul.mubr.f32.gmra.mxu0 %v5232
    %v5323 = vpop.f32.mrf.mxu0
    %v5324 = vadd.f32 %v5226, %v5323
    %v5325 = vpop.f32.mrf.mxu0
    %5326 = vmatprep.mubr.f32.mxu0 0.0
    %5327 = vmatmul.mubr.f32.gmra.mxu0 %v5235
    %v5328 = vpop.f32.mrf.mxu0
    %v5329 = vadd.f32 %v5226, %v5328
    %v5330 = vpop.f32.mrf.mxu0
    %5331 = vmatprep.mubr.f32.mxu0 0.0
    %5332 = vmatmul.mubr.f32.gmra.mxu0 %v5238
    %v5333 = vpop.f32.mrf.mxu0
    %v5334 = vadd.f32 %v5226, %v5333
    %v5335 = vpop.f32.mrf.mxu0
    %5336 = vmatprep.mubr.f32.mxu0 0.0
    %5337 = vmatmul.mubr.f32.gmra.mxu0 %v5241
    %v5338 = vpop.f32.mrf.mxu0
    %v5339 = vadd.f32 %v5226, %v5338
    %v5340 = vpop.f32.mrf.mxu0
    %5341 = vmatprep.mubr.f32.mxu0 0.0
    %5342 = vmatmul.mubr.f32.gmra.mxu0 %v5244
    %v5343 = vpop.f32.mrf.mxu0
    %v5344 = vadd.f32 %v5226, %v5343
    %v5345 = vpop.f32.mrf.mxu0
    %5346 = vmatprep.mubr.f32.mxu0 0.0
    %5347 = vmatmul.mubr.f32.gmra.mxu0 %v5247
    %v5348 = vpop.f32.mrf.mxu0
    %v5349 = vadd.f32 %v5226, %v5348
    %v5350 = vpop.f32.mrf.mxu0
    %5351 = vmatprep.mubr.f32.mxu0 0.0
    %5352 = vmatmul.mubr.f32.gmra.mxu0 %v5250
    %v5353 = vpop.f32.mrf.mxu0
    %v5354 = vadd.f32 %v5226, %v5353
    %v5355 = vpop.f32.mrf.mxu0
    %5356 = vdwg.mxu0
    %v5357 = vmax.f32 %v5319, 0.0
    %v5358 = vmax.f32 %v5324, 0.0
    %v5359 = vmax.f32 %v5329, 0.0
    %v5360 = vmax.f32 %v5334, 0.0
    %v5361 = vmax.f32 %v5339, 0.0
    %v5362 = vmax.f32 %v5344, 0.0
    %v5363 = vmax.f32 %v5349, 0.0
    %v5364 = vmax.f32 %v5354, 0.0
    %5365 = vst.msk [vmem:[#allocation2] sm:$0xff] %vm161, %v5357
    %5366 = vst.msk [vmem:[#allocation2 + $0x8] sm:$0xff] %vm161, %v5358
    %5367 = vst.msk [vmem:[#allocation2 + $0x10] sm:$0xff] %vm161, %v5359
    %5368 = vst.msk [vmem:[#allocation2 + $0x18] sm:$0xff] %vm161, %v5360
    %5369 = vst.msk [vmem:[#allocation2 + $0x20] sm:$0xff] %vm161, %v5361
    %5370 = vst.msk [vmem:[#allocation2 + $0x28] sm:$0xff] %vm161, %v5362
    %5371 = vst.msk [vmem:[#allocation2 + $0x30] sm:$0xff] %vm161, %v5363
    %5372 = vst.msk [vmem:[#allocation2 + $0x38] sm:$0xff] %vm161, %v5364
    %v5373 = vld [vmem:[%s63] sm:$0xff]
    %v5374 = vld [vmem:[%s63 + $0x8] sm:$0xff]
    %v5375 = vld [vmem:[%s63 + $0x10] sm:$0xff]
    %v5376 = vld [vmem:[%s63 + $0x18] sm:$0xff]
    %v5377 = vld [vmem:[%s65] sm:$0x1]
    %v5379 = vlaneseq
    %v5380 = vshrl.u32 %v5379, 7
    %v5381 = vsub.s32 0, %v5380
    %v5382 = vrot.slane %v5377, %v5381
    %v5385 = vsel %vm161, %v5357, 0
    %v5388 = vsel %vm161, %v5358, 0
    %v5391 = vsel %vm161, %v5359, 0
    %v5394 = vsel %vm161, %v5360, 0
    %v5397 = vsel %vm161, %v5361, 0
    %v5400 = vsel %vm161, %v5362, 0
    %v5403 = vsel %vm161, %v5363, 0
    %v5406 = vsel %vm161, %v5364, 0
    %5408 = vmatprep.subr.mxu0 0.0
    %5409 = vmatpush1.msra.mxu0 0.0
    %5410 = vmatprep.subr.mxu0 0.0
    %5411 = vmatpush1.msra.mxu0 0.0
    %5412 = vmatprep.subr.mxu0 0.0
    %5413 = vmatpush1.msra.mxu0 0.0
    %5414 = vmatprep.subr.mxu0 0.0
    %5415 = vmatpush1.msra.mxu0 0.0
    %5416 = vmatprep.subr.mxu0 0.0
    %5417 = vmatpush1.msra.mxu0 0.0
    %5418 = vmatprep.subr.mxu0 0.0
    %5419 = vmatpush1.msra.mxu0 0.0
    %5420 = vmatprep.subr.mxu0 0.0
    %5421 = vmatpush1.msra.mxu0 0.0
    %5422 = vmatprep.subr.mxu0 0.0
    %5423 = vmatpush1.msra.mxu0 0.0
    %5424 = vmatprep.subr.mxu0 0.0
    %5425 = vmatpush1.msra.mxu0 0.0
    %5426 = vmatprep.subr.mxu0 0.0
    %5427 = vmatpush1.msra.mxu0 0.0
    %5428 = vmatprep.subr.mxu0 0.0
    %5429 = vmatpush1.msra.mxu0 0.0
    %5430 = vmatprep.subr.mxu0 0.0
    %5431 = vmatpush1.msra.mxu0 0.0
    %5432 = vmatprep.subr.mxu0 0.0
    %5433 = vmatpush1.msra.mxu0 %v5376
    %5434 = vmatprep.subr.mxu0 0.0
    %5435 = vmatpush1.msra.mxu0 %v5375
    %5436 = vmatprep.subr.mxu0 0.0
    %5437 = vmatpush1.msra.mxu0 %v5374
    %5438 = vmatprep.subr.mxu0 0.0
    %5439 = vmatpush1.msra.mxu0 %v5373
    %5440 = vmatprep.subr.mxu0 0.0
    %5441 = vmatpush2.msra.mxu0 0.0
    %5442 = vmatprep.subr.mxu0 0.0
    %5443 = vmatpush2.msra.mxu0 0.0
    %5444 = vmatprep.subr.mxu0 0.0
    %5445 = vmatpush2.msra.mxu0 0.0
    %5446 = vmatprep.subr.mxu0 0.0
    %5447 = vmatpush2.msra.mxu0 0.0
    %5448 = vmatprep.subr.mxu0 0.0
    %5449 = vmatpush2.msra.mxu0 0.0
    %5450 = vmatprep.subr.mxu0 0.0
    %5451 = vmatpush2.msra.mxu0 0.0
    %5452 = vmatprep.subr.mxu0 0.0
    %5453 = vmatpush2.msra.mxu0 0.0
    %5454 = vmatprep.subr.mxu0 0.0
    %5455 = vmatpush2.msra.mxu0 0.0
    %5456 = vmatprep.subr.mxu0 0.0
    %5457 = vmatpush2.msra.mxu0 0.0
    %5458 = vmatprep.subr.mxu0 0.0
    %5459 = vmatpush2.msra.mxu0 0.0
    %5460 = vmatprep.subr.mxu0 0.0
    %5461 = vmatpush2.msra.mxu0 0.0
    %5462 = vmatprep.subr.mxu0 0.0
    %5463 = vmatpush2.msra.mxu0 0.0
    %5464 = vmatprep.subr.mxu0 0.0
    %5465 = vmatpush2.msra.mxu0 0.0
    %5466 = vmatprep.subr.mxu0 0.0
    %5467 = vmatpush2.msra.mxu0 0.0
    %5468 = vmatprep.subr.mxu0 0.0
    %5469 = vmatpush2.msra.mxu0 0.0
    %5470 = vmatprep.subr.mxu0 0.0
    %5471 = vmatpush2.msra.mxu0 0.0
    %5472 = vmatprep.mubr.f32.mxu0 0.0
    %5473 = vmatmul.mubr.f32.gmra.mxu0 %v5385
    %v5474 = vpop.f32.mrf.mxu0
    %v5475 = vadd.f32 %v5382, %v5474
    %v5476 = vpop.f32.mrf.mxu0
    %5477 = vmatprep.mubr.f32.mxu0 0.0
    %5478 = vmatmul.mubr.f32.gmra.mxu0 %v5388
    %v5479 = vpop.f32.mrf.mxu0
    %v5480 = vadd.f32 %v5382, %v5479
    %v5481 = vpop.f32.mrf.mxu0
    %5482 = vmatprep.mubr.f32.mxu0 0.0
    %5483 = vmatmul.mubr.f32.gmra.mxu0 %v5391
    %v5484 = vpop.f32.mrf.mxu0
    %v5485 = vadd.f32 %v5382, %v5484
    %v5486 = vpop.f32.mrf.mxu0
    %5487 = vmatprep.mubr.f32.mxu0 0.0
    %5488 = vmatmul.mubr.f32.gmra.mxu0 %v5394
    %v5489 = vpop.f32.mrf.mxu0
    %v5490 = vadd.f32 %v5382, %v5489
    %v5491 = vpop.f32.mrf.mxu0
    %5492 = vmatprep.mubr.f32.mxu0 0.0
    %5493 = vmatmul.mubr.f32.gmra.mxu0 %v5397
    %v5494 = vpop.f32.mrf.mxu0
    %v5495 = vadd.f32 %v5382, %v5494
    %v5496 = vpop.f32.mrf.mxu0
    %5497 = vmatprep.mubr.f32.mxu0 0.0
    %5498 = vmatmul.mubr.f32.gmra.mxu0 %v5400
    %v5499 = vpop.f32.mrf.mxu0
    %v5500 = vadd.f32 %v5382, %v5499
    %v5501 = vpop.f32.mrf.mxu0
    %5502 = vmatprep.mubr.f32.mxu0 0.0
    %5503 = vmatmul.mubr.f32.gmra.mxu0 %v5403
    %v5504 = vpop.f32.mrf.mxu0
    %v5505 = vadd.f32 %v5382, %v5504
    %v5506 = vpop.f32.mrf.mxu0
    %5507 = vmatprep.mubr.f32.mxu0 0.0
    %5508 = vmatmul.mubr.f32.gmra.mxu0 %v5406
    %v5509 = vpop.f32.mrf.mxu0
    %v5510 = vadd.f32 %v5382, %v5509
    %v5511 = vpop.f32.mrf.mxu0
    %5512 = vdwg.mxu0
    %v5513 = vsel %vm2837, %v5475, -inf
    %5514 = vmax.xlane.f32.xlu0 %v5513
    %v5515 = vpop.xlane.xlu0 %5514
    %v5516 = vsel %vm2837, %v5480, -inf
    %5517 = vmax.xlane.f32.xlu0 %v5516
    %v5518 = vpop.xlane.xlu0 %5517
    %v5519 = vsel %vm2837, %v5485, -inf
    %5520 = vmax.xlane.f32.xlu0 %v5519
    %v5521 = vpop.xlane.xlu0 %5520
    %v5522 = vsel %vm2837, %v5490, -inf
    %5523 = vmax.xlane.f32.xlu0 %v5522
    %v5524 = vpop.xlane.xlu0 %5523
    %v5525 = vsel %vm2837, %v5495, -inf
    %5526 = vmax.xlane.f32.xlu0 %v5525
    %v5527 = vpop.xlane.xlu0 %5526
    %v5528 = vsel %vm2837, %v5500, -inf
    %5529 = vmax.xlane.f32.xlu0 %v5528
    %v5530 = vpop.xlane.xlu0 %5529
    %v5531 = vsel %vm2837, %v5505, -inf
    %5532 = vmax.xlane.f32.xlu0 %v5531
    %v5533 = vpop.xlane.xlu0 %5532
    %v5534 = vsel %vm2837, %v5510, -inf
    %5535 = vmax.xlane.f32.xlu0 %v5534
    %v5536 = vpop.xlane.xlu0 %5535
    %v5537 = vsub.f32 %v5475, %v5515
    %v5538 = vsub.f32 %v5480, %v5518
    %v5539 = vsub.f32 %v5485, %v5521
    %v5540 = vsub.f32 %v5490, %v5524
    %v5541 = vsub.f32 %v5495, %v5527
    %v5542 = vsub.f32 %v5500, %v5530
    %v5543 = vsub.f32 %v5505, %v5533
    %v5544 = vsub.f32 %v5510, %v5536
    %v5545 = vmul.f32 %v5537, 1.442695
    %v5546 = vpow.pop %v5545
    %v5547 = vmul.f32 %v5538, 1.442695
    %v5548 = vpow.pop %v5547
    %v5549 = vmul.f32 %v5539, 1.442695
    %v5550 = vpow.pop %v5549
    %v5551 = vmul.f32 %v5540, 1.442695
    %v5552 = vpow.pop %v5551
    %v5553 = vmul.f32 %v5541, 1.442695
    %v5554 = vpow.pop %v5553
    %v5555 = vmul.f32 %v5542, 1.442695
    %v5556 = vpow.pop %v5555
    %v5557 = vmul.f32 %v5543, 1.442695
    %v5558 = vpow.pop %v5557
    %v5559 = vmul.f32 %v5544, 1.442695
    %v5560 = vpow.pop %v5559
    %v5561 = vsel %vm2837, %v5546, 0.0
    %5562 = vadd.xlane.f32.xlu0 %v5561
    %v5563 = vpop.xlane.xlu0 %5562
    %v5564 = vsel %vm2837, %v5548, 0.0
    %5565 = vadd.xlane.f32.xlu0 %v5564
    %v5566 = vpop.xlane.xlu0 %5565
    %v5567 = vsel %vm2837, %v5550, 0.0
    %5568 = vadd.xlane.f32.xlu0 %v5567
    %v5569 = vpop.xlane.xlu0 %5568
    %v5570 = vsel %vm2837, %v5552, 0.0
    %5571 = vadd.xlane.f32.xlu0 %v5570
    %v5572 = vpop.xlane.xlu0 %5571
    %v5573 = vsel %vm2837, %v5554, 0.0
    %5574 = vadd.xlane.f32.xlu0 %v5573
    %v5575 = vpop.xlane.xlu0 %5574
    %v5576 = vsel %vm2837, %v5556, 0.0
    %5577 = vadd.xlane.f32.xlu0 %v5576
    %v5578 = vpop.xlane.xlu0 %5577
    %v5579 = vsel %vm2837, %v5558, 0.0
    %5580 = vadd.xlane.f32.xlu0 %v5579
    %v5581 = vpop.xlane.xlu0 %5580
    %v5582 = vsel %vm2837, %v5560, 0.0
    %5583 = vadd.xlane.f32.xlu0 %v5582
    %v5584 = vpop.xlane.xlu0 %5583
    %v5585 = vlog2.pop %v5563
    %v5586 = vmul.f32 %v5585, 0.6931472
    %v5587 = vlog2.pop %v5566
    %v5588 = vmul.f32 %v5587, 0.6931472
    %v5589 = vlog2.pop %v5569
    %v5590 = vmul.f32 %v5589, 0.6931472
    %v5591 = vlog2.pop %v5572
    %v5592 = vmul.f32 %v5591, 0.6931472
    %v5593 = vlog2.pop %v5575
    %v5594 = vmul.f32 %v5593, 0.6931472
    %v5595 = vlog2.pop %v5578
    %v5596 = vmul.f32 %v5595, 0.6931472
    %v5597 = vlog2.pop %v5581
    %v5598 = vmul.f32 %v5597, 0.6931472
    %v5599 = vlog2.pop %v5584
    %v5600 = vmul.f32 %v5599, 0.6931472
    %v5601 = vadd.f32 %v5515, %v5586
    %v5602 = vadd.f32 %v5518, %v5588
    %v5603 = vadd.f32 %v5521, %v5590
    %v5604 = vadd.f32 %v5524, %v5592
    %v5605 = vadd.f32 %v5527, %v5594
    %v5606 = vadd.f32 %v5530, %v5596
    %v5607 = vadd.f32 %v5533, %v5598
    %v5608 = vadd.f32 %v5536, %v5600
    %v5609 = vsub.f32 %v5475, %v5601
    %v5610 = vsub.f32 %v5480, %v5602
    %v5611 = vsub.f32 %v5485, %v5603
    %v5612 = vsub.f32 %v5490, %v5604
    %v5613 = vsub.f32 %v5495, %v5605
    %v5614 = vsub.f32 %v5500, %v5606
    %v5615 = vsub.f32 %v5505, %v5607
    %v5616 = vsub.f32 %v5510, %v5608
    %5617 = vst.msk [vmem:[%s69] sm:$0xff] %vm2837, %v5609
    %5618 = vst.msk [vmem:[%s69 + $0x8] sm:$0xff] %vm2837, %v5610
    %5619 = vst.msk [vmem:[%s69 + $0x10] sm:$0xff] %vm2837, %v5611
    %5620 = vst.msk [vmem:[%s69 + $0x18] sm:$0xff] %vm2837, %v5612
    %5621 = vst.msk [vmem:[%s69 + $0x20] sm:$0xff] %vm2837, %v5613
    %5622 = vst.msk [vmem:[%s69 + $0x28] sm:$0xff] %vm2837, %v5614
    %5623 = vst.msk [vmem:[%s69 + $0x30] sm:$0xff] %vm2837, %v5615
    %5624 = vst.msk [vmem:[%s69 + $0x38] sm:$0xff] %vm2837, %v5616
    // Predicated region
    $region134: #{rnn_decoder_forward.1} parent=1 // pred_check
      _
    $region135: #{rnn_decoder_forward.1} parent=1 // pred_check_branch
      %5626 = sbr.rel (0) target = $region137
    $region136: #{rnn_decoder_forward.1} parent=1 // pred_region
      %s5628 = ssub.s32 1024, 1024
      %5629 = vsyncadd [#allocation3], %s5628
      %s5630 = sshll.u32 [#allocation2], 4
      %s5631 = int_to_ptr.vmem [resolvable:$true] %s5630
      %5636 = dma.vmem_to_hbm [thread:$0]  %s5631, 1024, %s67, [#allocation3], 128, 128, 8
    $region137: #{rnn_decoder_forward.1} parent=1 // pred_fallthru
      _
    // Predicated region
    $region138: #{rnn_decoder_forward.1} parent=1 // pred_check
      _
    $region139: #{rnn_decoder_forward.1} parent=1 // pred_check_branch
      %5638 = sbr.rel (0) target = $region141
    $region140: #{rnn_decoder_forward.1} parent=1 // pred_region
      _
    $region141: #{rnn_decoder_forward.1} parent=1 // pred_fallthru
      _
    // Predicated region
    $region142: #{rnn_decoder_forward.1} parent=1 // pred_check
      _
    $region143: #{rnn_decoder_forward.1} parent=1 // pred_check_branch
      %5640 = sbr.rel (0) target = $region145
    $region144: #{rnn_decoder_forward.1} parent=1 // pred_region
      %5641 = dma.done [#allocation3], 1024
    $region145: #{rnn_decoder_forward.1} parent=1 // pred_fallthru
      _
    // Predicated region
    $region146: #{rnn_decoder_forward.1} parent=1 // pred_check
      _
    $region147: #{rnn_decoder_forward.1} parent=1 // pred_check_branch
      %5643 = sbr.rel (0) target = $region149
    $region148: #{rnn_decoder_forward.1} parent=1 // pred_region
      _
    $region149: #{rnn_decoder_forward.1} parent=1 // pred_fallthru
      _
    %5644 = vsyncpa [#allocation3], 1

</llo_original>
